<compile_context>
chip_gen: v7x
topology: tpu7x:2x2x1
jax: 0.10.0
libtpu: 0.0.40
codegen_flags: <defaults>
</compile_context>

<pallas_src>
import functools
import math

import jax
import jax.numpy as jnp
from jax.experimental import pallas as pl
from jax.experimental.pallas import tpu as pltpu

F32 = jnp.float32
BF16 = jnp.bfloat16
_NEG = -1e30          # finite large-negative additive mask (self-loops guarantee >=1 valid key per row)
_LN_EPS = 1e-5
_VMEM_LIMIT = 32 * 1024 * 1024   # explicit scoped-VMEM limit, safe on v5e/v6e/v7x


# ----------------------------------------------------------------------------- small helpers (inside kernels)

def _layer_norm(x, g, b):
    mean = jnp.mean(x, axis=-1, keepdims=True)
    var = jnp.mean((x - mean) ** 2, axis=-1, keepdims=True)
    return (x - mean) * jax.lax.rsqrt(var + _LN_EPS) * g + b


def _softmax_lastdim(scores):
    m = jnp.max(scores, axis=-1, keepdims=True)
    p = jnp.exp(scores - m)
    inv = pl.reciprocal(jnp.sum(p, axis=-1, keepdims=True), approx=True)
    return p * inv


def _full_spec(shape):
    """BlockSpec covering the whole array, same block for every grid step (fetched once)."""
    nd = len(shape)
    return pl.BlockSpec(shape, lambda i, nd=nd: (0,) * nd)


# ----------------------------------------------------------------------------- stage 1: spatial kernel

def _spatial_stage_kernel(n_layers, num_heads,
                          x_ref, src_oh_ref, dst_oh_ref, dst_ohT_ref, eterm_ref, mask_ref,
                          fw1_ref, fb1_ref, fw2_ref, fb2_ref,
                          wm_src_ref, wm_dst_ref, wm2_ref, bm2_ref,
                          wgu_h_ref, wgu_agg_ref, bgu_ref, wu2_ref, bu2_ref,
                          mln_g_ref, mln_b_ref,
                          wqkv_ref, bqkv_ref, wo_ref, bo_ref, aln_g_ref, aln_b_ref,
                          o_ref):
    """Feature encoder + n_layers EnhancedMessageLayer + SpatialAttention for one graph chunk.

    Rows are (graph, node) within the chunk.  Edge gather/scatter use bf16 block-diagonal
    one-hot operators (chunk_E, chunk_N) shared by every chunk; mask is additive (0 / -1e30).
    """
    H = fw2_ref.shape[1]

    # feature encoder: Linear -> ReLU -> (Dropout=id) -> Linear -> ReLU -> (Dropout=id)
    h = jnp.maximum(jnp.dot(x_ref[...], fw1_ref[...], preferred_element_type=F32) + fb1_ref[...], 0.0)
    h = jnp.maximum(jnp.dot(h, fw2_ref[...], preferred_element_type=F32) + fb2_ref[...], 0.0)   # (R, H)

    src_oh = src_oh_ref[...]      # (CE, R) bf16, gather x[edge_index[0]]
    dst_oh = dst_oh_ref[...]      # (CE, R) bf16, gather x[edge_index[1]]
    dst_ohT = dst_ohT_ref[...]    # (R, CE) bf16, scatter-add over edge_index[1]

    for l in range(n_layers):
        hb = h.astype(BF16)
        src_f = jnp.dot(src_oh, hb, preferred_element_type=F32)       # (CE, H)
        dst_f = jnp.dot(dst_oh, hb, preferred_element_type=F32)       # (CE, H)
        # message MLP first layer, split weights (no lane concat); edge term precomputed (incl. bias)
        m = (jnp.dot(src_f, wm_src_ref[l], preferred_element_type=F32)
             + jnp.dot(dst_f, wm_dst_ref[l], preferred_element_type=F32)
             + eterm_ref[l])
        m = jnp.maximum(m, 0.0)
        m = jnp.dot(m, wm2_ref[l], preferred_element_type=F32) + bm2_ref[l]           # (CE, H)
        agg = jnp.dot(dst_ohT, m.astype(BF16), preferred_element_type=F32)            # (R, H)

        # fused gate|update first matmuls, split over [h | agg] (no lane concat)
        pre = (jnp.dot(h, wgu_h_ref[l], preferred_element_type=F32)
               + jnp.dot(agg, wgu_agg_ref[l], preferred_element_type=F32)
               + bgu_ref[l])                                                          # (R, 2H)
        gate = jax.nn.sigmoid(pre[:, :H])
        upd = jnp.maximum(pre[:, H:], 0.0)
        upd = jnp.dot(upd, wu2_ref[l], preferred_element_type=F32) + bu2_ref[l]
        h = _layer_norm(gate * upd + (1.0 - gate) * h, mln_g_ref[l], mln_b_ref[l])

    # ---- spatial attention (fused QKV, additive block-diagonal mask, per-head fold into out-proj)
    hd = H // num_heads
    scale = 1.0 / math.sqrt(hd)
    mask_add = mask_ref[...].astype(F32)                                              # (R, R)
    qkv = jnp.dot(h, wqkv_ref[...], preferred_element_type=F32) + bqkv_ref[...]       # (R, 3H)
    wo = wo_ref[...]

    attn_out = jnp.zeros_like(h)
    for hh in range(num_heads):
        q = qkv[:, hh * hd:(hh + 1) * hd]
        k = qkv[:, H + hh * hd:H + (hh + 1) * hd]
        v = qkv[:, 2 * H + hh * hd:2 * H + (hh + 1) * hd]
        s = jax.lax.dot_general(q, k, (((1,), (1,)), ((), ())),
                                preferred_element_type=F32) * scale + mask_add        # (R, R)
        p = _softmax_lastdim(s)                                                       # (dropout=id)
        head = jnp.dot(p, v, preferred_element_type=F32)                              # (R, hd)
        # concat(heads) @ Wo == sum_h head_h @ Wo[rows of head h]
        attn_out = attn_out + jnp.dot(head, wo[hh * hd:(hh + 1) * hd, :],
                                      preferred_element_type=F32)
    y = h + attn_out + bo_ref[...]
    o_ref[...] = _layer_norm(y, aln_g_ref[...], aln_b_ref[...]).astype(o_ref.dtype)


# ----------------------------------------------------------------------------- stage 2: temporal kernel

def _temporal_stage_kernel(num_heads,
                           x_ref, wi0_ref, wh0_ref, b0_ref, wi1_ref, wh1_ref, b1_ref,
                           taq_w_ref, taq_b_ref, takv_w_ref, takv_b_ref, pool_ref,
                           tao_w_ref, tao_b_ref, taln_g_ref, taln_b_ref,
                           ws_ref, bs_ref, whead_ref, bhead_ref,
                           o_ref, ys_ref):
    """2-layer LSTM (fused gates, hoisted layer-0 input projection) + TemporalAttention
    (last query only, head-pooled) + prediction heads, for one chunk of node sequences."""
    T, M, Hin = x_ref.shape
    TH = wh0_ref.shape[0]

    # layer-0 input projection hoisted off the serial path: ONE (T*M, H) @ (H, 4TH) matmul
    gx = (jnp.dot(x_ref[...].reshape(T * M, Hin), wi0_ref[...], preferred_element_type=F32)
          + b0_ref[...])                                                              # (T*M, 4TH)

    wh0 = wh0_ref[...]; wi1 = wi1_ref[...]; wh1 = wh1_ref[...]; b1 = b1_ref[...]

    def gates_to_hc(g, cprev):                       # PyTorch gate order i, f, g, o
        i = jax.nn.sigmoid(g[:, 0 * TH:1 * TH])
        f = jax.nn.sigmoid(g[:, 1 * TH:2 * TH])
        gg = jnp.tanh(g[:, 2 * TH:3 * TH])
        o = jax.nn.sigmoid(g[:, 3 * TH:4 * TH])
        c = f * cprev + i * gg
        return o * jnp.tanh(c), c

    h1 = jnp.zeros((M, TH), F32); c1 = jnp.zeros((M, TH), F32)
    h2 = jnp.zeros((M, TH), F32); c2 = jnp.zeros((M, TH), F32)
    for t in range(T):                               # small static trip count -> unrolled
        g1 = gx[t * M:(t + 1) * M] + jnp.dot(h1, wh0, preferred_element_type=F32)
        h1, c1 = gates_to_hc(g1, c1)
        g2 = (jnp.dot(h1, wi1, preferred_element_type=F32)
              + jnp.dot(h2, wh1, preferred_element_type=F32) + b1)                    # dropout=id (eval)
        h2, c2 = gates_to_hc(g2, c2)
        ys_ref[t] = h2                               # park hidden states in VMEM scratch

    x_last = h2
    hd = TH // num_heads
    scale = 1.0 / math.sqrt(hd)
    pool = pool_ref[...]                             # (TH, NH) head-segment pooling operator

    # batched K|V projection over ALL timesteps at once (one full-M matmul)
    kv = (jnp.dot(ys_ref[...].reshape(T * M, TH), takv_w_ref[...], preferred_element_type=F32)
          + takv_b_ref[...])                                                          # (T*M, 2TH)
    k_all = kv[:, :TH]
    v_all = kv[:, TH:]
    q = jnp.dot(x_last, taq_w_ref[...], preferred_element_type=F32) + taq_b_ref[...]  # (M, TH)

    # all-head scores per timestep via the head-pool matmul (no 8-lane per-head slices)
    s = [jnp.dot(q * k_all[t * M:(t + 1) * M], pool, preferred_element_type=F32) * scale
         for t in range(T)]                                                            # T x (M, NH)
    mmax = s[0]
    for t in range(1, T):
        mmax = jnp.maximum(mmax, s[t])
    p = [jnp.exp(st - mmax) for st in s]
    denom = p[0]
    for t in range(1, T):
        denom = denom + p[t]
    inv = pl.reciprocal(denom, approx=True)                                            # (M, NH)

    expand = (((1,), (1,)), ((), ()))                # broadcast per-head weights to hd lanes via pool^T
    acc = jnp.zeros((M, TH), F32)
    for t in range(T):
        p_full = jax.lax.dot_general(p[t], pool, expand, preferred_element_type=F32)   # (M, TH)
        acc = acc + p_full * v_all[t * M:(t + 1) * M]
    inv_full = jax.lax.dot_general(inv, pool, expand, preferred_element_type=F32)
    att = acc * inv_full                                                               # (M, TH)

    y = x_last + jnp.dot(att, tao_w_ref[...], preferred_element_type=F32) + tao_b_ref[...]
    y = _layer_norm(y, taln_g_ref[...], taln_b_ref[...])

    # shared head (Linear->ReLU->Dropout=id), then concat(swh, mwd, mwp) heads
    sh = jnp.maximum(jnp.dot(y, ws_ref[...], preferred_element_type=F32) + bs_ref[...], 0.0)
    o_ref[...] = (jnp.dot(sh, whead_ref[...], preferred_element_type=F32)
                  + bhead_ref[...]).astype(o_ref.dtype)


# ----------------------------------------------------------------------------- parameters

def _xavier(key, shape):
    fan_in, fan_out = shape
    lim = math.sqrt(6.0 / (fan_in + fan_out))
    return jax.random.uniform(key, shape, F32, -lim, lim)


def init_params(key, Fin, H, TH, NH, n_spatial, f_pad=16):
    assert H % NH == 0 and TH % NH == 0
    keys = iter(jax.random.split(key, 128))
    p = {}
    hs = H // 2

    # feature encoder: Linear(F, H/2) -> ReLU -> Linear(H/2, H) -> ReLU  (F padded with zero weight rows)
    w1 = _xavier(next(keys), (Fin, hs))
    p["fe_w1"] = jnp.zeros((f_pad, hs), F32).at[:Fin].set(w1)
    p["fe_b1"] = jnp.zeros((1, hs), F32)
    p["fe_w2"] = _xavier(next(keys), (hs, H))
    p["fe_b2"] = jnp.zeros((1, H), F32)

    # spatial message-passing layers (split / fused weights, stacked over layers)
    sp = {k: [] for k in ("wm_src", "wm_dst", "wm_edge", "bm1", "wm2", "bm2",
                          "wgu_h", "wgu_agg", "bgu", "wu2", "bu2", "lng", "lnb")}
    for _ in range(n_spatial):
        wm = _xavier(next(keys), (2 * H + 3, H))                  # rows: [src | dst | edge(3)]
        sp["wm_src"].append(wm[:H]); sp["wm_dst"].append(wm[H:2 * H]); sp["wm_edge"].append(wm[2 * H:])
        sp["bm1"].append(jnp.zeros((1, H), F32))
        sp["wm2"].append(_xavier(next(keys), (H, H)))
        sp["bm2"].append(jnp.zeros((1, H), F32))
        wg = _xavier(next(keys), (2 * H, H))                      # rows: [x | agg]
        wu = _xavier(next(keys), (2 * H, H))
        sp["wgu_h"].append(jnp.concatenate([wg[:H], wu[:H]], axis=1))     # (H, 2H): [gate | update]
        sp["wgu_agg"].append(jnp.concatenate([wg[H:], wu[H:]], axis=1))   # (H, 2H)
        sp["bgu"].append(jnp.zeros((1, 2 * H), F32))
        sp["wu2"].append(_xavier(next(keys), (H, H)))
        sp["bu2"].append(jnp.zeros((1, H), F32))
        sp["lng"].append(jnp.ones((1, H), F32))
        sp["lnb"].append(jnp.zeros((1, H), F32))
    for k, v in sp.items():
        p["sp_" + k] = jnp.stack(v, axis=0)

    # spatial attention (fused QKV)
    p["sa_wqkv"] = jnp.concatenate([_xavier(next(keys), (H, H)) for _ in range(3)], axis=1)
    p["sa_bqkv"] = jnp.zeros((1, 3 * H), F32)
    p["sa_wo"] = _xavier(next(keys), (H, H))
    p["sa_bo"] = jnp.zeros((1, H), F32)
    p["sa_lng"] = jnp.ones((1, H), F32)
    p["sa_lnb"] = jnp.zeros((1, H), F32)

    # 2-layer LSTM, fused i/f/g/o gates: weights stored transposed, (in, 4*TH)
    p["lstm_wi0"] = _xavier(next(keys), (H, 4 * TH))
    p["lstm_wh0"] = _xavier(next(keys), (TH, 4 * TH))   # TODO(synk): reference uses orthogonal init here
    p["lstm_b0"] = jnp.zeros((1, 4 * TH), F32)
    p["lstm_wi1"] = _xavier(next(keys), (TH, 4 * TH))
    p["lstm_wh1"] = _xavier(next(keys), (TH, 4 * TH))
    p["lstm_b1"] = jnp.zeros((1, 4 * TH), F32)

    # temporal attention (fused K|V projection; Q only used for last timestep) + head-pool operator
    p["ta_wq"] = _xavier(next(keys), (TH, TH)); p["ta_bq"] = jnp.zeros((1, TH), F32)
    p["ta_wkv"] = jnp.concatenate([_xavier(next(keys), (TH, TH)),
                                   _xavier(next(keys), (TH, TH))], axis=1)
    p["ta_bkv"] = jnp.zeros((1, 2 * TH), F32)
    p["ta_wo"] = _xavier(next(keys), (TH, TH)); p["ta_bo"] = jnp.zeros((1, TH), F32)
    p["ta_lng"] = jnp.ones((1, TH), F32); p["ta_lnb"] = jnp.zeros((1, TH), F32)
    hd = TH // NH
    rows = jnp.arange(TH)
    p["ta_pool"] = jnp.zeros((TH, NH), F32).at[rows, rows // hd].set(1.0)   # pool[h*hd+d, h] = 1

    # shared head + variable heads (swh:1, mwd:2, mwp:1 -> concatenated -> 4)
    p["ws"] = _xavier(next(keys), (TH, hs)); p["bs"] = jnp.zeros((1, hs), F32)
    p["wh"] = jnp.concatenate([_xavier(next(keys), (hs, 1)),
                               _xavier(next(keys), (hs, 2)),
                               _xavier(next(keys), (hs, 1))], axis=1)
    p["bh"] = jnp.zeros((1, 4), F32)
    return p


# ----------------------------------------------------------------------------- graph operators (built ONCE)

def build_graph_operators(src, dst, num_nodes, graph_chunk):
    """bf16 one-hot gather/scatter operators and additive attention mask for ONE chunk of
    graph_chunk identical graphs.  Built once outside the jitted forward path."""
    N = int(num_nodes); GC = int(graph_chunk)
    offs = (jnp.arange(GC, dtype=src.dtype) * N)[:, None]
    src_c = (src[None, :] + offs).reshape(-1)                        # (GC*E,)
    dst_c = (dst[None, :] + offs).reshape(-1)
    src_oh = jax.nn.one_hot(src_c, GC * N, dtype=BF16)               # (GC*E, GC*N) gather
    dst_oh = jax.nn.one_hot(dst_c, GC * N, dtype=BF16)               # (GC*E, GC*N) gather
    dst_ohT = dst_oh.T                                               # (GC*N, GC*E) scatter-add
    adj = jnp.zeros((N, N), F32).at[src, dst].set(1.0)               # mask[i, j] = edge (i -> j)
    block = jnp.kron(jnp.eye(GC, dtype=F32), adj)                    # block-diagonal within chunk
    add_mask = jnp.where(block > 0, 0.0, _NEG).astype(BF16)          # additive mask (0 / -1e30)
    return {"src_oh": src_oh, "dst_oh": dst_oh, "dst_ohT": dst_ohT, "mask": add_mask}


# ----------------------------------------------------------------------------- forward

def forward(params, ops, x, edge_attr, *, num_heads=4, graph_chunk=2, node_chunk=16):
    B, T, N, Fin = x.shape
    G = B * T
    H = params["fe_w2"].shape[1]
    TH = params["lstm_wh0"].shape[0]
    Fp = params["fe_w1"].shape[0]
    L = params["sp_wm_src"].shape[0]
    E = edge_attr.shape[0]
    GC = graph_chunk
    MC = node_chunk
    M = B * N
    assert G % GC == 0 and M % MC == 0
    R = GC * N                       # rows per stage-1 chunk
    CE = GC * E                      # edges per stage-1 chunk

    # per-layer edge-attr contribution (incl. message bias), computed once and tiled across
    # the graphs of a chunk (replaces eattr tiling + zero-padded contraction rows)
    edge_term = jnp.einsum("ep,lph->leh", edge_attr, params["sp_wm_edge"]) + params["sp_bm1"]
    edge_term = jnp.tile(edge_term, (1, GC, 1))                      # (L, CE, H)

    # stage-1 rows ordered (t, b, n) so the temporal stage needs only metadata reshapes
    xf = jnp.transpose(x, (1, 0, 2, 3)).reshape(G * N, Fin)
    xf = jnp.pad(xf, ((0, 0), (0, Fp - Fin)))

    spatial_out = pl.pallas_call(
        functools.partial(_spatial_stage_kernel, L, num_heads),
        out_shape=jax.ShapeDtypeStruct((G * N, H), F32),
        grid_spec=pltpu.PrefetchScalarGridSpec(
            num_scalar_prefetch=0,
            grid=(G // GC,),
            in_specs=[
                pl.BlockSpec((R, Fp), lambda i: (i, 0)),             # node features (per chunk)
                _full_spec((CE, R)), _full_spec((CE, R)), _full_spec((R, CE)),
                _full_spec((L, CE, H)), _full_spec((R, R)),
                _full_spec((Fp, H // 2)), _full_spec((1, H // 2)),
                _full_spec((H // 2, H)), _full_spec((1, H)),
                _full_spec((L, H, H)), _full_spec((L, H, H)),
                _full_spec((L, H, H)), _full_spec((L, 1, H)),
                _full_spec((L, H, 2 * H)), _full_spec((L, H, 2 * H)), _full_spec((L, 1, 2 * H)),
                _full_spec((L, H, H)), _full_spec((L, 1, H)),
                _full_spec((L, 1, H)), _full_spec((L, 1, H)),
                _full_spec((H, 3 * H)), _full_spec((1, 3 * H)),
                _full_spec((H, H)), _full_spec((1, H)),
                _full_spec((1, H)), _full_spec((1, H)),
            ],
            out_specs=pl.BlockSpec((R, H), lambda i: (i, 0)),
        ),
        compiler_params=pltpu.CompilerParams(
            dimension_semantics=("parallel",),
            vmem_limit_bytes=_VMEM_LIMIT),
    )(xf, ops["src_oh"], ops["dst_oh"], ops["dst_ohT"], edge_term, ops["mask"],
      params["fe_w1"], params["fe_b1"], params["fe_w2"], params["fe_b2"],
      params["sp_wm_src"], params["sp_wm_dst"], params["sp_wm2"], params["sp_bm2"],
      params["sp_wgu_h"], params["sp_wgu_agg"], params["sp_bgu"],
      params["sp_wu2"], params["sp_bu2"], params["sp_lng"], params["sp_lnb"],
      params["sa_wqkv"], params["sa_bqkv"], params["sa_wo"], params["sa_bo"],
      params["sa_lng"], params["sa_lnb"])

    # stage 2: (T, B*N, H) sequences (pure metadata reshape: rows were (t, b, n))
    seqs = spatial_out.reshape(T, M, H)

    preds = pl.pallas_call(
        functools.partial(_temporal_stage_kernel, num_heads),
        out_shape=jax.ShapeDtypeStruct((M, 4), F32),
        grid_spec=pltpu.PrefetchScalarGridSpec(
            num_scalar_prefetch=0,
            grid=(M // MC,),
            in_specs=[
                pl.BlockSpec((T, MC, H), lambda i: (0, i, 0)),       # sequence chunk
                _full_spec((H, 4 * TH)), _full_spec((TH, 4 * TH)), _full_spec((1, 4 * TH)),
                _full_spec((TH, 4 * TH)), _full_spec((TH, 4 * TH)), _full_spec((1, 4 * TH)),
                _full_spec((TH, TH)), _full_spec((1, TH)),
                _full_spec((TH, 2 * TH)), _full_spec((1, 2 * TH)),
                _full_spec((TH, num_heads)),
                _full_spec((TH, TH)), _full_spec((1, TH)),
                _full_spec((1, TH)), _full_spec((1, TH)),
                _full_spec((TH, H // 2)), _full_spec((1, H // 2)),
                _full_spec((H // 2, 4)), _full_spec((1, 4)),
            ],
            out_specs=pl.BlockSpec((MC, 4), lambda i: (i, 0)),
            scratch_shapes=[pltpu.VMEM((T, MC, TH), F32)],
        ),
        compiler_params=pltpu.CompilerParams(
            dimension_semantics=("parallel",),
            vmem_limit_bytes=_VMEM_LIMIT),
    )(seqs,
      params["lstm_wi0"], params["lstm_wh0"], params["lstm_b0"],
      params["lstm_wi1"], params["lstm_wh1"], params["lstm_b1"],
      params["ta_wq"], params["ta_bq"], params["ta_wkv"], params["ta_bkv"],
      params["ta_pool"],
      params["ta_wo"], params["ta_bo"], params["ta_lng"], params["ta_lnb"],
      params["ws"], params["bs"], params["wh"], params["bh"])
    return preds.reshape(B, N, 4)


# ----------------------------------------------------------------------------- test harness

def build_grid_graph(rows, cols):
    """4-neighbour lattice + self-loops (every node has >=1 outgoing edge -> no degenerate softmax rows)."""
    edges = []

    def nid(r, c):
        return r * cols + c

    for r in range(rows):
        for c in range(cols):
            edges.append((nid(r, c), nid(r, c)))
            for dr, dc in ((0, 1), (0, -1), (1, 0), (-1, 0)):
                rr, cc = r + dr, c + dc
                if 0 <= rr < rows and 0 <= cc < cols:
                    edges.append((nid(r, c), nid(rr, cc)))
    src = jnp.array([e[0] for e in edges], jnp.int32)
    dst = jnp.array([e[1] for e in edges], jnp.int32)
    return src, dst


if __name__ == "__main__":
    # small config consistent with the module's forward
    B, T, N, Fin = 2, 4, 16, 11      # batch, sequence_length, num_nodes, input_features
    H, TH, NH, NSP = 32, 32, 4, 2    # hidden_dim, temporal_hidden_dim, num_heads, num_spatial_layers
    GC, MC = 2, 16                   # graph chunk (stage-1 grid), sequence chunk (stage-2 grid)

    key = jax.random.PRNGKey(0)
    k_x, k_e, k_p = jax.random.split(key, 3)

    x = jax.random.normal(k_x, (B, T, N, Fin), F32)
    src, dst = build_grid_graph(4, 4)
    E = int(src.shape[0])
    edge_attr = jax.random.normal(k_e, (E, 3), F32)

    params = init_params(k_p, Fin, H, TH, NH, NSP)
    ops = build_graph_operators(src, dst, N, GC)     # built once, outside the jitted path

    fwd = jax.jit(functools.partial(forward, num_heads=NH, graph_chunk=GC, node_chunk=MC))
    out = fwd(params, ops, x, edge_attr)
    out = jax.block_until_ready(out)

    assert out.shape == (B, N, 4), out.shape
    assert bool(jnp.isfinite(out).all())
    print("KERNEL_OK")
</pallas_src>

<mosaic_0001>
module attributes {stable_mosaic.version = 11 : i64} {
  func.func @_temporal_stage_kernel(%arg0: i32, %arg1: memref<4x16x32xf32, #tpu.memory_space<vmem>>, %arg2: memref<32x128xf32, #tpu.memory_space<vmem>>, %arg3: memref<32x128xf32, #tpu.memory_space<vmem>>, %arg4: memref<1x128xf32, #tpu.memory_space<vmem>>, %arg5: memref<32x128xf32, #tpu.memory_space<vmem>>, %arg6: memref<32x128xf32, #tpu.memory_space<vmem>>, %arg7: memref<1x128xf32, #tpu.memory_space<vmem>>, %arg8: memref<32x32xf32, #tpu.memory_space<vmem>>, %arg9: memref<1x32xf32, #tpu.memory_space<vmem>>, %arg10: memref<32x64xf32, #tpu.memory_space<vmem>>, %arg11: memref<1x64xf32, #tpu.memory_space<vmem>>, %arg12: memref<32x4xf32, #tpu.memory_space<vmem>>, %arg13: memref<32x32xf32, #tpu.memory_space<vmem>>, %arg14: memref<1x32xf32, #tpu.memory_space<vmem>>, %arg15: memref<1x32xf32, #tpu.memory_space<vmem>>, %arg16: memref<1x32xf32, #tpu.memory_space<vmem>>, %arg17: memref<32x16xf32, #tpu.memory_space<vmem>>, %arg18: memref<1x16xf32, #tpu.memory_space<vmem>>, %arg19: memref<16x4xf32, #tpu.memory_space<vmem>>, %arg20: memref<1x4xf32, #tpu.memory_space<vmem>>, %arg21: memref<16x4xf32, #tpu.memory_space<vmem>>, %arg22: memref<4x16x32xf32, #tpu.memory_space<vmem>>) attributes {dimension_semantics = [#tpu.dimension_semantics<parallel>], iteration_bounds = array<i64: 2>, scalar_prefetch = 0 : i64, scratch_operands = 1 : i64, tpu.core_type = #tpu.core_type<tc>, window_params = [{transform_indices = @transform_0, window_bounds = array<i64: 4, 16, 32>}, {pipeline_mode = #tpu.pipeline_mode<synchronous>, transform_indices = @transform_1, window_bounds = array<i64: 32, 128>}, {pipeline_mode = #tpu.pipeline_mode<synchronous>, transform_indices = @transform_2, window_bounds = array<i64: 32, 128>}, {pipeline_mode = #tpu.pipeline_mode<synchronous>, transform_indices = @transform_3, window_bounds = array<i64: 1, 128>}, {pipeline_mode = #tpu.pipeline_mode<synchronous>, transform_indices = @transform_4, window_bounds = array<i64: 32, 128>}, {pipeline_mode = #tpu.pipeline_mode<synchronous>, transform_indices = @transform_5, window_bounds = array<i64: 32, 128>}, {pipeline_mode = #tpu.pipeline_mode<synchronous>, transform_indices = @transform_6, window_bounds = array<i64: 1, 128>}, {pipeline_mode = #tpu.pipeline_mode<synchronous>, transform_indices = @transform_7, window_bounds = array<i64: 32, 32>}, {pipeline_mode = #tpu.pipeline_mode<synchronous>, transform_indices = @transform_8, window_bounds = array<i64: 1, 32>}, {pipeline_mode = #tpu.pipeline_mode<synchronous>, transform_indices = @transform_9, window_bounds = array<i64: 32, 64>}, {pipeline_mode = #tpu.pipeline_mode<synchronous>, transform_indices = @transform_10, window_bounds = array<i64: 1, 64>}, {pipeline_mode = #tpu.pipeline_mode<synchronous>, transform_indices = @transform_11, window_bounds = array<i64: 32, 4>}, {pipeline_mode = #tpu.pipeline_mode<synchronous>, transform_indices = @transform_12, window_bounds = array<i64: 32, 32>}, {pipeline_mode = #tpu.pipeline_mode<synchronous>, transform_indices = @transform_13, window_bounds = array<i64: 1, 32>}, {pipeline_mode = #tpu.pipeline_mode<synchronous>, transform_indices = @transform_14, window_bounds = array<i64: 1, 32>}, {pipeline_mode = #tpu.pipeline_mode<synchronous>, transform_indices = @transform_15, window_bounds = array<i64: 1, 32>}, {pipeline_mode = #tpu.pipeline_mode<synchronous>, transform_indices = @transform_16, window_bounds = array<i64: 32, 16>}, {pipeline_mode = #tpu.pipeline_mode<synchronous>, transform_indices = @transform_17, window_bounds = array<i64: 1, 16>}, {pipeline_mode = #tpu.pipeline_mode<synchronous>, transform_indices = @transform_18, window_bounds = array<i64: 16, 4>}, {pipeline_mode = #tpu.pipeline_mode<synchronous>, transform_indices = @transform_19, window_bounds = array<i64: 1, 4>}, {transform_indices = @transform_20, window_bounds = array<i64: 16, 4>}]} {
    %c0 = arith.constant 0 : index
    %c0_0 = arith.constant 0 : index
    %c0_1 = arith.constant 0 : index
    %0 = vector.load %arg1[%c0, %c0_0, %c0_1] : memref<4x16x32xf32, #tpu.memory_space<vmem>>, vector<4x16x32xf32>
    %1 = vector.shape_cast %0 : vector<4x16x32xf32> to vector<64x32xf32>
    %c0_2 = arith.constant 0 : index
    %c0_3 = arith.constant 0 : index
    %2 = vector.load %arg2[%c0_2, %c0_3] : memref<32x128xf32, #tpu.memory_space<vmem>>, vector<32x128xf32>
    %cst = arith.constant dense<0.000000e+00> : vector<64x128xf32>
    %3 = tpu.matmul %1, %2, %cst {dimension_numbers = #tpu.dot_dimension_numbers<[1], [0], [0], [1], [0, 0, 1, 1], [], []>} : vector<64x32xf32>, vector<32x128xf32>, vector<64x128xf32> -> vector<64x128xf32>
    %c0_4 = arith.constant 0 : index
    %c0_5 = arith.constant 0 : index
    %4 = vector.load %arg4[%c0_4, %c0_5] : memref<1x128xf32, #tpu.memory_space<vmem>>, vector<1x128xf32>
    %5 = vector.broadcast %4 : vector<1x128xf32> to vector<64x128xf32>
    %6 = arith.addf %3, %5 : vector<64x128xf32>
    %c0_6 = arith.constant 0 : index
    %c0_7 = arith.constant 0 : index
    %7 = vector.load %arg3[%c0_6, %c0_7] : memref<32x128xf32, #tpu.memory_space<vmem>>, vector<32x128xf32>
    %c0_8 = arith.constant 0 : index
    %c0_9 = arith.constant 0 : index
    %8 = vector.load %arg5[%c0_8, %c0_9] : memref<32x128xf32, #tpu.memory_space<vmem>>, vector<32x128xf32>
    %c0_10 = arith.constant 0 : index
    %c0_11 = arith.constant 0 : index
    %9 = vector.load %arg6[%c0_10, %c0_11] : memref<32x128xf32, #tpu.memory_space<vmem>>, vector<32x128xf32>
    %c0_12 = arith.constant 0 : index
    %c0_13 = arith.constant 0 : index
    %10 = vector.load %arg7[%c0_12, %c0_13] : memref<1x128xf32, #tpu.memory_space<vmem>>, vector<1x128xf32>
    %cst_14 = arith.constant 0.000000e+00 : f32
    %11 = vector.broadcast %cst_14 : f32 to vector<16x32xf32>
    %cst_15 = arith.constant 0.000000e+00 : f32
    %12 = vector.broadcast %cst_15 : f32 to vector<16x32xf32>
    %cst_16 = arith.constant 0.000000e+00 : f32
    %13 = vector.broadcast %cst_16 : f32 to vector<16x32xf32>
    %cst_17 = arith.constant 0.000000e+00 : f32
    %14 = vector.broadcast %cst_17 : f32 to vector<16x32xf32>
    %15 = vector.extract_strided_slice %6 {offsets = [0, 0], sizes = [16, 128], strides = [1, 1]} : vector<64x128xf32> to vector<16x128xf32>
    %cst_18 = arith.constant dense<0.000000e+00> : vector<16x128xf32>
    %16 = tpu.matmul %11, %7, %cst_18 {dimension_numbers = #tpu.dot_dimension_numbers<[1], [0], [0], [1], [0, 0, 1, 1], [], []>} : vector<16x32xf32>, vector<32x128xf32>, vector<16x128xf32> -> vector<16x128xf32>
    %17 = arith.addf %15, %16 : vector<16x128xf32>
    %18 = vector.extract_strided_slice %17 {offsets = [0, 0], sizes = [16, 32], strides = [1, 1]} : vector<16x128xf32> to vector<16x32xf32>
    %19 = arith.negf %18 : vector<16x32xf32>
    %20 = math.exp %19 : vector<16x32xf32>
    %cst_19 = arith.constant 1.000000e+00 : f32
    %21 = vector.broadcast %cst_19 : f32 to vector<16x32xf32>
    %22 = arith.addf %21, %20 : vector<16x32xf32>
    %23 = arith.divf %21, %22 : vector<16x32xf32>
    %24 = vector.extract_strided_slice %17 {offsets = [0, 32], sizes = [16, 32], strides = [1, 1]} : vector<16x128xf32> to vector<16x32xf32>
    %25 = arith.negf %24 : vector<16x32xf32>
    %26 = math.exp %25 : vector<16x32xf32>
    %cst_20 = arith.constant 1.000000e+00 : f32
    %27 = vector.broadcast %cst_20 : f32 to vector<16x32xf32>
    %28 = arith.addf %27, %26 : vector<16x32xf32>
    %29 = arith.divf %27, %28 : vector<16x32xf32>
    %30 = vector.extract_strided_slice %17 {offsets = [0, 64], sizes = [16, 32], strides = [1, 1]} : vector<16x128xf32> to vector<16x32xf32>
    %31 = math.tanh %30 : vector<16x32xf32>
    %32 = vector.extract_strided_slice %17 {offsets = [0, 96], sizes = [16, 32], strides = [1, 1]} : vector<16x128xf32> to vector<16x32xf32>
    %33 = arith.negf %32 : vector<16x32xf32>
    %34 = math.exp %33 : vector<16x32xf32>
    %cst_21 = arith.constant 1.000000e+00 : f32
    %35 = vector.broadcast %cst_21 : f32 to vector<16x32xf32>
    %36 = arith.addf %35, %34 : vector<16x32xf32>
    %37 = arith.divf %35, %36 : vector<16x32xf32>
    %38 = arith.mulf %29, %12 : vector<16x32xf32>
    %39 = arith.mulf %23, %31 : vector<16x32xf32>
    %40 = arith.addf %38, %39 : vector<16x32xf32>
    %41 = math.tanh %40 : vector<16x32xf32>
    %42 = arith.mulf %37, %41 : vector<16x32xf32>
    %cst_22 = arith.constant dense<0.000000e+00> : vector<16x128xf32>
    %43 = tpu.matmul %42, %8, %cst_22 {dimension_numbers = #tpu.dot_dimension_numbers<[1], [0], [0], [1], [0, 0, 1, 1], [], []>} : vector<16x32xf32>, vector<32x128xf32>, vector<16x128xf32> -> vector<16x128xf32>
    %cst_23 = arith.constant dense<0.000000e+00> : vector<16x128xf32>
    %44 = tpu.matmul %13, %9, %cst_23 {dimension_numbers = #tpu.dot_dimension_numbers<[1], [0], [0], [1], [0, 0, 1, 1], [], []>} : vector<16x32xf32>, vector<32x128xf32>, vector<16x128xf32> -> vector<16x128xf32>
    %45 = arith.addf %43, %44 : vector<16x128xf32>
    %46 = vector.broadcast %10 : vector<1x128xf32> to vector<16x128xf32>
    %47 = arith.addf %45, %46 : vector<16x128xf32>
    %48 = vector.extract_strided_slice %47 {offsets = [0, 0], sizes = [16, 32], strides = [1, 1]} : vector<16x128xf32> to vector<16x32xf32>
    %49 = arith.negf %48 : vector<16x32xf32>
    %50 = math.exp %49 : vector<16x32xf32>
    %cst_24 = arith.constant 1.000000e+00 : f32
    %51 = vector.broadcast %cst_24 : f32 to vector<16x32xf32>
    %52 = arith.addf %51, %50 : vector<16x32xf32>
    %53 = arith.divf %51, %52 : vector<16x32xf32>
    %54 = vector.extract_strided_slice %47 {offsets = [0, 32], sizes = [16, 32], strides = [1, 1]} : vector<16x128xf32> to vector<16x32xf32>
    %55 = arith.negf %54 : vector<16x32xf32>
    %56 = math.exp %55 : vector<16x32xf32>
    %cst_25 = arith.constant 1.000000e+00 : f32
    %57 = vector.broadcast %cst_25 : f32 to vector<16x32xf32>
    %58 = arith.addf %57, %56 : vector<16x32xf32>
    %59 = arith.divf %57, %58 : vector<16x32xf32>
    %60 = vector.extract_strided_slice %47 {offsets = [0, 64], sizes = [16, 32], strides = [1, 1]} : vector<16x128xf32> to vector<16x32xf32>
    %61 = math.tanh %60 : vector<16x32xf32>
    %62 = vector.extract_strided_slice %47 {offsets = [0, 96], sizes = [16, 32], strides = [1, 1]} : vector<16x128xf32> to vector<16x32xf32>
    %63 = arith.negf %62 : vector<16x32xf32>
    %64 = math.exp %63 : vector<16x32xf32>
    %cst_26 = arith.constant 1.000000e+00 : f32
    %65 = vector.broadcast %cst_26 : f32 to vector<16x32xf32>
    %66 = arith.addf %65, %64 : vector<16x32xf32>
    %67 = arith.divf %65, %66 : vector<16x32xf32>
    %68 = arith.mulf %59, %14 : vector<16x32xf32>
    %69 = arith.mulf %53, %61 : vector<16x32xf32>
    %70 = arith.addf %68, %69 : vector<16x32xf32>
    %71 = math.tanh %70 : vector<16x32xf32>
    %72 = arith.mulf %67, %71 : vector<16x32xf32>
    %c0_27 = arith.constant 0 : index
    %c0_28 = arith.constant 0 : index
    %c0_29 = arith.constant 0 : index
    %73 = vector.load %arg22[%c0_27, %c0_28, %c0_29] : memref<4x16x32xf32, #tpu.memory_space<vmem>>, vector<1x16x32xf32>
    %74 = vector.shape_cast %73 : vector<1x16x32xf32> to vector<16x32xf32>
    %75 = vector.shape_cast %72 : vector<16x32xf32> to vector<1x16x32xf32>
    tpu.vector_store %arg22[%c0_27, %c0_28, %c0_29], %75 {strides = array<i32>} : memref<4x16x32xf32, #tpu.memory_space<vmem>>, vector<1x16x32xf32>,
    %76 = vector.extract_strided_slice %6 {offsets = [16, 0], sizes = [16, 128], strides = [1, 1]} : vector<64x128xf32> to vector<16x128xf32>
    %cst_30 = arith.constant dense<0.000000e+00> : vector<16x128xf32>
    %77 = tpu.matmul %42, %7, %cst_30 {dimension_numbers = #tpu.dot_dimension_numbers<[1], [0], [0], [1], [0, 0, 1, 1], [], []>} : vector<16x32xf32>, vector<32x128xf32>, vector<16x128xf32> -> vector<16x128xf32>
    %78 = arith.addf %76, %77 : vector<16x128xf32>
    %79 = vector.extract_strided_slice %78 {offsets = [0, 0], sizes = [16, 32], strides = [1, 1]} : vector<16x128xf32> to vector<16x32xf32>
    %80 = arith.negf %79 : vector<16x32xf32>
    %81 = math.exp %80 : vector<16x32xf32>
    %cst_31 = arith.constant 1.000000e+00 : f32
    %82 = vector.broadcast %cst_31 : f32 to vector<16x32xf32>
    %83 = arith.addf %82, %81 : vector<16x32xf32>
    %84 = arith.divf %82, %83 : vector<16x32xf32>
    %85 = vector.extract_strided_slice %78 {offsets = [0, 32], sizes = [16, 32], strides = [1, 1]} : vector<16x128xf32> to vector<16x32xf32>
    %86 = arith.negf %85 : vector<16x32xf32>
    %87 = math.exp %86 : vector<16x32xf32>
    %cst_32 = arith.constant 1.000000e+00 : f32
    %88 = vector.broadcast %cst_32 : f32 to vector<16x32xf32>
    %89 = arith.addf %88, %87 : vector<16x32xf32>
    %90 = arith.divf %88, %89 : vector<16x32xf32>
    %91 = vector.extract_strided_slice %78 {offsets = [0, 64], sizes = [16, 32], strides = [1, 1]} : vector<16x128xf32> to vector<16x32xf32>
    %92 = math.tanh %91 : vector<16x32xf32>
    %93 = vector.extract_strided_slice %78 {offsets = [0, 96], sizes = [16, 32], strides = [1, 1]} : vector<16x128xf32> to vector<16x32xf32>
    %94 = arith.negf %93 : vector<16x32xf32>
    %95 = math.exp %94 : vector<16x32xf32>
    %cst_33 = arith.constant 1.000000e+00 : f32
    %96 = vector.broadcast %cst_33 : f32 to vector<16x32xf32>
    %97 = arith.addf %96, %95 : vector<16x32xf32>
    %98 = arith.divf %96, %97 : vector<16x32xf32>
    %99 = arith.mulf %90, %40 : vector<16x32xf32>
    %100 = arith.mulf %84, %92 : vector<16x32xf32>
    %101 = arith.addf %99, %100 : vector<16x32xf32>
    %102 = math.tanh %101 : vector<16x32xf32>
    %103 = arith.mulf %98, %102 : vector<16x32xf32>
    %cst_34 = arith.constant dense<0.000000e+00> : vector<16x128xf32>
    %104 = tpu.matmul %103, %8, %cst_34 {dimension_numbers = #tpu.dot_dimension_numbers<[1], [0], [0], [1], [0, 0, 1, 1], [], []>} : vector<16x32xf32>, vector<32x128xf32>, vector<16x128xf32> -> vector<16x128xf32>
    %cst_35 = arith.constant dense<0.000000e+00> : vector<16x128xf32>
    %105 = tpu.matmul %72, %9, %cst_35 {dimension_numbers = #tpu.dot_dimension_numbers<[1], [0], [0], [1], [0, 0, 1, 1], [], []>} : vector<16x32xf32>, vector<32x128xf32>, vector<16x128xf32> -> vector<16x128xf32>
    %106 = arith.addf %104, %105 : vector<16x128xf32>
    %107 = vector.broadcast %10 : vector<1x128xf32> to vector<16x128xf32>
    %108 = arith.addf %106, %107 : vector<16x128xf32>
    %109 = vector.extract_strided_slice %108 {offsets = [0, 0], sizes = [16, 32], strides = [1, 1]} : vector<16x128xf32> to vector<16x32xf32>
    %110 = arith.negf %109 : vector<16x32xf32>
    %111 = math.exp %110 : vector<16x32xf32>
    %cst_36 = arith.constant 1.000000e+00 : f32
    %112 = vector.broadcast %cst_36 : f32 to vector<16x32xf32>
    %113 = arith.addf %112, %111 : vector<16x32xf32>
    %114 = arith.divf %112, %113 : vector<16x32xf32>
    %115 = vector.extract_strided_slice %108 {offsets = [0, 32], sizes = [16, 32], strides = [1, 1]} : vector<16x128xf32> to vector<16x32xf32>
    %116 = arith.negf %115 : vector<16x32xf32>
    %117 = math.exp %116 : vector<16x32xf32>
    %cst_37 = arith.constant 1.000000e+00 : f32
    %118 = vector.broadcast %cst_37 : f32 to vector<16x32xf32>
    %119 = arith.addf %118, %117 : vector<16x32xf32>
    %120 = arith.divf %118, %119 : vector<16x32xf32>
    %121 = vector.extract_strided_slice %108 {offsets = [0, 64], sizes = [16, 32], strides = [1, 1]} : vector<16x128xf32> to vector<16x32xf32>
    %122 = math.tanh %121 : vector<16x32xf32>
    %123 = vector.extract_strided_slice %108 {offsets = [0, 96], sizes = [16, 32], strides = [1, 1]} : vector<16x128xf32> to vector<16x32xf32>
    %124 = arith.negf %123 : vector<16x32xf32>
    %125 = math.exp %124 : vector<16x32xf32>
    %cst_38 = arith.constant 1.000000e+00 : f32
    %126 = vector.broadcast %cst_38 : f32 to vector<16x32xf32>
    %127 = arith.addf %126, %125 : vector<16x32xf32>
    %128 = arith.divf %126, %127 : vector<16x32xf32>
    %129 = arith.mulf %120, %70 : vector<16x32xf32>
    %130 = arith.mulf %114, %122 : vector<16x32xf32>
    %131 = arith.addf %129, %130 : vector<16x32xf32>
    %132 = math.tanh %131 : vector<16x32xf32>
    %133 = arith.mulf %128, %132 : vector<16x32xf32>
    %c1 = arith.constant 1 : index
    %c0_39 = arith.constant 0 : index
    %c0_40 = arith.constant 0 : index
    %134 = vector.load %arg22[%c1, %c0_39, %c0_40] : memref<4x16x32xf32, #tpu.memory_space<vmem>>, vector<1x16x32xf32>
    %135 = vector.shape_cast %134 : vector<1x16x32xf32> to vector<16x32xf32>
    %136 = vector.shape_cast %133 : vector<16x32xf32> to vector<1x16x32xf32>
    tpu.vector_store %arg22[%c1, %c0_39, %c0_40], %136 {strides = array<i32>} : memref<4x16x32xf32, #tpu.memory_space<vmem>>, vector<1x16x32xf32>,
    %137 = vector.extract_strided_slice %6 {offsets = [32, 0], sizes = [16, 128], strides = [1, 1]} : vector<64x128xf32> to vector<16x128xf32>
    %cst_41 = arith.constant dense<0.000000e+00> : vector<16x128xf32>
    %138 = tpu.matmul %103, %7, %cst_41 {dimension_numbers = #tpu.dot_dimension_numbers<[1], [0], [0], [1], [0, 0, 1, 1], [], []>} : vector<16x32xf32>, vector<32x128xf32>, vector<16x128xf32> -> vector<16x128xf32>
    %139 = arith.addf %137, %138 : vector<16x128xf32>
    %140 = vector.extract_strided_slice %139 {offsets = [0, 0], sizes = [16, 32], strides = [1, 1]} : vector<16x128xf32> to vector<16x32xf32>
    %141 = arith.negf %140 : vector<16x32xf32>
    %142 = math.exp %141 : vector<16x32xf32>
    %cst_42 = arith.constant 1.000000e+00 : f32
    %143 = vector.broadcast %cst_42 : f32 to vector<16x32xf32>
    %144 = arith.addf %143, %142 : vector<16x32xf32>
    %145 = arith.divf %143, %144 : vector<16x32xf32>
    %146 = vector.extract_strided_slice %139 {offsets = [0, 32], sizes = [16, 32], strides = [1, 1]} : vector<16x128xf32> to vector<16x32xf32>
    %147 = arith.negf %146 : vector<16x32xf32>
    %148 = math.exp %147 : vector<16x32xf32>
    %cst_43 = arith.constant 1.000000e+00 : f32
    %149 = vector.broadcast %cst_43 : f32 to vector<16x32xf32>
    %150 = arith.addf %149, %148 : vector<16x32xf32>
    %151 = arith.divf %149, %150 : vector<16x32xf32>
    %152 = vector.extract_strided_slice %139 {offsets = [0, 64], sizes = [16, 32], strides = [1, 1]} : vector<16x128xf32> to vector<16x32xf32>
    %153 = math.tanh %152 : vector<16x32xf32>
    %154 = vector.extract_strided_slice %139 {offsets = [0, 96], sizes = [16, 32], strides = [1, 1]} : vector<16x128xf32> to vector<16x32xf32>
    %155 = arith.negf %154 : vector<16x32xf32>
    %156 = math.exp %155 : vector<16x32xf32>
    %cst_44 = arith.constant 1.000000e+00 : f32
    %157 = vector.broadcast %cst_44 : f32 to vector<16x32xf32>
    %158 = arith.addf %157, %156 : vector<16x32xf32>
    %159 = arith.divf %157, %158 : vector<16x32xf32>
    %160 = arith.mulf %151, %101 : vector<16x32xf32>
    %161 = arith.mulf %145, %153 : vector<16x32xf32>
    %162 = arith.addf %160, %161 : vector<16x32xf32>
    %163 = math.tanh %162 : vector<16x32xf32>
    %164 = arith.mulf %159, %163 : vector<16x32xf32>
    %cst_45 = arith.constant dense<0.000000e+00> : vector<16x128xf32>
    %165 = tpu.matmul %164, %8, %cst_45 {dimension_numbers = #tpu.dot_dimension_numbers<[1], [0], [0], [1], [0, 0, 1, 1], [], []>} : vector<16x32xf32>, vector<32x128xf32>, vector<16x128xf32> -> vector<16x128xf32>
    %cst_46 = arith.constant dense<0.000000e+00> : vector<16x128xf32>
    %166 = tpu.matmul %133, %9, %cst_46 {dimension_numbers = #tpu.dot_dimension_numbers<[1], [0], [0], [1], [0, 0, 1, 1], [], []>} : vector<16x32xf32>, vector<32x128xf32>, vector<16x128xf32> -> vector<16x128xf32>
    %167 = arith.addf %165, %166 : vector<16x128xf32>
    %168 = vector.broadcast %10 : vector<1x128xf32> to vector<16x128xf32>
    %169 = arith.addf %167, %168 : vector<16x128xf32>
    %170 = vector.extract_strided_slice %169 {offsets = [0, 0], sizes = [16, 32], strides = [1, 1]} : vector<16x128xf32> to vector<16x32xf32>
    %171 = arith.negf %170 : vector<16x32xf32>
    %172 = math.exp %171 : vector<16x32xf32>
    %cst_47 = arith.constant 1.000000e+00 : f32
    %173 = vector.broadcast %cst_47 : f32 to vector<16x32xf32>
    %174 = arith.addf %173, %172 : vector<16x32xf32>
    %175 = arith.divf %173, %174 : vector<16x32xf32>
    %176 = vector.extract_strided_slice %169 {offsets = [0, 32], sizes = [16, 32], strides = [1, 1]} : vector<16x128xf32> to vector<16x32xf32>
    %177 = arith.negf %176 : vector<16x32xf32>
    %178 = math.exp %177 : vector<16x32xf32>
    %cst_48 = arith.constant 1.000000e+00 : f32
    %179 = vector.broadcast %cst_48 : f32 to vector<16x32xf32>
    %180 = arith.addf %179, %178 : vector<16x32xf32>
    %181 = arith.divf %179, %180 : vector<16x32xf32>
    %182 = vector.extract_strided_slice %169 {offsets = [0, 64], sizes = [16, 32], strides = [1, 1]} : vector<16x128xf32> to vector<16x32xf32>
    %183 = math.tanh %182 : vector<16x32xf32>
    %184 = vector.extract_strided_slice %169 {offsets = [0, 96], sizes = [16, 32], strides = [1, 1]} : vector<16x128xf32> to vector<16x32xf32>
    %185 = arith.negf %184 : vector<16x32xf32>
    %186 = math.exp %185 : vector<16x32xf32>
    %cst_49 = arith.constant 1.000000e+00 : f32
    %187 = vector.broadcast %cst_49 : f32 to vector<16x32xf32>
    %188 = arith.addf %187, %186 : vector<16x32xf32>
    %189 = arith.divf %187, %188 : vector<16x32xf32>
    %190 = arith.mulf %181, %131 : vector<16x32xf32>
    %191 = arith.mulf %175, %183 : vector<16x32xf32>
    %192 = arith.addf %190, %191 : vector<16x32xf32>
    %193 = math.tanh %192 : vector<16x32xf32>
    %194 = arith.mulf %189, %193 : vector<16x32xf32>
    %c2 = arith.constant 2 : index
    %c0_50 = arith.constant 0 : index
    %c0_51 = arith.constant 0 : index
    %195 = vector.load %arg22[%c2, %c0_50, %c0_51] : memref<4x16x32xf32, #tpu.memory_space<vmem>>, vector<1x16x32xf32>
    %196 = vector.shape_cast %195 : vector<1x16x32xf32> to vector<16x32xf32>
    %197 = vector.shape_cast %194 : vector<16x32xf32> to vector<1x16x32xf32>
    tpu.vector_store %arg22[%c2, %c0_50, %c0_51], %197 {strides = array<i32>} : memref<4x16x32xf32, #tpu.memory_space<vmem>>, vector<1x16x32xf32>,
    %198 = vector.extract_strided_slice %6 {offsets = [48, 0], sizes = [16, 128], strides = [1, 1]} : vector<64x128xf32> to vector<16x128xf32>
    %cst_52 = arith.constant dense<0.000000e+00> : vector<16x128xf32>
    %199 = tpu.matmul %164, %7, %cst_52 {dimension_numbers = #tpu.dot_dimension_numbers<[1], [0], [0], [1], [0, 0, 1, 1], [], []>} : vector<16x32xf32>, vector<32x128xf32>, vector<16x128xf32> -> vector<16x128xf32>
    %200 = arith.addf %198, %199 : vector<16x128xf32>
    %201 = vector.extract_strided_slice %200 {offsets = [0, 0], sizes = [16, 32], strides = [1, 1]} : vector<16x128xf32> to vector<16x32xf32>
    %202 = arith.negf %201 : vector<16x32xf32>
    %203 = math.exp %202 : vector<16x32xf32>
    %cst_53 = arith.constant 1.000000e+00 : f32
    %204 = vector.broadcast %cst_53 : f32 to vector<16x32xf32>
    %205 = arith.addf %204, %203 : vector<16x32xf32>
    %206 = arith.divf %204, %205 : vector<16x32xf32>
    %207 = vector.extract_strided_slice %200 {offsets = [0, 32], sizes = [16, 32], strides = [1, 1]} : vector<16x128xf32> to vector<16x32xf32>
    %208 = arith.negf %207 : vector<16x32xf32>
    %209 = math.exp %208 : vector<16x32xf32>
    %cst_54 = arith.constant 1.000000e+00 : f32
    %210 = vector.broadcast %cst_54 : f32 to vector<16x32xf32>
    %211 = arith.addf %210, %209 : vector<16x32xf32>
    %212 = arith.divf %210, %211 : vector<16x32xf32>
    %213 = vector.extract_strided_slice %200 {offsets = [0, 64], sizes = [16, 32], strides = [1, 1]} : vector<16x128xf32> to vector<16x32xf32>
    %214 = math.tanh %213 : vector<16x32xf32>
    %215 = vector.extract_strided_slice %200 {offsets = [0, 96], sizes = [16, 32], strides = [1, 1]} : vector<16x128xf32> to vector<16x32xf32>
    %216 = arith.negf %215 : vector<16x32xf32>
    %217 = math.exp %216 : vector<16x32xf32>
    %cst_55 = arith.constant 1.000000e+00 : f32
    %218 = vector.broadcast %cst_55 : f32 to vector<16x32xf32>
    %219 = arith.addf %218, %217 : vector<16x32xf32>
    %220 = arith.divf %218, %219 : vector<16x32xf32>
    %221 = arith.mulf %212, %162 : vector<16x32xf32>
    %222 = arith.mulf %206, %214 : vector<16x32xf32>
    %223 = arith.addf %221, %222 : vector<16x32xf32>
    %224 = math.tanh %223 : vector<16x32xf32>
    %225 = arith.mulf %220, %224 : vector<16x32xf32>
    %cst_56 = arith.constant dense<0.000000e+00> : vector<16x128xf32>
    %226 = tpu.matmul %225, %8, %cst_56 {dimension_numbers = #tpu.dot_dimension_numbers<[1], [0], [0], [1], [0, 0, 1, 1], [], []>} : vector<16x32xf32>, vector<32x128xf32>, vector<16x128xf32> -> vector<16x128xf32>
    %cst_57 = arith.constant dense<0.000000e+00> : vector<16x128xf32>
    %227 = tpu.matmul %194, %9, %cst_57 {dimension_numbers = #tpu.dot_dimension_numbers<[1], [0], [0], [1], [0, 0, 1, 1], [], []>} : vector<16x32xf32>, vector<32x128xf32>, vector<16x128xf32> -> vector<16x128xf32>
    %228 = arith.addf %226, %227 : vector<16x128xf32>
    %229 = vector.broadcast %10 : vector<1x128xf32> to vector<16x128xf32>
    %230 = arith.addf %228, %229 : vector<16x128xf32>
    %231 = vector.extract_strided_slice %230 {offsets = [0, 0], sizes = [16, 32], strides = [1, 1]} : vector<16x128xf32> to vector<16x32xf32>
    %232 = arith.negf %231 : vector<16x32xf32>
    %233 = math.exp %232 : vector<16x32xf32>
    %cst_58 = arith.constant 1.000000e+00 : f32
    %234 = vector.broadcast %cst_58 : f32 to vector<16x32xf32>
    %235 = arith.addf %234, %233 : vector<16x32xf32>
    %236 = arith.divf %234, %235 : vector<16x32xf32>
    %237 = vector.extract_strided_slice %230 {offsets = [0, 32], sizes = [16, 32], strides = [1, 1]} : vector<16x128xf32> to vector<16x32xf32>
    %238 = arith.negf %237 : vector<16x32xf32>
    %239 = math.exp %238 : vector<16x32xf32>
    %cst_59 = arith.constant 1.000000e+00 : f32
    %240 = vector.broadcast %cst_59 : f32 to vector<16x32xf32>
    %241 = arith.addf %240, %239 : vector<16x32xf32>
    %242 = arith.divf %240, %241 : vector<16x32xf32>
    %243 = vector.extract_strided_slice %230 {offsets = [0, 64], sizes = [16, 32], strides = [1, 1]} : vector<16x128xf32> to vector<16x32xf32>
    %244 = math.tanh %243 : vector<16x32xf32>
    %245 = vector.extract_strided_slice %230 {offsets = [0, 96], sizes = [16, 32], strides = [1, 1]} : vector<16x128xf32> to vector<16x32xf32>
    %246 = arith.negf %245 : vector<16x32xf32>
    %247 = math.exp %246 : vector<16x32xf32>
    %cst_60 = arith.constant 1.000000e+00 : f32
    %248 = vector.broadcast %cst_60 : f32 to vector<16x32xf32>
    %249 = arith.addf %248, %247 : vector<16x32xf32>
    %250 = arith.divf %248, %249 : vector<16x32xf32>
    %251 = arith.mulf %242, %192 : vector<16x32xf32>
    %252 = arith.mulf %236, %244 : vector<16x32xf32>
    %253 = arith.addf %251, %252 : vector<16x32xf32>
    %254 = math.tanh %253 : vector<16x32xf32>
    %255 = arith.mulf %250, %254 : vector<16x32xf32>
    %c3 = arith.constant 3 : index
    %c0_61 = arith.constant 0 : index
    %c0_62 = arith.constant 0 : index
    %256 = vector.load %arg22[%c3, %c0_61, %c0_62] : memref<4x16x32xf32, #tpu.memory_space<vmem>>, vector<1x16x32xf32>
    %257 = vector.shape_cast %256 : vector<1x16x32xf32> to vector<16x32xf32>
    %258 = vector.shape_cast %255 : vector<16x32xf32> to vector<1x16x32xf32>
    tpu.vector_store %arg22[%c3, %c0_61, %c0_62], %258 {strides = array<i32>} : memref<4x16x32xf32, #tpu.memory_space<vmem>>, vector<1x16x32xf32>,
    %c0_63 = arith.constant 0 : index
    %c0_64 = arith.constant 0 : index
    %259 = vector.load %arg12[%c0_63, %c0_64] : memref<32x4xf32, #tpu.memory_space<vmem>>, vector<32x4xf32>
    %c0_65 = arith.constant 0 : index
    %c0_66 = arith.constant 0 : index
    %c0_67 = arith.constant 0 : index
    %260 = vector.load %arg22[%c0_65, %c0_66, %c0_67] : memref<4x16x32xf32, #tpu.memory_space<vmem>>, vector<4x16x32xf32>
    %261 = vector.shape_cast %260 : vector<4x16x32xf32> to vector<64x32xf32>
    %c0_68 = arith.constant 0 : index
    %c0_69 = arith.constant 0 : index
    %262 = vector.load %arg10[%c0_68, %c0_69] : memref<32x64xf32, #tpu.memory_space<vmem>>, vector<32x64xf32>
    %cst_70 = arith.constant dense<0.000000e+00> : vector<64x64xf32>
    %263 = tpu.matmul %261, %262, %cst_70 {dimension_numbers = #tpu.dot_dimension_numbers<[1], [0], [0], [1], [0, 0, 1, 1], [], []>} : vector<64x32xf32>, vector<32x64xf32>, vector<64x64xf32> -> vector<64x64xf32>
    %c0_71 = arith.constant 0 : index
    %c0_72 = arith.constant 0 : index
    %264 = vector.load %arg11[%c0_71, %c0_72] : memref<1x64xf32, #tpu.memory_space<vmem>>, vector<1x64xf32>
    %265 = vector.broadcast %264 : vector<1x64xf32> to vector<64x64xf32>
    %266 = arith.addf %263, %265 : vector<64x64xf32>
    %267 = vector.extract_strided_slice %266 {offsets = [0, 0], sizes = [64, 32], strides = [1, 1]} : vector<64x64xf32> to vector<64x32xf32>
    %268 = vector.extract_strided_slice %266 {offsets = [0, 32], sizes = [64, 32], strides = [1, 1]} : vector<64x64xf32> to vector<64x32xf32>
    %c0_73 = arith.constant 0 : index
    %c0_74 = arith.constant 0 : index
    %269 = vector.load %arg8[%c0_73, %c0_74] : memref<32x32xf32, #tpu.memory_space<vmem>>, vector<32x32xf32>
    %cst_75 = arith.constant dense<0.000000e+00> : vector<16x32xf32>
    %270 = tpu.matmul %255, %269, %cst_75 {dimension_numbers = #tpu.dot_dimension_numbers<[1], [0], [0], [1], [0, 0, 1, 1], [], []>} : vector<16x32xf32>, vector<32x32xf32>, vector<16x32xf32> -> vector<16x32xf32>
    %c0_76 = arith.constant 0 : index
    %c0_77 = arith.constant 0 : index
    %271 = vector.load %arg9[%c0_76, %c0_77] : memref<1x32xf32, #tpu.memory_space<vmem>>, vector<1x32xf32>
    %272 = vector.broadcast %271 : vector<1x32xf32> to vector<16x32xf32>
    %273 = arith.addf %270, %272 : vector<16x32xf32>
    %274 = vector.extract_strided_slice %267 {offsets = [0, 0], sizes = [16, 32], strides = [1, 1]} : vector<64x32xf32> to vector<16x32xf32>
    %275 = arith.mulf %273, %274 : vector<16x32xf32>
    %cst_78 = arith.constant dense<0.000000e+00> : vector<16x4xf32>
    %276 = tpu.matmul %275, %259, %cst_78 {dimension_numbers = #tpu.dot_dimension_numbers<[1], [0], [0], [1], [0, 0, 1, 1], [], []>} : vector<16x32xf32>, vector<32x4xf32>, vector<16x4xf32> -> vector<16x4xf32>
    %cst_79 = arith.constant 0.353553385 : f32
    %277 = vector.broadcast %cst_79 : f32 to vector<16x4xf32>
    %278 = arith.mulf %276, %277 : vector<16x4xf32>
    %279 = vector.extract_strided_slice %267 {offsets = [16, 0], sizes = [16, 32], strides = [1, 1]} : vector<64x32xf32> to vector<16x32xf32>
    %280 = arith.mulf %273, %279 : vector<16x32xf32>
    %cst_80 = arith.constant dense<0.000000e+00> : vector<16x4xf32>
    %281 = tpu.matmul %280, %259, %cst_80 {dimension_numbers = #tpu.dot_dimension_numbers<[1], [0], [0], [1], [0, 0, 1, 1], [], []>} : vector<16x32xf32>, vector<32x4xf32>, vector<16x4xf32> -> vector<16x4xf32>
    %cst_81 = arith.constant 0.353553385 : f32
    %282 = vector.broadcast %cst_81 : f32 to vector<16x4xf32>
    %283 = arith.mulf %281, %282 : vector<16x4xf32>
    %284 = vector.extract_strided_slice %267 {offsets = [32, 0], sizes = [16, 32], strides = [1, 1]} : vector<64x32xf32> to vector<16x32xf32>
    %285 = arith.mulf %273, %284 : vector<16x32xf32>
    %cst_82 = arith.constant dense<0.000000e+00> : vector<16x4xf32>
    %286 = tpu.matmul %285, %259, %cst_82 {dimension_numbers = #tpu.dot_dimension_numbers<[1], [0], [0], [1], [0, 0, 1, 1], [], []>} : vector<16x32xf32>, vector<32x4xf32>, vector<16x4xf32> -> vector<16x4xf32>
    %cst_83 = arith.constant 0.353553385 : f32
    %287 = vector.broadcast %cst_83 : f32 to vector<16x4xf32>
    %288 = arith.mulf %286, %287 : vector<16x4xf32>
    %289 = vector.extract_strided_slice %267 {offsets = [48, 0], sizes = [16, 32], strides = [1, 1]} : vector<64x32xf32> to vector<16x32xf32>
    %290 = arith.mulf %273, %289 : vector<16x32xf32>
    %cst_84 = arith.constant dense<0.000000e+00> : vector<16x4xf32>
    %291 = tpu.matmul %290, %259, %cst_84 {dimension_numbers = #tpu.dot_dimension_numbers<[1], [0], [0], [1], [0, 0, 1, 1], [], []>} : vector<16x32xf32>, vector<32x4xf32>, vector<16x4xf32> -> vector<16x4xf32>
    %cst_85 = arith.constant 0.353553385 : f32
    %292 = vector.broadcast %cst_85 : f32 to vector<16x4xf32>
    %293 = arith.mulf %291, %292 : vector<16x4xf32>
    %294 = arith.maximumf %278, %283 : vector<16x4xf32>
    %295 = arith.maximumf %294, %288 : vector<16x4xf32>
    %296 = arith.maximumf %295, %293 : vector<16x4xf32>
    %297 = arith.subf %278, %296 : vector<16x4xf32>
    %298 = math.exp %297 : vector<16x4xf32>
    %299 = arith.subf %283, %296 : vector<16x4xf32>
    %300 = math.exp %299 : vector<16x4xf32>
    %301 = arith.subf %288, %296 : vector<16x4xf32>
    %302 = math.exp %301 : vector<16x4xf32>
    %303 = arith.subf %293, %296 : vector<16x4xf32>
    %304 = math.exp %303 : vector<16x4xf32>
    %305 = arith.addf %298, %300 : vector<16x4xf32>
    %306 = arith.addf %305, %302 : vector<16x4xf32>
    %307 = arith.addf %306, %304 : vector<16x4xf32>
    %308 = tpu.reciprocal %307 {approx = true} : vector<16x4xf32> -> vector<16x4xf32>
    %cst_86 = arith.constant 0.000000e+00 : f32
    %309 = vector.broadcast %cst_86 : f32 to vector<16x32xf32>
    %cst_87 = arith.constant dense<0.000000e+00> : vector<16x32xf32>
    %310 = tpu.matmul %298, %259, %cst_87 {dimension_numbers = #tpu.dot_dimension_numbers<[1], [1], [0], [0], [0, 0, 1, 0], [], []>} : vector<16x4xf32>, vector<32x4xf32>, vector<16x32xf32> -> vector<16x32xf32>
    %311 = vector.extract_strided_slice %268 {offsets = [0, 0], sizes = [16, 32], strides = [1, 1]} : vector<64x32xf32> to vector<16x32xf32>
    %312 = arith.mulf %310, %311 : vector<16x32xf32>
    %313 = arith.addf %309, %312 : vector<16x32xf32>
    %cst_88 = arith.constant dense<0.000000e+00> : vector<16x32xf32>
    %314 = tpu.matmul %300, %259, %cst_88 {dimension_numbers = #tpu.dot_dimension_numbers<[1], [1], [0], [0], [0, 0, 1, 0], [], []>} : vector<16x4xf32>, vector<32x4xf32>, vector<16x32xf32> -> vector<16x32xf32>
    %315 = vector.extract_strided_slice %268 {offsets = [16, 0], sizes = [16, 32], strides = [1, 1]} : vector<64x32xf32> to vector<16x32xf32>
    %316 = arith.mulf %314, %315 : vector<16x32xf32>
    %317 = arith.addf %313, %316 : vector<16x32xf32>
    %cst_89 = arith.constant dense<0.000000e+00> : vector<16x32xf32>
    %318 = tpu.matmul %302, %259, %cst_89 {dimension_numbers = #tpu.dot_dimension_numbers<[1], [1], [0], [0], [0, 0, 1, 0], [], []>} : vector<16x4xf32>, vector<32x4xf32>, vector<16x32xf32> -> vector<16x32xf32>
    %319 = vector.extract_strided_slice %268 {offsets = [32, 0], sizes = [16, 32], strides = [1, 1]} : vector<64x32xf32> to vector<16x32xf32>
    %320 = arith.mulf %318, %319 : vector<16x32xf32>
    %321 = arith.addf %317, %320 : vector<16x32xf32>
    %cst_90 = arith.constant dense<0.000000e+00> : vector<16x32xf32>
    %322 = tpu.matmul %304, %259, %cst_90 {dimension_numbers = #tpu.dot_dimension_numbers<[1], [1], [0], [0], [0, 0, 1, 0], [], []>} : vector<16x4xf32>, vector<32x4xf32>, vector<16x32xf32> -> vector<16x32xf32>
    %323 = vector.extract_strided_slice %268 {offsets = [48, 0], sizes = [16, 32], strides = [1, 1]} : vector<64x32xf32> to vector<16x32xf32>
    %324 = arith.mulf %322, %323 : vector<16x32xf32>
    %325 = arith.addf %321, %324 : vector<16x32xf32>
    %cst_91 = arith.constant dense<0.000000e+00> : vector<16x32xf32>
    %326 = tpu.matmul %308, %259, %cst_91 {dimension_numbers = #tpu.dot_dimension_numbers<[1], [1], [0], [0], [0, 0, 1, 0], [], []>} : vector<16x4xf32>, vector<32x4xf32>, vector<16x32xf32> -> vector<16x32xf32>
    %327 = arith.mulf %325, %326 : vector<16x32xf32>
    %c0_92 = arith.constant 0 : index
    %c0_93 = arith.constant 0 : index
    %328 = vector.load %arg13[%c0_92, %c0_93] : memref<32x32xf32, #tpu.memory_space<vmem>>, vector<32x32xf32>
    %cst_94 = arith.constant dense<0.000000e+00> : vector<16x32xf32>
    %329 = tpu.matmul %327, %328, %cst_94 {dimension_numbers = #tpu.dot_dimension_numbers<[1], [0], [0], [1], [0, 0, 1, 1], [], []>} : vector<16x32xf32>, vector<32x32xf32>, vector<16x32xf32> -> vector<16x32xf32>
    %330 = arith.addf %255, %329 : vector<16x32xf32>
    %c0_95 = arith.constant 0 : index
    %c0_96 = arith.constant 0 : index
    %331 = vector.load %arg14[%c0_95, %c0_96] : memref<1x32xf32, #tpu.memory_space<vmem>>, vector<1x32xf32>
    %332 = vector.broadcast %331 : vector<1x32xf32> to vector<16x32xf32>
    %333 = arith.addf %330, %332 : vector<16x32xf32>
    %c0_97 = arith.constant 0 : index
    %c0_98 = arith.constant 0 : index
    %334 = vector.load %arg15[%c0_97, %c0_98] : memref<1x32xf32, #tpu.memory_space<vmem>>, vector<1x32xf32>
    %c0_99 = arith.constant 0 : index
    %c0_100 = arith.constant 0 : index
    %335 = vector.load %arg16[%c0_99, %c0_100] : memref<1x32xf32, #tpu.memory_space<vmem>>, vector<1x32xf32>
    %cst_101 = arith.constant dense<0.000000e+00> : vector<16xf32>
    %336 = vector.multi_reduction <add>, %333, %cst_101 [1] : vector<16x32xf32> to vector<16xf32>
    %337 = vector.shape_cast %336 : vector<16xf32> to vector<16x1xf32>
    %cst_102 = arith.constant 3.200000e+01 : f32
    %338 = vector.broadcast %cst_102 : f32 to vector<16x1xf32>
    %339 = arith.divf %337, %338 : vector<16x1xf32>
    %340 = vector.broadcast %339 : vector<16x1xf32> to vector<16x32xf32>
    %341 = arith.subf %333, %340 : vector<16x32xf32>
    %342 = arith.mulf %341, %341 : vector<16x32xf32>
    %cst_103 = arith.constant dense<0.000000e+00> : vector<16xf32>
    %343 = vector.multi_reduction <add>, %342, %cst_103 [1] : vector<16x32xf32> to vector<16xf32>
    %344 = vector.shape_cast %343 : vector<16xf32> to vector<16x1xf32>
    %cst_104 = arith.constant 3.200000e+01 : f32
    %345 = vector.broadcast %cst_104 : f32 to vector<16x1xf32>
    %346 = arith.divf %344, %345 : vector<16x1xf32>
    %347 = vector.broadcast %339 : vector<16x1xf32> to vector<16x32xf32>
    %348 = arith.subf %333, %347 : vector<16x32xf32>
    %cst_105 = arith.constant 9.99999974E-6 : f32
    %349 = vector.broadcast %cst_105 : f32 to vector<16x1xf32>
    %350 = arith.addf %346, %349 : vector<16x1xf32>
    %351 = math.rsqrt %350 : vector<16x1xf32>
    %352 = vector.broadcast %351 : vector<16x1xf32> to vector<16x32xf32>
    %353 = arith.mulf %348, %352 : vector<16x32xf32>
    %354 = vector.broadcast %334 : vector<1x32xf32> to vector<16x32xf32>
    %355 = arith.mulf %353, %354 : vector<16x32xf32>
    %356 = vector.broadcast %335 : vector<1x32xf32> to vector<16x32xf32>
    %357 = arith.addf %355, %356 : vector<16x32xf32>
    %c0_106 = arith.constant 0 : index
    %c0_107 = arith.constant 0 : index
    %358 = vector.load %arg17[%c0_106, %c0_107] : memref<32x16xf32, #tpu.memory_space<vmem>>, vector<32x16xf32>
    %cst_108 = arith.constant dense<0.000000e+00> : vector<16x16xf32>
    %359 = tpu.matmul %357, %358, %cst_108 {dimension_numbers = #tpu.dot_dimension_numbers<[1], [0], [0], [1], [0, 0, 1, 1], [], []>} : vector<16x32xf32>, vector<32x16xf32>, vector<16x16xf32> -> vector<16x16xf32>
    %c0_109 = arith.constant 0 : index
    %c0_110 = arith.constant 0 : index
    %360 = vector.load %arg18[%c0_109, %c0_110] : memref<1x16xf32, #tpu.memory_space<vmem>>, vector<1x16xf32>
    %361 = vector.broadcast %360 : vector<1x16xf32> to vector<16x16xf32>
    %362 = arith.addf %359, %361 : vector<16x16xf32>
    %cst_111 = arith.constant 0.000000e+00 : f32
    %363 = vector.broadcast %cst_111 : f32 to vector<16x16xf32>
    %364 = arith.maximumf %362, %363 : vector<16x16xf32>
    %c0_112 = arith.constant 0 : index
    %c0_113 = arith.constant 0 : index
    %365 = vector.load %arg19[%c0_112, %c0_113] : memref<16x4xf32, #tpu.memory_space<vmem>>, vector<16x4xf32>
    %cst_114 = arith.constant dense<0.000000e+00> : vector<16x4xf32>
    %366 = tpu.matmul %364, %365, %cst_114 {dimension_numbers = #tpu.dot_dimension_numbers<[1], [0], [0], [1], [0, 0, 1, 1], [], []>} : vector<16x16xf32>, vector<16x4xf32>, vector<16x4xf32> -> vector<16x4xf32>
    %c0_115 = arith.constant 0 : index
    %c0_116 = arith.constant 0 : index
    %367 = vector.load %arg20[%c0_115, %c0_116] : memref<1x4xf32, #tpu.memory_space<vmem>>, vector<1x4xf32>
    %368 = vector.broadcast %367 : vector<1x4xf32> to vector<16x4xf32>
    %369 = arith.addf %366, %368 : vector<16x4xf32>
    %c0_117 = arith.constant 0 : index
    %c0_118 = arith.constant 0 : index
    %370 = vector.load %arg21[%c0_117, %c0_118] : memref<16x4xf32, #tpu.memory_space<vmem>>, vector<16x4xf32>
    tpu.vector_store %arg21[%c0_117, %c0_118], %369 {strides = array<i32>} : memref<16x4xf32, #tpu.memory_space<vmem>>, vector<16x4xf32>,
    return
  }
  func.func @transform_0(%arg0: i32) -> (i32, i32, i32) {
    %c0_i32 = arith.constant 0 : i32
    %c0_i32_0 = arith.constant 0 : i32
    %c0_i32_1 = arith.constant 0 : i32
    return %c0_i32, %arg0, %c0_i32_0 : i32, i32, i32
  }
  func.func @transform_1(%arg0: i32) -> (i32, i32) {
    %c0_i32 = arith.constant 0 : i32
    %c0_i32_0 = arith.constant 0 : i32
    %c0_i32_1 = arith.constant 0 : i32
    return %c0_i32, %c0_i32_0 : i32, i32
  }
  func.func @transform_2(%arg0: i32) -> (i32, i32) {
    %c0_i32 = arith.constant 0 : i32
    %c0_i32_0 = arith.constant 0 : i32
    %c0_i32_1 = arith.constant 0 : i32
    return %c0_i32, %c0_i32_0 : i32, i32
  }
  func.func @transform_3(%arg0: i32) -> (i32, i32) {
    %c0_i32 = arith.constant 0 : i32
    %c0_i32_0 = arith.constant 0 : i32
    %c0_i32_1 = arith.constant 0 : i32
    return %c0_i32, %c0_i32_0 : i32, i32
  }
  func.func @transform_4(%arg0: i32) -> (i32, i32) {
    %c0_i32 = arith.constant 0 : i32
    %c0_i32_0 = arith.constant 0 : i32
    %c0_i32_1 = arith.constant 0 : i32
    return %c0_i32, %c0_i32_0 : i32, i32
  }
  func.func @transform_5(%arg0: i32) -> (i32, i32) {
    %c0_i32 = arith.constant 0 : i32
    %c0_i32_0 = arith.constant 0 : i32
    %c0_i32_1 = arith.constant 0 : i32
    return %c0_i32, %c0_i32_0 : i32, i32
  }
  func.func @transform_6(%arg0: i32) -> (i32, i32) {
    %c0_i32 = arith.constant 0 : i32
    %c0_i32_0 = arith.constant 0 : i32
    %c0_i32_1 = arith.constant 0 : i32
    return %c0_i32, %c0_i32_0 : i32, i32
  }
  func.func @transform_7(%arg0: i32) -> (i32, i32) {
    %c0_i32 = arith.constant 0 : i32
    %c0_i32_0 = arith.constant 0 : i32
    %c0_i32_1 = arith.constant 0 : i32
    return %c0_i32, %c0_i32_0 : i32, i32
  }
  func.func @transform_8(%arg0: i32) -> (i32, i32) {
    %c0_i32 = arith.constant 0 : i32
    %c0_i32_0 = arith.constant 0 : i32
    %c0_i32_1 = arith.constant 0 : i32
    return %c0_i32, %c0_i32_0 : i32, i32
  }
  func.func @transform_9(%arg0: i32) -> (i32, i32) {
    %c0_i32 = arith.constant 0 : i32
    %c0_i32_0 = arith.constant 0 : i32
    %c0_i32_1 = arith.constant 0 : i32
    return %c0_i32, %c0_i32_0 : i32, i32
  }
  func.func @transform_10(%arg0: i32) -> (i32, i32) {
    %c0_i32 = arith.constant 0 : i32
    %c0_i32_0 = arith.constant 0 : i32
    %c0_i32_1 = arith.constant 0 : i32
    return %c0_i32, %c0_i32_0 : i32, i32
  }
  func.func @transform_11(%arg0: i32) -> (i32, i32) {
    %c0_i32 = arith.constant 0 : i32
    %c0_i32_0 = arith.constant 0 : i32
    %c0_i32_1 = arith.constant 0 : i32
    return %c0_i32, %c0_i32_0 : i32, i32
  }
  func.func @transform_12(%arg0: i32) -> (i32, i32) {
    %c0_i32 = arith.constant 0 : i32
    %c0_i32_0 = arith.constant 0 : i32
    %c0_i32_1 = arith.constant 0 : i32
    return %c0_i32, %c0_i32_0 : i32, i32
  }
  func.func @transform_13(%arg0: i32) -> (i32, i32) {
    %c0_i32 = arith.constant 0 : i32
    %c0_i32_0 = arith.constant 0 : i32
    %c0_i32_1 = arith.constant 0 : i32
    return %c0_i32, %c0_i32_0 : i32, i32
  }
  func.func @transform_14(%arg0: i32) -> (i32, i32) {
    %c0_i32 = arith.constant 0 : i32
    %c0_i32_0 = arith.constant 0 : i32
    %c0_i32_1 = arith.constant 0 : i32
    return %c0_i32, %c0_i32_0 : i32, i32
  }
  func.func @transform_15(%arg0: i32) -> (i32, i32) {
    %c0_i32 = arith.constant 0 : i32
    %c0_i32_0 = arith.constant 0 : i32
    %c0_i32_1 = arith.constant 0 : i32
    return %c0_i32, %c0_i32_0 : i32, i32
  }
  func.func @transform_16(%arg0: i32) -> (i32, i32) {
    %c0_i32 = arith.constant 0 : i32
    %c0_i32_0 = arith.constant 0 : i32
    %c0_i32_1 = arith.constant 0 : i32
    return %c0_i32, %c0_i32_0 : i32, i32
  }
  func.func @transform_17(%arg0: i32) -> (i32, i32) {
    %c0_i32 = arith.constant 0 : i32
    %c0_i32_0 = arith.constant 0 : i32
    %c0_i32_1 = arith.constant 0 : i32
    return %c0_i32, %c0_i32_0 : i32, i32
  }
  func.func @transform_18(%arg0: i32) -> (i32, i32) {
    %c0_i32 = arith.constant 0 : i32
    %c0_i32_0 = arith.constant 0 : i32
    %c0_i32_1 = arith.constant 0 : i32
    return %c0_i32, %c0_i32_0 : i32, i32
  }
  func.func @transform_19(%arg0: i32) -> (i32, i32) {
    %c0_i32 = arith.constant 0 : i32
    %c0_i32_0 = arith.constant 0 : i32
    %c0_i32_1 = arith.constant 0 : i32
    return %c0_i32, %c0_i32_0 : i32, i32
  }
  func.func @transform_20(%arg0: i32) -> (i32, i32) {
    %c0_i32 = arith.constant 0 : i32
    %c0_i32_0 = arith.constant 0 : i32
    return %arg0, %c0_i32 : i32, i32
  }
}

module attributes {stable_mosaic.version = 11 : i64} {
  func.func @_spatial_stage_kernel(%arg0: i32, %arg1: memref<32x16xf32, #tpu.memory_space<vmem>>, %arg2: memref<128x32xbf16, #tpu.memory_space<vmem>>, %arg3: memref<128x32xbf16, #tpu.memory_space<vmem>>, %arg4: memref<32x128xbf16, #tpu.memory_space<vmem>>, %arg5: memref<2x128x32xf32, #tpu.memory_space<vmem>>, %arg6: memref<32x32xbf16, #tpu.memory_space<vmem>>, %arg7: memref<16x16xf32, #tpu.memory_space<vmem>>, %arg8: memref<1x16xf32, #tpu.memory_space<vmem>>, %arg9: memref<16x32xf32, #tpu.memory_space<vmem>>, %arg10: memref<1x32xf32, #tpu.memory_space<vmem>>, %arg11: memref<2x32x32xf32, #tpu.memory_space<vmem>>, %arg12: memref<2x32x32xf32, #tpu.memory_space<vmem>>, %arg13: memref<2x32x32xf32, #tpu.memory_space<vmem>>, %arg14: memref<2x1x32xf32, #tpu.memory_space<vmem>>, %arg15: memref<2x32x64xf32, #tpu.memory_space<vmem>>, %arg16: memref<2x32x64xf32, #tpu.memory_space<vmem>>, %arg17: memref<2x1x64xf32, #tpu.memory_space<vmem>>, %arg18: memref<2x32x32xf32, #tpu.memory_space<vmem>>, %arg19: memref<2x1x32xf32, #tpu.memory_space<vmem>>, %arg20: memref<2x1x32xf32, #tpu.memory_space<vmem>>, %arg21: memref<2x1x32xf32, #tpu.memory_space<vmem>>, %arg22: memref<32x96xf32, #tpu.memory_space<vmem>>, %arg23: memref<1x96xf32, #tpu.memory_space<vmem>>, %arg24: memref<32x32xf32, #tpu.memory_space<vmem>>, %arg25: memref<1x32xf32, #tpu.memory_space<vmem>>, %arg26: memref<1x32xf32, #tpu.memory_space<vmem>>, %arg27: memref<1x32xf32, #tpu.memory_space<vmem>>, %arg28: memref<32x32xf32, #tpu.memory_space<vmem>>) attributes {dimension_semantics = [#tpu.dimension_semantics<parallel>], iteration_bounds = array<i64: 4>, scalar_prefetch = 0 : i64, scratch_operands = 0 : i64, tpu.core_type = #tpu.core_type<tc>, window_params = [{transform_indices = @transform_0, window_bounds = array<i64: 32, 16>}, {pipeline_mode = #tpu.pipeline_mode<synchronous>, transform_indices = @transform_1, window_bounds = array<i64: 128, 32>}, {pipeline_mode = #tpu.pipeline_mode<synchronous>, transform_indices = @transform_2, window_bounds = array<i64: 128, 32>}, {pipeline_mode = #tpu.pipeline_mode<synchronous>, transform_indices = @transform_3, window_bounds = array<i64: 32, 128>}, {pipeline_mode = #tpu.pipeline_mode<synchronous>, transform_indices = @transform_4, window_bounds = array<i64: 2, 128, 32>}, {pipeline_mode = #tpu.pipeline_mode<synchronous>, transform_indices = @transform_5, window_bounds = array<i64: 32, 32>}, {pipeline_mode = #tpu.pipeline_mode<synchronous>, transform_indices = @transform_6, window_bounds = array<i64: 16, 16>}, {pipeline_mode = #tpu.pipeline_mode<synchronous>, transform_indices = @transform_7, window_bounds = array<i64: 1, 16>}, {pipeline_mode = #tpu.pipeline_mode<synchronous>, transform_indices = @transform_8, window_bounds = array<i64: 16, 32>}, {pipeline_mode = #tpu.pipeline_mode<synchronous>, transform_indices = @transform_9, window_bounds = array<i64: 1, 32>}, {pipeline_mode = #tpu.pipeline_mode<synchronous>, transform_indices = @transform_10, window_bounds = array<i64: 2, 32, 32>}, {pipeline_mode = #tpu.pipeline_mode<synchronous>, transform_indices = @transform_11, window_bounds = array<i64: 2, 32, 32>}, {pipeline_mode = #tpu.pipeline_mode<synchronous>, transform_indices = @transform_12, window_bounds = array<i64: 2, 32, 32>}, {pipeline_mode = #tpu.pipeline_mode<synchronous>, transform_indices = @transform_13, window_bounds = array<i64: 2, 1, 32>}, {pipeline_mode = #tpu.pipeline_mode<synchronous>, transform_indices = @transform_14, window_bounds = array<i64: 2, 32, 64>}, {pipeline_mode = #tpu.pipeline_mode<synchronous>, transform_indices = @transform_15, window_bounds = array<i64: 2, 32, 64>}, {pipeline_mode = #tpu.pipeline_mode<synchronous>, transform_indices = @transform_16, window_bounds = array<i64: 2, 1, 64>}, {pipeline_mode = #tpu.pipeline_mode<synchronous>, transform_indices = @transform_17, window_bounds = array<i64: 2, 32, 32>}, {pipeline_mode = #tpu.pipeline_mode<synchronous>, transform_indices = @transform_18, window_bounds = array<i64: 2, 1, 32>}, {pipeline_mode = #tpu.pipeline_mode<synchronous>, transform_indices = @transform_19, window_bounds = array<i64: 2, 1, 32>}, {pipeline_mode = #tpu.pipeline_mode<synchronous>, transform_indices = @transform_20, window_bounds = array<i64: 2, 1, 32>}, {pipeline_mode = #tpu.pipeline_mode<synchronous>, transform_indices = @transform_21, window_bounds = array<i64: 32, 96>}, {pipeline_mode = #tpu.pipeline_mode<synchronous>, transform_indices = @transform_22, window_bounds = array<i64: 1, 96>}, {pipeline_mode = #tpu.pipeline_mode<synchronous>, transform_indices = @transform_23, window_bounds = array<i64: 32, 32>}, {pipeline_mode = #tpu.pipeline_mode<synchronous>, transform_indices = @transform_24, window_bounds = array<i64: 1, 32>}, {pipeline_mode = #tpu.pipeline_mode<synchronous>, transform_indices = @transform_25, window_bounds = array<i64: 1, 32>}, {pipeline_mode = #tpu.pipeline_mode<synchronous>, transform_indices = @transform_26, window_bounds = array<i64: 1, 32>}, {transform_indices = @transform_27, window_bounds = array<i64: 32, 32>}]} {
    %c0 = arith.constant 0 : index
    %c0_0 = arith.constant 0 : index
    %0 = vector.load %arg1[%c0, %c0_0] : memref<32x16xf32, #tpu.memory_space<vmem>>, vector<32x16xf32>
    %c0_1 = arith.constant 0 : index
    %c0_2 = arith.constant 0 : index
    %1 = vector.load %arg7[%c0_1, %c0_2] : memref<16x16xf32, #tpu.memory_space<vmem>>, vector<16x16xf32>
    %cst = arith.constant dense<0.000000e+00> : vector<32x16xf32>
    %2 = tpu.matmul %0, %1, %cst {dimension_numbers = #tpu.dot_dimension_numbers<[1], [0], [0], [1], [0, 0, 1, 1], [], []>} : vector<32x16xf32>, vector<16x16xf32>, vector<32x16xf32> -> vector<32x16xf32>
    %c0_3 = arith.constant 0 : index
    %c0_4 = arith.constant 0 : index
    %3 = vector.load %arg8[%c0_3, %c0_4] : memref<1x16xf32, #tpu.memory_space<vmem>>, vector<1x16xf32>
    %4 = vector.broadcast %3 : vector<1x16xf32> to vector<32x16xf32>
    %5 = arith.addf %2, %4 : vector<32x16xf32>
    %cst_5 = arith.constant 0.000000e+00 : f32
    %6 = vector.broadcast %cst_5 : f32 to vector<32x16xf32>
    %7 = arith.maximumf %5, %6 : vector<32x16xf32>
    %c0_6 = arith.constant 0 : index
    %c0_7 = arith.constant 0 : index
    %8 = vector.load %arg9[%c0_6, %c0_7] : memref<16x32xf32, #tpu.memory_space<vmem>>, vector<16x32xf32>
    %cst_8 = arith.constant dense<0.000000e+00> : vector<32x32xf32>
    %9 = tpu.matmul %7, %8, %cst_8 {dimension_numbers = #tpu.dot_dimension_numbers<[1], [0], [0], [1], [0, 0, 1, 1], [], []>} : vector<32x16xf32>, vector<16x32xf32>, vector<32x32xf32> -> vector<32x32xf32>
    %c0_9 = arith.constant 0 : index
    %c0_10 = arith.constant 0 : index
    %10 = vector.load %arg10[%c0_9, %c0_10] : memref<1x32xf32, #tpu.memory_space<vmem>>, vector<1x32xf32>
    %11 = vector.broadcast %10 : vector<1x32xf32> to vector<32x32xf32>
    %12 = arith.addf %9, %11 : vector<32x32xf32>
    %cst_11 = arith.constant 0.000000e+00 : f32
    %13 = vector.broadcast %cst_11 : f32 to vector<32x32xf32>
    %14 = arith.maximumf %12, %13 : vector<32x32xf32>
    %c0_12 = arith.constant 0 : index
    %c0_13 = arith.constant 0 : index
    %15 = vector.load %arg2[%c0_12, %c0_13] : memref<128x32xbf16, #tpu.memory_space<vmem>>, vector<128x32xbf16>
    %c0_14 = arith.constant 0 : index
    %c0_15 = arith.constant 0 : index
    %16 = vector.load %arg3[%c0_14, %c0_15] : memref<128x32xbf16, #tpu.memory_space<vmem>>, vector<128x32xbf16>
    %c0_16 = arith.constant 0 : index
    %c0_17 = arith.constant 0 : index
    %17 = vector.load %arg4[%c0_16, %c0_17] : memref<32x128xbf16, #tpu.memory_space<vmem>>, vector<32x128xbf16>
    %18 = arith.truncf %14 : vector<32x32xf32> to vector<32x32xbf16>
    %cst_18 = arith.constant dense<0.000000e+00> : vector<128x32xf32>
    %19 = tpu.matmul %15, %18, %cst_18 {dimension_numbers = #tpu.dot_dimension_numbers<[1], [0], [0], [1], [0, 0, 1, 1], [], []>} : vector<128x32xbf16>, vector<32x32xbf16>, vector<128x32xf32> -> vector<128x32xf32>
    %cst_19 = arith.constant dense<0.000000e+00> : vector<128x32xf32>
    %20 = tpu.matmul %16, %18, %cst_19 {dimension_numbers = #tpu.dot_dimension_numbers<[1], [0], [0], [1], [0, 0, 1, 1], [], []>} : vector<128x32xbf16>, vector<32x32xbf16>, vector<128x32xf32> -> vector<128x32xf32>
    %c0_20 = arith.constant 0 : index
    %c0_21 = arith.constant 0 : index
    %c0_22 = arith.constant 0 : index
    %21 = vector.load %arg11[%c0_20, %c0_21, %c0_22] : memref<2x32x32xf32, #tpu.memory_space<vmem>>, vector<1x32x32xf32>
    %22 = vector.shape_cast %21 : vector<1x32x32xf32> to vector<32x32xf32>
    %cst_23 = arith.constant dense<0.000000e+00> : vector<128x32xf32>
    %23 = tpu.matmul %19, %22, %cst_23 {dimension_numbers = #tpu.dot_dimension_numbers<[1], [0], [0], [1], [0, 0, 1, 1], [], []>} : vector<128x32xf32>, vector<32x32xf32>, vector<128x32xf32> -> vector<128x32xf32>
    %c0_24 = arith.constant 0 : index
    %c0_25 = arith.constant 0 : index
    %c0_26 = arith.constant 0 : index
    %24 = vector.load %arg12[%c0_24, %c0_25, %c0_26] : memref<2x32x32xf32, #tpu.memory_space<vmem>>, vector<1x32x32xf32>
    %25 = vector.shape_cast %24 : vector<1x32x32xf32> to vector<32x32xf32>
    %cst_27 = arith.constant dense<0.000000e+00> : vector<128x32xf32>
    %26 = tpu.matmul %20, %25, %cst_27 {dimension_numbers = #tpu.dot_dimension_numbers<[1], [0], [0], [1], [0, 0, 1, 1], [], []>} : vector<128x32xf32>, vector<32x32xf32>, vector<128x32xf32> -> vector<128x32xf32>
    %27 = arith.addf %23, %26 : vector<128x32xf32>
    %c0_28 = arith.constant 0 : index
    %c0_29 = arith.constant 0 : index
    %c0_30 = arith.constant 0 : index
    %28 = vector.load %arg5[%c0_28, %c0_29, %c0_30] : memref<2x128x32xf32, #tpu.memory_space<vmem>>, vector<1x128x32xf32>
    %29 = vector.shape_cast %28 : vector<1x128x32xf32> to vector<128x32xf32>
    %30 = arith.addf %27, %29 : vector<128x32xf32>
    %cst_31 = arith.constant 0.000000e+00 : f32
    %31 = vector.broadcast %cst_31 : f32 to vector<128x32xf32>
    %32 = arith.maximumf %30, %31 : vector<128x32xf32>
    %c0_32 = arith.constant 0 : index
    %c0_33 = arith.constant 0 : index
    %c0_34 = arith.constant 0 : index
    %33 = vector.load %arg13[%c0_32, %c0_33, %c0_34] : memref<2x32x32xf32, #tpu.memory_space<vmem>>, vector<1x32x32xf32>
    %34 = vector.shape_cast %33 : vector<1x32x32xf32> to vector<32x32xf32>
    %cst_35 = arith.constant dense<0.000000e+00> : vector<128x32xf32>
    %35 = tpu.matmul %32, %34, %cst_35 {dimension_numbers = #tpu.dot_dimension_numbers<[1], [0], [0], [1], [0, 0, 1, 1], [], []>} : vector<128x32xf32>, vector<32x32xf32>, vector<128x32xf32> -> vector<128x32xf32>
    %c0_36 = arith.constant 0 : index
    %c0_37 = arith.constant 0 : index
    %c0_38 = arith.constant 0 : index
    %36 = vector.load %arg14[%c0_36, %c0_37, %c0_38] : memref<2x1x32xf32, #tpu.memory_space<vmem>>, vector<1x1x32xf32>
    %37 = vector.shape_cast %36 : vector<1x1x32xf32> to vector<1x32xf32>
    %38 = vector.broadcast %37 : vector<1x32xf32> to vector<128x32xf32>
    %39 = arith.addf %35, %38 : vector<128x32xf32>
    %40 = arith.truncf %39 : vector<128x32xf32> to vector<128x32xbf16>
    %cst_39 = arith.constant dense<0.000000e+00> : vector<32x32xf32>
    %41 = tpu.matmul %17, %40, %cst_39 {dimension_numbers = #tpu.dot_dimension_numbers<[1], [0], [0], [1], [0, 0, 1, 1], [], []>} : vector<32x128xbf16>, vector<128x32xbf16>, vector<32x32xf32> -> vector<32x32xf32>
    %c0_40 = arith.constant 0 : index
    %c0_41 = arith.constant 0 : index
    %c0_42 = arith.constant 0 : index
    %42 = vector.load %arg15[%c0_40, %c0_41, %c0_42] : memref<2x32x64xf32, #tpu.memory_space<vmem>>, vector<1x32x64xf32>
    %43 = vector.shape_cast %42 : vector<1x32x64xf32> to vector<32x64xf32>
    %cst_43 = arith.constant dense<0.000000e+00> : vector<32x64xf32>
    %44 = tpu.matmul %14, %43, %cst_43 {dimension_numbers = #tpu.dot_dimension_numbers<[1], [0], [0], [1], [0, 0, 1, 1], [], []>} : vector<32x32xf32>, vector<32x64xf32>, vector<32x64xf32> -> vector<32x64xf32>
    %c0_44 = arith.constant 0 : index
    %c0_45 = arith.constant 0 : index
    %c0_46 = arith.constant 0 : index
    %45 = vector.load %arg16[%c0_44, %c0_45, %c0_46] : memref<2x32x64xf32, #tpu.memory_space<vmem>>, vector<1x32x64xf32>
    %46 = vector.shape_cast %45 : vector<1x32x64xf32> to vector<32x64xf32>
    %cst_47 = arith.constant dense<0.000000e+00> : vector<32x64xf32>
    %47 = tpu.matmul %41, %46, %cst_47 {dimension_numbers = #tpu.dot_dimension_numbers<[1], [0], [0], [1], [0, 0, 1, 1], [], []>} : vector<32x32xf32>, vector<32x64xf32>, vector<32x64xf32> -> vector<32x64xf32>
    %48 = arith.addf %44, %47 : vector<32x64xf32>
    %c0_48 = arith.constant 0 : index
    %c0_49 = arith.constant 0 : index
    %c0_50 = arith.constant 0 : index
    %49 = vector.load %arg17[%c0_48, %c0_49, %c0_50] : memref<2x1x64xf32, #tpu.memory_space<vmem>>, vector<1x1x64xf32>
    %50 = vector.shape_cast %49 : vector<1x1x64xf32> to vector<1x64xf32>
    %51 = vector.broadcast %50 : vector<1x64xf32> to vector<32x64xf32>
    %52 = arith.addf %48, %51 : vector<32x64xf32>
    %53 = vector.extract_strided_slice %52 {offsets = [0, 0], sizes = [32, 32], strides = [1, 1]} : vector<32x64xf32> to vector<32x32xf32>
    %54 = arith.negf %53 : vector<32x32xf32>
    %55 = math.exp %54 : vector<32x32xf32>
    %cst_51 = arith.constant 1.000000e+00 : f32
    %56 = vector.broadcast %cst_51 : f32 to vector<32x32xf32>
    %57 = arith.addf %56, %55 : vector<32x32xf32>
    %58 = arith.divf %56, %57 : vector<32x32xf32>
    %59 = vector.extract_strided_slice %52 {offsets = [0, 32], sizes = [32, 32], strides = [1, 1]} : vector<32x64xf32> to vector<32x32xf32>
    %cst_52 = arith.constant 0.000000e+00 : f32
    %60 = vector.broadcast %cst_52 : f32 to vector<32x32xf32>
    %61 = arith.maximumf %59, %60 : vector<32x32xf32>
    %c0_53 = arith.constant 0 : index
    %c0_54 = arith.constant 0 : index
    %c0_55 = arith.constant 0 : index
    %62 = vector.load %arg18[%c0_53, %c0_54, %c0_55] : memref<2x32x32xf32, #tpu.memory_space<vmem>>, vector<1x32x32xf32>
    %63 = vector.shape_cast %62 : vector<1x32x32xf32> to vector<32x32xf32>
    %cst_56 = arith.constant dense<0.000000e+00> : vector<32x32xf32>
    %64 = tpu.matmul %61, %63, %cst_56 {dimension_numbers = #tpu.dot_dimension_numbers<[1], [0], [0], [1], [0, 0, 1, 1], [], []>} : vector<32x32xf32>, vector<32x32xf32>, vector<32x32xf32> -> vector<32x32xf32>
    %c0_57 = arith.constant 0 : index
    %c0_58 = arith.constant 0 : index
    %c0_59 = arith.constant 0 : index
    %65 = vector.load %arg19[%c0_57, %c0_58, %c0_59] : memref<2x1x32xf32, #tpu.memory_space<vmem>>, vector<1x1x32xf32>
    %66 = vector.shape_cast %65 : vector<1x1x32xf32> to vector<1x32xf32>
    %67 = vector.broadcast %66 : vector<1x32xf32> to vector<32x32xf32>
    %68 = arith.addf %64, %67 : vector<32x32xf32>
    %69 = arith.mulf %58, %68 : vector<32x32xf32>
    %cst_60 = arith.constant 1.000000e+00 : f32
    %70 = vector.broadcast %cst_60 : f32 to vector<32x32xf32>
    %71 = arith.subf %70, %58 : vector<32x32xf32>
    %72 = arith.mulf %71, %14 : vector<32x32xf32>
    %73 = arith.addf %69, %72 : vector<32x32xf32>
    %c0_61 = arith.constant 0 : index
    %c0_62 = arith.constant 0 : index
    %c0_63 = arith.constant 0 : index
    %74 = vector.load %arg20[%c0_61, %c0_62, %c0_63] : memref<2x1x32xf32, #tpu.memory_space<vmem>>, vector<1x1x32xf32>
    %75 = vector.shape_cast %74 : vector<1x1x32xf32> to vector<1x32xf32>
    %c0_64 = arith.constant 0 : index
    %c0_65 = arith.constant 0 : index
    %c0_66 = arith.constant 0 : index
    %76 = vector.load %arg21[%c0_64, %c0_65, %c0_66] : memref<2x1x32xf32, #tpu.memory_space<vmem>>, vector<1x1x32xf32>
    %77 = vector.shape_cast %76 : vector<1x1x32xf32> to vector<1x32xf32>
    %cst_67 = arith.constant dense<0.000000e+00> : vector<32xf32>
    %78 = vector.multi_reduction <add>, %73, %cst_67 [1] : vector<32x32xf32> to vector<32xf32>
    %79 = vector.shape_cast %78 : vector<32xf32> to vector<32x1xf32>
    %cst_68 = arith.constant 3.200000e+01 : f32
    %80 = vector.broadcast %cst_68 : f32 to vector<32x1xf32>
    %81 = arith.divf %79, %80 : vector<32x1xf32>
    %82 = vector.broadcast %81 : vector<32x1xf32> to vector<32x32xf32>
    %83 = arith.subf %73, %82 : vector<32x32xf32>
    %84 = arith.mulf %83, %83 : vector<32x32xf32>
    %cst_69 = arith.constant dense<0.000000e+00> : vector<32xf32>
    %85 = vector.multi_reduction <add>, %84, %cst_69 [1] : vector<32x32xf32> to vector<32xf32>
    %86 = vector.shape_cast %85 : vector<32xf32> to vector<32x1xf32>
    %cst_70 = arith.constant 3.200000e+01 : f32
    %87 = vector.broadcast %cst_70 : f32 to vector<32x1xf32>
    %88 = arith.divf %86, %87 : vector<32x1xf32>
    %89 = vector.broadcast %81 : vector<32x1xf32> to vector<32x32xf32>
    %90 = arith.subf %73, %89 : vector<32x32xf32>
    %cst_71 = arith.constant 9.99999974E-6 : f32
    %91 = vector.broadcast %cst_71 : f32 to vector<32x1xf32>
    %92 = arith.addf %88, %91 : vector<32x1xf32>
    %93 = math.rsqrt %92 : vector<32x1xf32>
    %94 = vector.broadcast %93 : vector<32x1xf32> to vector<32x32xf32>
    %95 = arith.mulf %90, %94 : vector<32x32xf32>
    %96 = vector.broadcast %75 : vector<1x32xf32> to vector<32x32xf32>
    %97 = arith.mulf %95, %96 : vector<32x32xf32>
    %98 = vector.broadcast %77 : vector<1x32xf32> to vector<32x32xf32>
    %99 = arith.addf %97, %98 : vector<32x32xf32>
    %100 = arith.truncf %99 : vector<32x32xf32> to vector<32x32xbf16>
    %cst_72 = arith.constant dense<0.000000e+00> : vector<128x32xf32>
    %101 = tpu.matmul %15, %100, %cst_72 {dimension_numbers = #tpu.dot_dimension_numbers<[1], [0], [0], [1], [0, 0, 1, 1], [], []>} : vector<128x32xbf16>, vector<32x32xbf16>, vector<128x32xf32> -> vector<128x32xf32>
    %cst_73 = arith.constant dense<0.000000e+00> : vector<128x32xf32>
    %102 = tpu.matmul %16, %100, %cst_73 {dimension_numbers = #tpu.dot_dimension_numbers<[1], [0], [0], [1], [0, 0, 1, 1], [], []>} : vector<128x32xbf16>, vector<32x32xbf16>, vector<128x32xf32> -> vector<128x32xf32>
    %c1 = arith.constant 1 : index
    %c0_74 = arith.constant 0 : index
    %c0_75 = arith.constant 0 : index
    %103 = vector.load %arg11[%c1, %c0_74, %c0_75] : memref<2x32x32xf32, #tpu.memory_space<vmem>>, vector<1x32x32xf32>
    %104 = vector.shape_cast %103 : vector<1x32x32xf32> to vector<32x32xf32>
    %cst_76 = arith.constant dense<0.000000e+00> : vector<128x32xf32>
    %105 = tpu.matmul %101, %104, %cst_76 {dimension_numbers = #tpu.dot_dimension_numbers<[1], [0], [0], [1], [0, 0, 1, 1], [], []>} : vector<128x32xf32>, vector<32x32xf32>, vector<128x32xf32> -> vector<128x32xf32>
    %c1_77 = arith.constant 1 : index
    %c0_78 = arith.constant 0 : index
    %c0_79 = arith.constant 0 : index
    %106 = vector.load %arg12[%c1_77, %c0_78, %c0_79] : memref<2x32x32xf32, #tpu.memory_space<vmem>>, vector<1x32x32xf32>
    %107 = vector.shape_cast %106 : vector<1x32x32xf32> to vector<32x32xf32>
    %cst_80 = arith.constant dense<0.000000e+00> : vector<128x32xf32>
    %108 = tpu.matmul %102, %107, %cst_80 {dimension_numbers = #tpu.dot_dimension_numbers<[1], [0], [0], [1], [0, 0, 1, 1], [], []>} : vector<128x32xf32>, vector<32x32xf32>, vector<128x32xf32> -> vector<128x32xf32>
    %109 = arith.addf %105, %108 : vector<128x32xf32>
    %c1_81 = arith.constant 1 : index
    %c0_82 = arith.constant 0 : index
    %c0_83 = arith.constant 0 : index
    %110 = vector.load %arg5[%c1_81, %c0_82, %c0_83] : memref<2x128x32xf32, #tpu.memory_space<vmem>>, vector<1x128x32xf32>
    %111 = vector.shape_cast %110 : vector<1x128x32xf32> to vector<128x32xf32>
    %112 = arith.addf %109, %111 : vector<128x32xf32>
    %cst_84 = arith.constant 0.000000e+00 : f32
    %113 = vector.broadcast %cst_84 : f32 to vector<128x32xf32>
    %114 = arith.maximumf %112, %113 : vector<128x32xf32>
    %c1_85 = arith.constant 1 : index
    %c0_86 = arith.constant 0 : index
    %c0_87 = arith.constant 0 : index
    %115 = vector.load %arg13[%c1_85, %c0_86, %c0_87] : memref<2x32x32xf32, #tpu.memory_space<vmem>>, vector<1x32x32xf32>
    %116 = vector.shape_cast %115 : vector<1x32x32xf32> to vector<32x32xf32>
    %cst_88 = arith.constant dense<0.000000e+00> : vector<128x32xf32>
    %117 = tpu.matmul %114, %116, %cst_88 {dimension_numbers = #tpu.dot_dimension_numbers<[1], [0], [0], [1], [0, 0, 1, 1], [], []>} : vector<128x32xf32>, vector<32x32xf32>, vector<128x32xf32> -> vector<128x32xf32>
    %c1_89 = arith.constant 1 : index
    %c0_90 = arith.constant 0 : index
    %c0_91 = arith.constant 0 : index
    %118 = vector.load %arg14[%c1_89, %c0_90, %c0_91] : memref<2x1x32xf32, #tpu.memory_space<vmem>>, vector<1x1x32xf32>
    %119 = vector.shape_cast %118 : vector<1x1x32xf32> to vector<1x32xf32>
    %120 = vector.broadcast %119 : vector<1x32xf32> to vector<128x32xf32>
    %121 = arith.addf %117, %120 : vector<128x32xf32>
    %122 = arith.truncf %121 : vector<128x32xf32> to vector<128x32xbf16>
    %cst_92 = arith.constant dense<0.000000e+00> : vector<32x32xf32>
    %123 = tpu.matmul %17, %122, %cst_92 {dimension_numbers = #tpu.dot_dimension_numbers<[1], [0], [0], [1], [0, 0, 1, 1], [], []>} : vector<32x128xbf16>, vector<128x32xbf16>, vector<32x32xf32> -> vector<32x32xf32>
    %c1_93 = arith.constant 1 : index
    %c0_94 = arith.constant 0 : index
    %c0_95 = arith.constant 0 : index
    %124 = vector.load %arg15[%c1_93, %c0_94, %c0_95] : memref<2x32x64xf32, #tpu.memory_space<vmem>>, vector<1x32x64xf32>
    %125 = vector.shape_cast %124 : vector<1x32x64xf32> to vector<32x64xf32>
    %cst_96 = arith.constant dense<0.000000e+00> : vector<32x64xf32>
    %126 = tpu.matmul %99, %125, %cst_96 {dimension_numbers = #tpu.dot_dimension_numbers<[1], [0], [0], [1], [0, 0, 1, 1], [], []>} : vector<32x32xf32>, vector<32x64xf32>, vector<32x64xf32> -> vector<32x64xf32>
    %c1_97 = arith.constant 1 : index
    %c0_98 = arith.constant 0 : index
    %c0_99 = arith.constant 0 : index
    %127 = vector.load %arg16[%c1_97, %c0_98, %c0_99] : memref<2x32x64xf32, #tpu.memory_space<vmem>>, vector<1x32x64xf32>
    %128 = vector.shape_cast %127 : vector<1x32x64xf32> to vector<32x64xf32>
    %cst_100 = arith.constant dense<0.000000e+00> : vector<32x64xf32>
    %129 = tpu.matmul %123, %128, %cst_100 {dimension_numbers = #tpu.dot_dimension_numbers<[1], [0], [0], [1], [0, 0, 1, 1], [], []>} : vector<32x32xf32>, vector<32x64xf32>, vector<32x64xf32> -> vector<32x64xf32>
    %130 = arith.addf %126, %129 : vector<32x64xf32>
    %c1_101 = arith.constant 1 : index
    %c0_102 = arith.constant 0 : index
    %c0_103 = arith.constant 0 : index
    %131 = vector.load %arg17[%c1_101, %c0_102, %c0_103] : memref<2x1x64xf32, #tpu.memory_space<vmem>>, vector<1x1x64xf32>
    %132 = vector.shape_cast %131 : vector<1x1x64xf32> to vector<1x64xf32>
    %133 = vector.broadcast %132 : vector<1x64xf32> to vector<32x64xf32>
    %134 = arith.addf %130, %133 : vector<32x64xf32>
    %135 = vector.extract_strided_slice %134 {offsets = [0, 0], sizes = [32, 32], strides = [1, 1]} : vector<32x64xf32> to vector<32x32xf32>
    %136 = arith.negf %135 : vector<32x32xf32>
    %137 = math.exp %136 : vector<32x32xf32>
    %cst_104 = arith.constant 1.000000e+00 : f32
    %138 = vector.broadcast %cst_104 : f32 to vector<32x32xf32>
    %139 = arith.addf %138, %137 : vector<32x32xf32>
    %140 = arith.divf %138, %139 : vector<32x32xf32>
    %141 = vector.extract_strided_slice %134 {offsets = [0, 32], sizes = [32, 32], strides = [1, 1]} : vector<32x64xf32> to vector<32x32xf32>
    %cst_105 = arith.constant 0.000000e+00 : f32
    %142 = vector.broadcast %cst_105 : f32 to vector<32x32xf32>
    %143 = arith.maximumf %141, %142 : vector<32x32xf32>
    %c1_106 = arith.constant 1 : index
    %c0_107 = arith.constant 0 : index
    %c0_108 = arith.constant 0 : index
    %144 = vector.load %arg18[%c1_106, %c0_107, %c0_108] : memref<2x32x32xf32, #tpu.memory_space<vmem>>, vector<1x32x32xf32>
    %145 = vector.shape_cast %144 : vector<1x32x32xf32> to vector<32x32xf32>
    %cst_109 = arith.constant dense<0.000000e+00> : vector<32x32xf32>
    %146 = tpu.matmul %143, %145, %cst_109 {dimension_numbers = #tpu.dot_dimension_numbers<[1], [0], [0], [1], [0, 0, 1, 1], [], []>} : vector<32x32xf32>, vector<32x32xf32>, vector<32x32xf32> -> vector<32x32xf32>
    %c1_110 = arith.constant 1 : index
    %c0_111 = arith.constant 0 : index
    %c0_112 = arith.constant 0 : index
    %147 = vector.load %arg19[%c1_110, %c0_111, %c0_112] : memref<2x1x32xf32, #tpu.memory_space<vmem>>, vector<1x1x32xf32>
    %148 = vector.shape_cast %147 : vector<1x1x32xf32> to vector<1x32xf32>
    %149 = vector.broadcast %148 : vector<1x32xf32> to vector<32x32xf32>
    %150 = arith.addf %146, %149 : vector<32x32xf32>
    %151 = arith.mulf %140, %150 : vector<32x32xf32>
    %cst_113 = arith.constant 1.000000e+00 : f32
    %152 = vector.broadcast %cst_113 : f32 to vector<32x32xf32>
    %153 = arith.subf %152, %140 : vector<32x32xf32>
    %154 = arith.mulf %153, %99 : vector<32x32xf32>
    %155 = arith.addf %151, %154 : vector<32x32xf32>
    %c1_114 = arith.constant 1 : index
    %c0_115 = arith.constant 0 : index
    %c0_116 = arith.constant 0 : index
    %156 = vector.load %arg20[%c1_114, %c0_115, %c0_116] : memref<2x1x32xf32, #tpu.memory_space<vmem>>, vector<1x1x32xf32>
    %157 = vector.shape_cast %156 : vector<1x1x32xf32> to vector<1x32xf32>
    %c1_117 = arith.constant 1 : index
    %c0_118 = arith.constant 0 : index
    %c0_119 = arith.constant 0 : index
    %158 = vector.load %arg21[%c1_117, %c0_118, %c0_119] : memref<2x1x32xf32, #tpu.memory_space<vmem>>, vector<1x1x32xf32>
    %159 = vector.shape_cast %158 : vector<1x1x32xf32> to vector<1x32xf32>
    %cst_120 = arith.constant dense<0.000000e+00> : vector<32xf32>
    %160 = vector.multi_reduction <add>, %155, %cst_120 [1] : vector<32x32xf32> to vector<32xf32>
    %161 = vector.shape_cast %160 : vector<32xf32> to vector<32x1xf32>
    %cst_121 = arith.constant 3.200000e+01 : f32
    %162 = vector.broadcast %cst_121 : f32 to vector<32x1xf32>
    %163 = arith.divf %161, %162 : vector<32x1xf32>
    %164 = vector.broadcast %163 : vector<32x1xf32> to vector<32x32xf32>
    %165 = arith.subf %155, %164 : vector<32x32xf32>
    %166 = arith.mulf %165, %165 : vector<32x32xf32>
    %cst_122 = arith.constant dense<0.000000e+00> : vector<32xf32>
    %167 = vector.multi_reduction <add>, %166, %cst_122 [1] : vector<32x32xf32> to vector<32xf32>
    %168 = vector.shape_cast %167 : vector<32xf32> to vector<32x1xf32>
    %cst_123 = arith.constant 3.200000e+01 : f32
    %169 = vector.broadcast %cst_123 : f32 to vector<32x1xf32>
    %170 = arith.divf %168, %169 : vector<32x1xf32>
    %171 = vector.broadcast %163 : vector<32x1xf32> to vector<32x32xf32>
    %172 = arith.subf %155, %171 : vector<32x32xf32>
    %cst_124 = arith.constant 9.99999974E-6 : f32
    %173 = vector.broadcast %cst_124 : f32 to vector<32x1xf32>
    %174 = arith.addf %170, %173 : vector<32x1xf32>
    %175 = math.rsqrt %174 : vector<32x1xf32>
    %176 = vector.broadcast %175 : vector<32x1xf32> to vector<32x32xf32>
    %177 = arith.mulf %172, %176 : vector<32x32xf32>
    %178 = vector.broadcast %157 : vector<1x32xf32> to vector<32x32xf32>
    %179 = arith.mulf %177, %178 : vector<32x32xf32>
    %180 = vector.broadcast %159 : vector<1x32xf32> to vector<32x32xf32>
    %181 = arith.addf %179, %180 : vector<32x32xf32>
    %c0_125 = arith.constant 0 : index
    %c0_126 = arith.constant 0 : index
    %182 = vector.load %arg6[%c0_125, %c0_126] : memref<32x32xbf16, #tpu.memory_space<vmem>>, vector<32x32xbf16>
    %183 = arith.extf %182 : vector<32x32xbf16> to vector<32x32xf32>
    %c0_127 = arith.constant 0 : index
    %c0_128 = arith.constant 0 : index
    %184 = vector.load %arg22[%c0_127, %c0_128] : memref<32x96xf32, #tpu.memory_space<vmem>>, vector<32x96xf32>
    %cst_129 = arith.constant dense<0.000000e+00> : vector<32x96xf32>
    %185 = tpu.matmul %181, %184, %cst_129 {dimension_numbers = #tpu.dot_dimension_numbers<[1], [0], [0], [1], [0, 0, 1, 1], [], []>} : vector<32x32xf32>, vector<32x96xf32>, vector<32x96xf32> -> vector<32x96xf32>
    %c0_130 = arith.constant 0 : index
    %c0_131 = arith.constant 0 : index
    %186 = vector.load %arg23[%c0_130, %c0_131] : memref<1x96xf32, #tpu.memory_space<vmem>>, vector<1x96xf32>
    %187 = vector.broadcast %186 : vector<1x96xf32> to vector<32x96xf32>
    %188 = arith.addf %185, %187 : vector<32x96xf32>
    %c0_132 = arith.constant 0 : index
    %c0_133 = arith.constant 0 : index
    %189 = vector.load %arg24[%c0_132, %c0_133] : memref<32x32xf32, #tpu.memory_space<vmem>>, vector<32x32xf32>
    %cst_134 = arith.constant 0.000000e+00 : f32
    %190 = vector.broadcast %cst_134 : f32 to vector<32x32xf32>
    %191 = vector.extract_strided_slice %188 {offsets = [0, 0], sizes = [32, 8], strides = [1, 1]} : vector<32x96xf32> to vector<32x8xf32>
    %192 = vector.extract_strided_slice %188 {offsets = [0, 32], sizes = [32, 8], strides = [1, 1]} : vector<32x96xf32> to vector<32x8xf32>
    %193 = vector.extract_strided_slice %188 {offsets = [0, 64], sizes = [32, 8], strides = [1, 1]} : vector<32x96xf32> to vector<32x8xf32>
    %cst_135 = arith.constant dense<0.000000e+00> : vector<32x32xf32>
    %194 = tpu.matmul %191, %192, %cst_135 {dimension_numbers = #tpu.dot_dimension_numbers<[1], [1], [0], [0], [0, 0, 1, 0], [], []>} : vector<32x8xf32>, vector<32x8xf32>, vector<32x32xf32> -> vector<32x32xf32>
    %cst_136 = arith.constant 0.353553385 : f32
    %195 = vector.broadcast %cst_136 : f32 to vector<32x32xf32>
    %196 = arith.mulf %194, %195 : vector<32x32xf32>
    %197 = arith.addf %196, %183 : vector<32x32xf32>
    %cst_137 = arith.constant dense<0xFF800000> : vector<32xf32>
    %198 = vector.multi_reduction <maximumf>, %197, %cst_137 [1] : vector<32x32xf32> to vector<32xf32>
    %199 = vector.shape_cast %198 : vector<32xf32> to vector<32x1xf32>
    %200 = vector.broadcast %199 : vector<32x1xf32> to vector<32x32xf32>
    %201 = arith.subf %197, %200 : vector<32x32xf32>
    %202 = math.exp %201 : vector<32x32xf32>
    %cst_138 = arith.constant dense<0.000000e+00> : vector<32xf32>
    %203 = vector.multi_reduction <add>, %202, %cst_138 [1] : vector<32x32xf32> to vector<32xf32>
    %204 = vector.shape_cast %203 : vector<32xf32> to vector<32x1xf32>
    %205 = tpu.reciprocal %204 {approx = true} : vector<32x1xf32> -> vector<32x1xf32>
    %206 = vector.broadcast %205 : vector<32x1xf32> to vector<32x32xf32>
    %207 = arith.mulf %202, %206 : vector<32x32xf32>
    %cst_139 = arith.constant dense<0.000000e+00> : vector<32x8xf32>
    %208 = tpu.matmul %207, %193, %cst_139 {dimension_numbers = #tpu.dot_dimension_numbers<[1], [0], [0], [1], [0, 0, 1, 1], [], []>} : vector<32x32xf32>, vector<32x8xf32>, vector<32x8xf32> -> vector<32x8xf32>
    %209 = vector.extract_strided_slice %189 {offsets = [0, 0], sizes = [8, 32], strides = [1, 1]} : vector<32x32xf32> to vector<8x32xf32>
    %cst_140 = arith.constant dense<0.000000e+00> : vector<32x32xf32>
    %210 = tpu.matmul %208, %209, %cst_140 {dimension_numbers = #tpu.dot_dimension_numbers<[1], [0], [0], [1], [0, 0, 1, 1], [], []>} : vector<32x8xf32>, vector<8x32xf32>, vector<32x32xf32> -> vector<32x32xf32>
    %211 = arith.addf %190, %210 : vector<32x32xf32>
    %212 = vector.extract_strided_slice %188 {offsets = [0, 8], sizes = [32, 8], strides = [1, 1]} : vector<32x96xf32> to vector<32x8xf32>
    %213 = vector.extract_strided_slice %188 {offsets = [0, 40], sizes = [32, 8], strides = [1, 1]} : vector<32x96xf32> to vector<32x8xf32>
    %214 = vector.extract_strided_slice %188 {offsets = [0, 72], sizes = [32, 8], strides = [1, 1]} : vector<32x96xf32> to vector<32x8xf32>
    %cst_141 = arith.constant dense<0.000000e+00> : vector<32x32xf32>
    %215 = tpu.matmul %212, %213, %cst_141 {dimension_numbers = #tpu.dot_dimension_numbers<[1], [1], [0], [0], [0, 0, 1, 0], [], []>} : vector<32x8xf32>, vector<32x8xf32>, vector<32x32xf32> -> vector<32x32xf32>
    %cst_142 = arith.constant 0.353553385 : f32
    %216 = vector.broadcast %cst_142 : f32 to vector<32x32xf32>
    %217 = arith.mulf %215, %216 : vector<32x32xf32>
    %218 = arith.addf %217, %183 : vector<32x32xf32>
    %cst_143 = arith.constant dense<0xFF800000> : vector<32xf32>
    %219 = vector.multi_reduction <maximumf>, %218, %cst_143 [1] : vector<32x32xf32> to vector<32xf32>
    %220 = vector.shape_cast %219 : vector<32xf32> to vector<32x1xf32>
    %221 = vector.broadcast %220 : vector<32x1xf32> to vector<32x32xf32>
    %222 = arith.subf %218, %221 : vector<32x32xf32>
    %223 = math.exp %222 : vector<32x32xf32>
    %cst_144 = arith.constant dense<0.000000e+00> : vector<32xf32>
    %224 = vector.multi_reduction <add>, %223, %cst_144 [1] : vector<32x32xf32> to vector<32xf32>
    %225 = vector.shape_cast %224 : vector<32xf32> to vector<32x1xf32>
    %226 = tpu.reciprocal %225 {approx = true} : vector<32x1xf32> -> vector<32x1xf32>
    %227 = vector.broadcast %226 : vector<32x1xf32> to vector<32x32xf32>
    %228 = arith.mulf %223, %227 : vector<32x32xf32>
    %cst_145 = arith.constant dense<0.000000e+00> : vector<32x8xf32>
    %229 = tpu.matmul %228, %214, %cst_145 {dimension_numbers = #tpu.dot_dimension_numbers<[1], [0], [0], [1], [0, 0, 1, 1], [], []>} : vector<32x32xf32>, vector<32x8xf32>, vector<32x8xf32> -> vector<32x8xf32>
    %230 = vector.extract_strided_slice %189 {offsets = [8, 0], sizes = [8, 32], strides = [1, 1]} : vector<32x32xf32> to vector<8x32xf32>
    %cst_146 = arith.constant dense<0.000000e+00> : vector<32x32xf32>
    %231 = tpu.matmul %229, %230, %cst_146 {dimension_numbers = #tpu.dot_dimension_numbers<[1], [0], [0], [1], [0, 0, 1, 1], [], []>} : vector<32x8xf32>, vector<8x32xf32>, vector<32x32xf32> -> vector<32x32xf32>
    %232 = arith.addf %211, %231 : vector<32x32xf32>
    %233 = vector.extract_strided_slice %188 {offsets = [0, 16], sizes = [32, 8], strides = [1, 1]} : vector<32x96xf32> to vector<32x8xf32>
    %234 = vector.extract_strided_slice %188 {offsets = [0, 48], sizes = [32, 8], strides = [1, 1]} : vector<32x96xf32> to vector<32x8xf32>
    %235 = vector.extract_strided_slice %188 {offsets = [0, 80], sizes = [32, 8], strides = [1, 1]} : vector<32x96xf32> to vector<32x8xf32>
    %cst_147 = arith.constant dense<0.000000e+00> : vector<32x32xf32>
    %236 = tpu.matmul %233, %234, %cst_147 {dimension_numbers = #tpu.dot_dimension_numbers<[1], [1], [0], [0], [0, 0, 1, 0], [], []>} : vector<32x8xf32>, vector<32x8xf32>, vector<32x32xf32> -> vector<32x32xf32>
    %cst_148 = arith.constant 0.353553385 : f32
    %237 = vector.broadcast %cst_148 : f32 to vector<32x32xf32>
    %238 = arith.mulf %236, %237 : vector<32x32xf32>
    %239 = arith.addf %238, %183 : vector<32x32xf32>
    %cst_149 = arith.constant dense<0xFF800000> : vector<32xf32>
    %240 = vector.multi_reduction <maximumf>, %239, %cst_149 [1] : vector<32x32xf32> to vector<32xf32>
    %241 = vector.shape_cast %240 : vector<32xf32> to vector<32x1xf32>
    %242 = vector.broadcast %241 : vector<32x1xf32> to vector<32x32xf32>
    %243 = arith.subf %239, %242 : vector<32x32xf32>
    %244 = math.exp %243 : vector<32x32xf32>
    %cst_150 = arith.constant dense<0.000000e+00> : vector<32xf32>
    %245 = vector.multi_reduction <add>, %244, %cst_150 [1] : vector<32x32xf32> to vector<32xf32>
    %246 = vector.shape_cast %245 : vector<32xf32> to vector<32x1xf32>
    %247 = tpu.reciprocal %246 {approx = true} : vector<32x1xf32> -> vector<32x1xf32>
    %248 = vector.broadcast %247 : vector<32x1xf32> to vector<32x32xf32>
    %249 = arith.mulf %244, %248 : vector<32x32xf32>
    %cst_151 = arith.constant dense<0.000000e+00> : vector<32x8xf32>
    %250 = tpu.matmul %249, %235, %cst_151 {dimension_numbers = #tpu.dot_dimension_numbers<[1], [0], [0], [1], [0, 0, 1, 1], [], []>} : vector<32x32xf32>, vector<32x8xf32>, vector<32x8xf32> -> vector<32x8xf32>
    %251 = vector.extract_strided_slice %189 {offsets = [16, 0], sizes = [8, 32], strides = [1, 1]} : vector<32x32xf32> to vector<8x32xf32>
    %cst_152 = arith.constant dense<0.000000e+00> : vector<32x32xf32>
    %252 = tpu.matmul %250, %251, %cst_152 {dimension_numbers = #tpu.dot_dimension_numbers<[1], [0], [0], [1], [0, 0, 1, 1], [], []>} : vector<32x8xf32>, vector<8x32xf32>, vector<32x32xf32> -> vector<32x32xf32>
    %253 = arith.addf %232, %252 : vector<32x32xf32>
    %254 = vector.extract_strided_slice %188 {offsets = [0, 24], sizes = [32, 8], strides = [1, 1]} : vector<32x96xf32> to vector<32x8xf32>
    %255 = vector.extract_strided_slice %188 {offsets = [0, 56], sizes = [32, 8], strides = [1, 1]} : vector<32x96xf32> to vector<32x8xf32>
    %256 = vector.extract_strided_slice %188 {offsets = [0, 88], sizes = [32, 8], strides = [1, 1]} : vector<32x96xf32> to vector<32x8xf32>
    %cst_153 = arith.constant dense<0.000000e+00> : vector<32x32xf32>
    %257 = tpu.matmul %254, %255, %cst_153 {dimension_numbers = #tpu.dot_dimension_numbers<[1], [1], [0], [0], [0, 0, 1, 0], [], []>} : vector<32x8xf32>, vector<32x8xf32>, vector<32x32xf32> -> vector<32x32xf32>
    %cst_154 = arith.constant 0.353553385 : f32
    %258 = vector.broadcast %cst_154 : f32 to vector<32x32xf32>
    %259 = arith.mulf %257, %258 : vector<32x32xf32>
    %260 = arith.addf %259, %183 : vector<32x32xf32>
    %cst_155 = arith.constant dense<0xFF800000> : vector<32xf32>
    %261 = vector.multi_reduction <maximumf>, %260, %cst_155 [1] : vector<32x32xf32> to vector<32xf32>
    %262 = vector.shape_cast %261 : vector<32xf32> to vector<32x1xf32>
    %263 = vector.broadcast %262 : vector<32x1xf32> to vector<32x32xf32>
    %264 = arith.subf %260, %263 : vector<32x32xf32>
    %265 = math.exp %264 : vector<32x32xf32>
    %cst_156 = arith.constant dense<0.000000e+00> : vector<32xf32>
    %266 = vector.multi_reduction <add>, %265, %cst_156 [1] : vector<32x32xf32> to vector<32xf32>
    %267 = vector.shape_cast %266 : vector<32xf32> to vector<32x1xf32>
    %268 = tpu.reciprocal %267 {approx = true} : vector<32x1xf32> -> vector<32x1xf32>
    %269 = vector.broadcast %268 : vector<32x1xf32> to vector<32x32xf32>
    %270 = arith.mulf %265, %269 : vector<32x32xf32>
    %cst_157 = arith.constant dense<0.000000e+00> : vector<32x8xf32>
    %271 = tpu.matmul %270, %256, %cst_157 {dimension_numbers = #tpu.dot_dimension_numbers<[1], [0], [0], [1], [0, 0, 1, 1], [], []>} : vector<32x32xf32>, vector<32x8xf32>, vector<32x8xf32> -> vector<32x8xf32>
    %272 = vector.extract_strided_slice %189 {offsets = [24, 0], sizes = [8, 32], strides = [1, 1]} : vector<32x32xf32> to vector<8x32xf32>
    %cst_158 = arith.constant dense<0.000000e+00> : vector<32x32xf32>
    %273 = tpu.matmul %271, %272, %cst_158 {dimension_numbers = #tpu.dot_dimension_numbers<[1], [0], [0], [1], [0, 0, 1, 1], [], []>} : vector<32x8xf32>, vector<8x32xf32>, vector<32x32xf32> -> vector<32x32xf32>
    %274 = arith.addf %253, %273 : vector<32x32xf32>
    %275 = arith.addf %181, %274 : vector<32x32xf32>
    %c0_159 = arith.constant 0 : index
    %c0_160 = arith.constant 0 : index
    %276 = vector.load %arg25[%c0_159, %c0_160] : memref<1x32xf32, #tpu.memory_space<vmem>>, vector<1x32xf32>
    %277 = vector.broadcast %276 : vector<1x32xf32> to vector<32x32xf32>
    %278 = arith.addf %275, %277 : vector<32x32xf32>
    %c0_161 = arith.constant 0 : index
    %c0_162 = arith.constant 0 : index
    %279 = vector.load %arg26[%c0_161, %c0_162] : memref<1x32xf32, #tpu.memory_space<vmem>>, vector<1x32xf32>
    %c0_163 = arith.constant 0 : index
    %c0_164 = arith.constant 0 : index
    %280 = vector.load %arg27[%c0_163, %c0_164] : memref<1x32xf32, #tpu.memory_space<vmem>>, vector<1x32xf32>
    %cst_165 = arith.constant dense<0.000000e+00> : vector<32xf32>
    %281 = vector.multi_reduction <add>, %278, %cst_165 [1] : vector<32x32xf32> to vector<32xf32>
    %282 = vector.shape_cast %281 : vector<32xf32> to vector<32x1xf32>
    %cst_166 = arith.constant 3.200000e+01 : f32
    %283 = vector.broadcast %cst_166 : f32 to vector<32x1xf32>
    %284 = arith.divf %282, %283 : vector<32x1xf32>
    %285 = vector.broadcast %284 : vector<32x1xf32> to vector<32x32xf32>
    %286 = arith.subf %278, %285 : vector<32x32xf32>
    %287 = arith.mulf %286, %286 : vector<32x32xf32>
    %cst_167 = arith.constant dense<0.000000e+00> : vector<32xf32>
    %288 = vector.multi_reduction <add>, %287, %cst_167 [1] : vector<32x32xf32> to vector<32xf32>
    %289 = vector.shape_cast %288 : vector<32xf32> to vector<32x1xf32>
    %cst_168 = arith.constant 3.200000e+01 : f32
    %290 = vector.broadcast %cst_168 : f32 to vector<32x1xf32>
    %291 = arith.divf %289, %290 : vector<32x1xf32>
    %292 = vector.broadcast %284 : vector<32x1xf32> to vector<32x32xf32>
    %293 = arith.subf %278, %292 : vector<32x32xf32>
    %cst_169 = arith.constant 9.99999974E-6 : f32
    %294 = vector.broadcast %cst_169 : f32 to vector<32x1xf32>
    %295 = arith.addf %291, %294 : vector<32x1xf32>
    %296 = math.rsqrt %295 : vector<32x1xf32>
    %297 = vector.broadcast %296 : vector<32x1xf32> to vector<32x32xf32>
    %298 = arith.mulf %293, %297 : vector<32x32xf32>
    %299 = vector.broadcast %279 : vector<1x32xf32> to vector<32x32xf32>
    %300 = arith.mulf %298, %299 : vector<32x32xf32>
    %301 = vector.broadcast %280 : vector<1x32xf32> to vector<32x32xf32>
    %302 = arith.addf %300, %301 : vector<32x32xf32>
    %c0_170 = arith.constant 0 : index
    %c0_171 = arith.constant 0 : index
    %303 = vector.load %arg28[%c0_170, %c0_171] : memref<32x32xf32, #tpu.memory_space<vmem>>, vector<32x32xf32>
    tpu.vector_store %arg28[%c0_170, %c0_171], %302 {strides = array<i32>} : memref<32x32xf32, #tpu.memory_space<vmem>>, vector<32x32xf32>,
    return
  }
  func.func @transform_0(%arg0: i32) -> (i32, i32) {
    %c0_i32 = arith.constant 0 : i32
    %c0_i32_0 = arith.constant 0 : i32
    return %arg0, %c0_i32 : i32, i32
  }
  func.func @transform_1(%arg0: i32) -> (i32, i32) {
    %c0_i32 = arith.constant 0 : i32
    %c0_i32_0 = arith.constant 0 : i32
    %c0_i32_1 = arith.constant 0 : i32
    return %c0_i32, %c0_i32_0 : i32, i32
  }
  func.func @transform_2(%arg0: i32) -> (i32, i32) {
    %c0_i32 = arith.constant 0 : i32
    %c0_i32_0 = arith.constant 0 : i32
    %c0_i32_1 = arith.constant 0 : i32
    return %c0_i32, %c0_i32_0 : i32, i32
  }
  func.func @transform_3(%arg0: i32) -> (i32, i32) {
    %c0_i32 = arith.constant 0 : i32
    %c0_i32_0 = arith.constant 0 : i32
    %c0_i32_1 = arith.constant 0 : i32
    return %c0_i32, %c0_i32_0 : i32, i32
  }
  func.func @transform_4(%arg0: i32) -> (i32, i32, i32) {
    %c0_i32 = arith.constant 0 : i32
    %c0_i32_0 = arith.constant 0 : i32
    %c0_i32_1 = arith.constant 0 : i32
    %c0_i32_2 = arith.constant 0 : i32
    return %c0_i32, %c0_i32_0, %c0_i32_1 : i32, i32, i32
  }
  func.func @transform_5(%arg0: i32) -> (i32, i32) {
    %c0_i32 = arith.constant 0 : i32
    %c0_i32_0 = arith.constant 0 : i32
    %c0_i32_1 = arith.constant 0 : i32
    return %c0_i32, %c0_i32_0 : i32, i32
  }
  func.func @transform_6(%arg0: i32) -> (i32, i32) {
    %c0_i32 = arith.constant 0 : i32
    %c0_i32_0 = arith.constant 0 : i32
    %c0_i32_1 = arith.constant 0 : i32
    return %c0_i32, %c0_i32_0 : i32, i32
  }
  func.func @transform_7(%arg0: i32) -> (i32, i32) {
    %c0_i32 = arith.constant 0 : i32
    %c0_i32_0 = arith.constant 0 : i32
    %c0_i32_1 = arith.constant 0 : i32
    return %c0_i32, %c0_i32_0 : i32, i32
  }
  func.func @transform_8(%arg0: i32) -> (i32, i32) {
    %c0_i32 = arith.constant 0 : i32
    %c0_i32_0 = arith.constant 0 : i32
    %c0_i32_1 = arith.constant 0 : i32
    return %c0_i32, %c0_i32_0 : i32, i32
  }
  func.func @transform_9(%arg0: i32) -> (i32, i32) {
    %c0_i32 = arith.constant 0 : i32
    %c0_i32_0 = arith.constant 0 : i32
    %c0_i32_1 = arith.constant 0 : i32
    return %c0_i32, %c0_i32_0 : i32, i32
  }
  func.func @transform_10(%arg0: i32) -> (i32, i32, i32) {
    %c0_i32 = arith.constant 0 : i32
    %c0_i32_0 = arith.constant 0 : i32
    %c0_i32_1 = arith.constant 0 : i32
    %c0_i32_2 = arith.constant 0 : i32
    return %c0_i32, %c0_i32_0, %c0_i32_1 : i32, i32, i32
  }
  func.func @transform_11(%arg0: i32) -> (i32, i32, i32) {
    %c0_i32 = arith.constant 0 : i32
    %c0_i32_0 = arith.constant 0 : i32
    %c0_i32_1 = arith.constant 0 : i32
    %c0_i32_2 = arith.constant 0 : i32
    return %c0_i32, %c0_i32_0, %c0_i32_1 : i32, i32, i32
  }
  func.func @transform_12(%arg0: i32) -> (i32, i32, i32) {
    %c0_i32 = arith.constant 0 : i32
    %c0_i32_0 = arith.constant 0 : i32
    %c0_i32_1 = arith.constant 0 : i32
    %c0_i32_2 = arith.constant 0 : i32
    return %c0_i32, %c0_i32_0, %c0_i32_1 : i32, i32, i32
  }
  func.func @transform_13(%arg0: i32) -> (i32, i32, i32) {
    %c0_i32 = arith.constant 0 : i32
    %c0_i32_0 = arith.constant 0 : i32
    %c0_i32_1 = arith.constant 0 : i32
    %c0_i32_2 = arith.constant 0 : i32
    return %c0_i32, %c0_i32_0, %c0_i32_1 : i32, i32, i32
  }
  func.func @transform_14(%arg0: i32) -> (i32, i32, i32) {
    %c0_i32 = arith.constant 0 : i32
    %c0_i32_0 = arith.constant 0 : i32
    %c0_i32_1 = arith.constant 0 : i32
    %c0_i32_2 = arith.constant 0 : i32
    return %c0_i32, %c0_i32_0, %c0_i32_1 : i32, i32, i32
  }
  func.func @transform_15(%arg0: i32) -> (i32, i32, i32) {
    %c0_i32 = arith.constant 0 : i32
    %c0_i32_0 = arith.constant 0 : i32
    %c0_i32_1 = arith.constant 0 : i32
    %c0_i32_2 = arith.constant 0 : i32
    return %c0_i32, %c0_i32_0, %c0_i32_1 : i32, i32, i32
  }
  func.func @transform_16(%arg0: i32) -> (i32, i32, i32) {
    %c0_i32 = arith.constant 0 : i32
    %c0_i32_0 = arith.constant 0 : i32
    %c0_i32_1 = arith.constant 0 : i32
    %c0_i32_2 = arith.constant 0 : i32
    return %c0_i32, %c0_i32_0, %c0_i32_1 : i32, i32, i32
  }
  func.func @transform_17(%arg0: i32) -> (i32, i32, i32) {
    %c0_i32 = arith.constant 0 : i32
    %c0_i32_0 = arith.constant 0 : i32
    %c0_i32_1 = arith.constant 0 : i32
    %c0_i32_2 = arith.constant 0 : i32
    return %c0_i32, %c0_i32_0, %c0_i32_1 : i32, i32, i32
  }
  func.func @transform_18(%arg0: i32) -> (i32, i32, i32) {
    %c0_i32 = arith.constant 0 : i32
    %c0_i32_0 = arith.constant 0 : i32
    %c0_i32_1 = arith.constant 0 : i32
    %c0_i32_2 = arith.constant 0 : i32
    return %c0_i32, %c0_i32_0, %c0_i32_1 : i32, i32, i32
  }
  func.func @transform_19(%arg0: i32) -> (i32, i32, i32) {
    %c0_i32 = arith.constant 0 : i32
    %c0_i32_0 = arith.constant 0 : i32
    %c0_i32_1 = arith.constant 0 : i32
    %c0_i32_2 = arith.constant 0 : i32
    return %c0_i32, %c0_i32_0, %c0_i32_1 : i32, i32, i32
  }
  func.func @transform_20(%arg0: i32) -> (i32, i32, i32) {
    %c0_i32 = arith.constant 0 : i32
    %c0_i32_0 = arith.constant 0 : i32
    %c0_i32_1 = arith.constant 0 : i32
    %c0_i32_2 = arith.constant 0 : i32
    return %c0_i32, %c0_i32_0, %c0_i32_1 : i32, i32, i32
  }
  func.func @transform_21(%arg0: i32) -> (i32, i32) {
    %c0_i32 = arith.constant 0 : i32
    %c0_i32_0 = arith.constant 0 : i32
    %c0_i32_1 = arith.constant 0 : i32
    return %c0_i32, %c0_i32_0 : i32, i32
  }
  func.func @transform_22(%arg0: i32) -> (i32, i32) {
    %c0_i32 = arith.constant 0 : i32
    %c0_i32_0 = arith.constant 0 : i32
    %c0_i32_1 = arith.constant 0 : i32
    return %c0_i32, %c0_i32_0 : i32, i32
  }
  func.func @transform_23(%arg0: i32) -> (i32, i32) {
    %c0_i32 = arith.constant 0 : i32
    %c0_i32_0 = arith.constant 0 : i32
    %c0_i32_1 = arith.constant 0 : i32
    return %c0_i32, %c0_i32_0 : i32, i32
  }
  func.func @transform_24(%arg0: i32) -> (i32, i32) {
    %c0_i32 = arith.constant 0 : i32
    %c0_i32_0 = arith.constant 0 : i32
    %c0_i32_1 = arith.constant 0 : i32
    return %c0_i32, %c0_i32_0 : i32, i32
  }
  func.func @transform_25(%arg0: i32) -> (i32, i32) {
    %c0_i32 = arith.constant 0 : i32
    %c0_i32_0 = arith.constant 0 : i32
    %c0_i32_1 = arith.constant 0 : i32
    return %c0_i32, %c0_i32_0 : i32, i32
  }
  func.func @transform_26(%arg0: i32) -> (i32, i32) {
    %c0_i32 = arith.constant 0 : i32
    %c0_i32_0 = arith.constant 0 : i32
    %c0_i32_1 = arith.constant 0 : i32
    return %c0_i32, %c0_i32_0 : i32, i32
  }
  func.func @transform_27(%arg0: i32) -> (i32, i32) {
    %c0_i32 = arith.constant 0 : i32
    %c0_i32_0 = arith.constant 0 : i32
    return %arg0, %c0_i32 : i32, i32
  }
}

</mosaic_0001>

<llo_original>
// kernel: forward.3
$region0: #{forward.3}
  #allocation0 [shape = 'u32[]', space=smem, size = 0x4, offset = 0x4, fixed_abs, tag = 'smem constant byte address 0x4 - core index']
  #allocation1 [shape = 'u32[144,128]{1,0:T(1,128)}', space=vmem, size = 0x12000, scoped, tag = 'internal scratch']
  #allocation2 [shape = 'f32[4,16,32]{2,1,0:T(8,128)}', space=vmem, size = 0x8000, scoped, tag = 'scratch operand']
  %s0 = inlined_call_operand.vmem [shape: f32[4,32,32], index: 0, kind: input, shape index: {}]
  %s1 = inlined_call_operand.vmem [shape: f32[32,128], index: 1, kind: input, shape index: {}]
  %s2 = inlined_call_operand.vmem [shape: f32[32,128], index: 2, kind: input, shape index: {}]
  %s3 = inlined_call_operand.vmem [shape: f32[1,128], index: 3, kind: input, shape index: {}]
  %s4 = inlined_call_operand.vmem [shape: f32[32,128], index: 4, kind: input, shape index: {}]
  %s5 = inlined_call_operand.vmem [shape: f32[32,128], index: 5, kind: input, shape index: {}]
  %s6 = inlined_call_operand.vmem [shape: f32[1,128], index: 6, kind: input, shape index: {}]
  %s7 = inlined_call_operand.vmem [shape: f32[32,32], index: 7, kind: input, shape index: {}]
  %s8 = inlined_call_operand.vmem [shape: f32[1,32], index: 8, kind: input, shape index: {}]
  %s9 = inlined_call_operand.vmem [shape: f32[32,64], index: 9, kind: input, shape index: {}]
  %s10 = inlined_call_operand.vmem [shape: f32[1,64], index: 10, kind: input, shape index: {}]
  %s11 = inlined_call_operand.vmem [shape: f32[32,4], index: 11, kind: input, shape index: {}]
  %s12 = inlined_call_operand.vmem [shape: f32[32,32], index: 12, kind: input, shape index: {}]
  %s13 = inlined_call_operand.vmem [shape: f32[1,32], index: 13, kind: input, shape index: {}]
  %s14 = inlined_call_operand.vmem [shape: f32[1,32], index: 14, kind: input, shape index: {}]
  %s15 = inlined_call_operand.hbm [shape: f32[1,32], index: 15, kind: input, shape index: {}]
  %s16 = inlined_call_operand.vmem [shape: f32[32,16], index: 16, kind: input, shape index: {}]
  %s17 = inlined_call_operand.hbm [shape: f32[1,16], index: 17, kind: input, shape index: {}]
  %s18 = inlined_call_operand.vmem [shape: f32[16,4], index: 18, kind: input, shape index: {}]
  %s19 = inlined_call_operand.hbm [shape: f32[1,4], index: 19, kind: input, shape index: {}]
  %s20 = inlined_call_operand.vmem [shape: f32[32,4], index: 20, kind: output, shape index: {}]
  %s21 = sld [smem:[#allocation0]]
  $region163: #{forward.3} parent=0
    _
  %s23 = ssub.s32 1, %s21
  %s24 = scalar_select 0, %s23, %s21
  $region1: #{forward.3} parent=0
    #allocation3 [shape = 'u8[65536]{0}', space=vmem, size = 0x10000, scoped, tag = 'input window, operand 0']
    #allocation4 [shape = 'u8[512]{0}', space=vmem, size = 0x400, scoped, tag = 'input window, operand 15, single buffered']
    #allocation5 [shape = 's32[2]{0}', space=sflag, size = 0x8, scoped, tag = 'scoped memory for forward.3']
    #allocation6 [shape = 'u8[512]{0}', space=vmem, size = 0x400, scoped, tag = 'input window, operand 17, single buffered']
    #allocation7 [shape = 's32[1]{0}', space=sflag, size = 0x4, scoped, tag = 'scoped memory for forward.3']
    #allocation8 [shape = 'u8[512]{0}', space=vmem, size = 0x400, scoped, tag = 'input window, operand 19, single buffered']
    %25 = vsyncpa [#allocation5], 0
    %26 = vsyncpa [#allocation7], 0
    loop: start=0, step=1, limit=4
    $region2: #{forward.3} parent=1 // loop_pre_header
      _
    $region3: #{forward.3} parent=1 // loop_header
      %s28 = sphi 0, %s32
      %p29 = scmp.ge.s32.totalorder %s28, 4
      %s38 = sphi 0, %s40
      %s41 = sphi 0, %s38
      %s42 = sphi 0, %s41
      %s58 = sphi 0, %s42
      %s62 = sphi 0, %s62
      %s64 = sphi 0, %s62
      %s65 = sphi 0, %s64
      %s79 = sphi 0, %s65
      %s83 = sphi 0, %s83
      %s85 = sphi 0, %s83
      %s86 = sphi 0, %s85
      %s100 = sphi 0, %s86
      %s104 = sphi 0, %s104
      %s106 = sphi 0, %s104
      %s107 = sphi 0, %s106
      %s121 = sphi 0, %s107
      %s125 = sphi 0, %s125
      %s127 = sphi 0, %s125
      %s128 = sphi 0, %s127
      %s142 = sphi 0, %s128
      %s146 = sphi 0, %s146
      %s148 = sphi 0, %s146
      %s149 = sphi 0, %s148
      %s163 = sphi 0, %s149
      %s167 = sphi 0, %s167
      %s169 = sphi 0, %s167
      %s170 = sphi 0, %s169
      %s184 = sphi 0, %s170
      %s188 = sphi 0, %s188
      %s190 = sphi 0, %s188
      %s191 = sphi 0, %s190
      %s205 = sphi 0, %s191
      %s209 = sphi 0, %s209
      %s211 = sphi 0, %s209
      %s212 = sphi 0, %s211
      %s226 = sphi 0, %s212
      %s230 = sphi 0, %s230
      %s232 = sphi 0, %s230
      %s233 = sphi 0, %s232
      %s247 = sphi 0, %s233
      %s251 = sphi 0, %s251
      %s253 = sphi 0, %s251
      %s254 = sphi 0, %s253
      %s268 = sphi 0, %s254
      %s272 = sphi 0, %s272
      %s274 = sphi 0, %s272
      %s275 = sphi 0, %s274
      %s289 = sphi 0, %s275
      %s293 = sphi 0, %s293
      %s295 = sphi 0, %s293
      %s296 = sphi 0, %s295
      %s310 = sphi 0, %s296
      %s314 = sphi 0, %s314
      %s316 = sphi 0, %s314
      %s317 = sphi 0, %s316
      %s331 = sphi 0, %s317
      %s335 = sphi 0, %s335
      %s337 = sphi 0, %s335
      %s338 = sphi 0, %s337
      %s352 = sphi 0, %s338
      %s356 = sphi 0, %s356
      %s358 = sphi 0, %s356
      %s359 = sphi 0, %s358
      %s373 = sphi 0, %s359
      %s377 = sphi 0, %s377
      %s379 = sphi 0, %s377
      %s380 = sphi 0, %s379
      %s394 = sphi 0, %s380
      %s398 = sphi 0, %s398
      %s400 = sphi 0, %s398
      %s401 = sphi 0, %s400
      %s415 = sphi 0, %s401
      %s419 = sphi 0, %s419
      %s421 = sphi 0, %s419
      %s422 = sphi 0, %s421
      %s436 = sphi 0, %s422
      %s440 = sphi 0, %s440
      %s442 = sphi 0, %s440
      %s443 = sphi 0, %s442
      %s457 = sphi 0, %s443
      %s463 = sphi 0, %s465
      %s466 = sphi 0, %s463
      %s467 = sphi 0, %s466
      %s483 = sphi 0, %s467
    $region4: #{forward.3} parent=1 // loop_header_branch
      %31 = sbr.rel (%p29) target = $region8
    $region5: #{forward.3} parent=1 // loop_body
      %s33 = ssub.s32 %s28, 1
      %s34 = ssub.s32 %s28, 2
      %s35 = sadd.s32 %s28, 1
      %s36 = ssub.s32 %s28, %s35
      %p37 = scmp.eq.s32.totalorder %s36, 0
      %s39 = sadd.s32 %s38, 1
      %s40 = scalar_select %p37, %s38, %s39
      %p43 = pneg %p37
      %p44 = scmp.eq.s32.totalorder %s28, 1
      %p45 = por %p43, %p44
      %p46 = scmp.ne.s32.totalorder %s38, %s41
      %p47 = scmp.eq.s32.totalorder %s28, 0
      %p48 = por %p46, %p47
      %p49 = scmp.ne.s32.totalorder %s38, %s41
      %p50 = scmp.eq.s32.totalorder %s33, 1
      %p51 = por %p49, %p50
      %p52 = scmp.ne.s32.totalorder %s41, %s42
      %p53 = scmp.eq.s32.totalorder %s33, 0
      %p54 = por %p52, %p53
      %p55 = scmp.ne.s32.totalorder %s41, %s42
      %p56 = scmp.eq.s32.totalorder %s34, 1
      %p57 = por %p55, %p56
      %p59 = scmp.ne.s32.totalorder %s42, %s58
      %p60 = scmp.eq.s32.totalorder %s34, 0
      %p61 = por %p59, %p60
      %s63 = sadd.s32 %s62, 1
      %p66 = scmp.eq.s32.totalorder %s28, 1
      %p67 = scmp.ne.s32.totalorder %s62, %s64
      %p68 = scmp.eq.s32.totalorder %s28, 0
      %p69 = por %p67, %p68
      %p70 = scmp.ne.s32.totalorder %s62, %s64
      %p71 = scmp.eq.s32.totalorder %s33, 1
      %p72 = por %p70, %p71
      %p73 = scmp.ne.s32.totalorder %s64, %s65
      %p74 = scmp.eq.s32.totalorder %s33, 0
      %p75 = por %p73, %p74
      %p76 = scmp.ne.s32.totalorder %s64, %s65
      %p77 = scmp.eq.s32.totalorder %s34, 1
      %p78 = por %p76, %p77
      %p80 = scmp.ne.s32.totalorder %s65, %s79
      %p81 = scmp.eq.s32.totalorder %s34, 0
      %p82 = por %p80, %p81
      %s84 = sadd.s32 %s83, 1
      %p87 = scmp.eq.s32.totalorder %s28, 1
      %p88 = scmp.ne.s32.totalorder %s83, %s85
      %p89 = scmp.eq.s32.totalorder %s28, 0
      %p90 = por %p88, %p89
      %p91 = scmp.ne.s32.totalorder %s83, %s85
      %p92 = scmp.eq.s32.totalorder %s33, 1
      %p93 = por %p91, %p92
      %p94 = scmp.ne.s32.totalorder %s85, %s86
      %p95 = scmp.eq.s32.totalorder %s33, 0
      %p96 = por %p94, %p95
      %p97 = scmp.ne.s32.totalorder %s85, %s86
      %p98 = scmp.eq.s32.totalorder %s34, 1
      %p99 = por %p97, %p98
      %p101 = scmp.ne.s32.totalorder %s86, %s100
      %p102 = scmp.eq.s32.totalorder %s34, 0
      %p103 = por %p101, %p102
      %s105 = sadd.s32 %s104, 1
      %p108 = scmp.eq.s32.totalorder %s28, 1
      %p109 = scmp.ne.s32.totalorder %s104, %s106
      %p110 = scmp.eq.s32.totalorder %s28, 0
      %p111 = por %p109, %p110
      %p112 = scmp.ne.s32.totalorder %s104, %s106
      %p113 = scmp.eq.s32.totalorder %s33, 1
      %p114 = por %p112, %p113
      %p115 = scmp.ne.s32.totalorder %s106, %s107
      %p116 = scmp.eq.s32.totalorder %s33, 0
      %p117 = por %p115, %p116
      %p118 = scmp.ne.s32.totalorder %s106, %s107
      %p119 = scmp.eq.s32.totalorder %s34, 1
      %p120 = por %p118, %p119
      %p122 = scmp.ne.s32.totalorder %s107, %s121
      %p123 = scmp.eq.s32.totalorder %s34, 0
      %p124 = por %p122, %p123
      %s126 = sadd.s32 %s125, 1
      %p129 = scmp.eq.s32.totalorder %s28, 1
      %p130 = scmp.ne.s32.totalorder %s125, %s127
      %p131 = scmp.eq.s32.totalorder %s28, 0
      %p132 = por %p130, %p131
      %p133 = scmp.ne.s32.totalorder %s125, %s127
      %p134 = scmp.eq.s32.totalorder %s33, 1
      %p135 = por %p133, %p134
      %p136 = scmp.ne.s32.totalorder %s127, %s128
      %p137 = scmp.eq.s32.totalorder %s33, 0
      %p138 = por %p136, %p137
      %p139 = scmp.ne.s32.totalorder %s127, %s128
      %p140 = scmp.eq.s32.totalorder %s34, 1
      %p141 = por %p139, %p140
      %p143 = scmp.ne.s32.totalorder %s128, %s142
      %p144 = scmp.eq.s32.totalorder %s34, 0
      %p145 = por %p143, %p144
      %s147 = sadd.s32 %s146, 1
      %p150 = scmp.eq.s32.totalorder %s28, 1
      %p151 = scmp.ne.s32.totalorder %s146, %s148
      %p152 = scmp.eq.s32.totalorder %s28, 0
      %p153 = por %p151, %p152
      %p154 = scmp.ne.s32.totalorder %s146, %s148
      %p155 = scmp.eq.s32.totalorder %s33, 1
      %p156 = por %p154, %p155
      %p157 = scmp.ne.s32.totalorder %s148, %s149
      %p158 = scmp.eq.s32.totalorder %s33, 0
      %p159 = por %p157, %p158
      %p160 = scmp.ne.s32.totalorder %s148, %s149
      %p161 = scmp.eq.s32.totalorder %s34, 1
      %p162 = por %p160, %p161
      %p164 = scmp.ne.s32.totalorder %s149, %s163
      %p165 = scmp.eq.s32.totalorder %s34, 0
      %p166 = por %p164, %p165
      %s168 = sadd.s32 %s167, 1
      %p171 = scmp.eq.s32.totalorder %s28, 1
      %p172 = scmp.ne.s32.totalorder %s167, %s169
      %p173 = scmp.eq.s32.totalorder %s28, 0
      %p174 = por %p172, %p173
      %p175 = scmp.ne.s32.totalorder %s167, %s169
      %p176 = scmp.eq.s32.totalorder %s33, 1
      %p177 = por %p175, %p176
      %p178 = scmp.ne.s32.totalorder %s169, %s170
      %p179 = scmp.eq.s32.totalorder %s33, 0
      %p180 = por %p178, %p179
      %p181 = scmp.ne.s32.totalorder %s169, %s170
      %p182 = scmp.eq.s32.totalorder %s34, 1
      %p183 = por %p181, %p182
      %p185 = scmp.ne.s32.totalorder %s170, %s184
      %p186 = scmp.eq.s32.totalorder %s34, 0
      %p187 = por %p185, %p186
      %s189 = sadd.s32 %s188, 1
      %p192 = scmp.eq.s32.totalorder %s28, 1
      %p193 = scmp.ne.s32.totalorder %s188, %s190
      %p194 = scmp.eq.s32.totalorder %s28, 0
      %p195 = por %p193, %p194
      %p196 = scmp.ne.s32.totalorder %s188, %s190
      %p197 = scmp.eq.s32.totalorder %s33, 1
      %p198 = por %p196, %p197
      %p199 = scmp.ne.s32.totalorder %s190, %s191
      %p200 = scmp.eq.s32.totalorder %s33, 0
      %p201 = por %p199, %p200
      %p202 = scmp.ne.s32.totalorder %s190, %s191
      %p203 = scmp.eq.s32.totalorder %s34, 1
      %p204 = por %p202, %p203
      %p206 = scmp.ne.s32.totalorder %s191, %s205
      %p207 = scmp.eq.s32.totalorder %s34, 0
      %p208 = por %p206, %p207
      %s210 = sadd.s32 %s209, 1
      %p213 = scmp.eq.s32.totalorder %s28, 1
      %p214 = scmp.ne.s32.totalorder %s209, %s211
      %p215 = scmp.eq.s32.totalorder %s28, 0
      %p216 = por %p214, %p215
      %p217 = scmp.ne.s32.totalorder %s209, %s211
      %p218 = scmp.eq.s32.totalorder %s33, 1
      %p219 = por %p217, %p218
      %p220 = scmp.ne.s32.totalorder %s211, %s212
      %p221 = scmp.eq.s32.totalorder %s33, 0
      %p222 = por %p220, %p221
      %p223 = scmp.ne.s32.totalorder %s211, %s212
      %p224 = scmp.eq.s32.totalorder %s34, 1
      %p225 = por %p223, %p224
      %p227 = scmp.ne.s32.totalorder %s212, %s226
      %p228 = scmp.eq.s32.totalorder %s34, 0
      %p229 = por %p227, %p228
      %s231 = sadd.s32 %s230, 1
      %p234 = scmp.eq.s32.totalorder %s28, 1
      %p235 = scmp.ne.s32.totalorder %s230, %s232
      %p236 = scmp.eq.s32.totalorder %s28, 0
      %p237 = por %p235, %p236
      %p238 = scmp.ne.s32.totalorder %s230, %s232
      %p239 = scmp.eq.s32.totalorder %s33, 1
      %p240 = por %p238, %p239
      %p241 = scmp.ne.s32.totalorder %s232, %s233
      %p242 = scmp.eq.s32.totalorder %s33, 0
      %p243 = por %p241, %p242
      %p244 = scmp.ne.s32.totalorder %s232, %s233
      %p245 = scmp.eq.s32.totalorder %s34, 1
      %p246 = por %p244, %p245
      %p248 = scmp.ne.s32.totalorder %s233, %s247
      %p249 = scmp.eq.s32.totalorder %s34, 0
      %p250 = por %p248, %p249
      %s252 = sadd.s32 %s251, 1
      %p255 = scmp.eq.s32.totalorder %s28, 1
      %p256 = scmp.ne.s32.totalorder %s251, %s253
      %p257 = scmp.eq.s32.totalorder %s28, 0
      %p258 = por %p256, %p257
      %p259 = scmp.ne.s32.totalorder %s251, %s253
      %p260 = scmp.eq.s32.totalorder %s33, 1
      %p261 = por %p259, %p260
      %p262 = scmp.ne.s32.totalorder %s253, %s254
      %p263 = scmp.eq.s32.totalorder %s33, 0
      %p264 = por %p262, %p263
      %p265 = scmp.ne.s32.totalorder %s253, %s254
      %p266 = scmp.eq.s32.totalorder %s34, 1
      %p267 = por %p265, %p266
      %p269 = scmp.ne.s32.totalorder %s254, %s268
      %p270 = scmp.eq.s32.totalorder %s34, 0
      %p271 = por %p269, %p270
      %s273 = sadd.s32 %s272, 1
      %p276 = scmp.eq.s32.totalorder %s28, 1
      %p277 = scmp.ne.s32.totalorder %s272, %s274
      %p278 = scmp.eq.s32.totalorder %s28, 0
      %p279 = por %p277, %p278
      %p280 = scmp.ne.s32.totalorder %s272, %s274
      %p281 = scmp.eq.s32.totalorder %s33, 1
      %p282 = por %p280, %p281
      %p283 = scmp.ne.s32.totalorder %s274, %s275
      %p284 = scmp.eq.s32.totalorder %s33, 0
      %p285 = por %p283, %p284
      %p286 = scmp.ne.s32.totalorder %s274, %s275
      %p287 = scmp.eq.s32.totalorder %s34, 1
      %p288 = por %p286, %p287
      %p290 = scmp.ne.s32.totalorder %s275, %s289
      %p291 = scmp.eq.s32.totalorder %s34, 0
      %p292 = por %p290, %p291
      %s294 = sadd.s32 %s293, 1
      %p297 = scmp.eq.s32.totalorder %s28, 1
      %p298 = scmp.ne.s32.totalorder %s293, %s295
      %p299 = scmp.eq.s32.totalorder %s28, 0
      %p300 = por %p298, %p299
      %p301 = scmp.ne.s32.totalorder %s293, %s295
      %p302 = scmp.eq.s32.totalorder %s33, 1
      %p303 = por %p301, %p302
      %p304 = scmp.ne.s32.totalorder %s295, %s296
      %p305 = scmp.eq.s32.totalorder %s33, 0
      %p306 = por %p304, %p305
      %p307 = scmp.ne.s32.totalorder %s295, %s296
      %p308 = scmp.eq.s32.totalorder %s34, 1
      %p309 = por %p307, %p308
      %p311 = scmp.ne.s32.totalorder %s296, %s310
      %p312 = scmp.eq.s32.totalorder %s34, 0
      %p313 = por %p311, %p312
      %s315 = sadd.s32 %s314, 1
      %p318 = scmp.eq.s32.totalorder %s28, 1
      %p319 = scmp.ne.s32.totalorder %s314, %s316
      %p320 = scmp.eq.s32.totalorder %s28, 0
      %p321 = por %p319, %p320
      %p322 = scmp.ne.s32.totalorder %s314, %s316
      %p323 = scmp.eq.s32.totalorder %s33, 1
      %p324 = por %p322, %p323
      %p325 = scmp.ne.s32.totalorder %s316, %s317
      %p326 = scmp.eq.s32.totalorder %s33, 0
      %p327 = por %p325, %p326
      %p328 = scmp.ne.s32.totalorder %s316, %s317
      %p329 = scmp.eq.s32.totalorder %s34, 1
      %p330 = por %p328, %p329
      %p332 = scmp.ne.s32.totalorder %s317, %s331
      %p333 = scmp.eq.s32.totalorder %s34, 0
      %p334 = por %p332, %p333
      %s336 = sadd.s32 %s335, 1
      %p339 = scmp.eq.s32.totalorder %s28, 1
      %p340 = scmp.ne.s32.totalorder %s335, %s337
      %p341 = scmp.eq.s32.totalorder %s28, 0
      %p342 = por %p340, %p341
      %p343 = scmp.ne.s32.totalorder %s335, %s337
      %p344 = scmp.eq.s32.totalorder %s33, 1
      %p345 = por %p343, %p344
      %p346 = scmp.ne.s32.totalorder %s337, %s338
      %p347 = scmp.eq.s32.totalorder %s33, 0
      %p348 = por %p346, %p347
      %p349 = scmp.ne.s32.totalorder %s337, %s338
      %p350 = scmp.eq.s32.totalorder %s34, 1
      %p351 = por %p349, %p350
      %p353 = scmp.ne.s32.totalorder %s338, %s352
      %p354 = scmp.eq.s32.totalorder %s34, 0
      %p355 = por %p353, %p354
      %s357 = sadd.s32 %s356, 1
      %p360 = scmp.eq.s32.totalorder %s28, 1
      %p361 = scmp.ne.s32.totalorder %s356, %s358
      %p362 = scmp.eq.s32.totalorder %s28, 0
      %p363 = por %p361, %p362
      %p364 = scmp.ne.s32.totalorder %s356, %s358
      %p365 = scmp.eq.s32.totalorder %s33, 1
      %p366 = por %p364, %p365
      %p367 = scmp.ne.s32.totalorder %s358, %s359
      %p368 = scmp.eq.s32.totalorder %s33, 0
      %p369 = por %p367, %p368
      %p370 = scmp.ne.s32.totalorder %s358, %s359
      %p371 = scmp.eq.s32.totalorder %s34, 1
      %p372 = por %p370, %p371
      %p374 = scmp.ne.s32.totalorder %s359, %s373
      %p375 = scmp.eq.s32.totalorder %s34, 0
      %p376 = por %p374, %p375
      %s378 = sadd.s32 %s377, 1
      %p381 = scmp.eq.s32.totalorder %s28, 1
      %p382 = scmp.ne.s32.totalorder %s377, %s379
      %p383 = scmp.eq.s32.totalorder %s28, 0
      %p384 = por %p382, %p383
      %p385 = scmp.ne.s32.totalorder %s377, %s379
      %p386 = scmp.eq.s32.totalorder %s33, 1
      %p387 = por %p385, %p386
      %p388 = scmp.ne.s32.totalorder %s379, %s380
      %p389 = scmp.eq.s32.totalorder %s33, 0
      %p390 = por %p388, %p389
      %p391 = scmp.ne.s32.totalorder %s379, %s380
      %p392 = scmp.eq.s32.totalorder %s34, 1
      %p393 = por %p391, %p392
      %p395 = scmp.ne.s32.totalorder %s380, %s394
      %p396 = scmp.eq.s32.totalorder %s34, 0
      %p397 = por %p395, %p396
      %s399 = sadd.s32 %s398, 1
      %p402 = scmp.eq.s32.totalorder %s28, 1
      %p403 = scmp.ne.s32.totalorder %s398, %s400
      %p404 = scmp.eq.s32.totalorder %s28, 0
      %p405 = por %p403, %p404
      %p406 = scmp.ne.s32.totalorder %s398, %s400
      %p407 = scmp.eq.s32.totalorder %s33, 1
      %p408 = por %p406, %p407
      %p409 = scmp.ne.s32.totalorder %s400, %s401
      %p410 = scmp.eq.s32.totalorder %s33, 0
      %p411 = por %p409, %p410
      %p412 = scmp.ne.s32.totalorder %s400, %s401
      %p413 = scmp.eq.s32.totalorder %s34, 1
      %p414 = por %p412, %p413
      %p416 = scmp.ne.s32.totalorder %s401, %s415
      %p417 = scmp.eq.s32.totalorder %s34, 0
      %p418 = por %p416, %p417
      %s420 = sadd.s32 %s419, 1
      %p423 = scmp.eq.s32.totalorder %s28, 1
      %p424 = scmp.ne.s32.totalorder %s419, %s421
      %p425 = scmp.eq.s32.totalorder %s28, 0
      %p426 = por %p424, %p425
      %p427 = scmp.ne.s32.totalorder %s419, %s421
      %p428 = scmp.eq.s32.totalorder %s33, 1
      %p429 = por %p427, %p428
      %p430 = scmp.ne.s32.totalorder %s421, %s422
      %p431 = scmp.eq.s32.totalorder %s33, 0
      %p432 = por %p430, %p431
      %p433 = scmp.ne.s32.totalorder %s421, %s422
      %p434 = scmp.eq.s32.totalorder %s34, 1
      %p435 = por %p433, %p434
      %p437 = scmp.ne.s32.totalorder %s422, %s436
      %p438 = scmp.eq.s32.totalorder %s34, 0
      %p439 = por %p437, %p438
      %s441 = sadd.s32 %s440, 1
      %p444 = scmp.eq.s32.totalorder %s28, 1
      %p445 = scmp.ne.s32.totalorder %s440, %s442
      %p446 = scmp.eq.s32.totalorder %s28, 0
      %p447 = por %p445, %p446
      %p448 = scmp.ne.s32.totalorder %s440, %s442
      %p449 = scmp.eq.s32.totalorder %s33, 1
      %p450 = por %p448, %p449
      %p451 = scmp.ne.s32.totalorder %s442, %s443
      %p452 = scmp.eq.s32.totalorder %s33, 0
      %p453 = por %p451, %p452
      %p454 = scmp.ne.s32.totalorder %s442, %s443
      %p455 = scmp.eq.s32.totalorder %s34, 1
      %p456 = por %p454, %p455
      %p458 = scmp.ne.s32.totalorder %s443, %s457
      %p459 = scmp.eq.s32.totalorder %s34, 0
      %p460 = por %p458, %p459
      %s461 = ssub.s32 %s28, %s35
      %p462 = scmp.eq.s32.totalorder %s461, 0
      %s464 = sadd.s32 %s463, 1
      %s465 = scalar_select %p462, %s463, %s464
      %p468 = pneg %p462
      %p469 = scmp.eq.s32.totalorder %s28, 1
      %p470 = por %p468, %p469
      %p471 = scmp.ne.s32.totalorder %s463, %s466
      %p472 = scmp.eq.s32.totalorder %s28, 0
      %p473 = por %p471, %p472
      %p474 = scmp.ne.s32.totalorder %s463, %s466
      %p475 = scmp.eq.s32.totalorder %s33, 1
      %p476 = por %p474, %p475
      %p477 = scmp.ne.s32.totalorder %s466, %s467
      %p478 = scmp.eq.s32.totalorder %s33, 0
      %p479 = por %p477, %p478
      %p480 = scmp.ne.s32.totalorder %s466, %s467
      %p481 = scmp.eq.s32.totalorder %s34, 1
      %p482 = por %p480, %p481
      %p484 = scmp.ne.s32.totalorder %s467, %s483
      %p485 = scmp.eq.s32.totalorder %s34, 0
      %p486 = por %p484, %p485
      %p487 = scmp.le.s32.totalorder 1, %s28
      %p488 = scmp.lt.s32.totalorder %s28, 3
      %p489 = pnand %p487, %p488
      %p490 = pneg %p489
      // Predicated region
      $region9: #{forward.3} parent=5 // pred_check
        _
      $region10: #{forward.3} parent=5 // pred_check_branch
        %492 = sbr.rel (%p489) target = $region12
      $region11: #{forward.3} parent=5 // pred_region
        %s493 = ssub.s32 %s28, 1
        // Predicated region
        $region13: #{forward.3} parent=11 // pred_check
          %p494 = pneg %p75
        $region14: #{forward.3} parent=11 // pred_check_branch
          %496 = sbr.rel (%p494) target = $region16
        $region15: #{forward.3} parent=11 // pred_region
          _
        $region16: #{forward.3} parent=11 // pred_fallthru
          _
        // Predicated region
        $region17: #{forward.3} parent=11 // pred_check
          %p497 = pneg %p96
        $region18: #{forward.3} parent=11 // pred_check_branch
          %499 = sbr.rel (%p497) target = $region20
        $region19: #{forward.3} parent=11 // pred_region
          _
        $region20: #{forward.3} parent=11 // pred_fallthru
          _
        // Predicated region
        $region21: #{forward.3} parent=11 // pred_check
          %p500 = pneg %p117
        $region22: #{forward.3} parent=11 // pred_check_branch
          %502 = sbr.rel (%p500) target = $region24
        $region23: #{forward.3} parent=11 // pred_region
          _
        $region24: #{forward.3} parent=11 // pred_fallthru
          _
        // Predicated region
        $region25: #{forward.3} parent=11 // pred_check
          %p503 = pneg %p138
        $region26: #{forward.3} parent=11 // pred_check_branch
          %505 = sbr.rel (%p503) target = $region28
        $region27: #{forward.3} parent=11 // pred_region
          _
        $region28: #{forward.3} parent=11 // pred_fallthru
          _
        // Predicated region
        $region29: #{forward.3} parent=11 // pred_check
          %p506 = pneg %p159
        $region30: #{forward.3} parent=11 // pred_check_branch
          %508 = sbr.rel (%p506) target = $region32
        $region31: #{forward.3} parent=11 // pred_region
          _
        $region32: #{forward.3} parent=11 // pred_fallthru
          _
        // Predicated region
        $region33: #{forward.3} parent=11 // pred_check
          %p509 = pneg %p180
        $region34: #{forward.3} parent=11 // pred_check_branch
          %511 = sbr.rel (%p509) target = $region36
        $region35: #{forward.3} parent=11 // pred_region
          _
        $region36: #{forward.3} parent=11 // pred_fallthru
          _
        // Predicated region
        $region37: #{forward.3} parent=11 // pred_check
          %p512 = pneg %p201
        $region38: #{forward.3} parent=11 // pred_check_branch
          %514 = sbr.rel (%p512) target = $region40
        $region39: #{forward.3} parent=11 // pred_region
          _
        $region40: #{forward.3} parent=11 // pred_fallthru
          _
        // Predicated region
        $region41: #{forward.3} parent=11 // pred_check
          %p515 = pneg %p222
        $region42: #{forward.3} parent=11 // pred_check_branch
          %517 = sbr.rel (%p515) target = $region44
        $region43: #{forward.3} parent=11 // pred_region
          _
        $region44: #{forward.3} parent=11 // pred_fallthru
          _
        // Predicated region
        $region45: #{forward.3} parent=11 // pred_check
          %p518 = pneg %p243
        $region46: #{forward.3} parent=11 // pred_check_branch
          %520 = sbr.rel (%p518) target = $region48
        $region47: #{forward.3} parent=11 // pred_region
          _
        $region48: #{forward.3} parent=11 // pred_fallthru
          _
        // Predicated region
        $region49: #{forward.3} parent=11 // pred_check
          %p521 = pneg %p264
        $region50: #{forward.3} parent=11 // pred_check_branch
          %523 = sbr.rel (%p521) target = $region52
        $region51: #{forward.3} parent=11 // pred_region
          _
        $region52: #{forward.3} parent=11 // pred_fallthru
          _
        // Predicated region
        $region53: #{forward.3} parent=11 // pred_check
          %p524 = pneg %p285
        $region54: #{forward.3} parent=11 // pred_check_branch
          %526 = sbr.rel (%p524) target = $region56
        $region55: #{forward.3} parent=11 // pred_region
          _
        $region56: #{forward.3} parent=11 // pred_fallthru
          _
        // Predicated region
        $region57: #{forward.3} parent=11 // pred_check
          %p527 = pneg %p306
        $region58: #{forward.3} parent=11 // pred_check_branch
          %529 = sbr.rel (%p527) target = $region60
        $region59: #{forward.3} parent=11 // pred_region
          _
        $region60: #{forward.3} parent=11 // pred_fallthru
          _
        // Predicated region
        $region61: #{forward.3} parent=11 // pred_check
          %p530 = pneg %p327
        $region62: #{forward.3} parent=11 // pred_check_branch
          %532 = sbr.rel (%p530) target = $region64
        $region63: #{forward.3} parent=11 // pred_region
          _
        $region64: #{forward.3} parent=11 // pred_fallthru
          _
        // Predicated region
        $region65: #{forward.3} parent=11 // pred_check
          %p533 = pneg %p348
        $region66: #{forward.3} parent=11 // pred_check_branch
          %535 = sbr.rel (%p533) target = $region68
        $region67: #{forward.3} parent=11 // pred_region
          _
        $region68: #{forward.3} parent=11 // pred_fallthru
          _
        // Predicated region
        $region69: #{forward.3} parent=11 // pred_check
          %p536 = pneg %p369
        $region70: #{forward.3} parent=11 // pred_check_branch
          %538 = sbr.rel (%p536) target = $region72
        $region71: #{forward.3} parent=11 // pred_region
          %s540 = ssub.s32 16, 16
          %541 = vsyncadd [#allocation5], %s540
          %s543 = sshll.u32 [#allocation4], 4
          %s544 = int_to_ptr.vmem [resolvable:$true] %s543
          %546 = dma.hbm_to_vmem [thread:$0]  %s15, 16, %s544, [#allocation5]
        $region72: #{forward.3} parent=11 // pred_fallthru
          _
        // Predicated region
        $region73: #{forward.3} parent=11 // pred_check
          %p547 = pneg %p390
        $region74: #{forward.3} parent=11 // pred_check_branch
          %549 = sbr.rel (%p547) target = $region76
        $region75: #{forward.3} parent=11 // pred_region
          _
        $region76: #{forward.3} parent=11 // pred_fallthru
          _
        // Predicated region
        $region77: #{forward.3} parent=11 // pred_check
          %p550 = pneg %p411
        $region78: #{forward.3} parent=11 // pred_check_branch
          %552 = sbr.rel (%p550) target = $region80
        $region79: #{forward.3} parent=11 // pred_region
          %s554 = ssub.s32 16, 16
          %555 = vsyncadd [#allocation7], %s554
          %s557 = sshll.u32 [#allocation6], 4
          %s558 = int_to_ptr.vmem [resolvable:$true] %s557
          %560 = dma.hbm_to_vmem [thread:$0]  %s17, 16, %s558, [#allocation7]
        $region80: #{forward.3} parent=11 // pred_fallthru
          _
        // Predicated region
        $region81: #{forward.3} parent=11 // pred_check
          %p561 = pneg %p432
        $region82: #{forward.3} parent=11 // pred_check_branch
          %563 = sbr.rel (%p561) target = $region84
        $region83: #{forward.3} parent=11 // pred_region
          _
        $region84: #{forward.3} parent=11 // pred_fallthru
          _
        // Predicated region
        $region85: #{forward.3} parent=11 // pred_check
          %p564 = pneg %p453
        $region86: #{forward.3} parent=11 // pred_check_branch
          %566 = sbr.rel (%p564) target = $region88
        $region87: #{forward.3} parent=11 // pred_region
          %s568 = ssub.s32 16, 16
          %569 = vsyncadd [#allocation7], %s568
          %s571 = sshll.u32 [#allocation8], 4
          %s572 = int_to_ptr.vmem [resolvable:$true] %s571
          %574 = dma.hbm_to_vmem [thread:$0]  %s19, 16, %s572, [#allocation7]
        $region88: #{forward.3} parent=11 // pred_fallthru
          _
      $region12: #{forward.3} parent=5 // pred_fallthru
        _
      %p575 = scmp.lt.s32.totalorder %s28, 2
      // Predicated region
      $region89: #{forward.3} parent=5 // pred_check
        %p576 = pneg %p575
      $region90: #{forward.3} parent=5 // pred_check_branch
        %578 = sbr.rel (%p576) target = $region92
      $region91: #{forward.3} parent=5 // pred_region
        // Predicated region
        $region93: #{forward.3} parent=91 // pred_check
          %p579 = pneg %p48
        $region94: #{forward.3} parent=91 // pred_check_branch
          %581 = sbr.rel (%p579) target = $region96
        $region95: #{forward.3} parent=91 // pred_region
          %s582 = sand.u32 %s38, 1
          %s583 = sand.u32 %s38, 1
          %s584 = smul.addr %s583, 64
          %s585 = scalar_lea.vmem [#allocation3], %s584
          %s586 = smul.u32 2, %s28
          %s587 = smul.addr %s586, 8
          %s588 = scalar_lea.vmem %s0, %s587
          // Predicated region
          $region97: #{forward.3} parent=95 // pred_check
            _
          $region98: #{forward.3} parent=95 // pred_check_branch
            %590 = sbr.rel (0) target = $region100
          $region99: #{forward.3} parent=95 // pred_region
            // Predicated region
            $region101: #{forward.3} parent=99 // pred_check
              _
            $region102: #{forward.3} parent=99 // pred_check_branch
              %592 = sbr.rel (0) target = $region104
            $region103: #{forward.3} parent=99 // pred_region
              // Predicated region
              $region116: #{forward.3} parent=103 // pred_check
                _
              $region117: #{forward.3} parent=103 // pred_check_branch
                %621 = sbr.rel (0) target = $region119
              $region118: #{forward.3} parent=103 // pred_region
                loop: start=0, step=1, limit=1
                $region120: #{forward.3} parent=118 // loop_pre_header
                  _
                $region121: #{forward.3} parent=118 // loop_header
                  %s623 = sphi 0, %s627
                  %p624 = scmp.ge.s32.totalorder %s623, 1
                  %s628 = sphi %s588, %s588
                  %s629 = sphi %s585, %s585
                $region122: #{forward.3} parent=118 // loop_header_branch
                  %626 = sbr.rel (%p624) target = $region126
                $region123: #{forward.3} parent=118 // loop_body
                  %v630 = vld [vmem:[%s628] sm:$0xff]
                  %631 = vst [vmem:[%s629] sm:$0xff] %v630
                  %v632 = vld [vmem:[%s628 + $0x8] sm:$0xff]
                  %633 = vst [vmem:[%s629 + $0x8] sm:$0xff] %v632
                  %v634 = vld [vmem:[%s628 + $0x20] sm:$0xff]
                  %635 = vst [vmem:[%s629 + $0x10] sm:$0xff] %v634
                  %v636 = vld [vmem:[%s628 + $0x28] sm:$0xff]
                  %637 = vst [vmem:[%s629 + $0x18] sm:$0xff] %v636
                  %v638 = vld [vmem:[%s628 + $0x40] sm:$0xff]
                  %639 = vst [vmem:[%s629 + $0x20] sm:$0xff] %v638
                  %v640 = vld [vmem:[%s628 + $0x48] sm:$0xff]
                  %641 = vst [vmem:[%s629 + $0x28] sm:$0xff] %v640
                  %v642 = vld [vmem:[%s628 + $0x60] sm:$0xff]
                  %643 = vst [vmem:[%s629 + $0x30] sm:$0xff] %v642
                  %v644 = vld [vmem:[%s628 + $0x68] sm:$0xff]
                  %645 = vst [vmem:[%s629 + $0x38] sm:$0xff] %v644
                $region124: #{forward.3} parent=118 // loop_footer
                  %s627 = sadd.s32 1, %s623
                $region125: #{forward.3} parent=118 // loop_footer_branch
                  %622 = sbr.rel target = $region121
                $region126: #{forward.3} parent=118 // loop_exit
                  _
              $region119: #{forward.3} parent=103 // pred_fallthru
                _
              // Predicated region
              $region127: #{forward.3} parent=103 // pred_check
                _
              $region128: #{forward.3} parent=103 // pred_check_branch
                %647 = sbr.rel target = $region130
              $region129: #{forward.3} parent=103 // pred_region
                _
              $region130: #{forward.3} parent=103 // pred_fallthru
                _
            $region104: #{forward.3} parent=99 // pred_fallthru
              _
            // Predicated region
            $region105: #{forward.3} parent=99 // pred_check
              _
            $region106: #{forward.3} parent=99 // pred_check_branch
              %594 = sbr.rel target = $region108
            $region107: #{forward.3} parent=99 // pred_region
              loop: start=0, step=1, limit=1
              $region109: #{forward.3} parent=107 // loop_pre_header
                _
              $region110: #{forward.3} parent=107 // loop_header
                %s597 = sphi 0, %s601
                %p598 = scmp.ge.s32.totalorder %s597, 1
                %s602 = sphi %s588, %s588
                %s603 = sphi %s585, %s585
              $region111: #{forward.3} parent=107 // loop_header_branch
                %600 = sbr.rel (%p598) target = $region115
              $region112: #{forward.3} parent=107 // loop_body
                %v604 = vld [vmem:[%s602] sm:$0xff]
                %605 = vst [vmem:[%s603] sm:$0xff] %v604
                %v606 = vld [vmem:[%s602 + $0x8] sm:$0xff]
                %607 = vst [vmem:[%s603 + $0x8] sm:$0xff] %v606
                %v608 = vld [vmem:[%s602 + $0x20] sm:$0xff]
                %609 = vst [vmem:[%s603 + $0x10] sm:$0xff] %v608
                %v610 = vld [vmem:[%s602 + $0x28] sm:$0xff]
                %611 = vst [vmem:[%s603 + $0x18] sm:$0xff] %v610
                %v612 = vld [vmem:[%s602 + $0x40] sm:$0xff]
                %613 = vst [vmem:[%s603 + $0x20] sm:$0xff] %v612
                %v614 = vld [vmem:[%s602 + $0x48] sm:$0xff]
                %615 = vst [vmem:[%s603 + $0x28] sm:$0xff] %v614
                %v616 = vld [vmem:[%s602 + $0x60] sm:$0xff]
                %617 = vst [vmem:[%s603 + $0x30] sm:$0xff] %v616
                %v618 = vld [vmem:[%s602 + $0x68] sm:$0xff]
                %619 = vst [vmem:[%s603 + $0x38] sm:$0xff] %v618
              $region113: #{forward.3} parent=107 // loop_footer
                %s601 = sadd.s32 1, %s597
              $region114: #{forward.3} parent=107 // loop_footer_branch
                %596 = sbr.rel target = $region110
              $region115: #{forward.3} parent=107 // loop_exit
                _
            $region108: #{forward.3} parent=99 // pred_fallthru
              _
          $region100: #{forward.3} parent=95 // pred_fallthru
            _
          %648 = vnop
        $region96: #{forward.3} parent=91 // pred_fallthru
          _
      $region92: #{forward.3} parent=5 // pred_fallthru
        _
      %p649 = scmp.le.s32.totalorder 1, %s28
      %p650 = scmp.lt.s32.totalorder %s28, 3
      %p651 = pnand %p649, %p650
      %p652 = pneg %p651
      // Predicated region
      $region131: #{forward.3} parent=5 // pred_check
        _
      $region132: #{forward.3} parent=5 // pred_check_branch
        %654 = sbr.rel (%p651) target = $region134
      $region133: #{forward.3} parent=5 // pred_region
        %s655 = ssub.s32 %s28, 1
        %s656 = sand.u32 %s41, 1
        %s657 = sand.u32 %s41, 1
        %s658 = smul.addr %s657, 64
        %s659 = scalar_lea.vmem [#allocation3], %s658
        // Predicated region
        $region135: #{forward.3} parent=133 // pred_check
          %p660 = pneg %p54
        $region136: #{forward.3} parent=133 // pred_check_branch
          %662 = sbr.rel (%p660) target = $region138
        $region137: #{forward.3} parent=133 // pred_region
          _
        $region138: #{forward.3} parent=133 // pred_fallthru
          _
        // Predicated region
        $region139: #{forward.3} parent=133 // pred_check
          %p663 = pneg %p369
        $region140: #{forward.3} parent=133 // pred_check_branch
          %665 = sbr.rel (%p663) target = $region142
        $region141: #{forward.3} parent=133 // pred_region
          %666 = dma.done [#allocation5], 16
        $region142: #{forward.3} parent=133 // pred_fallthru
          _
        // Predicated region
        $region143: #{forward.3} parent=133 // pred_check
          %p667 = pneg %p411
        $region144: #{forward.3} parent=133 // pred_check_branch
          %669 = sbr.rel (%p667) target = $region146
        $region145: #{forward.3} parent=133 // pred_region
          %670 = dma.done [#allocation7], 16
        $region146: #{forward.3} parent=133 // pred_fallthru
          _
        // Predicated region
        $region147: #{forward.3} parent=133 // pred_check
          %p671 = pneg %p453
        $region148: #{forward.3} parent=133 // pred_check_branch
          %673 = sbr.rel (%p671) target = $region150
        $region149: #{forward.3} parent=133 // pred_region
          %674 = dma.done [#allocation7], 16
        $region150: #{forward.3} parent=133 // pred_fallthru
          _
        %s675 = sand.u32 %s41, 1
        %s676 = sand.u32 %s41, 1
        %s677 = smul.addr %s676, 64
        %s678 = scalar_lea.vmem [#allocation3], %s677
        %p679 = pneg %p54
        %p680 = pneg %p51
        %p681 = pneg %p75
        %p682 = pneg %p72
        %p683 = pneg %p96
        %p684 = pneg %p93
        %p685 = pneg %p117
        %p686 = pneg %p114
        %p687 = pneg %p138
        %p688 = pneg %p135
        %p689 = pneg %p159
        %p690 = pneg %p156
        %p691 = pneg %p180
        %p692 = pneg %p177
        %p693 = pneg %p201
        %p694 = pneg %p198
        %p695 = pneg %p222
        %p696 = pneg %p219
        %p697 = pneg %p243
        %p698 = pneg %p240
        %p699 = pneg %p264
        %p700 = pneg %p261
        %p701 = pneg %p285
        %p702 = pneg %p282
        %p703 = pneg %p306
        %p704 = pneg %p303
        %p705 = pneg %p327
        %p706 = pneg %p324
        %p707 = pneg %p348
        %p708 = pneg %p345
        %p709 = pneg %p369
        %p710 = pneg %p366
        %p711 = pneg %p390
        %p712 = pneg %p387
        %p713 = pneg %p411
        %p714 = pneg %p408
        %p715 = pneg %p432
        %p716 = pneg %p429
        %p717 = pneg %p453
        %p718 = pneg %p450
        %p719 = pneg %p479
        %p720 = pneg %p476
        %s721 = smul.u32 2, %s33
        %p722 = scmp.lt.s32.totalorder %s721, 3
        %s723 = scalar_select %p722, %s721, 3
        %s724 = smul.addr %s723, 8
        %s725 = scalar_lea.vmem %s20, %s724
        %s726 = smul.u32 2, %s33
        %s727 = smul.u32 2, %s33
        %p728 = scmp.lt.s32.totalorder %s727, 3
        %s729 = scalar_select %p728, %s727, 3
        %s730 = smul.addr %s729, 8
        %s731 = scalar_lea.vmem %s20, %s730
        %s732 = smul.u32 2, %s33
        %v733 = vld [vmem:[%s659] sm:$0xff]
        %v734 = vld [vmem:[%s659 + $0x8] sm:$0xff]
        %v735 = vld [vmem:[%s659 + $0x10] sm:$0xff]
        %v736 = vld [vmem:[%s659 + $0x18] sm:$0xff]
        %v737 = vld [vmem:[%s659 + $0x20] sm:$0xff]
        %v738 = vld [vmem:[%s659 + $0x28] sm:$0xff]
        %v739 = vld [vmem:[%s659 + $0x30] sm:$0xff]
        %v740 = vld [vmem:[%s659 + $0x38] sm:$0xff]
        %v741 = vld [vmem:[%s1] sm:$0xff]
        %v742 = vld [vmem:[%s1 + $0x8] sm:$0xff]
        %v743 = vld [vmem:[%s1 + $0x10] sm:$0xff]
        %v744 = vld [vmem:[%s1 + $0x18] sm:$0xff]
        %v745 = vld [vmem:[%s3] sm:$0x1]
        %v747 = vlaneseq
        %v748 = vshrl.u32 %v747, 7
        %v749 = vsub.s32 0, %v748
        %v750 = vrot.slane %v745, %v749
        %vm752 = vcmask 261120
        %v754 = vsel %vm752, %v733, 0
        %v757 = vsel %vm752, %v734, 0
        %v760 = vsel %vm752, %v735, 0
        %v763 = vsel %vm752, %v736, 0
        %v766 = vsel %vm752, %v737, 0
        %v769 = vsel %vm752, %v738, 0
        %v772 = vsel %vm752, %v739, 0
        %v775 = vsel %vm752, %v740, 0
        %777 = vmatprep.subr.mxu0 0.0
        %778 = vmatpush1.msra.mxu0 %v741
        %779 = vmatprep.subr.mxu0 0.0
        %780 = vmatpush1.msra.mxu0 %v742
        %781 = vmatprep.subr.mxu0 0.0
        %782 = vmatpush1.msra.mxu0 %v743
        %783 = vmatprep.subr.mxu0 0.0
        %784 = vmatpush1.msra.mxu0 %v744
        %785 = vmatprep.subr.mxu0 0.0
        %786 = vmatpush1.msra.mxu0 0.0
        %787 = vmatprep.subr.mxu0 0.0
        %788 = vmatpush1.msra.mxu0 0.0
        %789 = vmatprep.subr.mxu0 0.0
        %790 = vmatpush1.msra.mxu0 0.0
        %791 = vmatprep.subr.mxu0 0.0
        %792 = vmatpush1.msra.mxu0 0.0
        %793 = vmatprep.subr.mxu0 0.0
        %794 = vmatpush1.msra.mxu0 0.0
        %795 = vmatprep.subr.mxu0 0.0
        %796 = vmatpush1.msra.mxu0 0.0
        %797 = vmatprep.subr.mxu0 0.0
        %798 = vmatpush1.msra.mxu0 0.0
        %799 = vmatprep.subr.mxu0 0.0
        %800 = vmatpush1.msra.mxu0 0.0
        %801 = vmatprep.subr.mxu0 0.0
        %802 = vmatpush1.msra.mxu0 0.0
        %803 = vmatprep.subr.mxu0 0.0
        %804 = vmatpush1.msra.mxu0 0.0
        %805 = vmatprep.subr.mxu0 0.0
        %806 = vmatpush1.msra.mxu0 0.0
        %807 = vmatprep.subr.mxu0 0.0
        %808 = vmatpush1.msra.mxu0 0.0
        %809 = vmatprep.subr.mxu0 0.0
        %810 = vmatpush1.msra.mxu0 0.0
        %811 = vmatprep.subr.mxu0 0.0
        %812 = vmatpush1.msra.mxu0 0.0
        %813 = vmatprep.subr.mxu0 0.0
        %814 = vmatpush1.msra.mxu0 0.0
        %815 = vmatprep.subr.mxu0 0.0
        %816 = vmatpush1.msra.mxu0 0.0
        %817 = vmatprep.subr.mxu0 0.0
        %818 = vmatpush1.msra.mxu0 0.0
        %819 = vmatprep.subr.mxu0 0.0
        %820 = vmatpush1.msra.mxu0 0.0
        %821 = vmatprep.subr.mxu0 0.0
        %822 = vmatpush1.msra.mxu0 0.0
        %823 = vmatprep.subr.mxu0 0.0
        %824 = vmatpush1.msra.mxu0 0.0
        %825 = vmatprep.subr.mxu0 0.0
        %826 = vmatpush1.msra.mxu0 0.0
        %827 = vmatprep.subr.mxu0 0.0
        %828 = vmatpush1.msra.mxu0 0.0
        %829 = vmatprep.subr.mxu0 0.0
        %830 = vmatpush1.msra.mxu0 0.0
        %831 = vmatprep.subr.mxu0 0.0
        %832 = vmatpush1.msra.mxu0 0.0
        %833 = vmatprep.subr.mxu0 0.0
        %834 = vmatpush1.msra.mxu0 0.0
        %835 = vmatprep.subr.mxu0 0.0
        %836 = vmatpush1.msra.mxu0 0.0
        %837 = vmatprep.subr.mxu0 0.0
        %838 = vmatpush1.msra.mxu0 0.0
        %839 = vmatprep.subr.mxu0 0.0
        %840 = vmatpush1.msra.mxu0 0.0
        %841 = vmatprep.mubr.f32.mxu0 0.0
        %842 = vmatmul.mubr.f32.gmra.mrb[0].mxu0 %v754
        %v843 = vpop.f32.mrb[0].mxu0
        %v844 = vadd.f32 %v750, %v843
        %v845 = vpop.f32.mrb[0].mxu0
        %846 = vmatprep.mubr.f32.mxu0 0.0
        %847 = vmatmul.mubr.f32.gmra.mrb[0].mxu0 %v757
        %v848 = vpop.f32.mrb[0].mxu0
        %v849 = vadd.f32 %v750, %v848
        %v850 = vpop.f32.mrb[0].mxu0
        %851 = vmatprep.mubr.f32.mxu0 0.0
        %852 = vmatmul.mubr.f32.gmra.mrb[0].mxu0 %v760
        %v853 = vpop.f32.mrb[0].mxu0
        %v854 = vadd.f32 %v750, %v853
        %v855 = vpop.f32.mrb[0].mxu0
        %856 = vmatprep.mubr.f32.mxu0 0.0
        %857 = vmatmul.mubr.f32.gmra.mrb[0].mxu0 %v763
        %v858 = vpop.f32.mrb[0].mxu0
        %v859 = vadd.f32 %v750, %v858
        %v860 = vpop.f32.mrb[0].mxu0
        %861 = vmatprep.mubr.f32.mxu0 0.0
        %862 = vmatmul.mubr.f32.gmra.mrb[0].mxu0 %v766
        %v863 = vpop.f32.mrb[0].mxu0
        %v864 = vadd.f32 %v750, %v863
        %v865 = vpop.f32.mrb[0].mxu0
        %866 = vmatprep.mubr.f32.mxu0 0.0
        %867 = vmatmul.mubr.f32.gmra.mrb[0].mxu0 %v769
        %v868 = vpop.f32.mrb[0].mxu0
        %v869 = vadd.f32 %v750, %v868
        %v870 = vpop.f32.mrb[0].mxu0
        %871 = vmatprep.mubr.f32.mxu0 0.0
        %872 = vmatmul.mubr.f32.gmra.mrb[0].mxu0 %v772
        %v873 = vpop.f32.mrb[0].mxu0
        %v874 = vadd.f32 %v750, %v873
        %v875 = vpop.f32.mrb[0].mxu0
        %876 = vmatprep.mubr.f32.mxu0 0.0
        %877 = vmatmul.mubr.f32.gmra.mrb[0].mxu0 %v775
        %v878 = vpop.f32.mrb[0].mxu0
        %v879 = vadd.f32 %v750, %v878
        %v880 = vpop.f32.mrb[0].mxu0
        %881 = vdwg.mxu0
        %v882 = vld [vmem:[%s2] sm:$0xff]
        %v883 = vld [vmem:[%s2 + $0x8] sm:$0xff]
        %v884 = vld [vmem:[%s2 + $0x10] sm:$0xff]
        %v885 = vld [vmem:[%s2 + $0x18] sm:$0xff]
        %v886 = vld [vmem:[%s4] sm:$0xff]
        %v887 = vld [vmem:[%s4 + $0x8] sm:$0xff]
        %v888 = vld [vmem:[%s4 + $0x10] sm:$0xff]
        %v889 = vld [vmem:[%s4 + $0x18] sm:$0xff]
        %v890 = vld [vmem:[%s5] sm:$0xff]
        %v891 = vld [vmem:[%s5 + $0x8] sm:$0xff]
        %v892 = vld [vmem:[%s5 + $0x10] sm:$0xff]
        %v893 = vld [vmem:[%s5 + $0x18] sm:$0xff]
        %v894 = vld [vmem:[%s6] sm:$0x1]
        %v896 = vsel %vm752, 0.0, 0
        %898 = vmatprep.subr.mxu0 0.0
        %899 = vmatpush1.msra.mxu0 %v882
        %900 = vmatprep.subr.mxu0 0.0
        %901 = vmatpush1.msra.mxu0 %v883
        %902 = vmatprep.subr.mxu0 0.0
        %903 = vmatpush1.msra.mxu0 %v884
        %904 = vmatprep.subr.mxu0 0.0
        %905 = vmatpush1.msra.mxu0 %v885
        %906 = vmatprep.subr.mxu0 0.0
        %907 = vmatpush1.msra.mxu0 0.0
        %908 = vmatprep.subr.mxu0 0.0
        %909 = vmatpush1.msra.mxu0 0.0
        %910 = vmatprep.subr.mxu0 0.0
        %911 = vmatpush1.msra.mxu0 0.0
        %912 = vmatprep.subr.mxu0 0.0
        %913 = vmatpush1.msra.mxu0 0.0
        %914 = vmatprep.subr.mxu0 0.0
        %915 = vmatpush1.msra.mxu0 0.0
        %916 = vmatprep.subr.mxu0 0.0
        %917 = vmatpush1.msra.mxu0 0.0
        %918 = vmatprep.subr.mxu0 0.0
        %919 = vmatpush1.msra.mxu0 0.0
        %920 = vmatprep.subr.mxu0 0.0
        %921 = vmatpush1.msra.mxu0 0.0
        %922 = vmatprep.subr.mxu0 0.0
        %923 = vmatpush1.msra.mxu0 0.0
        %924 = vmatprep.subr.mxu0 0.0
        %925 = vmatpush1.msra.mxu0 0.0
        %926 = vmatprep.subr.mxu0 0.0
        %927 = vmatpush1.msra.mxu0 0.0
        %928 = vmatprep.subr.mxu0 0.0
        %929 = vmatpush1.msra.mxu0 0.0
        %930 = vmatprep.subr.mxu0 0.0
        %931 = vmatpush1.msra.mxu0 0.0
        %932 = vmatprep.subr.mxu0 0.0
        %933 = vmatpush1.msra.mxu0 0.0
        %934 = vmatprep.subr.mxu0 0.0
        %935 = vmatpush1.msra.mxu0 0.0
        %936 = vmatprep.subr.mxu0 0.0
        %937 = vmatpush1.msra.mxu0 0.0
        %938 = vmatprep.subr.mxu0 0.0
        %939 = vmatpush1.msra.mxu0 0.0
        %940 = vmatprep.subr.mxu0 0.0
        %941 = vmatpush1.msra.mxu0 0.0
        %942 = vmatprep.subr.mxu0 0.0
        %943 = vmatpush1.msra.mxu0 0.0
        %944 = vmatprep.subr.mxu0 0.0
        %945 = vmatpush1.msra.mxu0 0.0
        %946 = vmatprep.subr.mxu0 0.0
        %947 = vmatpush1.msra.mxu0 0.0
        %948 = vmatprep.subr.mxu0 0.0
        %949 = vmatpush1.msra.mxu0 0.0
        %950 = vmatprep.subr.mxu0 0.0
        %951 = vmatpush1.msra.mxu0 0.0
        %952 = vmatprep.subr.mxu0 0.0
        %953 = vmatpush1.msra.mxu0 0.0
        %954 = vmatprep.subr.mxu0 0.0
        %955 = vmatpush1.msra.mxu0 0.0
        %956 = vmatprep.subr.mxu0 0.0
        %957 = vmatpush1.msra.mxu0 0.0
        %958 = vmatprep.subr.mxu0 0.0
        %959 = vmatpush1.msra.mxu0 0.0
        %960 = vmatprep.subr.mxu0 0.0
        %961 = vmatpush1.msra.mxu0 0.0
        %962 = vmatprep.mubr.f32.mxu0 0.0
        %963 = vmatmul.mubr.f32.gmra.mrb[0].mxu0 %v896
        %v964 = vpop.f32.mrb[0].mxu0
        %v965 = vadd.f32 0.0, %v964
        %v966 = vpop.f32.mrb[0].mxu0
        %967 = vmatprep.mubr.f32.mxu0 0.0
        %968 = vmatmul.mubr.f32.gmra.mrb[0].mxu0 %v896
        %v969 = vpop.f32.mrb[0].mxu0
        %v970 = vadd.f32 0.0, %v969
        %v971 = vpop.f32.mrb[0].mxu0
        %972 = vdwg.mxu0
        %v973 = vadd.f32 %v844, %v965
        %v974 = vadd.f32 %v849, %v970
        %v975 = vxor.u32 %v973, 2147483648
        %v976 = vxor.u32 %v974, 2147483648
        %v977 = vmul.f32 %v975, 1.442695
        %v978 = vpow.pop %v977
        %v979 = vmul.f32 %v976, 1.442695
        %v980 = vpow.pop %v979
        %v981 = vadd.f32 %v978, 1.0
        %v982 = vadd.f32 %v980, 1.0
        %v983 = vrcp.pop %v981
        %v984 = vmul.f32 1.0, %v983
        %v985 = vrcp.pop %v982
        %v986 = vmul.f32 1.0, %v985
        %v987 = vtanh.pop %v973
        %v988 = vtanh.pop %v974
        %v989 = vmul.f32 %v984, 0.0
        %v990 = vmul.f32 %v986, 0.0
        %993 = vrot.lane.b32.xlu0 %v987, 64
        %v994 = vpop.permute.xlu0 %993
        %995 = vrot.lane.b32.xlu0 %v988, 64
        %v996 = vpop.permute.xlu0 %995
        %v999 = vmul.f32 %v984, %v994
        %v1000 = vmul.f32 %v986, %v996
        %1003 = vrot.lane.b32.xlu0 %v999, 32
        %v1004 = vpop.permute.xlu0 %1003
        %1005 = vrot.lane.b32.xlu0 %v1000, 32
        %v1006 = vpop.permute.xlu0 %1005
        %v1009 = vadd.f32 %v989, %v1004
        %v1010 = vadd.f32 %v990, %v1006
        %v1011 = vtanh.pop %v1009
        %v1012 = vtanh.pop %v1010
        %1015 = vrot.lane.b32.xlu0 %v1011, 64
        %v1016 = vpop.permute.xlu0 %1015
        %1017 = vrot.lane.b32.xlu0 %v1012, 64
        %v1018 = vpop.permute.xlu0 %1017
        %v1021 = vmul.f32 %v984, %v1016
        %v1022 = vmul.f32 %v986, %v1018
        %1023 = vmatprep.subr.mxu0 0.0
        %1024 = vmatpush1.msra.mxu0 %v890
        %1025 = vmatprep.subr.mxu0 0.0
        %1026 = vmatpush1.msra.mxu0 %v891
        %1027 = vmatprep.subr.mxu0 0.0
        %1028 = vmatpush1.msra.mxu0 %v892
        %1029 = vmatprep.subr.mxu0 0.0
        %1030 = vmatpush1.msra.mxu0 %v893
        %1031 = vmatprep.subr.mxu0 0.0
        %1032 = vmatpush1.msra.mxu0 0.0
        %1033 = vmatprep.subr.mxu0 0.0
        %1034 = vmatpush1.msra.mxu0 0.0
        %1035 = vmatprep.subr.mxu0 0.0
        %1036 = vmatpush1.msra.mxu0 0.0
        %1037 = vmatprep.subr.mxu0 0.0
        %1038 = vmatpush1.msra.mxu0 0.0
        %1039 = vmatprep.subr.mxu0 0.0
        %1040 = vmatpush1.msra.mxu0 0.0
        %1041 = vmatprep.subr.mxu0 0.0
        %1042 = vmatpush1.msra.mxu0 0.0
        %1043 = vmatprep.subr.mxu0 0.0
        %1044 = vmatpush1.msra.mxu0 0.0
        %1045 = vmatprep.subr.mxu0 0.0
        %1046 = vmatpush1.msra.mxu0 0.0
        %1047 = vmatprep.subr.mxu0 0.0
        %1048 = vmatpush1.msra.mxu0 0.0
        %1049 = vmatprep.subr.mxu0 0.0
        %1050 = vmatpush1.msra.mxu0 0.0
        %1051 = vmatprep.subr.mxu0 0.0
        %1052 = vmatpush1.msra.mxu0 0.0
        %1053 = vmatprep.subr.mxu0 0.0
        %1054 = vmatpush1.msra.mxu0 0.0
        %1055 = vmatprep.subr.mxu0 0.0
        %1056 = vmatpush1.msra.mxu0 0.0
        %1057 = vmatprep.subr.mxu0 0.0
        %1058 = vmatpush1.msra.mxu0 0.0
        %1059 = vmatprep.subr.mxu0 0.0
        %1060 = vmatpush1.msra.mxu0 0.0
        %1061 = vmatprep.subr.mxu0 0.0
        %1062 = vmatpush1.msra.mxu0 0.0
        %1063 = vmatprep.subr.mxu0 0.0
        %1064 = vmatpush1.msra.mxu0 0.0
        %1065 = vmatprep.subr.mxu0 0.0
        %1066 = vmatpush1.msra.mxu0 0.0
        %1067 = vmatprep.subr.mxu0 0.0
        %1068 = vmatpush1.msra.mxu0 0.0
        %1069 = vmatprep.subr.mxu0 0.0
        %1070 = vmatpush1.msra.mxu0 0.0
        %1071 = vmatprep.subr.mxu0 0.0
        %1072 = vmatpush1.msra.mxu0 0.0
        %1073 = vmatprep.subr.mxu0 0.0
        %1074 = vmatpush1.msra.mxu0 0.0
        %1075 = vmatprep.subr.mxu0 0.0
        %1076 = vmatpush1.msra.mxu0 0.0
        %1077 = vmatprep.subr.mxu0 0.0
        %1078 = vmatpush1.msra.mxu0 0.0
        %1079 = vmatprep.subr.mxu0 0.0
        %1080 = vmatpush1.msra.mxu0 0.0
        %1081 = vmatprep.subr.mxu0 0.0
        %1082 = vmatpush1.msra.mxu0 0.0
        %1083 = vmatprep.subr.mxu0 0.0
        %1084 = vmatpush1.msra.mxu0 0.0
        %1085 = vmatprep.subr.mxu0 0.0
        %1086 = vmatpush1.msra.mxu0 0.0
        %1087 = vmatprep.mubr.f32.mxu0 0.0
        %1088 = vmatmul.mubr.f32.gmra.mrb[0].mxu0 %v896
        %v1089 = vpop.f32.mrb[0].mxu0
        %v1090 = vadd.f32 0.0, %v1089
        %v1091 = vpop.f32.mrb[0].mxu0
        %1092 = vmatprep.mubr.f32.mxu0 0.0
        %1093 = vmatmul.mubr.f32.gmra.mrb[0].mxu0 %v896
        %v1094 = vpop.f32.mrb[0].mxu0
        %v1095 = vadd.f32 0.0, %v1094
        %v1096 = vpop.f32.mrb[0].mxu0
        %1097 = vdwg.mxu0
        %1100 = vrot.lane.b32.xlu0 %v1021, 32
        %v1101 = vpop.permute.xlu0 %1100
        %1102 = vrot.lane.b32.xlu0 %v1022, 32
        %v1103 = vpop.permute.xlu0 %1102
        %v1104 = vsel %vm752, %v1101, 0
        %v1106 = vsel %vm752, %v1103, 0
        %1108 = vmatprep.subr.mxu0 0.0
        %1109 = vmatpush1.msra.mxu0 %v886
        %1110 = vmatprep.subr.mxu0 0.0
        %1111 = vmatpush1.msra.mxu0 %v887
        %1112 = vmatprep.subr.mxu0 0.0
        %1113 = vmatpush1.msra.mxu0 %v888
        %1114 = vmatprep.subr.mxu0 0.0
        %1115 = vmatpush1.msra.mxu0 %v889
        %1116 = vmatprep.subr.mxu0 0.0
        %1117 = vmatpush1.msra.mxu0 0.0
        %1118 = vmatprep.subr.mxu0 0.0
        %1119 = vmatpush1.msra.mxu0 0.0
        %1120 = vmatprep.subr.mxu0 0.0
        %1121 = vmatpush1.msra.mxu0 0.0
        %1122 = vmatprep.subr.mxu0 0.0
        %1123 = vmatpush1.msra.mxu0 0.0
        %1124 = vmatprep.subr.mxu0 0.0
        %1125 = vmatpush1.msra.mxu0 0.0
        %1126 = vmatprep.subr.mxu0 0.0
        %1127 = vmatpush1.msra.mxu0 0.0
        %1128 = vmatprep.subr.mxu0 0.0
        %1129 = vmatpush1.msra.mxu0 0.0
        %1130 = vmatprep.subr.mxu0 0.0
        %1131 = vmatpush1.msra.mxu0 0.0
        %1132 = vmatprep.subr.mxu0 0.0
        %1133 = vmatpush1.msra.mxu0 0.0
        %1134 = vmatprep.subr.mxu0 0.0
        %1135 = vmatpush1.msra.mxu0 0.0
        %1136 = vmatprep.subr.mxu0 0.0
        %1137 = vmatpush1.msra.mxu0 0.0
        %1138 = vmatprep.subr.mxu0 0.0
        %1139 = vmatpush1.msra.mxu0 0.0
        %1140 = vmatprep.subr.mxu0 0.0
        %1141 = vmatpush1.msra.mxu0 0.0
        %1142 = vmatprep.subr.mxu0 0.0
        %1143 = vmatpush1.msra.mxu0 0.0
        %1144 = vmatprep.subr.mxu0 0.0
        %1145 = vmatpush1.msra.mxu0 0.0
        %1146 = vmatprep.subr.mxu0 0.0
        %1147 = vmatpush1.msra.mxu0 0.0
        %1148 = vmatprep.subr.mxu0 0.0
        %1149 = vmatpush1.msra.mxu0 0.0
        %1150 = vmatprep.subr.mxu0 0.0
        %1151 = vmatpush1.msra.mxu0 0.0
        %1152 = vmatprep.subr.mxu0 0.0
        %1153 = vmatpush1.msra.mxu0 0.0
        %1154 = vmatprep.subr.mxu0 0.0
        %1155 = vmatpush1.msra.mxu0 0.0
        %1156 = vmatprep.subr.mxu0 0.0
        %1157 = vmatpush1.msra.mxu0 0.0
        %1158 = vmatprep.subr.mxu0 0.0
        %1159 = vmatpush1.msra.mxu0 0.0
        %1160 = vmatprep.subr.mxu0 0.0
        %1161 = vmatpush1.msra.mxu0 0.0
        %1162 = vmatprep.subr.mxu0 0.0
        %1163 = vmatpush1.msra.mxu0 0.0
        %1164 = vmatprep.subr.mxu0 0.0
        %1165 = vmatpush1.msra.mxu0 0.0
        %1166 = vmatprep.subr.mxu0 0.0
        %1167 = vmatpush1.msra.mxu0 0.0
        %1168 = vmatprep.subr.mxu0 0.0
        %1169 = vmatpush1.msra.mxu0 0.0
        %1170 = vmatprep.subr.mxu0 0.0
        %1171 = vmatpush1.msra.mxu0 0.0
        %1172 = vmatprep.mubr.f32.mxu0 0.0
        %1173 = vmatmul.mubr.f32.gmra.mrb[0].mxu0 %v1104
        %v1174 = vpop.f32.mrb[0].mxu0
        %v1175 = vadd.f32 %v1090, %v1174
        %v1176 = vpop.f32.mrb[0].mxu0
        %1177 = vmatprep.mubr.f32.mxu0 0.0
        %1178 = vmatmul.mubr.f32.gmra.mrb[0].mxu0 %v1106
        %v1179 = vpop.f32.mrb[0].mxu0
        %v1180 = vadd.f32 %v1095, %v1179
        %v1181 = vpop.f32.mrb[0].mxu0
        %1182 = vdwg.mxu0
        %v1184 = vlaneseq
        %v1185 = vshrl.u32 %v1184, 7
        %v1186 = vsub.s32 0, %v1185
        %v1187 = vrot.slane %v894, %v1186
        %v1189 = vadd.f32 %v1175, %v1187
        %v1190 = vadd.f32 %v1180, %v1187
        %v1191 = vxor.u32 %v1189, 2147483648
        %v1192 = vxor.u32 %v1190, 2147483648
        %v1193 = vmul.f32 %v1191, 1.442695
        %v1194 = vpow.pop %v1193
        %v1195 = vmul.f32 %v1192, 1.442695
        %v1196 = vpow.pop %v1195
        %v1197 = vadd.f32 %v1194, 1.0
        %v1198 = vadd.f32 %v1196, 1.0
        %v1199 = vrcp.pop %v1197
        %v1200 = vmul.f32 1.0, %v1199
        %v1201 = vrcp.pop %v1198
        %v1202 = vmul.f32 1.0, %v1201
        %v1203 = vtanh.pop %v1189
        %v1204 = vtanh.pop %v1190
        %v1205 = vmul.f32 %v1200, 0.0
        %v1206 = vmul.f32 %v1202, 0.0
        %1209 = vrot.lane.b32.xlu0 %v1203, 64
        %v1210 = vpop.permute.xlu0 %1209
        %1211 = vrot.lane.b32.xlu0 %v1204, 64
        %v1212 = vpop.permute.xlu0 %1211
        %v1215 = vmul.f32 %v1200, %v1210
        %v1216 = vmul.f32 %v1202, %v1212
        %1219 = vrot.lane.b32.xlu0 %v1215, 32
        %v1220 = vpop.permute.xlu0 %1219
        %1221 = vrot.lane.b32.xlu0 %v1216, 32
        %v1222 = vpop.permute.xlu0 %1221
        %v1225 = vadd.f32 %v1205, %v1220
        %v1226 = vadd.f32 %v1206, %v1222
        %v1227 = vtanh.pop %v1225
        %v1228 = vtanh.pop %v1226
        %1231 = vrot.lane.b32.xlu0 %v1227, 64
        %v1232 = vpop.permute.xlu0 %1231
        %1233 = vrot.lane.b32.xlu0 %v1228, 64
        %v1234 = vpop.permute.xlu0 %1233
        %v1237 = vmul.f32 %v1200, %v1232
        %v1238 = vmul.f32 %v1202, %v1234
        %1241 = vrot.lane.b32.xlu0 %v1237, 32
        %v1242 = vpop.permute.xlu0 %1241
        %1243 = vrot.lane.b32.xlu0 %v1238, 32
        %v1244 = vpop.permute.xlu0 %1243
        %1247 = vst.msk [vmem:[#allocation2] sm:$0xff] %vm752, %v1242
        %1248 = vst.msk [vmem:[#allocation2 + $0x8] sm:$0xff] %vm752, %v1244
        %1249 = vmatprep.subr.mxu0 0.0
        %1250 = vmatpush1.msra.mxu0 %v882
        %1251 = vmatprep.subr.mxu0 0.0
        %1252 = vmatpush1.msra.mxu0 %v883
        %1253 = vmatprep.subr.mxu0 0.0
        %1254 = vmatpush1.msra.mxu0 %v884
        %1255 = vmatprep.subr.mxu0 0.0
        %1256 = vmatpush1.msra.mxu0 %v885
        %1257 = vmatprep.subr.mxu0 0.0
        %1258 = vmatpush1.msra.mxu0 0.0
        %1259 = vmatprep.subr.mxu0 0.0
        %1260 = vmatpush1.msra.mxu0 0.0
        %1261 = vmatprep.subr.mxu0 0.0
        %1262 = vmatpush1.msra.mxu0 0.0
        %1263 = vmatprep.subr.mxu0 0.0
        %1264 = vmatpush1.msra.mxu0 0.0
        %1265 = vmatprep.subr.mxu0 0.0
        %1266 = vmatpush1.msra.mxu0 0.0
        %1267 = vmatprep.subr.mxu0 0.0
        %1268 = vmatpush1.msra.mxu0 0.0
        %1269 = vmatprep.subr.mxu0 0.0
        %1270 = vmatpush1.msra.mxu0 0.0
        %1271 = vmatprep.subr.mxu0 0.0
        %1272 = vmatpush1.msra.mxu0 0.0
        %1273 = vmatprep.subr.mxu0 0.0
        %1274 = vmatpush1.msra.mxu0 0.0
        %1275 = vmatprep.subr.mxu0 0.0
        %1276 = vmatpush1.msra.mxu0 0.0
        %1277 = vmatprep.subr.mxu0 0.0
        %1278 = vmatpush1.msra.mxu0 0.0
        %1279 = vmatprep.subr.mxu0 0.0
        %1280 = vmatpush1.msra.mxu0 0.0
        %1281 = vmatprep.subr.mxu0 0.0
        %1282 = vmatpush1.msra.mxu0 0.0
        %1283 = vmatprep.subr.mxu0 0.0
        %1284 = vmatpush1.msra.mxu0 0.0
        %1285 = vmatprep.subr.mxu0 0.0
        %1286 = vmatpush1.msra.mxu0 0.0
        %1287 = vmatprep.subr.mxu0 0.0
        %1288 = vmatpush1.msra.mxu0 0.0
        %1289 = vmatprep.subr.mxu0 0.0
        %1290 = vmatpush1.msra.mxu0 0.0
        %1291 = vmatprep.subr.mxu0 0.0
        %1292 = vmatpush1.msra.mxu0 0.0
        %1293 = vmatprep.subr.mxu0 0.0
        %1294 = vmatpush1.msra.mxu0 0.0
        %1295 = vmatprep.subr.mxu0 0.0
        %1296 = vmatpush1.msra.mxu0 0.0
        %1297 = vmatprep.subr.mxu0 0.0
        %1298 = vmatpush1.msra.mxu0 0.0
        %1299 = vmatprep.subr.mxu0 0.0
        %1300 = vmatpush1.msra.mxu0 0.0
        %1301 = vmatprep.subr.mxu0 0.0
        %1302 = vmatpush1.msra.mxu0 0.0
        %1303 = vmatprep.subr.mxu0 0.0
        %1304 = vmatpush1.msra.mxu0 0.0
        %1305 = vmatprep.subr.mxu0 0.0
        %1306 = vmatpush1.msra.mxu0 0.0
        %1307 = vmatprep.subr.mxu0 0.0
        %1308 = vmatpush1.msra.mxu0 0.0
        %1309 = vmatprep.subr.mxu0 0.0
        %1310 = vmatpush1.msra.mxu0 0.0
        %1311 = vmatprep.subr.mxu0 0.0
        %1312 = vmatpush1.msra.mxu0 0.0
        %1313 = vmatprep.mubr.f32.mxu0 0.0
        %1314 = vmatmul.mubr.f32.gmra.mrb[0].mxu0 %v1104
        %v1315 = vpop.f32.mrb[0].mxu0
        %v1316 = vadd.f32 0.0, %v1315
        %v1317 = vpop.f32.mrb[0].mxu0
        %1318 = vmatprep.mubr.f32.mxu0 0.0
        %1319 = vmatmul.mubr.f32.gmra.mrb[0].mxu0 %v1106
        %v1320 = vpop.f32.mrb[0].mxu0
        %v1321 = vadd.f32 0.0, %v1320
        %v1322 = vpop.f32.mrb[0].mxu0
        %1323 = vdwg.mxu0
        %v1324 = vadd.f32 %v854, %v1316
        %v1325 = vadd.f32 %v859, %v1321
        %v1326 = vxor.u32 %v1324, 2147483648
        %v1327 = vxor.u32 %v1325, 2147483648
        %v1328 = vmul.f32 %v1326, 1.442695
        %v1329 = vpow.pop %v1328
        %v1330 = vmul.f32 %v1327, 1.442695
        %v1331 = vpow.pop %v1330
        %v1332 = vadd.f32 %v1329, 1.0
        %v1333 = vadd.f32 %v1331, 1.0
        %v1334 = vrcp.pop %v1332
        %v1335 = vmul.f32 1.0, %v1334
        %v1336 = vrcp.pop %v1333
        %v1337 = vmul.f32 1.0, %v1336
        %v1338 = vtanh.pop %v1324
        %v1339 = vtanh.pop %v1325
        %v1340 = vmul.f32 %v1335, %v1009
        %v1341 = vmul.f32 %v1337, %v1010
        %1344 = vrot.lane.b32.xlu0 %v1338, 64
        %v1345 = vpop.permute.xlu0 %1344
        %1346 = vrot.lane.b32.xlu0 %v1339, 64
        %v1347 = vpop.permute.xlu0 %1346
        %v1350 = vmul.f32 %v1335, %v1345
        %v1351 = vmul.f32 %v1337, %v1347
        %1354 = vrot.lane.b32.xlu0 %v1350, 32
        %v1355 = vpop.permute.xlu0 %1354
        %1356 = vrot.lane.b32.xlu0 %v1351, 32
        %v1357 = vpop.permute.xlu0 %1356
        %v1360 = vadd.f32 %v1340, %v1355
        %v1361 = vadd.f32 %v1341, %v1357
        %v1362 = vtanh.pop %v1360
        %v1363 = vtanh.pop %v1361
        %1366 = vrot.lane.b32.xlu0 %v1362, 64
        %v1367 = vpop.permute.xlu0 %1366
        %1368 = vrot.lane.b32.xlu0 %v1363, 64
        %v1369 = vpop.permute.xlu0 %1368
        %v1372 = vmul.f32 %v1335, %v1367
        %v1373 = vmul.f32 %v1337, %v1369
        %v1374 = vsel %vm752, %v1242, 0
        %v1376 = vsel %vm752, %v1244, 0
        %1378 = vmatprep.subr.mxu0 0.0
        %1379 = vmatpush1.msra.mxu0 %v890
        %1380 = vmatprep.subr.mxu0 0.0
        %1381 = vmatpush1.msra.mxu0 %v891
        %1382 = vmatprep.subr.mxu0 0.0
        %1383 = vmatpush1.msra.mxu0 %v892
        %1384 = vmatprep.subr.mxu0 0.0
        %1385 = vmatpush1.msra.mxu0 %v893
        %1386 = vmatprep.subr.mxu0 0.0
        %1387 = vmatpush1.msra.mxu0 0.0
        %1388 = vmatprep.subr.mxu0 0.0
        %1389 = vmatpush1.msra.mxu0 0.0
        %1390 = vmatprep.subr.mxu0 0.0
        %1391 = vmatpush1.msra.mxu0 0.0
        %1392 = vmatprep.subr.mxu0 0.0
        %1393 = vmatpush1.msra.mxu0 0.0
        %1394 = vmatprep.subr.mxu0 0.0
        %1395 = vmatpush1.msra.mxu0 0.0
        %1396 = vmatprep.subr.mxu0 0.0
        %1397 = vmatpush1.msra.mxu0 0.0
        %1398 = vmatprep.subr.mxu0 0.0
        %1399 = vmatpush1.msra.mxu0 0.0
        %1400 = vmatprep.subr.mxu0 0.0
        %1401 = vmatpush1.msra.mxu0 0.0
        %1402 = vmatprep.subr.mxu0 0.0
        %1403 = vmatpush1.msra.mxu0 0.0
        %1404 = vmatprep.subr.mxu0 0.0
        %1405 = vmatpush1.msra.mxu0 0.0
        %1406 = vmatprep.subr.mxu0 0.0
        %1407 = vmatpush1.msra.mxu0 0.0
        %1408 = vmatprep.subr.mxu0 0.0
        %1409 = vmatpush1.msra.mxu0 0.0
        %1410 = vmatprep.subr.mxu0 0.0
        %1411 = vmatpush1.msra.mxu0 0.0
        %1412 = vmatprep.subr.mxu0 0.0
        %1413 = vmatpush1.msra.mxu0 0.0
        %1414 = vmatprep.subr.mxu0 0.0
        %1415 = vmatpush1.msra.mxu0 0.0
        %1416 = vmatprep.subr.mxu0 0.0
        %1417 = vmatpush1.msra.mxu0 0.0
        %1418 = vmatprep.subr.mxu0 0.0
        %1419 = vmatpush1.msra.mxu0 0.0
        %1420 = vmatprep.subr.mxu0 0.0
        %1421 = vmatpush1.msra.mxu0 0.0
        %1422 = vmatprep.subr.mxu0 0.0
        %1423 = vmatpush1.msra.mxu0 0.0
        %1424 = vmatprep.subr.mxu0 0.0
        %1425 = vmatpush1.msra.mxu0 0.0
        %1426 = vmatprep.subr.mxu0 0.0
        %1427 = vmatpush1.msra.mxu0 0.0
        %1428 = vmatprep.subr.mxu0 0.0
        %1429 = vmatpush1.msra.mxu0 0.0
        %1430 = vmatprep.subr.mxu0 0.0
        %1431 = vmatpush1.msra.mxu0 0.0
        %1432 = vmatprep.subr.mxu0 0.0
        %1433 = vmatpush1.msra.mxu0 0.0
        %1434 = vmatprep.subr.mxu0 0.0
        %1435 = vmatpush1.msra.mxu0 0.0
        %1436 = vmatprep.subr.mxu0 0.0
        %1437 = vmatpush1.msra.mxu0 0.0
        %1438 = vmatprep.subr.mxu0 0.0
        %1439 = vmatpush1.msra.mxu0 0.0
        %1440 = vmatprep.subr.mxu0 0.0
        %1441 = vmatpush1.msra.mxu0 0.0
        %1442 = vmatprep.mubr.f32.mxu0 0.0
        %1443 = vmatmul.mubr.f32.gmra.mrb[0].mxu0 %v1374
        %v1444 = vpop.f32.mrb[0].mxu0
        %v1445 = vadd.f32 0.0, %v1444
        %v1446 = vpop.f32.mrb[0].mxu0
        %1447 = vmatprep.mubr.f32.mxu0 0.0
        %1448 = vmatmul.mubr.f32.gmra.mrb[0].mxu0 %v1376
        %v1449 = vpop.f32.mrb[0].mxu0
        %v1450 = vadd.f32 0.0, %v1449
        %v1451 = vpop.f32.mrb[0].mxu0
        %1452 = vdwg.mxu0
        %1455 = vrot.lane.b32.xlu0 %v1372, 32
        %v1456 = vpop.permute.xlu0 %1455
        %1457 = vrot.lane.b32.xlu0 %v1373, 32
        %v1458 = vpop.permute.xlu0 %1457
        %v1459 = vsel %vm752, %v1456, 0
        %v1461 = vsel %vm752, %v1458, 0
        %1463 = vmatprep.subr.mxu0 0.0
        %1464 = vmatpush1.msra.mxu0 %v886
        %1465 = vmatprep.subr.mxu0 0.0
        %1466 = vmatpush1.msra.mxu0 %v887
        %1467 = vmatprep.subr.mxu0 0.0
        %1468 = vmatpush1.msra.mxu0 %v888
        %1469 = vmatprep.subr.mxu0 0.0
        %1470 = vmatpush1.msra.mxu0 %v889
        %1471 = vmatprep.subr.mxu0 0.0
        %1472 = vmatpush1.msra.mxu0 0.0
        %1473 = vmatprep.subr.mxu0 0.0
        %1474 = vmatpush1.msra.mxu0 0.0
        %1475 = vmatprep.subr.mxu0 0.0
        %1476 = vmatpush1.msra.mxu0 0.0
        %1477 = vmatprep.subr.mxu0 0.0
        %1478 = vmatpush1.msra.mxu0 0.0
        %1479 = vmatprep.subr.mxu0 0.0
        %1480 = vmatpush1.msra.mxu0 0.0
        %1481 = vmatprep.subr.mxu0 0.0
        %1482 = vmatpush1.msra.mxu0 0.0
        %1483 = vmatprep.subr.mxu0 0.0
        %1484 = vmatpush1.msra.mxu0 0.0
        %1485 = vmatprep.subr.mxu0 0.0
        %1486 = vmatpush1.msra.mxu0 0.0
        %1487 = vmatprep.subr.mxu0 0.0
        %1488 = vmatpush1.msra.mxu0 0.0
        %1489 = vmatprep.subr.mxu0 0.0
        %1490 = vmatpush1.msra.mxu0 0.0
        %1491 = vmatprep.subr.mxu0 0.0
        %1492 = vmatpush1.msra.mxu0 0.0
        %1493 = vmatprep.subr.mxu0 0.0
        %1494 = vmatpush1.msra.mxu0 0.0
        %1495 = vmatprep.subr.mxu0 0.0
        %1496 = vmatpush1.msra.mxu0 0.0
        %1497 = vmatprep.subr.mxu0 0.0
        %1498 = vmatpush1.msra.mxu0 0.0
        %1499 = vmatprep.subr.mxu0 0.0
        %1500 = vmatpush1.msra.mxu0 0.0
        %1501 = vmatprep.subr.mxu0 0.0
        %1502 = vmatpush1.msra.mxu0 0.0
        %1503 = vmatprep.subr.mxu0 0.0
        %1504 = vmatpush1.msra.mxu0 0.0
        %1505 = vmatprep.subr.mxu0 0.0
        %1506 = vmatpush1.msra.mxu0 0.0
        %1507 = vmatprep.subr.mxu0 0.0
        %1508 = vmatpush1.msra.mxu0 0.0
        %1509 = vmatprep.subr.mxu0 0.0
        %1510 = vmatpush1.msra.mxu0 0.0
        %1511 = vmatprep.subr.mxu0 0.0
        %1512 = vmatpush1.msra.mxu0 0.0
        %1513 = vmatprep.subr.mxu0 0.0
        %1514 = vmatpush1.msra.mxu0 0.0
        %1515 = vmatprep.subr.mxu0 0.0
        %1516 = vmatpush1.msra.mxu0 0.0
        %1517 = vmatprep.subr.mxu0 0.0
        %1518 = vmatpush1.msra.mxu0 0.0
        %1519 = vmatprep.subr.mxu0 0.0
        %1520 = vmatpush1.msra.mxu0 0.0
        %1521 = vmatprep.subr.mxu0 0.0
        %1522 = vmatpush1.msra.mxu0 0.0
        %1523 = vmatprep.subr.mxu0 0.0
        %1524 = vmatpush1.msra.mxu0 0.0
        %1525 = vmatprep.subr.mxu0 0.0
        %1526 = vmatpush1.msra.mxu0 0.0
        %1527 = vmatprep.mubr.f32.mxu0 0.0
        %1528 = vmatmul.mubr.f32.gmra.mrb[0].mxu0 %v1459
        %v1529 = vpop.f32.mrb[0].mxu0
        %v1530 = vadd.f32 %v1445, %v1529
        %v1531 = vpop.f32.mrb[0].mxu0
        %1532 = vmatprep.mubr.f32.mxu0 0.0
        %1533 = vmatmul.mubr.f32.gmra.mrb[0].mxu0 %v1461
        %v1534 = vpop.f32.mrb[0].mxu0
        %v1535 = vadd.f32 %v1450, %v1534
        %v1536 = vpop.f32.mrb[0].mxu0
        %1537 = vdwg.mxu0
        %v1538 = vadd.f32 %v1530, %v1187
        %v1539 = vadd.f32 %v1535, %v1187
        %v1540 = vxor.u32 %v1538, 2147483648
        %v1541 = vxor.u32 %v1539, 2147483648
        %v1542 = vmul.f32 %v1540, 1.442695
        %v1543 = vpow.pop %v1542
        %v1544 = vmul.f32 %v1541, 1.442695
        %v1545 = vpow.pop %v1544
        %v1546 = vadd.f32 %v1543, 1.0
        %v1547 = vadd.f32 %v1545, 1.0
        %v1548 = vrcp.pop %v1546
        %v1549 = vmul.f32 1.0, %v1548
        %v1550 = vrcp.pop %v1547
        %v1551 = vmul.f32 1.0, %v1550
        %v1552 = vtanh.pop %v1538
        %v1553 = vtanh.pop %v1539
        %v1554 = vmul.f32 %v1549, %v1225
        %v1555 = vmul.f32 %v1551, %v1226
        %1558 = vrot.lane.b32.xlu0 %v1552, 64
        %v1559 = vpop.permute.xlu0 %1558
        %1560 = vrot.lane.b32.xlu0 %v1553, 64
        %v1561 = vpop.permute.xlu0 %1560
        %v1564 = vmul.f32 %v1549, %v1559
        %v1565 = vmul.f32 %v1551, %v1561
        %1568 = vrot.lane.b32.xlu0 %v1564, 32
        %v1569 = vpop.permute.xlu0 %1568
        %1570 = vrot.lane.b32.xlu0 %v1565, 32
        %v1571 = vpop.permute.xlu0 %1570
        %v1574 = vadd.f32 %v1554, %v1569
        %v1575 = vadd.f32 %v1555, %v1571
        %v1576 = vtanh.pop %v1574
        %v1577 = vtanh.pop %v1575
        %1580 = vrot.lane.b32.xlu0 %v1576, 64
        %v1581 = vpop.permute.xlu0 %1580
        %1582 = vrot.lane.b32.xlu0 %v1577, 64
        %v1583 = vpop.permute.xlu0 %1582
        %v1586 = vmul.f32 %v1549, %v1581
        %v1587 = vmul.f32 %v1551, %v1583
        %1590 = vrot.lane.b32.xlu0 %v1586, 32
        %v1591 = vpop.permute.xlu0 %1590
        %1592 = vrot.lane.b32.xlu0 %v1587, 32
        %v1593 = vpop.permute.xlu0 %1592
        %s1596 = scalar_lea.vmem [#allocation2], 16
        %1597 = vst.msk [vmem:[%s1596] sm:$0xff] %vm752, %v1591
        %1598 = vst.msk [vmem:[%s1596 + $0x8] sm:$0xff] %vm752, %v1593
        %1599 = vmatprep.subr.mxu0 0.0
        %1600 = vmatpush1.msra.mxu0 %v882
        %1601 = vmatprep.subr.mxu0 0.0
        %1602 = vmatpush1.msra.mxu0 %v883
        %1603 = vmatprep.subr.mxu0 0.0
        %1604 = vmatpush1.msra.mxu0 %v884
        %1605 = vmatprep.subr.mxu0 0.0
        %1606 = vmatpush1.msra.mxu0 %v885
        %1607 = vmatprep.subr.mxu0 0.0
        %1608 = vmatpush1.msra.mxu0 0.0
        %1609 = vmatprep.subr.mxu0 0.0
        %1610 = vmatpush1.msra.mxu0 0.0
        %1611 = vmatprep.subr.mxu0 0.0
        %1612 = vmatpush1.msra.mxu0 0.0
        %1613 = vmatprep.subr.mxu0 0.0
        %1614 = vmatpush1.msra.mxu0 0.0
        %1615 = vmatprep.subr.mxu0 0.0
        %1616 = vmatpush1.msra.mxu0 0.0
        %1617 = vmatprep.subr.mxu0 0.0
        %1618 = vmatpush1.msra.mxu0 0.0
        %1619 = vmatprep.subr.mxu0 0.0
        %1620 = vmatpush1.msra.mxu0 0.0
        %1621 = vmatprep.subr.mxu0 0.0
        %1622 = vmatpush1.msra.mxu0 0.0
        %1623 = vmatprep.subr.mxu0 0.0
        %1624 = vmatpush1.msra.mxu0 0.0
        %1625 = vmatprep.subr.mxu0 0.0
        %1626 = vmatpush1.msra.mxu0 0.0
        %1627 = vmatprep.subr.mxu0 0.0
        %1628 = vmatpush1.msra.mxu0 0.0
        %1629 = vmatprep.subr.mxu0 0.0
        %1630 = vmatpush1.msra.mxu0 0.0
        %1631 = vmatprep.subr.mxu0 0.0
        %1632 = vmatpush1.msra.mxu0 0.0
        %1633 = vmatprep.subr.mxu0 0.0
        %1634 = vmatpush1.msra.mxu0 0.0
        %1635 = vmatprep.subr.mxu0 0.0
        %1636 = vmatpush1.msra.mxu0 0.0
        %1637 = vmatprep.subr.mxu0 0.0
        %1638 = vmatpush1.msra.mxu0 0.0
        %1639 = vmatprep.subr.mxu0 0.0
        %1640 = vmatpush1.msra.mxu0 0.0
        %1641 = vmatprep.subr.mxu0 0.0
        %1642 = vmatpush1.msra.mxu0 0.0
        %1643 = vmatprep.subr.mxu0 0.0
        %1644 = vmatpush1.msra.mxu0 0.0
        %1645 = vmatprep.subr.mxu0 0.0
        %1646 = vmatpush1.msra.mxu0 0.0
        %1647 = vmatprep.subr.mxu0 0.0
        %1648 = vmatpush1.msra.mxu0 0.0
        %1649 = vmatprep.subr.mxu0 0.0
        %1650 = vmatpush1.msra.mxu0 0.0
        %1651 = vmatprep.subr.mxu0 0.0
        %1652 = vmatpush1.msra.mxu0 0.0
        %1653 = vmatprep.subr.mxu0 0.0
        %1654 = vmatpush1.msra.mxu0 0.0
        %1655 = vmatprep.subr.mxu0 0.0
        %1656 = vmatpush1.msra.mxu0 0.0
        %1657 = vmatprep.subr.mxu0 0.0
        %1658 = vmatpush1.msra.mxu0 0.0
        %1659 = vmatprep.subr.mxu0 0.0
        %1660 = vmatpush1.msra.mxu0 0.0
        %1661 = vmatprep.subr.mxu0 0.0
        %1662 = vmatpush1.msra.mxu0 0.0
        %1663 = vmatprep.mubr.f32.mxu0 0.0
        %1664 = vmatmul.mubr.f32.gmra.mrb[0].mxu0 %v1459
        %v1665 = vpop.f32.mrb[0].mxu0
        %v1666 = vadd.f32 0.0, %v1665
        %v1667 = vpop.f32.mrb[0].mxu0
        %1668 = vmatprep.mubr.f32.mxu0 0.0
        %1669 = vmatmul.mubr.f32.gmra.mrb[0].mxu0 %v1461
        %v1670 = vpop.f32.mrb[0].mxu0
        %v1671 = vadd.f32 0.0, %v1670
        %v1672 = vpop.f32.mrb[0].mxu0
        %1673 = vdwg.mxu0
        %v1674 = vadd.f32 %v864, %v1666
        %v1675 = vadd.f32 %v869, %v1671
        %v1676 = vxor.u32 %v1674, 2147483648
        %v1677 = vxor.u32 %v1675, 2147483648
        %v1678 = vmul.f32 %v1676, 1.442695
        %v1679 = vpow.pop %v1678
        %v1680 = vmul.f32 %v1677, 1.442695
        %v1681 = vpow.pop %v1680
        %v1682 = vadd.f32 %v1679, 1.0
        %v1683 = vadd.f32 %v1681, 1.0
        %v1684 = vrcp.pop %v1682
        %v1685 = vmul.f32 1.0, %v1684
        %v1686 = vrcp.pop %v1683
        %v1687 = vmul.f32 1.0, %v1686
        %v1688 = vtanh.pop %v1674
        %v1689 = vtanh.pop %v1675
        %v1690 = vmul.f32 %v1685, %v1360
        %v1691 = vmul.f32 %v1687, %v1361
        %1694 = vrot.lane.b32.xlu0 %v1688, 64
        %v1695 = vpop.permute.xlu0 %1694
        %1696 = vrot.lane.b32.xlu0 %v1689, 64
        %v1697 = vpop.permute.xlu0 %1696
        %v1700 = vmul.f32 %v1685, %v1695
        %v1701 = vmul.f32 %v1687, %v1697
        %1704 = vrot.lane.b32.xlu0 %v1700, 32
        %v1705 = vpop.permute.xlu0 %1704
        %1706 = vrot.lane.b32.xlu0 %v1701, 32
        %v1707 = vpop.permute.xlu0 %1706
        %v1710 = vadd.f32 %v1690, %v1705
        %v1711 = vadd.f32 %v1691, %v1707
        %v1712 = vtanh.pop %v1710
        %v1713 = vtanh.pop %v1711
        %1716 = vrot.lane.b32.xlu0 %v1712, 64
        %v1717 = vpop.permute.xlu0 %1716
        %1718 = vrot.lane.b32.xlu0 %v1713, 64
        %v1719 = vpop.permute.xlu0 %1718
        %v1722 = vmul.f32 %v1685, %v1717
        %v1723 = vmul.f32 %v1687, %v1719
        %v1724 = vsel %vm752, %v1591, 0
        %v1726 = vsel %vm752, %v1593, 0
        %1728 = vmatprep.subr.mxu0 0.0
        %1729 = vmatpush1.msra.mxu0 %v890
        %1730 = vmatprep.subr.mxu0 0.0
        %1731 = vmatpush1.msra.mxu0 %v891
        %1732 = vmatprep.subr.mxu0 0.0
        %1733 = vmatpush1.msra.mxu0 %v892
        %1734 = vmatprep.subr.mxu0 0.0
        %1735 = vmatpush1.msra.mxu0 %v893
        %1736 = vmatprep.subr.mxu0 0.0
        %1737 = vmatpush1.msra.mxu0 0.0
        %1738 = vmatprep.subr.mxu0 0.0
        %1739 = vmatpush1.msra.mxu0 0.0
        %1740 = vmatprep.subr.mxu0 0.0
        %1741 = vmatpush1.msra.mxu0 0.0
        %1742 = vmatprep.subr.mxu0 0.0
        %1743 = vmatpush1.msra.mxu0 0.0
        %1744 = vmatprep.subr.mxu0 0.0
        %1745 = vmatpush1.msra.mxu0 0.0
        %1746 = vmatprep.subr.mxu0 0.0
        %1747 = vmatpush1.msra.mxu0 0.0
        %1748 = vmatprep.subr.mxu0 0.0
        %1749 = vmatpush1.msra.mxu0 0.0
        %1750 = vmatprep.subr.mxu0 0.0
        %1751 = vmatpush1.msra.mxu0 0.0
        %1752 = vmatprep.subr.mxu0 0.0
        %1753 = vmatpush1.msra.mxu0 0.0
        %1754 = vmatprep.subr.mxu0 0.0
        %1755 = vmatpush1.msra.mxu0 0.0
        %1756 = vmatprep.subr.mxu0 0.0
        %1757 = vmatpush1.msra.mxu0 0.0
        %1758 = vmatprep.subr.mxu0 0.0
        %1759 = vmatpush1.msra.mxu0 0.0
        %1760 = vmatprep.subr.mxu0 0.0
        %1761 = vmatpush1.msra.mxu0 0.0
        %1762 = vmatprep.subr.mxu0 0.0
        %1763 = vmatpush1.msra.mxu0 0.0
        %1764 = vmatprep.subr.mxu0 0.0
        %1765 = vmatpush1.msra.mxu0 0.0
        %1766 = vmatprep.subr.mxu0 0.0
        %1767 = vmatpush1.msra.mxu0 0.0
        %1768 = vmatprep.subr.mxu0 0.0
        %1769 = vmatpush1.msra.mxu0 0.0
        %1770 = vmatprep.subr.mxu0 0.0
        %1771 = vmatpush1.msra.mxu0 0.0
        %1772 = vmatprep.subr.mxu0 0.0
        %1773 = vmatpush1.msra.mxu0 0.0
        %1774 = vmatprep.subr.mxu0 0.0
        %1775 = vmatpush1.msra.mxu0 0.0
        %1776 = vmatprep.subr.mxu0 0.0
        %1777 = vmatpush1.msra.mxu0 0.0
        %1778 = vmatprep.subr.mxu0 0.0
        %1779 = vmatpush1.msra.mxu0 0.0
        %1780 = vmatprep.subr.mxu0 0.0
        %1781 = vmatpush1.msra.mxu0 0.0
        %1782 = vmatprep.subr.mxu0 0.0
        %1783 = vmatpush1.msra.mxu0 0.0
        %1784 = vmatprep.subr.mxu0 0.0
        %1785 = vmatpush1.msra.mxu0 0.0
        %1786 = vmatprep.subr.mxu0 0.0
        %1787 = vmatpush1.msra.mxu0 0.0
        %1788 = vmatprep.subr.mxu0 0.0
        %1789 = vmatpush1.msra.mxu0 0.0
        %1790 = vmatprep.subr.mxu0 0.0
        %1791 = vmatpush1.msra.mxu0 0.0
        %1792 = vmatprep.mubr.f32.mxu0 0.0
        %1793 = vmatmul.mubr.f32.gmra.mrb[0].mxu0 %v1724
        %v1794 = vpop.f32.mrb[0].mxu0
        %v1795 = vadd.f32 0.0, %v1794
        %v1796 = vpop.f32.mrb[0].mxu0
        %1797 = vmatprep.mubr.f32.mxu0 0.0
        %1798 = vmatmul.mubr.f32.gmra.mrb[0].mxu0 %v1726
        %v1799 = vpop.f32.mrb[0].mxu0
        %v1800 = vadd.f32 0.0, %v1799
        %v1801 = vpop.f32.mrb[0].mxu0
        %1802 = vdwg.mxu0
        %1805 = vrot.lane.b32.xlu0 %v1722, 32
        %v1806 = vpop.permute.xlu0 %1805
        %1807 = vrot.lane.b32.xlu0 %v1723, 32
        %v1808 = vpop.permute.xlu0 %1807
        %v1809 = vsel %vm752, %v1806, 0
        %v1811 = vsel %vm752, %v1808, 0
        %1813 = vmatprep.subr.mxu0 0.0
        %1814 = vmatpush1.msra.mxu0 %v886
        %1815 = vmatprep.subr.mxu0 0.0
        %1816 = vmatpush1.msra.mxu0 %v887
        %1817 = vmatprep.subr.mxu0 0.0
        %1818 = vmatpush1.msra.mxu0 %v888
        %1819 = vmatprep.subr.mxu0 0.0
        %1820 = vmatpush1.msra.mxu0 %v889
        %1821 = vmatprep.subr.mxu0 0.0
        %1822 = vmatpush1.msra.mxu0 0.0
        %1823 = vmatprep.subr.mxu0 0.0
        %1824 = vmatpush1.msra.mxu0 0.0
        %1825 = vmatprep.subr.mxu0 0.0
        %1826 = vmatpush1.msra.mxu0 0.0
        %1827 = vmatprep.subr.mxu0 0.0
        %1828 = vmatpush1.msra.mxu0 0.0
        %1829 = vmatprep.subr.mxu0 0.0
        %1830 = vmatpush1.msra.mxu0 0.0
        %1831 = vmatprep.subr.mxu0 0.0
        %1832 = vmatpush1.msra.mxu0 0.0
        %1833 = vmatprep.subr.mxu0 0.0
        %1834 = vmatpush1.msra.mxu0 0.0
        %1835 = vmatprep.subr.mxu0 0.0
        %1836 = vmatpush1.msra.mxu0 0.0
        %1837 = vmatprep.subr.mxu0 0.0
        %1838 = vmatpush1.msra.mxu0 0.0
        %1839 = vmatprep.subr.mxu0 0.0
        %1840 = vmatpush1.msra.mxu0 0.0
        %1841 = vmatprep.subr.mxu0 0.0
        %1842 = vmatpush1.msra.mxu0 0.0
        %1843 = vmatprep.subr.mxu0 0.0
        %1844 = vmatpush1.msra.mxu0 0.0
        %1845 = vmatprep.subr.mxu0 0.0
        %1846 = vmatpush1.msra.mxu0 0.0
        %1847 = vmatprep.subr.mxu0 0.0
        %1848 = vmatpush1.msra.mxu0 0.0
        %1849 = vmatprep.subr.mxu0 0.0
        %1850 = vmatpush1.msra.mxu0 0.0
        %1851 = vmatprep.subr.mxu0 0.0
        %1852 = vmatpush1.msra.mxu0 0.0
        %1853 = vmatprep.subr.mxu0 0.0
        %1854 = vmatpush1.msra.mxu0 0.0
        %1855 = vmatprep.subr.mxu0 0.0
        %1856 = vmatpush1.msra.mxu0 0.0
        %1857 = vmatprep.subr.mxu0 0.0
        %1858 = vmatpush1.msra.mxu0 0.0
        %1859 = vmatprep.subr.mxu0 0.0
        %1860 = vmatpush1.msra.mxu0 0.0
        %1861 = vmatprep.subr.mxu0 0.0
        %1862 = vmatpush1.msra.mxu0 0.0
        %1863 = vmatprep.subr.mxu0 0.0
        %1864 = vmatpush1.msra.mxu0 0.0
        %1865 = vmatprep.subr.mxu0 0.0
        %1866 = vmatpush1.msra.mxu0 0.0
        %1867 = vmatprep.subr.mxu0 0.0
        %1868 = vmatpush1.msra.mxu0 0.0
        %1869 = vmatprep.subr.mxu0 0.0
        %1870 = vmatpush1.msra.mxu0 0.0
        %1871 = vmatprep.subr.mxu0 0.0
        %1872 = vmatpush1.msra.mxu0 0.0
        %1873 = vmatprep.subr.mxu0 0.0
        %1874 = vmatpush1.msra.mxu0 0.0
        %1875 = vmatprep.subr.mxu0 0.0
        %1876 = vmatpush1.msra.mxu0 0.0
        %1877 = vmatprep.mubr.f32.mxu0 0.0
        %1878 = vmatmul.mubr.f32.gmra.mrb[0].mxu0 %v1809
        %v1879 = vpop.f32.mrb[0].mxu0
        %v1880 = vadd.f32 %v1795, %v1879
        %v1881 = vpop.f32.mrb[0].mxu0
        %1882 = vmatprep.mubr.f32.mxu0 0.0
        %1883 = vmatmul.mubr.f32.gmra.mrb[0].mxu0 %v1811
        %v1884 = vpop.f32.mrb[0].mxu0
        %v1885 = vadd.f32 %v1800, %v1884
        %v1886 = vpop.f32.mrb[0].mxu0
        %1887 = vdwg.mxu0
        %v1888 = vadd.f32 %v1880, %v1187
        %v1889 = vadd.f32 %v1885, %v1187
        %v1890 = vxor.u32 %v1888, 2147483648
        %v1891 = vxor.u32 %v1889, 2147483648
        %v1892 = vmul.f32 %v1890, 1.442695
        %v1893 = vpow.pop %v1892
        %v1894 = vmul.f32 %v1891, 1.442695
        %v1895 = vpow.pop %v1894
        %v1896 = vadd.f32 %v1893, 1.0
        %v1897 = vadd.f32 %v1895, 1.0
        %v1898 = vrcp.pop %v1896
        %v1899 = vmul.f32 1.0, %v1898
        %v1900 = vrcp.pop %v1897
        %v1901 = vmul.f32 1.0, %v1900
        %v1902 = vtanh.pop %v1888
        %v1903 = vtanh.pop %v1889
        %v1904 = vmul.f32 %v1899, %v1574
        %v1905 = vmul.f32 %v1901, %v1575
        %1908 = vrot.lane.b32.xlu0 %v1902, 64
        %v1909 = vpop.permute.xlu0 %1908
        %1910 = vrot.lane.b32.xlu0 %v1903, 64
        %v1911 = vpop.permute.xlu0 %1910
        %v1914 = vmul.f32 %v1899, %v1909
        %v1915 = vmul.f32 %v1901, %v1911
        %1918 = vrot.lane.b32.xlu0 %v1914, 32
        %v1919 = vpop.permute.xlu0 %1918
        %1920 = vrot.lane.b32.xlu0 %v1915, 32
        %v1921 = vpop.permute.xlu0 %1920
        %v1924 = vadd.f32 %v1904, %v1919
        %v1925 = vadd.f32 %v1905, %v1921
        %v1926 = vtanh.pop %v1924
        %v1927 = vtanh.pop %v1925
        %1930 = vrot.lane.b32.xlu0 %v1926, 64
        %v1931 = vpop.permute.xlu0 %1930
        %1932 = vrot.lane.b32.xlu0 %v1927, 64
        %v1933 = vpop.permute.xlu0 %1932
        %v1936 = vmul.f32 %v1899, %v1931
        %v1937 = vmul.f32 %v1901, %v1933
        %1940 = vrot.lane.b32.xlu0 %v1936, 32
        %v1941 = vpop.permute.xlu0 %1940
        %1942 = vrot.lane.b32.xlu0 %v1937, 32
        %v1943 = vpop.permute.xlu0 %1942
        %s1946 = scalar_lea.vmem [#allocation2], 32
        %1947 = vst.msk [vmem:[%s1946] sm:$0xff] %vm752, %v1941
        %1948 = vst.msk [vmem:[%s1946 + $0x8] sm:$0xff] %vm752, %v1943
        %1949 = vmatprep.subr.mxu0 0.0
        %1950 = vmatpush1.msra.mxu0 %v882
        %1951 = vmatprep.subr.mxu0 0.0
        %1952 = vmatpush1.msra.mxu0 %v883
        %1953 = vmatprep.subr.mxu0 0.0
        %1954 = vmatpush1.msra.mxu0 %v884
        %1955 = vmatprep.subr.mxu0 0.0
        %1956 = vmatpush1.msra.mxu0 %v885
        %1957 = vmatprep.subr.mxu0 0.0
        %1958 = vmatpush1.msra.mxu0 0.0
        %1959 = vmatprep.subr.mxu0 0.0
        %1960 = vmatpush1.msra.mxu0 0.0
        %1961 = vmatprep.subr.mxu0 0.0
        %1962 = vmatpush1.msra.mxu0 0.0
        %1963 = vmatprep.subr.mxu0 0.0
        %1964 = vmatpush1.msra.mxu0 0.0
        %1965 = vmatprep.subr.mxu0 0.0
        %1966 = vmatpush1.msra.mxu0 0.0
        %1967 = vmatprep.subr.mxu0 0.0
        %1968 = vmatpush1.msra.mxu0 0.0
        %1969 = vmatprep.subr.mxu0 0.0
        %1970 = vmatpush1.msra.mxu0 0.0
        %1971 = vmatprep.subr.mxu0 0.0
        %1972 = vmatpush1.msra.mxu0 0.0
        %1973 = vmatprep.subr.mxu0 0.0
        %1974 = vmatpush1.msra.mxu0 0.0
        %1975 = vmatprep.subr.mxu0 0.0
        %1976 = vmatpush1.msra.mxu0 0.0
        %1977 = vmatprep.subr.mxu0 0.0
        %1978 = vmatpush1.msra.mxu0 0.0
        %1979 = vmatprep.subr.mxu0 0.0
        %1980 = vmatpush1.msra.mxu0 0.0
        %1981 = vmatprep.subr.mxu0 0.0
        %1982 = vmatpush1.msra.mxu0 0.0
        %1983 = vmatprep.subr.mxu0 0.0
        %1984 = vmatpush1.msra.mxu0 0.0
        %1985 = vmatprep.subr.mxu0 0.0
        %1986 = vmatpush1.msra.mxu0 0.0
        %1987 = vmatprep.subr.mxu0 0.0
        %1988 = vmatpush1.msra.mxu0 0.0
        %1989 = vmatprep.subr.mxu0 0.0
        %1990 = vmatpush1.msra.mxu0 0.0
        %1991 = vmatprep.subr.mxu0 0.0
        %1992 = vmatpush1.msra.mxu0 0.0
        %1993 = vmatprep.subr.mxu0 0.0
        %1994 = vmatpush1.msra.mxu0 0.0
        %1995 = vmatprep.subr.mxu0 0.0
        %1996 = vmatpush1.msra.mxu0 0.0
        %1997 = vmatprep.subr.mxu0 0.0
        %1998 = vmatpush1.msra.mxu0 0.0
        %1999 = vmatprep.subr.mxu0 0.0
        %2000 = vmatpush1.msra.mxu0 0.0
        %2001 = vmatprep.subr.mxu0 0.0
        %2002 = vmatpush1.msra.mxu0 0.0
        %2003 = vmatprep.subr.mxu0 0.0
        %2004 = vmatpush1.msra.mxu0 0.0
        %2005 = vmatprep.subr.mxu0 0.0
        %2006 = vmatpush1.msra.mxu0 0.0
        %2007 = vmatprep.subr.mxu0 0.0
        %2008 = vmatpush1.msra.mxu0 0.0
        %2009 = vmatprep.subr.mxu0 0.0
        %2010 = vmatpush1.msra.mxu0 0.0
        %2011 = vmatprep.subr.mxu0 0.0
        %2012 = vmatpush1.msra.mxu0 0.0
        %2013 = vmatprep.mubr.f32.mxu0 0.0
        %2014 = vmatmul.mubr.f32.gmra.mrb[0].mxu0 %v1809
        %v2015 = vpop.f32.mrb[0].mxu0
        %v2016 = vadd.f32 0.0, %v2015
        %v2017 = vpop.f32.mrb[0].mxu0
        %2018 = vmatprep.mubr.f32.mxu0 0.0
        %2019 = vmatmul.mubr.f32.gmra.mrb[0].mxu0 %v1811
        %v2020 = vpop.f32.mrb[0].mxu0
        %v2021 = vadd.f32 0.0, %v2020
        %v2022 = vpop.f32.mrb[0].mxu0
        %2023 = vdwg.mxu0
        %v2024 = vadd.f32 %v874, %v2016
        %v2025 = vadd.f32 %v879, %v2021
        %v2026 = vxor.u32 %v2024, 2147483648
        %v2027 = vxor.u32 %v2025, 2147483648
        %v2028 = vmul.f32 %v2026, 1.442695
        %v2029 = vpow.pop %v2028
        %v2030 = vmul.f32 %v2027, 1.442695
        %v2031 = vpow.pop %v2030
        %v2032 = vadd.f32 %v2029, 1.0
        %v2033 = vadd.f32 %v2031, 1.0
        %v2034 = vrcp.pop %v2032
        %v2035 = vmul.f32 1.0, %v2034
        %v2036 = vrcp.pop %v2033
        %v2037 = vmul.f32 1.0, %v2036
        %v2038 = vtanh.pop %v2024
        %v2039 = vtanh.pop %v2025
        %v2040 = vmul.f32 %v2035, %v1710
        %v2041 = vmul.f32 %v2037, %v1711
        %2044 = vrot.lane.b32.xlu0 %v2038, 64
        %v2045 = vpop.permute.xlu0 %2044
        %2046 = vrot.lane.b32.xlu0 %v2039, 64
        %v2047 = vpop.permute.xlu0 %2046
        %v2050 = vmul.f32 %v2035, %v2045
        %v2051 = vmul.f32 %v2037, %v2047
        %2054 = vrot.lane.b32.xlu0 %v2050, 32
        %v2055 = vpop.permute.xlu0 %2054
        %2056 = vrot.lane.b32.xlu0 %v2051, 32
        %v2057 = vpop.permute.xlu0 %2056
        %v2060 = vadd.f32 %v2040, %v2055
        %v2061 = vadd.f32 %v2041, %v2057
        %v2062 = vtanh.pop %v2060
        %v2063 = vtanh.pop %v2061
        %2066 = vrot.lane.b32.xlu0 %v2062, 64
        %v2067 = vpop.permute.xlu0 %2066
        %2068 = vrot.lane.b32.xlu0 %v2063, 64
        %v2069 = vpop.permute.xlu0 %2068
        %v2072 = vmul.f32 %v2035, %v2067
        %v2073 = vmul.f32 %v2037, %v2069
        %v2074 = vsel %vm752, %v1941, 0
        %v2076 = vsel %vm752, %v1943, 0
        %2078 = vmatprep.subr.mxu0 0.0
        %2079 = vmatpush1.msra.mxu0 %v890
        %2080 = vmatprep.subr.mxu0 0.0
        %2081 = vmatpush1.msra.mxu0 %v891
        %2082 = vmatprep.subr.mxu0 0.0
        %2083 = vmatpush1.msra.mxu0 %v892
        %2084 = vmatprep.subr.mxu0 0.0
        %2085 = vmatpush1.msra.mxu0 %v893
        %2086 = vmatprep.subr.mxu0 0.0
        %2087 = vmatpush1.msra.mxu0 0.0
        %2088 = vmatprep.subr.mxu0 0.0
        %2089 = vmatpush1.msra.mxu0 0.0
        %2090 = vmatprep.subr.mxu0 0.0
        %2091 = vmatpush1.msra.mxu0 0.0
        %2092 = vmatprep.subr.mxu0 0.0
        %2093 = vmatpush1.msra.mxu0 0.0
        %2094 = vmatprep.subr.mxu0 0.0
        %2095 = vmatpush1.msra.mxu0 0.0
        %2096 = vmatprep.subr.mxu0 0.0
        %2097 = vmatpush1.msra.mxu0 0.0
        %2098 = vmatprep.subr.mxu0 0.0
        %2099 = vmatpush1.msra.mxu0 0.0
        %2100 = vmatprep.subr.mxu0 0.0
        %2101 = vmatpush1.msra.mxu0 0.0
        %2102 = vmatprep.subr.mxu0 0.0
        %2103 = vmatpush1.msra.mxu0 0.0
        %2104 = vmatprep.subr.mxu0 0.0
        %2105 = vmatpush1.msra.mxu0 0.0
        %2106 = vmatprep.subr.mxu0 0.0
        %2107 = vmatpush1.msra.mxu0 0.0
        %2108 = vmatprep.subr.mxu0 0.0
        %2109 = vmatpush1.msra.mxu0 0.0
        %2110 = vmatprep.subr.mxu0 0.0
        %2111 = vmatpush1.msra.mxu0 0.0
        %2112 = vmatprep.subr.mxu0 0.0
        %2113 = vmatpush1.msra.mxu0 0.0
        %2114 = vmatprep.subr.mxu0 0.0
        %2115 = vmatpush1.msra.mxu0 0.0
        %2116 = vmatprep.subr.mxu0 0.0
        %2117 = vmatpush1.msra.mxu0 0.0
        %2118 = vmatprep.subr.mxu0 0.0
        %2119 = vmatpush1.msra.mxu0 0.0
        %2120 = vmatprep.subr.mxu0 0.0
        %2121 = vmatpush1.msra.mxu0 0.0
        %2122 = vmatprep.subr.mxu0 0.0
        %2123 = vmatpush1.msra.mxu0 0.0
        %2124 = vmatprep.subr.mxu0 0.0
        %2125 = vmatpush1.msra.mxu0 0.0
        %2126 = vmatprep.subr.mxu0 0.0
        %2127 = vmatpush1.msra.mxu0 0.0
        %2128 = vmatprep.subr.mxu0 0.0
        %2129 = vmatpush1.msra.mxu0 0.0
        %2130 = vmatprep.subr.mxu0 0.0
        %2131 = vmatpush1.msra.mxu0 0.0
        %2132 = vmatprep.subr.mxu0 0.0
        %2133 = vmatpush1.msra.mxu0 0.0
        %2134 = vmatprep.subr.mxu0 0.0
        %2135 = vmatpush1.msra.mxu0 0.0
        %2136 = vmatprep.subr.mxu0 0.0
        %2137 = vmatpush1.msra.mxu0 0.0
        %2138 = vmatprep.subr.mxu0 0.0
        %2139 = vmatpush1.msra.mxu0 0.0
        %2140 = vmatprep.subr.mxu0 0.0
        %2141 = vmatpush1.msra.mxu0 0.0
        %2142 = vmatprep.mubr.f32.mxu0 0.0
        %2143 = vmatmul.mubr.f32.gmra.mrb[0].mxu0 %v2074
        %v2144 = vpop.f32.mrb[0].mxu0
        %v2145 = vadd.f32 0.0, %v2144
        %v2146 = vpop.f32.mrb[0].mxu0
        %2147 = vmatprep.mubr.f32.mxu0 0.0
        %2148 = vmatmul.mubr.f32.gmra.mrb[0].mxu0 %v2076
        %v2149 = vpop.f32.mrb[0].mxu0
        %v2150 = vadd.f32 0.0, %v2149
        %v2151 = vpop.f32.mrb[0].mxu0
        %2152 = vdwg.mxu0
        %2155 = vrot.lane.b32.xlu0 %v2072, 32
        %v2156 = vpop.permute.xlu0 %2155
        %2157 = vrot.lane.b32.xlu0 %v2073, 32
        %v2158 = vpop.permute.xlu0 %2157
        %v2159 = vsel %vm752, %v2156, 0
        %v2161 = vsel %vm752, %v2158, 0
        %2163 = vmatprep.subr.mxu0 0.0
        %2164 = vmatpush1.msra.mxu0 %v886
        %2165 = vmatprep.subr.mxu0 0.0
        %2166 = vmatpush1.msra.mxu0 %v887
        %2167 = vmatprep.subr.mxu0 0.0
        %2168 = vmatpush1.msra.mxu0 %v888
        %2169 = vmatprep.subr.mxu0 0.0
        %2170 = vmatpush1.msra.mxu0 %v889
        %2171 = vmatprep.subr.mxu0 0.0
        %2172 = vmatpush1.msra.mxu0 0.0
        %2173 = vmatprep.subr.mxu0 0.0
        %2174 = vmatpush1.msra.mxu0 0.0
        %2175 = vmatprep.subr.mxu0 0.0
        %2176 = vmatpush1.msra.mxu0 0.0
        %2177 = vmatprep.subr.mxu0 0.0
        %2178 = vmatpush1.msra.mxu0 0.0
        %2179 = vmatprep.subr.mxu0 0.0
        %2180 = vmatpush1.msra.mxu0 0.0
        %2181 = vmatprep.subr.mxu0 0.0
        %2182 = vmatpush1.msra.mxu0 0.0
        %2183 = vmatprep.subr.mxu0 0.0
        %2184 = vmatpush1.msra.mxu0 0.0
        %2185 = vmatprep.subr.mxu0 0.0
        %2186 = vmatpush1.msra.mxu0 0.0
        %2187 = vmatprep.subr.mxu0 0.0
        %2188 = vmatpush1.msra.mxu0 0.0
        %2189 = vmatprep.subr.mxu0 0.0
        %2190 = vmatpush1.msra.mxu0 0.0
        %2191 = vmatprep.subr.mxu0 0.0
        %2192 = vmatpush1.msra.mxu0 0.0
        %2193 = vmatprep.subr.mxu0 0.0
        %2194 = vmatpush1.msra.mxu0 0.0
        %2195 = vmatprep.subr.mxu0 0.0
        %2196 = vmatpush1.msra.mxu0 0.0
        %2197 = vmatprep.subr.mxu0 0.0
        %2198 = vmatpush1.msra.mxu0 0.0
        %2199 = vmatprep.subr.mxu0 0.0
        %2200 = vmatpush1.msra.mxu0 0.0
        %2201 = vmatprep.subr.mxu0 0.0
        %2202 = vmatpush1.msra.mxu0 0.0
        %2203 = vmatprep.subr.mxu0 0.0
        %2204 = vmatpush1.msra.mxu0 0.0
        %2205 = vmatprep.subr.mxu0 0.0
        %2206 = vmatpush1.msra.mxu0 0.0
        %2207 = vmatprep.subr.mxu0 0.0
        %2208 = vmatpush1.msra.mxu0 0.0
        %2209 = vmatprep.subr.mxu0 0.0
        %2210 = vmatpush1.msra.mxu0 0.0
        %2211 = vmatprep.subr.mxu0 0.0
        %2212 = vmatpush1.msra.mxu0 0.0
        %2213 = vmatprep.subr.mxu0 0.0
        %2214 = vmatpush1.msra.mxu0 0.0
        %2215 = vmatprep.subr.mxu0 0.0
        %2216 = vmatpush1.msra.mxu0 0.0
        %2217 = vmatprep.subr.mxu0 0.0
        %2218 = vmatpush1.msra.mxu0 0.0
        %2219 = vmatprep.subr.mxu0 0.0
        %2220 = vmatpush1.msra.mxu0 0.0
        %2221 = vmatprep.subr.mxu0 0.0
        %2222 = vmatpush1.msra.mxu0 0.0
        %2223 = vmatprep.subr.mxu0 0.0
        %2224 = vmatpush1.msra.mxu0 0.0
        %2225 = vmatprep.subr.mxu0 0.0
        %2226 = vmatpush1.msra.mxu0 0.0
        %2227 = vmatprep.mubr.f32.mxu0 0.0
        %2228 = vmatmul.mubr.f32.gmra.mrb[0].mxu0 %v2159
        %v2229 = vpop.f32.mrb[0].mxu0
        %v2230 = vadd.f32 %v2145, %v2229
        %v2231 = vpop.f32.mrb[0].mxu0
        %2232 = vmatprep.mubr.f32.mxu0 0.0
        %2233 = vmatmul.mubr.f32.gmra.mrb[0].mxu0 %v2161
        %v2234 = vpop.f32.mrb[0].mxu0
        %v2235 = vadd.f32 %v2150, %v2234
        %v2236 = vpop.f32.mrb[0].mxu0
        %2237 = vdwg.mxu0
        %v2238 = vadd.f32 %v2230, %v1187
        %v2239 = vadd.f32 %v2235, %v1187
        %v2240 = vxor.u32 %v2238, 2147483648
        %v2241 = vxor.u32 %v2239, 2147483648
        %v2242 = vmul.f32 %v2240, 1.442695
        %v2243 = vpow.pop %v2242
        %v2244 = vmul.f32 %v2241, 1.442695
        %v2245 = vpow.pop %v2244
        %v2246 = vadd.f32 %v2243, 1.0
        %v2247 = vadd.f32 %v2245, 1.0
        %v2248 = vrcp.pop %v2246
        %v2249 = vmul.f32 1.0, %v2248
        %v2250 = vrcp.pop %v2247
        %v2251 = vmul.f32 1.0, %v2250
        %v2252 = vtanh.pop %v2238
        %v2253 = vtanh.pop %v2239
        %v2254 = vmul.f32 %v2249, %v1924
        %v2255 = vmul.f32 %v2251, %v1925
        %2258 = vrot.lane.b32.xlu0 %v2252, 64
        %v2259 = vpop.permute.xlu0 %2258
        %2260 = vrot.lane.b32.xlu0 %v2253, 64
        %v2261 = vpop.permute.xlu0 %2260
        %v2264 = vmul.f32 %v2249, %v2259
        %v2265 = vmul.f32 %v2251, %v2261
        %2268 = vrot.lane.b32.xlu0 %v2264, 32
        %v2269 = vpop.permute.xlu0 %2268
        %2270 = vrot.lane.b32.xlu0 %v2265, 32
        %v2271 = vpop.permute.xlu0 %2270
        %v2274 = vadd.f32 %v2254, %v2269
        %v2275 = vadd.f32 %v2255, %v2271
        %v2276 = vtanh.pop %v2274
        %v2277 = vtanh.pop %v2275
        %2280 = vrot.lane.b32.xlu0 %v2276, 64
        %v2281 = vpop.permute.xlu0 %2280
        %2282 = vrot.lane.b32.xlu0 %v2277, 64
        %v2283 = vpop.permute.xlu0 %2282
        %v2286 = vmul.f32 %v2249, %v2281
        %v2287 = vmul.f32 %v2251, %v2283
        %2290 = vrot.lane.b32.xlu0 %v2286, 32
        %v2291 = vpop.permute.xlu0 %2290
        %2292 = vrot.lane.b32.xlu0 %v2287, 32
        %v2293 = vpop.permute.xlu0 %2292
        %s2296 = scalar_lea.vmem [#allocation2], 48
        %2297 = vst.msk [vmem:[%s2296] sm:$0xff] %vm752, %v2291
        %2298 = vst.msk [vmem:[%s2296 + $0x8] sm:$0xff] %vm752, %v2293
        %v2299 = vld [vmem:[%s11] sm:$0xff]
        %v2300 = vld [vmem:[%s11 + $0x8] sm:$0xff]
        %v2301 = vld [vmem:[%s11 + $0x10] sm:$0xff]
        %v2302 = vld [vmem:[%s11 + $0x18] sm:$0xff]
        %v2303 = vld [vmem:[#allocation2] sm:$0xff]
        %v2304 = vld [vmem:[#allocation2 + $0x8] sm:$0xff]
        %v2305 = vld [vmem:[#allocation2 + $0x10] sm:$0xff]
        %v2306 = vld [vmem:[#allocation2 + $0x18] sm:$0xff]
        %v2307 = vld [vmem:[#allocation2 + $0x20] sm:$0xff]
        %v2308 = vld [vmem:[#allocation2 + $0x28] sm:$0xff]
        %v2309 = vld [vmem:[#allocation2 + $0x30] sm:$0xff]
        %v2310 = vld [vmem:[#allocation2 + $0x38] sm:$0xff]
        %v2311 = vld [vmem:[%s9] sm:$0xff]
        %v2312 = vld [vmem:[%s9 + $0x8] sm:$0xff]
        %v2313 = vld [vmem:[%s9 + $0x10] sm:$0xff]
        %v2314 = vld [vmem:[%s9 + $0x18] sm:$0xff]
        %v2315 = vld [vmem:[%s10] sm:$0x1]
        %v2317 = vlaneseq
        %v2318 = vshrl.u32 %v2317, 7
        %v2319 = vsub.s32 0, %v2318
        %v2320 = vrot.slane %v2315, %v2319
        %v2323 = vsel %vm752, %v2303, 0
        %v2326 = vsel %vm752, %v2304, 0
        %v2329 = vsel %vm752, %v2305, 0
        %v2332 = vsel %vm752, %v2306, 0
        %v2335 = vsel %vm752, %v2307, 0
        %v2338 = vsel %vm752, %v2308, 0
        %v2341 = vsel %vm752, %v2309, 0
        %v2344 = vsel %vm752, %v2310, 0
        %2346 = vmatprep.subr.mxu0 0.0
        %2347 = vmatpush1.msra.mxu0 %v2311
        %2348 = vmatprep.subr.mxu0 0.0
        %2349 = vmatpush1.msra.mxu0 %v2312
        %2350 = vmatprep.subr.mxu0 0.0
        %2351 = vmatpush1.msra.mxu0 %v2313
        %2352 = vmatprep.subr.mxu0 0.0
        %2353 = vmatpush1.msra.mxu0 %v2314
        %2354 = vmatprep.subr.mxu0 0.0
        %2355 = vmatpush1.msra.mxu0 0.0
        %2356 = vmatprep.subr.mxu0 0.0
        %2357 = vmatpush1.msra.mxu0 0.0
        %2358 = vmatprep.subr.mxu0 0.0
        %2359 = vmatpush1.msra.mxu0 0.0
        %2360 = vmatprep.subr.mxu0 0.0
        %2361 = vmatpush1.msra.mxu0 0.0
        %2362 = vmatprep.subr.mxu0 0.0
        %2363 = vmatpush1.msra.mxu0 0.0
        %2364 = vmatprep.subr.mxu0 0.0
        %2365 = vmatpush1.msra.mxu0 0.0
        %2366 = vmatprep.subr.mxu0 0.0
        %2367 = vmatpush1.msra.mxu0 0.0
        %2368 = vmatprep.subr.mxu0 0.0
        %2369 = vmatpush1.msra.mxu0 0.0
        %2370 = vmatprep.subr.mxu0 0.0
        %2371 = vmatpush1.msra.mxu0 0.0
        %2372 = vmatprep.subr.mxu0 0.0
        %2373 = vmatpush1.msra.mxu0 0.0
        %2374 = vmatprep.subr.mxu0 0.0
        %2375 = vmatpush1.msra.mxu0 0.0
        %2376 = vmatprep.subr.mxu0 0.0
        %2377 = vmatpush1.msra.mxu0 0.0
        %2378 = vmatprep.subr.mxu0 0.0
        %2379 = vmatpush1.msra.mxu0 0.0
        %2380 = vmatprep.subr.mxu0 0.0
        %2381 = vmatpush1.msra.mxu0 0.0
        %2382 = vmatprep.subr.mxu0 0.0
        %2383 = vmatpush1.msra.mxu0 0.0
        %2384 = vmatprep.subr.mxu0 0.0
        %2385 = vmatpush1.msra.mxu0 0.0
        %2386 = vmatprep.subr.mxu0 0.0
        %2387 = vmatpush1.msra.mxu0 0.0
        %2388 = vmatprep.subr.mxu0 0.0
        %2389 = vmatpush1.msra.mxu0 0.0
        %2390 = vmatprep.subr.mxu0 0.0
        %2391 = vmatpush1.msra.mxu0 0.0
        %2392 = vmatprep.subr.mxu0 0.0
        %2393 = vmatpush1.msra.mxu0 0.0
        %2394 = vmatprep.subr.mxu0 0.0
        %2395 = vmatpush1.msra.mxu0 0.0
        %2396 = vmatprep.subr.mxu0 0.0
        %2397 = vmatpush1.msra.mxu0 0.0
        %2398 = vmatprep.subr.mxu0 0.0
        %2399 = vmatpush1.msra.mxu0 0.0
        %2400 = vmatprep.subr.mxu0 0.0
        %2401 = vmatpush1.msra.mxu0 0.0
        %2402 = vmatprep.subr.mxu0 0.0
        %2403 = vmatpush1.msra.mxu0 0.0
        %2404 = vmatprep.subr.mxu0 0.0
        %2405 = vmatpush1.msra.mxu0 0.0
        %2406 = vmatprep.subr.mxu0 0.0
        %2407 = vmatpush1.msra.mxu0 0.0
        %2408 = vmatprep.subr.mxu0 0.0
        %2409 = vmatpush1.msra.mxu0 0.0
        %2410 = vmatprep.mubr.f32.mxu0 0.0
        %2411 = vmatmul.mubr.f32.gmra.mrb[0].mxu0 %v2323
        %v2412 = vpop.f32.mrb[0].mxu0
        %v2413 = vadd.f32 %v2320, %v2412
        %v2414 = vpop.f32.mrb[0].mxu0
        %2415 = vmatprep.mubr.f32.mxu0 0.0
        %2416 = vmatmul.mubr.f32.gmra.mrb[0].mxu0 %v2326
        %v2417 = vpop.f32.mrb[0].mxu0
        %v2418 = vadd.f32 %v2320, %v2417
        %v2419 = vpop.f32.mrb[0].mxu0
        %2420 = vmatprep.mubr.f32.mxu0 0.0
        %2421 = vmatmul.mubr.f32.gmra.mrb[0].mxu0 %v2329
        %v2422 = vpop.f32.mrb[0].mxu0
        %v2423 = vadd.f32 %v2320, %v2422
        %v2424 = vpop.f32.mrb[0].mxu0
        %2425 = vmatprep.mubr.f32.mxu0 0.0
        %2426 = vmatmul.mubr.f32.gmra.mrb[0].mxu0 %v2332
        %v2427 = vpop.f32.mrb[0].mxu0
        %v2428 = vadd.f32 %v2320, %v2427
        %v2429 = vpop.f32.mrb[0].mxu0
        %2430 = vmatprep.mubr.f32.mxu0 0.0
        %2431 = vmatmul.mubr.f32.gmra.mrb[0].mxu0 %v2335
        %v2432 = vpop.f32.mrb[0].mxu0
        %v2433 = vadd.f32 %v2320, %v2432
        %v2434 = vpop.f32.mrb[0].mxu0
        %2435 = vmatprep.mubr.f32.mxu0 0.0
        %2436 = vmatmul.mubr.f32.gmra.mrb[0].mxu0 %v2338
        %v2437 = vpop.f32.mrb[0].mxu0
        %v2438 = vadd.f32 %v2320, %v2437
        %v2439 = vpop.f32.mrb[0].mxu0
        %2440 = vmatprep.mubr.f32.mxu0 0.0
        %2441 = vmatmul.mubr.f32.gmra.mrb[0].mxu0 %v2341
        %v2442 = vpop.f32.mrb[0].mxu0
        %v2443 = vadd.f32 %v2320, %v2442
        %v2444 = vpop.f32.mrb[0].mxu0
        %2445 = vmatprep.mubr.f32.mxu0 0.0
        %2446 = vmatmul.mubr.f32.gmra.mrb[0].mxu0 %v2344
        %v2447 = vpop.f32.mrb[0].mxu0
        %v2448 = vadd.f32 %v2320, %v2447
        %v2449 = vpop.f32.mrb[0].mxu0
        %2450 = vdwg.mxu0
        %v2451 = vld [vmem:[%s7] sm:$0xff]
        %v2452 = vld [vmem:[%s7 + $0x8] sm:$0xff]
        %v2453 = vld [vmem:[%s7 + $0x10] sm:$0xff]
        %v2454 = vld [vmem:[%s7 + $0x18] sm:$0xff]
        %v2455 = vld [vmem:[%s8] sm:$0x1]
        %v2457 = vlaneseq
        %v2458 = vshrl.u32 %v2457, 7
        %v2459 = vsub.s32 0, %v2458
        %v2460 = vrot.slane %v2455, %v2459
        %v2462 = vsel %vm752, %v2291, 0
        %v2464 = vsel %vm752, %v2293, 0
        %2466 = vmatprep.subr.mxu0 0.0
        %2467 = vmatpush1.msra.mxu0 %v2451
        %2468 = vmatprep.subr.mxu0 0.0
        %2469 = vmatpush1.msra.mxu0 %v2452
        %2470 = vmatprep.subr.mxu0 0.0
        %2471 = vmatpush1.msra.mxu0 %v2453
        %2472 = vmatprep.subr.mxu0 0.0
        %2473 = vmatpush1.msra.mxu0 %v2454
        %2474 = vmatprep.subr.mxu0 0.0
        %2475 = vmatpush1.msra.mxu0 0.0
        %2476 = vmatprep.subr.mxu0 0.0
        %2477 = vmatpush1.msra.mxu0 0.0
        %2478 = vmatprep.subr.mxu0 0.0
        %2479 = vmatpush1.msra.mxu0 0.0
        %2480 = vmatprep.subr.mxu0 0.0
        %2481 = vmatpush1.msra.mxu0 0.0
        %2482 = vmatprep.subr.mxu0 0.0
        %2483 = vmatpush1.msra.mxu0 0.0
        %2484 = vmatprep.subr.mxu0 0.0
        %2485 = vmatpush1.msra.mxu0 0.0
        %2486 = vmatprep.subr.mxu0 0.0
        %2487 = vmatpush1.msra.mxu0 0.0
        %2488 = vmatprep.subr.mxu0 0.0
        %2489 = vmatpush1.msra.mxu0 0.0
        %2490 = vmatprep.subr.mxu0 0.0
        %2491 = vmatpush1.msra.mxu0 0.0
        %2492 = vmatprep.subr.mxu0 0.0
        %2493 = vmatpush1.msra.mxu0 0.0
        %2494 = vmatprep.subr.mxu0 0.0
        %2495 = vmatpush1.msra.mxu0 0.0
        %2496 = vmatprep.subr.mxu0 0.0
        %2497 = vmatpush1.msra.mxu0 0.0
        %2498 = vmatprep.subr.mxu0 0.0
        %2499 = vmatpush1.msra.mxu0 0.0
        %2500 = vmatprep.subr.mxu0 0.0
        %2501 = vmatpush1.msra.mxu0 0.0
        %2502 = vmatprep.subr.mxu0 0.0
        %2503 = vmatpush1.msra.mxu0 0.0
        %2504 = vmatprep.subr.mxu0 0.0
        %2505 = vmatpush1.msra.mxu0 0.0
        %2506 = vmatprep.subr.mxu0 0.0
        %2507 = vmatpush1.msra.mxu0 0.0
        %2508 = vmatprep.subr.mxu0 0.0
        %2509 = vmatpush1.msra.mxu0 0.0
        %2510 = vmatprep.subr.mxu0 0.0
        %2511 = vmatpush1.msra.mxu0 0.0
        %2512 = vmatprep.subr.mxu0 0.0
        %2513 = vmatpush1.msra.mxu0 0.0
        %2514 = vmatprep.subr.mxu0 0.0
        %2515 = vmatpush1.msra.mxu0 0.0
        %2516 = vmatprep.subr.mxu0 0.0
        %2517 = vmatpush1.msra.mxu0 0.0
        %2518 = vmatprep.subr.mxu0 0.0
        %2519 = vmatpush1.msra.mxu0 0.0
        %2520 = vmatprep.subr.mxu0 0.0
        %2521 = vmatpush1.msra.mxu0 0.0
        %2522 = vmatprep.subr.mxu0 0.0
        %2523 = vmatpush1.msra.mxu0 0.0
        %2524 = vmatprep.subr.mxu0 0.0
        %2525 = vmatpush1.msra.mxu0 0.0
        %2526 = vmatprep.subr.mxu0 0.0
        %2527 = vmatpush1.msra.mxu0 0.0
        %2528 = vmatprep.subr.mxu0 0.0
        %2529 = vmatpush1.msra.mxu0 0.0
        %2530 = vmatprep.mubr.f32.mxu0 0.0
        %2531 = vmatmul.mubr.f32.gmra.mrb[0].mxu0 %v2462
        %v2532 = vpop.f32.mrb[0].mxu0
        %v2533 = vadd.f32 %v2460, %v2532
        %v2534 = vpop.f32.mrb[0].mxu0
        %2535 = vmatprep.mubr.f32.mxu0 0.0
        %2536 = vmatmul.mubr.f32.gmra.mrb[0].mxu0 %v2464
        %v2537 = vpop.f32.mrb[0].mxu0
        %v2538 = vadd.f32 %v2460, %v2537
        %v2539 = vpop.f32.mrb[0].mxu0
        %2540 = vdwg.mxu0
        %v2541 = vmul.f32 %v2533, %v2413
        %v2542 = vmul.f32 %v2538, %v2418
        %v2544 = vsel %vm752, %v2541, 0
        %v2547 = vsel %vm752, %v2542, 0
        %2549 = vmatprep.subr.mxu0 0.0
        %2550 = vmatpush1.msra.mxu0 %v2299
        %2551 = vmatprep.subr.mxu0 0.0
        %2552 = vmatpush1.msra.mxu0 %v2300
        %2553 = vmatprep.subr.mxu0 0.0
        %2554 = vmatpush1.msra.mxu0 %v2301
        %2555 = vmatprep.subr.mxu0 0.0
        %2556 = vmatpush1.msra.mxu0 %v2302
        %2557 = vmatprep.subr.mxu0 0.0
        %2558 = vmatpush1.msra.mxu0 0.0
        %2559 = vmatprep.subr.mxu0 0.0
        %2560 = vmatpush1.msra.mxu0 0.0
        %2561 = vmatprep.subr.mxu0 0.0
        %2562 = vmatpush1.msra.mxu0 0.0
        %2563 = vmatprep.subr.mxu0 0.0
        %2564 = vmatpush1.msra.mxu0 0.0
        %2565 = vmatprep.subr.mxu0 0.0
        %2566 = vmatpush1.msra.mxu0 0.0
        %2567 = vmatprep.subr.mxu0 0.0
        %2568 = vmatpush1.msra.mxu0 0.0
        %2569 = vmatprep.subr.mxu0 0.0
        %2570 = vmatpush1.msra.mxu0 0.0
        %2571 = vmatprep.subr.mxu0 0.0
        %2572 = vmatpush1.msra.mxu0 0.0
        %2573 = vmatprep.subr.mxu0 0.0
        %2574 = vmatpush1.msra.mxu0 0.0
        %2575 = vmatprep.subr.mxu0 0.0
        %2576 = vmatpush1.msra.mxu0 0.0
        %2577 = vmatprep.subr.mxu0 0.0
        %2578 = vmatpush1.msra.mxu0 0.0
        %2579 = vmatprep.subr.mxu0 0.0
        %2580 = vmatpush1.msra.mxu0 0.0
        %2581 = vmatprep.subr.mxu0 0.0
        %2582 = vmatpush1.msra.mxu0 0.0
        %2583 = vmatprep.subr.mxu0 0.0
        %2584 = vmatpush1.msra.mxu0 0.0
        %2585 = vmatprep.subr.mxu0 0.0
        %2586 = vmatpush1.msra.mxu0 0.0
        %2587 = vmatprep.subr.mxu0 0.0
        %2588 = vmatpush1.msra.mxu0 0.0
        %2589 = vmatprep.subr.mxu0 0.0
        %2590 = vmatpush1.msra.mxu0 0.0
        %2591 = vmatprep.subr.mxu0 0.0
        %2592 = vmatpush1.msra.mxu0 0.0
        %2593 = vmatprep.subr.mxu0 0.0
        %2594 = vmatpush1.msra.mxu0 0.0
        %2595 = vmatprep.subr.mxu0 0.0
        %2596 = vmatpush1.msra.mxu0 0.0
        %2597 = vmatprep.subr.mxu0 0.0
        %2598 = vmatpush1.msra.mxu0 0.0
        %2599 = vmatprep.subr.mxu0 0.0
        %2600 = vmatpush1.msra.mxu0 0.0
        %2601 = vmatprep.subr.mxu0 0.0
        %2602 = vmatpush1.msra.mxu0 0.0
        %2603 = vmatprep.subr.mxu0 0.0
        %2604 = vmatpush1.msra.mxu0 0.0
        %2605 = vmatprep.subr.mxu0 0.0
        %2606 = vmatpush1.msra.mxu0 0.0
        %2607 = vmatprep.subr.mxu0 0.0
        %2608 = vmatpush1.msra.mxu0 0.0
        %2609 = vmatprep.subr.mxu0 0.0
        %2610 = vmatpush1.msra.mxu0 0.0
        %2611 = vmatprep.subr.mxu0 0.0
        %2612 = vmatpush1.msra.mxu0 0.0
        %2613 = vmatprep.mubr.f32.mxu0 0.0
        %2614 = vmatmul.mubr.f32.gmra.mrb[0].mxu0 %v2544
        %v2615 = vpop.f32.mrb[0].mxu0
        %v2616 = vadd.f32 0.0, %v2615
        %v2617 = vpop.f32.mrb[0].mxu0
        %2618 = vmatprep.mubr.f32.mxu0 0.0
        %2619 = vmatmul.mubr.f32.gmra.mrb[0].mxu0 %v2547
        %v2620 = vpop.f32.mrb[0].mxu0
        %v2621 = vadd.f32 0.0, %v2620
        %v2622 = vpop.f32.mrb[0].mxu0
        %2623 = vdwg.mxu0
        %v2624 = vmul.f32 %v2616, 0.35355338
        %v2625 = vmul.f32 %v2621, 0.35355338
        %v2626 = vmul.f32 %v2533, %v2423
        %v2627 = vmul.f32 %v2538, %v2428
        %v2629 = vsel %vm752, %v2626, 0
        %v2632 = vsel %vm752, %v2627, 0
        %2634 = vmatprep.subr.mxu0 0.0
        %2635 = vmatpush1.msra.mxu0 %v2299
        %2636 = vmatprep.subr.mxu0 0.0
        %2637 = vmatpush1.msra.mxu0 %v2300
        %2638 = vmatprep.subr.mxu0 0.0
        %2639 = vmatpush1.msra.mxu0 %v2301
        %2640 = vmatprep.subr.mxu0 0.0
        %2641 = vmatpush1.msra.mxu0 %v2302
        %2642 = vmatprep.subr.mxu0 0.0
        %2643 = vmatpush1.msra.mxu0 0.0
        %2644 = vmatprep.subr.mxu0 0.0
        %2645 = vmatpush1.msra.mxu0 0.0
        %2646 = vmatprep.subr.mxu0 0.0
        %2647 = vmatpush1.msra.mxu0 0.0
        %2648 = vmatprep.subr.mxu0 0.0
        %2649 = vmatpush1.msra.mxu0 0.0
        %2650 = vmatprep.subr.mxu0 0.0
        %2651 = vmatpush1.msra.mxu0 0.0
        %2652 = vmatprep.subr.mxu0 0.0
        %2653 = vmatpush1.msra.mxu0 0.0
        %2654 = vmatprep.subr.mxu0 0.0
        %2655 = vmatpush1.msra.mxu0 0.0
        %2656 = vmatprep.subr.mxu0 0.0
        %2657 = vmatpush1.msra.mxu0 0.0
        %2658 = vmatprep.subr.mxu0 0.0
        %2659 = vmatpush1.msra.mxu0 0.0
        %2660 = vmatprep.subr.mxu0 0.0
        %2661 = vmatpush1.msra.mxu0 0.0
        %2662 = vmatprep.subr.mxu0 0.0
        %2663 = vmatpush1.msra.mxu0 0.0
        %2664 = vmatprep.subr.mxu0 0.0
        %2665 = vmatpush1.msra.mxu0 0.0
        %2666 = vmatprep.subr.mxu0 0.0
        %2667 = vmatpush1.msra.mxu0 0.0
        %2668 = vmatprep.subr.mxu0 0.0
        %2669 = vmatpush1.msra.mxu0 0.0
        %2670 = vmatprep.subr.mxu0 0.0
        %2671 = vmatpush1.msra.mxu0 0.0
        %2672 = vmatprep.subr.mxu0 0.0
        %2673 = vmatpush1.msra.mxu0 0.0
        %2674 = vmatprep.subr.mxu0 0.0
        %2675 = vmatpush1.msra.mxu0 0.0
        %2676 = vmatprep.subr.mxu0 0.0
        %2677 = vmatpush1.msra.mxu0 0.0
        %2678 = vmatprep.subr.mxu0 0.0
        %2679 = vmatpush1.msra.mxu0 0.0
        %2680 = vmatprep.subr.mxu0 0.0
        %2681 = vmatpush1.msra.mxu0 0.0
        %2682 = vmatprep.subr.mxu0 0.0
        %2683 = vmatpush1.msra.mxu0 0.0
        %2684 = vmatprep.subr.mxu0 0.0
        %2685 = vmatpush1.msra.mxu0 0.0
        %2686 = vmatprep.subr.mxu0 0.0
        %2687 = vmatpush1.msra.mxu0 0.0
        %2688 = vmatprep.subr.mxu0 0.0
        %2689 = vmatpush1.msra.mxu0 0.0
        %2690 = vmatprep.subr.mxu0 0.0
        %2691 = vmatpush1.msra.mxu0 0.0
        %2692 = vmatprep.subr.mxu0 0.0
        %2693 = vmatpush1.msra.mxu0 0.0
        %2694 = vmatprep.subr.mxu0 0.0
        %2695 = vmatpush1.msra.mxu0 0.0
        %2696 = vmatprep.subr.mxu0 0.0
        %2697 = vmatpush1.msra.mxu0 0.0
        %2698 = vmatprep.mubr.f32.mxu0 0.0
        %2699 = vmatmul.mubr.f32.gmra.mrb[0].mxu0 %v2629
        %v2700 = vpop.f32.mrb[0].mxu0
        %v2701 = vadd.f32 0.0, %v2700
        %v2702 = vpop.f32.mrb[0].mxu0
        %2703 = vmatprep.mubr.f32.mxu0 0.0
        %2704 = vmatmul.mubr.f32.gmra.mrb[0].mxu0 %v2632
        %v2705 = vpop.f32.mrb[0].mxu0
        %v2706 = vadd.f32 0.0, %v2705
        %v2707 = vpop.f32.mrb[0].mxu0
        %2708 = vdwg.mxu0
        %v2709 = vmul.f32 %v2701, 0.35355338
        %v2710 = vmul.f32 %v2706, 0.35355338
        %v2711 = vmul.f32 %v2533, %v2433
        %v2712 = vmul.f32 %v2538, %v2438
        %v2714 = vsel %vm752, %v2711, 0
        %v2717 = vsel %vm752, %v2712, 0
        %2719 = vmatprep.subr.mxu0 0.0
        %2720 = vmatpush1.msra.mxu0 %v2299
        %2721 = vmatprep.subr.mxu0 0.0
        %2722 = vmatpush1.msra.mxu0 %v2300
        %2723 = vmatprep.subr.mxu0 0.0
        %2724 = vmatpush1.msra.mxu0 %v2301
        %2725 = vmatprep.subr.mxu0 0.0
        %2726 = vmatpush1.msra.mxu0 %v2302
        %2727 = vmatprep.subr.mxu0 0.0
        %2728 = vmatpush1.msra.mxu0 0.0
        %2729 = vmatprep.subr.mxu0 0.0
        %2730 = vmatpush1.msra.mxu0 0.0
        %2731 = vmatprep.subr.mxu0 0.0
        %2732 = vmatpush1.msra.mxu0 0.0
        %2733 = vmatprep.subr.mxu0 0.0
        %2734 = vmatpush1.msra.mxu0 0.0
        %2735 = vmatprep.subr.mxu0 0.0
        %2736 = vmatpush1.msra.mxu0 0.0
        %2737 = vmatprep.subr.mxu0 0.0
        %2738 = vmatpush1.msra.mxu0 0.0
        %2739 = vmatprep.subr.mxu0 0.0
        %2740 = vmatpush1.msra.mxu0 0.0
        %2741 = vmatprep.subr.mxu0 0.0
        %2742 = vmatpush1.msra.mxu0 0.0
        %2743 = vmatprep.subr.mxu0 0.0
        %2744 = vmatpush1.msra.mxu0 0.0
        %2745 = vmatprep.subr.mxu0 0.0
        %2746 = vmatpush1.msra.mxu0 0.0
        %2747 = vmatprep.subr.mxu0 0.0
        %2748 = vmatpush1.msra.mxu0 0.0
        %2749 = vmatprep.subr.mxu0 0.0
        %2750 = vmatpush1.msra.mxu0 0.0
        %2751 = vmatprep.subr.mxu0 0.0
        %2752 = vmatpush1.msra.mxu0 0.0
        %2753 = vmatprep.subr.mxu0 0.0
        %2754 = vmatpush1.msra.mxu0 0.0
        %2755 = vmatprep.subr.mxu0 0.0
        %2756 = vmatpush1.msra.mxu0 0.0
        %2757 = vmatprep.subr.mxu0 0.0
        %2758 = vmatpush1.msra.mxu0 0.0
        %2759 = vmatprep.subr.mxu0 0.0
        %2760 = vmatpush1.msra.mxu0 0.0
        %2761 = vmatprep.subr.mxu0 0.0
        %2762 = vmatpush1.msra.mxu0 0.0
        %2763 = vmatprep.subr.mxu0 0.0
        %2764 = vmatpush1.msra.mxu0 0.0
        %2765 = vmatprep.subr.mxu0 0.0
        %2766 = vmatpush1.msra.mxu0 0.0
        %2767 = vmatprep.subr.mxu0 0.0
        %2768 = vmatpush1.msra.mxu0 0.0
        %2769 = vmatprep.subr.mxu0 0.0
        %2770 = vmatpush1.msra.mxu0 0.0
        %2771 = vmatprep.subr.mxu0 0.0
        %2772 = vmatpush1.msra.mxu0 0.0
        %2773 = vmatprep.subr.mxu0 0.0
        %2774 = vmatpush1.msra.mxu0 0.0
        %2775 = vmatprep.subr.mxu0 0.0
        %2776 = vmatpush1.msra.mxu0 0.0
        %2777 = vmatprep.subr.mxu0 0.0
        %2778 = vmatpush1.msra.mxu0 0.0
        %2779 = vmatprep.subr.mxu0 0.0
        %2780 = vmatpush1.msra.mxu0 0.0
        %2781 = vmatprep.subr.mxu0 0.0
        %2782 = vmatpush1.msra.mxu0 0.0
        %2783 = vmatprep.mubr.f32.mxu0 0.0
        %2784 = vmatmul.mubr.f32.gmra.mrb[0].mxu0 %v2714
        %v2785 = vpop.f32.mrb[0].mxu0
        %v2786 = vadd.f32 0.0, %v2785
        %v2787 = vpop.f32.mrb[0].mxu0
        %2788 = vmatprep.mubr.f32.mxu0 0.0
        %2789 = vmatmul.mubr.f32.gmra.mrb[0].mxu0 %v2717
        %v2790 = vpop.f32.mrb[0].mxu0
        %v2791 = vadd.f32 0.0, %v2790
        %v2792 = vpop.f32.mrb[0].mxu0
        %2793 = vdwg.mxu0
        %v2794 = vmul.f32 %v2786, 0.35355338
        %v2795 = vmul.f32 %v2791, 0.35355338
        %v2796 = vmul.f32 %v2533, %v2443
        %v2797 = vmul.f32 %v2538, %v2448
        %v2799 = vsel %vm752, %v2796, 0
        %v2802 = vsel %vm752, %v2797, 0
        %2804 = vmatprep.subr.mxu0 0.0
        %2805 = vmatpush1.msra.mxu0 %v2299
        %2806 = vmatprep.subr.mxu0 0.0
        %2807 = vmatpush1.msra.mxu0 %v2300
        %2808 = vmatprep.subr.mxu0 0.0
        %2809 = vmatpush1.msra.mxu0 %v2301
        %2810 = vmatprep.subr.mxu0 0.0
        %2811 = vmatpush1.msra.mxu0 %v2302
        %2812 = vmatprep.subr.mxu0 0.0
        %2813 = vmatpush1.msra.mxu0 0.0
        %2814 = vmatprep.subr.mxu0 0.0
        %2815 = vmatpush1.msra.mxu0 0.0
        %2816 = vmatprep.subr.mxu0 0.0
        %2817 = vmatpush1.msra.mxu0 0.0
        %2818 = vmatprep.subr.mxu0 0.0
        %2819 = vmatpush1.msra.mxu0 0.0
        %2820 = vmatprep.subr.mxu0 0.0
        %2821 = vmatpush1.msra.mxu0 0.0
        %2822 = vmatprep.subr.mxu0 0.0
        %2823 = vmatpush1.msra.mxu0 0.0
        %2824 = vmatprep.subr.mxu0 0.0
        %2825 = vmatpush1.msra.mxu0 0.0
        %2826 = vmatprep.subr.mxu0 0.0
        %2827 = vmatpush1.msra.mxu0 0.0
        %2828 = vmatprep.subr.mxu0 0.0
        %2829 = vmatpush1.msra.mxu0 0.0
        %2830 = vmatprep.subr.mxu0 0.0
        %2831 = vmatpush1.msra.mxu0 0.0
        %2832 = vmatprep.subr.mxu0 0.0
        %2833 = vmatpush1.msra.mxu0 0.0
        %2834 = vmatprep.subr.mxu0 0.0
        %2835 = vmatpush1.msra.mxu0 0.0
        %2836 = vmatprep.subr.mxu0 0.0
        %2837 = vmatpush1.msra.mxu0 0.0
        %2838 = vmatprep.subr.mxu0 0.0
        %2839 = vmatpush1.msra.mxu0 0.0
        %2840 = vmatprep.subr.mxu0 0.0
        %2841 = vmatpush1.msra.mxu0 0.0
        %2842 = vmatprep.subr.mxu0 0.0
        %2843 = vmatpush1.msra.mxu0 0.0
        %2844 = vmatprep.subr.mxu0 0.0
        %2845 = vmatpush1.msra.mxu0 0.0
        %2846 = vmatprep.subr.mxu0 0.0
        %2847 = vmatpush1.msra.mxu0 0.0
        %2848 = vmatprep.subr.mxu0 0.0
        %2849 = vmatpush1.msra.mxu0 0.0
        %2850 = vmatprep.subr.mxu0 0.0
        %2851 = vmatpush1.msra.mxu0 0.0
        %2852 = vmatprep.subr.mxu0 0.0
        %2853 = vmatpush1.msra.mxu0 0.0
        %2854 = vmatprep.subr.mxu0 0.0
        %2855 = vmatpush1.msra.mxu0 0.0
        %2856 = vmatprep.subr.mxu0 0.0
        %2857 = vmatpush1.msra.mxu0 0.0
        %2858 = vmatprep.subr.mxu0 0.0
        %2859 = vmatpush1.msra.mxu0 0.0
        %2860 = vmatprep.subr.mxu0 0.0
        %2861 = vmatpush1.msra.mxu0 0.0
        %2862 = vmatprep.subr.mxu0 0.0
        %2863 = vmatpush1.msra.mxu0 0.0
        %2864 = vmatprep.subr.mxu0 0.0
        %2865 = vmatpush1.msra.mxu0 0.0
        %2866 = vmatprep.subr.mxu0 0.0
        %2867 = vmatpush1.msra.mxu0 0.0
        %2868 = vmatprep.mubr.f32.mxu0 0.0
        %2869 = vmatmul.mubr.f32.gmra.mrb[0].mxu0 %v2799
        %v2870 = vpop.f32.mrb[0].mxu0
        %v2871 = vadd.f32 0.0, %v2870
        %v2872 = vpop.f32.mrb[0].mxu0
        %2873 = vmatprep.mubr.f32.mxu0 0.0
        %2874 = vmatmul.mubr.f32.gmra.mrb[0].mxu0 %v2802
        %v2875 = vpop.f32.mrb[0].mxu0
        %v2876 = vadd.f32 0.0, %v2875
        %v2877 = vpop.f32.mrb[0].mxu0
        %2878 = vdwg.mxu0
        %v2879 = vmul.f32 %v2871, 0.35355338
        %v2880 = vmul.f32 %v2876, 0.35355338
        %v2881 = vmax.f32 %v2624, %v2709
        %v2882 = vmax.f32 %v2625, %v2710
        %v2883 = vmax.f32 %v2881, %v2794
        %v2884 = vmax.f32 %v2882, %v2795
        %v2885 = vmax.f32 %v2883, %v2879
        %v2886 = vmax.f32 %v2884, %v2880
        %v2887 = vsub.f32 %v2624, %v2885
        %v2888 = vsub.f32 %v2625, %v2886
        %v2889 = vmul.f32 %v2887, 1.442695
        %v2890 = vpow.pop %v2889
        %v2891 = vmul.f32 %v2888, 1.442695
        %v2892 = vpow.pop %v2891
        %v2893 = vsub.f32 %v2709, %v2885
        %v2894 = vsub.f32 %v2710, %v2886
        %v2895 = vmul.f32 %v2893, 1.442695
        %v2896 = vpow.pop %v2895
        %v2897 = vmul.f32 %v2894, 1.442695
        %v2898 = vpow.pop %v2897
        %v2899 = vsub.f32 %v2794, %v2885
        %v2900 = vsub.f32 %v2795, %v2886
        %v2901 = vmul.f32 %v2899, 1.442695
        %v2902 = vpow.pop %v2901
        %v2903 = vmul.f32 %v2900, 1.442695
        %v2904 = vpow.pop %v2903
        %v2905 = vsub.f32 %v2879, %v2885
        %v2906 = vsub.f32 %v2880, %v2886
        %v2907 = vmul.f32 %v2905, 1.442695
        %v2908 = vpow.pop %v2907
        %v2909 = vmul.f32 %v2906, 1.442695
        %v2910 = vpow.pop %v2909
        %v2911 = vadd.f32 %v2890, %v2896
        %v2912 = vadd.f32 %v2892, %v2898
        %v2913 = vadd.f32 %v2911, %v2902
        %v2914 = vadd.f32 %v2912, %v2904
        %v2915 = vadd.f32 %v2913, %v2908
        %v2916 = vadd.f32 %v2914, %v2910
        %v2917 = vrcp.pop %v2915
        %v2918 = vrcp.pop %v2916
        %vm2919 = vcmask 31744
        %v2921 = vsel %vm2919, %v2890, 0
        %v2924 = vsel %vm2919, %v2892, 0
        %v2927 = vsel %vm2919, %v2299, 0
        %v2930 = vsel %vm2919, %v2300, 0
        %v2933 = vsel %vm2919, %v2301, 0
        %v2936 = vsel %vm2919, %v2302, 0
        %2938 = vmatprep.subr.mxu0 0.0
        %2939 = vmatpush1.xpose.msra.mxu0 %v2927
        %2940 = vmatprep.subr.mxu0 0.0
        %2941 = vmatpush1.xpose.msra.mxu0 %v2930
        %2942 = vmatprep.subr.mxu0 0.0
        %2943 = vmatpush1.xpose.msra.mxu0 %v2933
        %2944 = vmatprep.subr.mxu0 0.0
        %2945 = vmatpush1.xpose.msra.mxu0 %v2936
        %2946 = vmatprep.subr.mxu0 0.0
        %2947 = vmatpush1.xpose.msra.mxu0 0.0
        %2948 = vmatprep.subr.mxu0 0.0
        %2949 = vmatpush1.xpose.msra.mxu0 0.0
        %2950 = vmatprep.subr.mxu0 0.0
        %2951 = vmatpush1.xpose.msra.mxu0 0.0
        %2952 = vmatprep.subr.mxu0 0.0
        %2953 = vmatpush1.xpose.msra.mxu0 0.0
        %2954 = vmatprep.subr.mxu0 0.0
        %2955 = vmatpush1.xpose.msra.mxu0 0.0
        %2956 = vmatprep.subr.mxu0 0.0
        %2957 = vmatpush1.xpose.msra.mxu0 0.0
        %2958 = vmatprep.subr.mxu0 0.0
        %2959 = vmatpush1.xpose.msra.mxu0 0.0
        %2960 = vmatprep.subr.mxu0 0.0
        %2961 = vmatpush1.xpose.msra.mxu0 0.0
        %2962 = vmatprep.subr.mxu0 0.0
        %2963 = vmatpush1.xpose.msra.mxu0 0.0
        %2964 = vmatprep.subr.mxu0 0.0
        %2965 = vmatpush1.xpose.msra.mxu0 0.0
        %2966 = vmatprep.subr.mxu0 0.0
        %2967 = vmatpush1.xpose.msra.mxu0 0.0
        %2968 = vmatprep.subr.mxu0 0.0
        %2969 = vmatpush1.xpose.msra.mxu0 0.0
        %2970 = vmatprep.subr.mxu0 0.0
        %2971 = vmatpush1.xpose.msra.mxu0 0.0
        %2972 = vmatprep.subr.mxu0 0.0
        %2973 = vmatpush1.xpose.msra.mxu0 0.0
        %2974 = vmatprep.subr.mxu0 0.0
        %2975 = vmatpush1.xpose.msra.mxu0 0.0
        %2976 = vmatprep.subr.mxu0 0.0
        %2977 = vmatpush1.xpose.msra.mxu0 0.0
        %2978 = vmatprep.subr.mxu0 0.0
        %2979 = vmatpush1.xpose.msra.mxu0 0.0
        %2980 = vmatprep.subr.mxu0 0.0
        %2981 = vmatpush1.xpose.msra.mxu0 0.0
        %2982 = vmatprep.subr.mxu0 0.0
        %2983 = vmatpush1.xpose.msra.mxu0 0.0
        %2984 = vmatprep.subr.mxu0 0.0
        %2985 = vmatpush1.xpose.msra.mxu0 0.0
        %2986 = vmatprep.subr.mxu0 0.0
        %2987 = vmatpush1.xpose.msra.mxu0 0.0
        %2988 = vmatprep.subr.mxu0 0.0
        %2989 = vmatpush1.xpose.msra.mxu0 0.0
        %2990 = vmatprep.subr.mxu0 0.0
        %2991 = vmatpush1.xpose.msra.mxu0 0.0
        %2992 = vmatprep.subr.mxu0 0.0
        %2993 = vmatpush1.xpose.msra.mxu0 0.0
        %2994 = vmatprep.subr.mxu0 0.0
        %2995 = vmatpush1.xpose.msra.mxu0 0.0
        %2996 = vmatprep.subr.mxu0 0.0
        %2997 = vmatpush1.xpose.msra.mxu0 0.0
        %2998 = vmatprep.subr.mxu0 0.0
        %2999 = vmatpush1.xpose.msra.mxu0 0.0
        %3000 = vmatprep.subr.mxu0 0.0
        %3001 = vmatpush1.xpose.msra.mxu0 0.0
        %3002 = vmatprep.mubr.f32.mxu0 0.0
        %3003 = vmatmul.mubr.f32.gmra.mrb[0].mxu0 %v2921
        %v3004 = vpop.f32.mrb[0].mxu0
        %v3005 = vadd.f32 0.0, %v3004
        %v3006 = vpop.f32.mrb[0].mxu0
        %3007 = vmatprep.mubr.f32.mxu0 0.0
        %3008 = vmatmul.mubr.f32.gmra.mrb[0].mxu0 %v2924
        %v3009 = vpop.f32.mrb[0].mxu0
        %v3010 = vadd.f32 0.0, %v3009
        %v3011 = vpop.f32.mrb[0].mxu0
        %3012 = vdwg.mxu0
        %3015 = vrot.lane.b32.xlu0 %v2413, 96
        %v3016 = vpop.permute.xlu0 %3015
        %3017 = vrot.lane.b32.xlu0 %v2418, 96
        %v3018 = vpop.permute.xlu0 %3017
        %v3021 = vmul.f32 %v3005, %v3016
        %v3022 = vmul.f32 %v3010, %v3018
        %v3023 = vadd.f32 %v3021, 0.0
        %v3024 = vadd.f32 %v3022, 0.0
        %v3026 = vsel %vm2919, %v2896, 0
        %v3029 = vsel %vm2919, %v2898, 0
        %3031 = vmatprep.subr.mxu0 0.0
        %3032 = vmatpush1.xpose.msra.mxu0 %v2927
        %3033 = vmatprep.subr.mxu0 0.0
        %3034 = vmatpush1.xpose.msra.mxu0 %v2930
        %3035 = vmatprep.subr.mxu0 0.0
        %3036 = vmatpush1.xpose.msra.mxu0 %v2933
        %3037 = vmatprep.subr.mxu0 0.0
        %3038 = vmatpush1.xpose.msra.mxu0 %v2936
        %3039 = vmatprep.subr.mxu0 0.0
        %3040 = vmatpush1.xpose.msra.mxu0 0.0
        %3041 = vmatprep.subr.mxu0 0.0
        %3042 = vmatpush1.xpose.msra.mxu0 0.0
        %3043 = vmatprep.subr.mxu0 0.0
        %3044 = vmatpush1.xpose.msra.mxu0 0.0
        %3045 = vmatprep.subr.mxu0 0.0
        %3046 = vmatpush1.xpose.msra.mxu0 0.0
        %3047 = vmatprep.subr.mxu0 0.0
        %3048 = vmatpush1.xpose.msra.mxu0 0.0
        %3049 = vmatprep.subr.mxu0 0.0
        %3050 = vmatpush1.xpose.msra.mxu0 0.0
        %3051 = vmatprep.subr.mxu0 0.0
        %3052 = vmatpush1.xpose.msra.mxu0 0.0
        %3053 = vmatprep.subr.mxu0 0.0
        %3054 = vmatpush1.xpose.msra.mxu0 0.0
        %3055 = vmatprep.subr.mxu0 0.0
        %3056 = vmatpush1.xpose.msra.mxu0 0.0
        %3057 = vmatprep.subr.mxu0 0.0
        %3058 = vmatpush1.xpose.msra.mxu0 0.0
        %3059 = vmatprep.subr.mxu0 0.0
        %3060 = vmatpush1.xpose.msra.mxu0 0.0
        %3061 = vmatprep.subr.mxu0 0.0
        %3062 = vmatpush1.xpose.msra.mxu0 0.0
        %3063 = vmatprep.subr.mxu0 0.0
        %3064 = vmatpush1.xpose.msra.mxu0 0.0
        %3065 = vmatprep.subr.mxu0 0.0
        %3066 = vmatpush1.xpose.msra.mxu0 0.0
        %3067 = vmatprep.subr.mxu0 0.0
        %3068 = vmatpush1.xpose.msra.mxu0 0.0
        %3069 = vmatprep.subr.mxu0 0.0
        %3070 = vmatpush1.xpose.msra.mxu0 0.0
        %3071 = vmatprep.subr.mxu0 0.0
        %3072 = vmatpush1.xpose.msra.mxu0 0.0
        %3073 = vmatprep.subr.mxu0 0.0
        %3074 = vmatpush1.xpose.msra.mxu0 0.0
        %3075 = vmatprep.subr.mxu0 0.0
        %3076 = vmatpush1.xpose.msra.mxu0 0.0
        %3077 = vmatprep.subr.mxu0 0.0
        %3078 = vmatpush1.xpose.msra.mxu0 0.0
        %3079 = vmatprep.subr.mxu0 0.0
        %3080 = vmatpush1.xpose.msra.mxu0 0.0
        %3081 = vmatprep.subr.mxu0 0.0
        %3082 = vmatpush1.xpose.msra.mxu0 0.0
        %3083 = vmatprep.subr.mxu0 0.0
        %3084 = vmatpush1.xpose.msra.mxu0 0.0
        %3085 = vmatprep.subr.mxu0 0.0
        %3086 = vmatpush1.xpose.msra.mxu0 0.0
        %3087 = vmatprep.subr.mxu0 0.0
        %3088 = vmatpush1.xpose.msra.mxu0 0.0
        %3089 = vmatprep.subr.mxu0 0.0
        %3090 = vmatpush1.xpose.msra.mxu0 0.0
        %3091 = vmatprep.subr.mxu0 0.0
        %3092 = vmatpush1.xpose.msra.mxu0 0.0
        %3093 = vmatprep.subr.mxu0 0.0
        %3094 = vmatpush1.xpose.msra.mxu0 0.0
        %3095 = vmatprep.mubr.f32.mxu0 0.0
        %3096 = vmatmul.mubr.f32.gmra.mrb[0].mxu0 %v3026
        %v3097 = vpop.f32.mrb[0].mxu0
        %v3098 = vadd.f32 0.0, %v3097
        %v3099 = vpop.f32.mrb[0].mxu0
        %3100 = vmatprep.mubr.f32.mxu0 0.0
        %3101 = vmatmul.mubr.f32.gmra.mrb[0].mxu0 %v3029
        %v3102 = vpop.f32.mrb[0].mxu0
        %v3103 = vadd.f32 0.0, %v3102
        %v3104 = vpop.f32.mrb[0].mxu0
        %3105 = vdwg.mxu0
        %3108 = vrot.lane.b32.xlu0 %v2423, 96
        %v3109 = vpop.permute.xlu0 %3108
        %3110 = vrot.lane.b32.xlu0 %v2428, 96
        %v3111 = vpop.permute.xlu0 %3110
        %v3114 = vmul.f32 %v3098, %v3109
        %v3115 = vmul.f32 %v3103, %v3111
        %v3116 = vadd.f32 %v3023, %v3114
        %v3117 = vadd.f32 %v3024, %v3115
        %v3119 = vsel %vm2919, %v2902, 0
        %v3122 = vsel %vm2919, %v2904, 0
        %3124 = vmatprep.subr.mxu0 0.0
        %3125 = vmatpush1.xpose.msra.mxu0 %v2927
        %3126 = vmatprep.subr.mxu0 0.0
        %3127 = vmatpush1.xpose.msra.mxu0 %v2930
        %3128 = vmatprep.subr.mxu0 0.0
        %3129 = vmatpush1.xpose.msra.mxu0 %v2933
        %3130 = vmatprep.subr.mxu0 0.0
        %3131 = vmatpush1.xpose.msra.mxu0 %v2936
        %3132 = vmatprep.subr.mxu0 0.0
        %3133 = vmatpush1.xpose.msra.mxu0 0.0
        %3134 = vmatprep.subr.mxu0 0.0
        %3135 = vmatpush1.xpose.msra.mxu0 0.0
        %3136 = vmatprep.subr.mxu0 0.0
        %3137 = vmatpush1.xpose.msra.mxu0 0.0
        %3138 = vmatprep.subr.mxu0 0.0
        %3139 = vmatpush1.xpose.msra.mxu0 0.0
        %3140 = vmatprep.subr.mxu0 0.0
        %3141 = vmatpush1.xpose.msra.mxu0 0.0
        %3142 = vmatprep.subr.mxu0 0.0
        %3143 = vmatpush1.xpose.msra.mxu0 0.0
        %3144 = vmatprep.subr.mxu0 0.0
        %3145 = vmatpush1.xpose.msra.mxu0 0.0
        %3146 = vmatprep.subr.mxu0 0.0
        %3147 = vmatpush1.xpose.msra.mxu0 0.0
        %3148 = vmatprep.subr.mxu0 0.0
        %3149 = vmatpush1.xpose.msra.mxu0 0.0
        %3150 = vmatprep.subr.mxu0 0.0
        %3151 = vmatpush1.xpose.msra.mxu0 0.0
        %3152 = vmatprep.subr.mxu0 0.0
        %3153 = vmatpush1.xpose.msra.mxu0 0.0
        %3154 = vmatprep.subr.mxu0 0.0
        %3155 = vmatpush1.xpose.msra.mxu0 0.0
        %3156 = vmatprep.subr.mxu0 0.0
        %3157 = vmatpush1.xpose.msra.mxu0 0.0
        %3158 = vmatprep.subr.mxu0 0.0
        %3159 = vmatpush1.xpose.msra.mxu0 0.0
        %3160 = vmatprep.subr.mxu0 0.0
        %3161 = vmatpush1.xpose.msra.mxu0 0.0
        %3162 = vmatprep.subr.mxu0 0.0
        %3163 = vmatpush1.xpose.msra.mxu0 0.0
        %3164 = vmatprep.subr.mxu0 0.0
        %3165 = vmatpush1.xpose.msra.mxu0 0.0
        %3166 = vmatprep.subr.mxu0 0.0
        %3167 = vmatpush1.xpose.msra.mxu0 0.0
        %3168 = vmatprep.subr.mxu0 0.0
        %3169 = vmatpush1.xpose.msra.mxu0 0.0
        %3170 = vmatprep.subr.mxu0 0.0
        %3171 = vmatpush1.xpose.msra.mxu0 0.0
        %3172 = vmatprep.subr.mxu0 0.0
        %3173 = vmatpush1.xpose.msra.mxu0 0.0
        %3174 = vmatprep.subr.mxu0 0.0
        %3175 = vmatpush1.xpose.msra.mxu0 0.0
        %3176 = vmatprep.subr.mxu0 0.0
        %3177 = vmatpush1.xpose.msra.mxu0 0.0
        %3178 = vmatprep.subr.mxu0 0.0
        %3179 = vmatpush1.xpose.msra.mxu0 0.0
        %3180 = vmatprep.subr.mxu0 0.0
        %3181 = vmatpush1.xpose.msra.mxu0 0.0
        %3182 = vmatprep.subr.mxu0 0.0
        %3183 = vmatpush1.xpose.msra.mxu0 0.0
        %3184 = vmatprep.subr.mxu0 0.0
        %3185 = vmatpush1.xpose.msra.mxu0 0.0
        %3186 = vmatprep.subr.mxu0 0.0
        %3187 = vmatpush1.xpose.msra.mxu0 0.0
        %3188 = vmatprep.mubr.f32.mxu0 0.0
        %3189 = vmatmul.mubr.f32.gmra.mrb[0].mxu0 %v3119
        %v3190 = vpop.f32.mrb[0].mxu0
        %v3191 = vadd.f32 0.0, %v3190
        %v3192 = vpop.f32.mrb[0].mxu0
        %3193 = vmatprep.mubr.f32.mxu0 0.0
        %3194 = vmatmul.mubr.f32.gmra.mrb[0].mxu0 %v3122
        %v3195 = vpop.f32.mrb[0].mxu0
        %v3196 = vadd.f32 0.0, %v3195
        %v3197 = vpop.f32.mrb[0].mxu0
        %3198 = vdwg.mxu0
        %3201 = vrot.lane.b32.xlu0 %v2433, 96
        %v3202 = vpop.permute.xlu0 %3201
        %3203 = vrot.lane.b32.xlu0 %v2438, 96
        %v3204 = vpop.permute.xlu0 %3203
        %v3207 = vmul.f32 %v3191, %v3202
        %v3208 = vmul.f32 %v3196, %v3204
        %v3209 = vadd.f32 %v3116, %v3207
        %v3210 = vadd.f32 %v3117, %v3208
        %v3212 = vsel %vm2919, %v2908, 0
        %v3215 = vsel %vm2919, %v2910, 0
        %3217 = vmatprep.subr.mxu0 0.0
        %3218 = vmatpush1.xpose.msra.mxu0 %v2927
        %3219 = vmatprep.subr.mxu0 0.0
        %3220 = vmatpush1.xpose.msra.mxu0 %v2930
        %3221 = vmatprep.subr.mxu0 0.0
        %3222 = vmatpush1.xpose.msra.mxu0 %v2933
        %3223 = vmatprep.subr.mxu0 0.0
        %3224 = vmatpush1.xpose.msra.mxu0 %v2936
        %3225 = vmatprep.subr.mxu0 0.0
        %3226 = vmatpush1.xpose.msra.mxu0 0.0
        %3227 = vmatprep.subr.mxu0 0.0
        %3228 = vmatpush1.xpose.msra.mxu0 0.0
        %3229 = vmatprep.subr.mxu0 0.0
        %3230 = vmatpush1.xpose.msra.mxu0 0.0
        %3231 = vmatprep.subr.mxu0 0.0
        %3232 = vmatpush1.xpose.msra.mxu0 0.0
        %3233 = vmatprep.subr.mxu0 0.0
        %3234 = vmatpush1.xpose.msra.mxu0 0.0
        %3235 = vmatprep.subr.mxu0 0.0
        %3236 = vmatpush1.xpose.msra.mxu0 0.0
        %3237 = vmatprep.subr.mxu0 0.0
        %3238 = vmatpush1.xpose.msra.mxu0 0.0
        %3239 = vmatprep.subr.mxu0 0.0
        %3240 = vmatpush1.xpose.msra.mxu0 0.0
        %3241 = vmatprep.subr.mxu0 0.0
        %3242 = vmatpush1.xpose.msra.mxu0 0.0
        %3243 = vmatprep.subr.mxu0 0.0
        %3244 = vmatpush1.xpose.msra.mxu0 0.0
        %3245 = vmatprep.subr.mxu0 0.0
        %3246 = vmatpush1.xpose.msra.mxu0 0.0
        %3247 = vmatprep.subr.mxu0 0.0
        %3248 = vmatpush1.xpose.msra.mxu0 0.0
        %3249 = vmatprep.subr.mxu0 0.0
        %3250 = vmatpush1.xpose.msra.mxu0 0.0
        %3251 = vmatprep.subr.mxu0 0.0
        %3252 = vmatpush1.xpose.msra.mxu0 0.0
        %3253 = vmatprep.subr.mxu0 0.0
        %3254 = vmatpush1.xpose.msra.mxu0 0.0
        %3255 = vmatprep.subr.mxu0 0.0
        %3256 = vmatpush1.xpose.msra.mxu0 0.0
        %3257 = vmatprep.subr.mxu0 0.0
        %3258 = vmatpush1.xpose.msra.mxu0 0.0
        %3259 = vmatprep.subr.mxu0 0.0
        %3260 = vmatpush1.xpose.msra.mxu0 0.0
        %3261 = vmatprep.subr.mxu0 0.0
        %3262 = vmatpush1.xpose.msra.mxu0 0.0
        %3263 = vmatprep.subr.mxu0 0.0
        %3264 = vmatpush1.xpose.msra.mxu0 0.0
        %3265 = vmatprep.subr.mxu0 0.0
        %3266 = vmatpush1.xpose.msra.mxu0 0.0
        %3267 = vmatprep.subr.mxu0 0.0
        %3268 = vmatpush1.xpose.msra.mxu0 0.0
        %3269 = vmatprep.subr.mxu0 0.0
        %3270 = vmatpush1.xpose.msra.mxu0 0.0
        %3271 = vmatprep.subr.mxu0 0.0
        %3272 = vmatpush1.xpose.msra.mxu0 0.0
        %3273 = vmatprep.subr.mxu0 0.0
        %3274 = vmatpush1.xpose.msra.mxu0 0.0
        %3275 = vmatprep.subr.mxu0 0.0
        %3276 = vmatpush1.xpose.msra.mxu0 0.0
        %3277 = vmatprep.subr.mxu0 0.0
        %3278 = vmatpush1.xpose.msra.mxu0 0.0
        %3279 = vmatprep.subr.mxu0 0.0
        %3280 = vmatpush1.xpose.msra.mxu0 0.0
        %3281 = vmatprep.mubr.f32.mxu0 0.0
        %3282 = vmatmul.mubr.f32.gmra.mrb[0].mxu0 %v3212
        %v3283 = vpop.f32.mrb[0].mxu0
        %v3284 = vadd.f32 0.0, %v3283
        %v3285 = vpop.f32.mrb[0].mxu0
        %3286 = vmatprep.mubr.f32.mxu0 0.0
        %3287 = vmatmul.mubr.f32.gmra.mrb[0].mxu0 %v3215
        %v3288 = vpop.f32.mrb[0].mxu0
        %v3289 = vadd.f32 0.0, %v3288
        %v3290 = vpop.f32.mrb[0].mxu0
        %3291 = vdwg.mxu0
        %3294 = vrot.lane.b32.xlu0 %v2443, 96
        %v3295 = vpop.permute.xlu0 %3294
        %3296 = vrot.lane.b32.xlu0 %v2448, 96
        %v3297 = vpop.permute.xlu0 %3296
        %v3300 = vmul.f32 %v3284, %v3295
        %v3301 = vmul.f32 %v3289, %v3297
        %v3302 = vadd.f32 %v3209, %v3300
        %v3303 = vadd.f32 %v3210, %v3301
        %v3305 = vsel %vm2919, %v2917, 0
        %v3308 = vsel %vm2919, %v2918, 0
        %3310 = vmatprep.subr.mxu0 0.0
        %3311 = vmatpush1.xpose.msra.mxu0 %v2927
        %3312 = vmatprep.subr.mxu0 0.0
        %3313 = vmatpush1.xpose.msra.mxu0 %v2930
        %3314 = vmatprep.subr.mxu0 0.0
        %3315 = vmatpush1.xpose.msra.mxu0 %v2933
        %3316 = vmatprep.subr.mxu0 0.0
        %3317 = vmatpush1.xpose.msra.mxu0 %v2936
        %3318 = vmatprep.subr.mxu0 0.0
        %3319 = vmatpush1.xpose.msra.mxu0 0.0
        %3320 = vmatprep.subr.mxu0 0.0
        %3321 = vmatpush1.xpose.msra.mxu0 0.0
        %3322 = vmatprep.subr.mxu0 0.0
        %3323 = vmatpush1.xpose.msra.mxu0 0.0
        %3324 = vmatprep.subr.mxu0 0.0
        %3325 = vmatpush1.xpose.msra.mxu0 0.0
        %3326 = vmatprep.subr.mxu0 0.0
        %3327 = vmatpush1.xpose.msra.mxu0 0.0
        %3328 = vmatprep.subr.mxu0 0.0
        %3329 = vmatpush1.xpose.msra.mxu0 0.0
        %3330 = vmatprep.subr.mxu0 0.0
        %3331 = vmatpush1.xpose.msra.mxu0 0.0
        %3332 = vmatprep.subr.mxu0 0.0
        %3333 = vmatpush1.xpose.msra.mxu0 0.0
        %3334 = vmatprep.subr.mxu0 0.0
        %3335 = vmatpush1.xpose.msra.mxu0 0.0
        %3336 = vmatprep.subr.mxu0 0.0
        %3337 = vmatpush1.xpose.msra.mxu0 0.0
        %3338 = vmatprep.subr.mxu0 0.0
        %3339 = vmatpush1.xpose.msra.mxu0 0.0
        %3340 = vmatprep.subr.mxu0 0.0
        %3341 = vmatpush1.xpose.msra.mxu0 0.0
        %3342 = vmatprep.subr.mxu0 0.0
        %3343 = vmatpush1.xpose.msra.mxu0 0.0
        %3344 = vmatprep.subr.mxu0 0.0
        %3345 = vmatpush1.xpose.msra.mxu0 0.0
        %3346 = vmatprep.subr.mxu0 0.0
        %3347 = vmatpush1.xpose.msra.mxu0 0.0
        %3348 = vmatprep.subr.mxu0 0.0
        %3349 = vmatpush1.xpose.msra.mxu0 0.0
        %3350 = vmatprep.subr.mxu0 0.0
        %3351 = vmatpush1.xpose.msra.mxu0 0.0
        %3352 = vmatprep.subr.mxu0 0.0
        %3353 = vmatpush1.xpose.msra.mxu0 0.0
        %3354 = vmatprep.subr.mxu0 0.0
        %3355 = vmatpush1.xpose.msra.mxu0 0.0
        %3356 = vmatprep.subr.mxu0 0.0
        %3357 = vmatpush1.xpose.msra.mxu0 0.0
        %3358 = vmatprep.subr.mxu0 0.0
        %3359 = vmatpush1.xpose.msra.mxu0 0.0
        %3360 = vmatprep.subr.mxu0 0.0
        %3361 = vmatpush1.xpose.msra.mxu0 0.0
        %3362 = vmatprep.subr.mxu0 0.0
        %3363 = vmatpush1.xpose.msra.mxu0 0.0
        %3364 = vmatprep.subr.mxu0 0.0
        %3365 = vmatpush1.xpose.msra.mxu0 0.0
        %3366 = vmatprep.subr.mxu0 0.0
        %3367 = vmatpush1.xpose.msra.mxu0 0.0
        %3368 = vmatprep.subr.mxu0 0.0
        %3369 = vmatpush1.xpose.msra.mxu0 0.0
        %3370 = vmatprep.subr.mxu0 0.0
        %3371 = vmatpush1.xpose.msra.mxu0 0.0
        %3372 = vmatprep.subr.mxu0 0.0
        %3373 = vmatpush1.xpose.msra.mxu0 0.0
        %3374 = vmatprep.mubr.f32.mxu0 0.0
        %3375 = vmatmul.mubr.f32.gmra.mrb[0].mxu0 %v3305
        %v3376 = vpop.f32.mrb[0].mxu0
        %v3377 = vadd.f32 0.0, %v3376
        %v3378 = vpop.f32.mrb[0].mxu0
        %3379 = vmatprep.mubr.f32.mxu0 0.0
        %3380 = vmatmul.mubr.f32.gmra.mrb[0].mxu0 %v3308
        %v3381 = vpop.f32.mrb[0].mxu0
        %v3382 = vadd.f32 0.0, %v3381
        %v3383 = vpop.f32.mrb[0].mxu0
        %3384 = vdwg.mxu0
        %v3385 = vmul.f32 %v3302, %v3377
        %v3386 = vmul.f32 %v3303, %v3382
        %v3387 = vld [vmem:[%s12] sm:$0xff]
        %v3388 = vld [vmem:[%s12 + $0x8] sm:$0xff]
        %v3389 = vld [vmem:[%s12 + $0x10] sm:$0xff]
        %v3390 = vld [vmem:[%s12 + $0x18] sm:$0xff]
        %v3392 = vsel %vm752, %v3385, 0
        %v3395 = vsel %vm752, %v3386, 0
        %3397 = vmatprep.subr.mxu0 0.0
        %3398 = vmatpush1.msra.mxu0 %v3387
        %3399 = vmatprep.subr.mxu0 0.0
        %3400 = vmatpush1.msra.mxu0 %v3388
        %3401 = vmatprep.subr.mxu0 0.0
        %3402 = vmatpush1.msra.mxu0 %v3389
        %3403 = vmatprep.subr.mxu0 0.0
        %3404 = vmatpush1.msra.mxu0 %v3390
        %3405 = vmatprep.subr.mxu0 0.0
        %3406 = vmatpush1.msra.mxu0 0.0
        %3407 = vmatprep.subr.mxu0 0.0
        %3408 = vmatpush1.msra.mxu0 0.0
        %3409 = vmatprep.subr.mxu0 0.0
        %3410 = vmatpush1.msra.mxu0 0.0
        %3411 = vmatprep.subr.mxu0 0.0
        %3412 = vmatpush1.msra.mxu0 0.0
        %3413 = vmatprep.subr.mxu0 0.0
        %3414 = vmatpush1.msra.mxu0 0.0
        %3415 = vmatprep.subr.mxu0 0.0
        %3416 = vmatpush1.msra.mxu0 0.0
        %3417 = vmatprep.subr.mxu0 0.0
        %3418 = vmatpush1.msra.mxu0 0.0
        %3419 = vmatprep.subr.mxu0 0.0
        %3420 = vmatpush1.msra.mxu0 0.0
        %3421 = vmatprep.subr.mxu0 0.0
        %3422 = vmatpush1.msra.mxu0 0.0
        %3423 = vmatprep.subr.mxu0 0.0
        %3424 = vmatpush1.msra.mxu0 0.0
        %3425 = vmatprep.subr.mxu0 0.0
        %3426 = vmatpush1.msra.mxu0 0.0
        %3427 = vmatprep.subr.mxu0 0.0
        %3428 = vmatpush1.msra.mxu0 0.0
        %3429 = vmatprep.subr.mxu0 0.0
        %3430 = vmatpush1.msra.mxu0 0.0
        %3431 = vmatprep.subr.mxu0 0.0
        %3432 = vmatpush1.msra.mxu0 0.0
        %3433 = vmatprep.subr.mxu0 0.0
        %3434 = vmatpush1.msra.mxu0 0.0
        %3435 = vmatprep.subr.mxu0 0.0
        %3436 = vmatpush1.msra.mxu0 0.0
        %3437 = vmatprep.subr.mxu0 0.0
        %3438 = vmatpush1.msra.mxu0 0.0
        %3439 = vmatprep.subr.mxu0 0.0
        %3440 = vmatpush1.msra.mxu0 0.0
        %3441 = vmatprep.subr.mxu0 0.0
        %3442 = vmatpush1.msra.mxu0 0.0
        %3443 = vmatprep.subr.mxu0 0.0
        %3444 = vmatpush1.msra.mxu0 0.0
        %3445 = vmatprep.subr.mxu0 0.0
        %3446 = vmatpush1.msra.mxu0 0.0
        %3447 = vmatprep.subr.mxu0 0.0
        %3448 = vmatpush1.msra.mxu0 0.0
        %3449 = vmatprep.subr.mxu0 0.0
        %3450 = vmatpush1.msra.mxu0 0.0
        %3451 = vmatprep.subr.mxu0 0.0
        %3452 = vmatpush1.msra.mxu0 0.0
        %3453 = vmatprep.subr.mxu0 0.0
        %3454 = vmatpush1.msra.mxu0 0.0
        %3455 = vmatprep.subr.mxu0 0.0
        %3456 = vmatpush1.msra.mxu0 0.0
        %3457 = vmatprep.subr.mxu0 0.0
        %3458 = vmatpush1.msra.mxu0 0.0
        %3459 = vmatprep.subr.mxu0 0.0
        %3460 = vmatpush1.msra.mxu0 0.0
        %3461 = vmatprep.mubr.f32.mxu0 0.0
        %3462 = vmatmul.mubr.f32.gmra.mrb[0].mxu0 %v3392
        %v3463 = vpop.f32.mrb[0].mxu0
        %v3464 = vadd.f32 0.0, %v3463
        %v3465 = vpop.f32.mrb[0].mxu0
        %3466 = vmatprep.mubr.f32.mxu0 0.0
        %3467 = vmatmul.mubr.f32.gmra.mrb[0].mxu0 %v3395
        %v3468 = vpop.f32.mrb[0].mxu0
        %v3469 = vadd.f32 0.0, %v3468
        %v3470 = vpop.f32.mrb[0].mxu0
        %3471 = vdwg.mxu0
        %3474 = vrot.lane.b32.xlu0 %v3464, 96
        %v3475 = vpop.permute.xlu0 %3474
        %3476 = vrot.lane.b32.xlu0 %v3469, 96
        %v3477 = vpop.permute.xlu0 %3476
        %v3480 = vadd.f32 %v2286, %v3475
        %v3481 = vadd.f32 %v2287, %v3477
        %v3482 = vld [vmem:[%s13] sm:$0x1]
        %v3484 = vlaneseq
        %v3485 = vshrl.u32 %v3484, 7
        %v3486 = vsub.s32 0, %v3485
        %v3487 = vrot.slane %v3482, %v3486
        %3488 = vrot.lane.b32.xlu0 %v3487, 96
        %v3489 = vpop.permute.xlu0 %3488
        %v3491 = vadd.f32 %v3480, %v3489
        %v3492 = vadd.f32 %v3481, %v3489
        %v3493 = vld [vmem:[%s14] sm:$0x1]
        %v3494 = vld [vmem:[#allocation4] sm:$0x1]
        %3497 = vrot.lane.b32.xlu0 %v3491, 32
        %v3498 = vpop.permute.xlu0 %3497
        %3499 = vrot.lane.b32.xlu0 %v3492, 32
        %v3500 = vpop.permute.xlu0 %3499
        %v3503 = vsel %vm752, %v3498, 0.0
        %3504 = vadd.xlane.f32.xlu0 %v3503
        %v3505 = vpop.xlane.xlu0 %3504
        %v3506 = vsel %vm752, %v3500, 0.0
        %3507 = vadd.xlane.f32.xlu0 %v3506
        %v3508 = vpop.xlane.xlu0 %3507
        %v3509 = vrcp.pop 32.0
        %v3510 = vmul.f32 %v3505, %v3509
        %v3511 = vmul.f32 %v3508, %v3509
        %v3512 = vsub.f32 %v3491, %v3510
        %v3513 = vsub.f32 %v3492, %v3511
        %v3514 = vmul.f32 %v3512, %v3512
        %v3515 = vmul.f32 %v3513, %v3513
        %3518 = vrot.lane.b32.xlu0 %v3514, 32
        %v3519 = vpop.permute.xlu0 %3518
        %3520 = vrot.lane.b32.xlu0 %v3515, 32
        %v3521 = vpop.permute.xlu0 %3520
        %v3524 = vsel %vm752, %v3519, 0.0
        %3525 = vadd.xlane.f32.xlu0 %v3524
        %v3526 = vpop.xlane.xlu0 %3525
        %v3527 = vsel %vm752, %v3521, 0.0
        %3528 = vadd.xlane.f32.xlu0 %v3527
        %v3529 = vpop.xlane.xlu0 %3528
        %v3530 = vmul.f32 %v3526, %v3509
        %v3531 = vmul.f32 %v3529, %v3509
        %v3532 = vadd.f32 %v3530, 1e-05
        %v3533 = vadd.f32 %v3531, 1e-05
        %v3534 = vrsqrt.pop %v3532
        %v3535 = vrsqrt.pop %v3533
        %v3536 = vmul.f32 %v3512, %v3534
        %v3537 = vmul.f32 %v3513, %v3535
        %v3539 = vlaneseq
        %v3540 = vshrl.u32 %v3539, 7
        %v3541 = vsub.s32 0, %v3540
        %v3542 = vrot.slane %v3493, %v3541
        %3543 = vrot.lane.b32.xlu0 %v3542, 96
        %v3544 = vpop.permute.xlu0 %3543
        %v3546 = vmul.f32 %v3536, %v3544
        %v3547 = vmul.f32 %v3537, %v3544
        %v3549 = vlaneseq
        %v3550 = vshrl.u32 %v3549, 7
        %v3551 = vsub.s32 0, %v3550
        %v3552 = vrot.slane %v3494, %v3551
        %3553 = vrot.lane.b32.xlu0 %v3552, 96
        %v3554 = vpop.permute.xlu0 %3553
        %v3556 = vadd.f32 %v3546, %v3554
        %v3557 = vadd.f32 %v3547, %v3554
        %v3558 = vld [vmem:[%s16] sm:$0xff]
        %v3559 = vld [vmem:[%s16 + $0x8] sm:$0xff]
        %v3560 = vld [vmem:[%s16 + $0x10] sm:$0xff]
        %v3561 = vld [vmem:[%s16 + $0x18] sm:$0xff]
        %v3562 = vld [vmem:[#allocation6] sm:$0x1]
        %v3564 = vlaneseq
        %v3565 = vshrl.u32 %v3564, 7
        %v3566 = vsub.s32 0, %v3565
        %v3567 = vrot.slane %v3562, %v3566
        %3571 = vrot.lane.b32.xlu0 %v3556, 32
        %v3572 = vpop.permute.xlu0 %3571
        %3573 = vrot.lane.b32.xlu0 %v3557, 32
        %v3574 = vpop.permute.xlu0 %3573
        %v3575 = vsel %vm752, %v3572, 0
        %v3577 = vsel %vm752, %v3574, 0
        %3579 = vmatprep.subr.mxu0 0.0
        %3580 = vmatpush1.msra.mxu0 %v3558
        %3581 = vmatprep.subr.mxu0 0.0
        %3582 = vmatpush1.msra.mxu0 %v3559
        %3583 = vmatprep.subr.mxu0 0.0
        %3584 = vmatpush1.msra.mxu0 %v3560
        %3585 = vmatprep.subr.mxu0 0.0
        %3586 = vmatpush1.msra.mxu0 %v3561
        %3587 = vmatprep.subr.mxu0 0.0
        %3588 = vmatpush1.msra.mxu0 0.0
        %3589 = vmatprep.subr.mxu0 0.0
        %3590 = vmatpush1.msra.mxu0 0.0
        %3591 = vmatprep.subr.mxu0 0.0
        %3592 = vmatpush1.msra.mxu0 0.0
        %3593 = vmatprep.subr.mxu0 0.0
        %3594 = vmatpush1.msra.mxu0 0.0
        %3595 = vmatprep.subr.mxu0 0.0
        %3596 = vmatpush1.msra.mxu0 0.0
        %3597 = vmatprep.subr.mxu0 0.0
        %3598 = vmatpush1.msra.mxu0 0.0
        %3599 = vmatprep.subr.mxu0 0.0
        %3600 = vmatpush1.msra.mxu0 0.0
        %3601 = vmatprep.subr.mxu0 0.0
        %3602 = vmatpush1.msra.mxu0 0.0
        %3603 = vmatprep.subr.mxu0 0.0
        %3604 = vmatpush1.msra.mxu0 0.0
        %3605 = vmatprep.subr.mxu0 0.0
        %3606 = vmatpush1.msra.mxu0 0.0
        %3607 = vmatprep.subr.mxu0 0.0
        %3608 = vmatpush1.msra.mxu0 0.0
        %3609 = vmatprep.subr.mxu0 0.0
        %3610 = vmatpush1.msra.mxu0 0.0
        %3611 = vmatprep.subr.mxu0 0.0
        %3612 = vmatpush1.msra.mxu0 0.0
        %3613 = vmatprep.subr.mxu0 0.0
        %3614 = vmatpush1.msra.mxu0 0.0
        %3615 = vmatprep.subr.mxu0 0.0
        %3616 = vmatpush1.msra.mxu0 0.0
        %3617 = vmatprep.subr.mxu0 0.0
        %3618 = vmatpush1.msra.mxu0 0.0
        %3619 = vmatprep.subr.mxu0 0.0
        %3620 = vmatpush1.msra.mxu0 0.0
        %3621 = vmatprep.subr.mxu0 0.0
        %3622 = vmatpush1.msra.mxu0 0.0
        %3623 = vmatprep.subr.mxu0 0.0
        %3624 = vmatpush1.msra.mxu0 0.0
        %3625 = vmatprep.subr.mxu0 0.0
        %3626 = vmatpush1.msra.mxu0 0.0
        %3627 = vmatprep.subr.mxu0 0.0
        %3628 = vmatpush1.msra.mxu0 0.0
        %3629 = vmatprep.subr.mxu0 0.0
        %3630 = vmatpush1.msra.mxu0 0.0
        %3631 = vmatprep.subr.mxu0 0.0
        %3632 = vmatpush1.msra.mxu0 0.0
        %3633 = vmatprep.subr.mxu0 0.0
        %3634 = vmatpush1.msra.mxu0 0.0
        %3635 = vmatprep.subr.mxu0 0.0
        %3636 = vmatpush1.msra.mxu0 0.0
        %3637 = vmatprep.subr.mxu0 0.0
        %3638 = vmatpush1.msra.mxu0 0.0
        %3639 = vmatprep.subr.mxu0 0.0
        %3640 = vmatpush1.msra.mxu0 0.0
        %3641 = vmatprep.subr.mxu0 0.0
        %3642 = vmatpush1.msra.mxu0 0.0
        %3643 = vmatprep.mubr.f32.mxu0 0.0
        %3644 = vmatmul.mubr.f32.gmra.mrb[0].mxu0 %v3575
        %v3645 = vpop.f32.mrb[0].mxu0
        %v3646 = vadd.f32 %v3567, %v3645
        %v3647 = vpop.f32.mrb[0].mxu0
        %3648 = vmatprep.mubr.f32.mxu0 0.0
        %3649 = vmatmul.mubr.f32.gmra.mrb[0].mxu0 %v3577
        %v3650 = vpop.f32.mrb[0].mxu0
        %v3651 = vadd.f32 %v3567, %v3650
        %v3652 = vpop.f32.mrb[0].mxu0
        %3653 = vdwg.mxu0
        %v3654 = vmax.f32 %v3646, 0.0
        %v3655 = vmax.f32 %v3651, 0.0
        %v3656 = vld [vmem:[%s18] sm:$0xff]
        %v3657 = vld [vmem:[%s18 + $0x8] sm:$0xff]
        %v3658 = vld [vmem:[#allocation8] sm:$0x1]
        %v3660 = vlaneseq
        %v3661 = vshrl.u32 %v3660, 7
        %v3662 = vsub.s32 0, %v3661
        %v3663 = vrot.slane %v3658, %v3662
        %vm3665 = vcmask 130048
        %v3667 = vsel %vm3665, %v3654, 0
        %v3670 = vsel %vm3665, %v3655, 0
        %3672 = vmatprep.subr.mxu0 0.0
        %3673 = vmatpush1.msra.mxu0 %v3656
        %3674 = vmatprep.subr.mxu0 0.0
        %3675 = vmatpush1.msra.mxu0 %v3657
        %3676 = vmatprep.subr.mxu0 0.0
        %3677 = vmatpush1.msra.mxu0 0.0
        %3678 = vmatprep.subr.mxu0 0.0
        %3679 = vmatpush1.msra.mxu0 0.0
        %3680 = vmatprep.subr.mxu0 0.0
        %3681 = vmatpush1.msra.mxu0 0.0
        %3682 = vmatprep.subr.mxu0 0.0
        %3683 = vmatpush1.msra.mxu0 0.0
        %3684 = vmatprep.subr.mxu0 0.0
        %3685 = vmatpush1.msra.mxu0 0.0
        %3686 = vmatprep.subr.mxu0 0.0
        %3687 = vmatpush1.msra.mxu0 0.0
        %3688 = vmatprep.subr.mxu0 0.0
        %3689 = vmatpush1.msra.mxu0 0.0
        %3690 = vmatprep.subr.mxu0 0.0
        %3691 = vmatpush1.msra.mxu0 0.0
        %3692 = vmatprep.subr.mxu0 0.0
        %3693 = vmatpush1.msra.mxu0 0.0
        %3694 = vmatprep.subr.mxu0 0.0
        %3695 = vmatpush1.msra.mxu0 0.0
        %3696 = vmatprep.subr.mxu0 0.0
        %3697 = vmatpush1.msra.mxu0 0.0
        %3698 = vmatprep.subr.mxu0 0.0
        %3699 = vmatpush1.msra.mxu0 0.0
        %3700 = vmatprep.subr.mxu0 0.0
        %3701 = vmatpush1.msra.mxu0 0.0
        %3702 = vmatprep.subr.mxu0 0.0
        %3703 = vmatpush1.msra.mxu0 0.0
        %3704 = vmatprep.subr.mxu0 0.0
        %3705 = vmatpush1.msra.mxu0 0.0
        %3706 = vmatprep.subr.mxu0 0.0
        %3707 = vmatpush1.msra.mxu0 0.0
        %3708 = vmatprep.subr.mxu0 0.0
        %3709 = vmatpush1.msra.mxu0 0.0
        %3710 = vmatprep.subr.mxu0 0.0
        %3711 = vmatpush1.msra.mxu0 0.0
        %3712 = vmatprep.subr.mxu0 0.0
        %3713 = vmatpush1.msra.mxu0 0.0
        %3714 = vmatprep.subr.mxu0 0.0
        %3715 = vmatpush1.msra.mxu0 0.0
        %3716 = vmatprep.subr.mxu0 0.0
        %3717 = vmatpush1.msra.mxu0 0.0
        %3718 = vmatprep.subr.mxu0 0.0
        %3719 = vmatpush1.msra.mxu0 0.0
        %3720 = vmatprep.subr.mxu0 0.0
        %3721 = vmatpush1.msra.mxu0 0.0
        %3722 = vmatprep.subr.mxu0 0.0
        %3723 = vmatpush1.msra.mxu0 0.0
        %3724 = vmatprep.subr.mxu0 0.0
        %3725 = vmatpush1.msra.mxu0 0.0
        %3726 = vmatprep.subr.mxu0 0.0
        %3727 = vmatpush1.msra.mxu0 0.0
        %3728 = vmatprep.subr.mxu0 0.0
        %3729 = vmatpush1.msra.mxu0 0.0
        %3730 = vmatprep.subr.mxu0 0.0
        %3731 = vmatpush1.msra.mxu0 0.0
        %3732 = vmatprep.subr.mxu0 0.0
        %3733 = vmatpush1.msra.mxu0 0.0
        %3734 = vmatprep.subr.mxu0 0.0
        %3735 = vmatpush1.msra.mxu0 0.0
        %3736 = vmatprep.mubr.f32.mxu0 0.0
        %3737 = vmatmul.mubr.f32.gmra.mrb[0].mxu0 %v3667
        %v3738 = vpop.f32.mrb[0].mxu0
        %v3739 = vadd.f32 %v3663, %v3738
        %v3740 = vpop.f32.mrb[0].mxu0
        %3741 = vmatprep.mubr.f32.mxu0 0.0
        %3742 = vmatmul.mubr.f32.gmra.mrb[0].mxu0 %v3670
        %v3743 = vpop.f32.mrb[0].mxu0
        %v3744 = vadd.f32 %v3663, %v3743
        %v3745 = vpop.f32.mrb[0].mxu0
        %3746 = vdwg.mxu0
        %3747 = vst.msk [vmem:[%s731] sm:$0xff] %vm2919, %v3739
        %3748 = vst.msk [vmem:[%s731 + $0x8] sm:$0xff] %vm2919, %v3744
        %s3749 = smul.u32 2, %s33
        %p3750 = scmp.lt.s32.totalorder %s3749, 3
        %s3751 = scalar_select %p3750, %s3749, 3
        %s3752 = smul.addr %s3751, 8
        %s3753 = scalar_lea.vmem %s20, %s3752
        // Predicated region
        $region151: #{forward.3} parent=133 // pred_check
          %p3754 = pneg %p476
        $region152: #{forward.3} parent=133 // pred_check_branch
          %3756 = sbr.rel (%p3754) target = $region154
        $region153: #{forward.3} parent=133 // pred_region
          %s3757 = smul.u32 2, %s33
        $region154: #{forward.3} parent=133 // pred_fallthru
          _
      $region134: #{forward.3} parent=5 // pred_fallthru
        _
      %p3758 = scmp.le.s32.totalorder 2, %s28
      // Predicated region
      $region155: #{forward.3} parent=5 // pred_check
        %p3759 = pneg %p3758
      $region156: #{forward.3} parent=5 // pred_check_branch
        %3761 = sbr.rel (%p3759) target = $region158
      $region157: #{forward.3} parent=5 // pred_region
        %s3762 = ssub.s32 %s28, 2
        // Predicated region
        $region159: #{forward.3} parent=157 // pred_check
          %p3763 = pneg %p482
        $region160: #{forward.3} parent=157 // pred_check_branch
          %3765 = sbr.rel (%p3763) target = $region162
        $region161: #{forward.3} parent=157 // pred_region
          %s3766 = smul.u32 2, %s34
          %p3767 = scmp.lt.s32.totalorder %s3766, 3
          %s3768 = scalar_select %p3767, %s3766, 3
          %s3769 = smul.addr %s3768, 8
          %s3770 = scalar_lea.vmem %s20, %s3769
        $region162: #{forward.3} parent=157 // pred_fallthru
          _
      $region158: #{forward.3} parent=5 // pred_fallthru
        _
    $region6: #{forward.3} parent=1 // loop_footer
      %s32 = sadd.s32 1, %s28
    $region7: #{forward.3} parent=1 // loop_footer_branch
      %27 = sbr.rel target = $region3
    $region8: #{forward.3} parent=1 // loop_exit
      _
    %3771 = vsyncpa [#allocation5], 1
    %s3772 = scalar_lea.sflag [#allocation5], 1
    %3773 = vsyncpa %s3772, 1
    %3774 = vsyncpa [#allocation7], 1

// kernel: forward.2
$region0: #{forward.2}
  #allocation0 [shape = 'u32[]', space=smem, size = 0x4, offset = 0x4, fixed_abs, tag = 'smem constant byte address 0x4 - core index']
  #allocation1 [shape = 'u32[144,128]{1,0:T(1,128)}', space=vmem, size = 0x12000, scoped, tag = 'internal scratch']
  %s0 = inlined_call_operand.vmem [shape: f32[128,16], index: 0, kind: input, shape index: {}]
  %s1 = inlined_call_operand.vmem [shape: bf16[128,32], index: 1, kind: input, shape index: {}]
  %s2 = inlined_call_operand.vmem [shape: bf16[128,32], index: 2, kind: input, shape index: {}]
  %s3 = inlined_call_operand.vmem [shape: bf16[32,128], index: 3, kind: input, shape index: {}]
  %s4 = inlined_call_operand.vmem [shape: f32[2,128,32], index: 4, kind: input, shape index: {}]
  %s5 = inlined_call_operand.vmem [shape: bf16[32,32], index: 5, kind: input, shape index: {}]
  %s6 = inlined_call_operand.vmem [shape: f32[16,16], index: 6, kind: input, shape index: {}]
  %s7 = inlined_call_operand.vmem [shape: f32[1,16], index: 7, kind: input, shape index: {}]
  %s8 = inlined_call_operand.vmem [shape: f32[16,32], index: 8, kind: input, shape index: {}]
  %s9 = inlined_call_operand.vmem [shape: f32[1,32], index: 9, kind: input, shape index: {}]
  %s10 = inlined_call_operand.vmem [shape: f32[2,32,32], index: 10, kind: input, shape index: {}]
  %s11 = inlined_call_operand.vmem [shape: f32[2,32,32], index: 11, kind: input, shape index: {}]
  %s12 = inlined_call_operand.vmem [shape: f32[2,32,32], index: 12, kind: input, shape index: {}]
  %s13 = inlined_call_operand.vmem [shape: f32[2,1,32], index: 13, kind: input, shape index: {}]
  %s14 = inlined_call_operand.vmem [shape: f32[2,32,64], index: 14, kind: input, shape index: {}]
  %s15 = inlined_call_operand.vmem [shape: f32[2,32,64], index: 15, kind: input, shape index: {}]
  %s16 = inlined_call_operand.vmem [shape: f32[2,1,64], index: 16, kind: input, shape index: {}]
  %s17 = inlined_call_operand.vmem [shape: f32[2,32,32], index: 17, kind: input, shape index: {}]
  %s18 = inlined_call_operand.vmem [shape: f32[2,1,32], index: 18, kind: input, shape index: {}]
  %s19 = inlined_call_operand.vmem [shape: f32[2,1,32], index: 19, kind: input, shape index: {}]
  %s20 = inlined_call_operand.vmem [shape: f32[2,1,32], index: 20, kind: input, shape index: {}]
  %s21 = inlined_call_operand.vmem [shape: f32[32,96], index: 21, kind: input, shape index: {}]
  %s22 = inlined_call_operand.vmem [shape: f32[1,96], index: 22, kind: input, shape index: {}]
  %s23 = inlined_call_operand.vmem [shape: f32[32,32], index: 23, kind: input, shape index: {}]
  %s24 = inlined_call_operand.vmem [shape: f32[1,32], index: 24, kind: input, shape index: {}]
  %s25 = inlined_call_operand.vmem [shape: f32[1,32], index: 25, kind: input, shape index: {}]
  %s26 = inlined_call_operand.vmem [shape: f32[1,32], index: 26, kind: input, shape index: {}]
  %s27 = inlined_call_operand.vmem [shape: f32[128,32], index: 27, kind: output, shape index: {}]
  %s28 = sld [smem:[#allocation0]]
  $region141: #{forward.2} parent=0
    _
  %s30 = ssub.s32 1, %s28
  %s31 = scalar_select 0, %s30, %s28
  loop: start=0, step=1, limit=6
  $region2: #{forward.2} parent=0 // loop_pre_header
    _
  $region3: #{forward.2} parent=0 // loop_header
    %s33 = sphi 0, %s37
    %p34 = scmp.ge.s32.totalorder %s33, 6
    %s43 = sphi 0, %s45
    %s46 = sphi 0, %s43
    %s47 = sphi 0, %s46
    %s63 = sphi 0, %s47
    %s67 = sphi 0, %s67
    %s69 = sphi 0, %s67
    %s70 = sphi 0, %s69
    %s84 = sphi 0, %s70
    %s88 = sphi 0, %s88
    %s90 = sphi 0, %s88
    %s91 = sphi 0, %s90
    %s105 = sphi 0, %s91
    %s109 = sphi 0, %s109
    %s111 = sphi 0, %s109
    %s112 = sphi 0, %s111
    %s126 = sphi 0, %s112
    %s130 = sphi 0, %s130
    %s132 = sphi 0, %s130
    %s133 = sphi 0, %s132
    %s147 = sphi 0, %s133
    %s151 = sphi 0, %s151
    %s153 = sphi 0, %s151
    %s154 = sphi 0, %s153
    %s168 = sphi 0, %s154
    %s172 = sphi 0, %s172
    %s174 = sphi 0, %s172
    %s175 = sphi 0, %s174
    %s189 = sphi 0, %s175
    %s193 = sphi 0, %s193
    %s195 = sphi 0, %s193
    %s196 = sphi 0, %s195
    %s210 = sphi 0, %s196
    %s214 = sphi 0, %s214
    %s216 = sphi 0, %s214
    %s217 = sphi 0, %s216
    %s231 = sphi 0, %s217
    %s235 = sphi 0, %s235
    %s237 = sphi 0, %s235
    %s238 = sphi 0, %s237
    %s252 = sphi 0, %s238
    %s256 = sphi 0, %s256
    %s258 = sphi 0, %s256
    %s259 = sphi 0, %s258
    %s273 = sphi 0, %s259
    %s277 = sphi 0, %s277
    %s279 = sphi 0, %s277
    %s280 = sphi 0, %s279
    %s294 = sphi 0, %s280
    %s298 = sphi 0, %s298
    %s300 = sphi 0, %s298
    %s301 = sphi 0, %s300
    %s315 = sphi 0, %s301
    %s319 = sphi 0, %s319
    %s321 = sphi 0, %s319
    %s322 = sphi 0, %s321
    %s336 = sphi 0, %s322
    %s340 = sphi 0, %s340
    %s342 = sphi 0, %s340
    %s343 = sphi 0, %s342
    %s357 = sphi 0, %s343
    %s361 = sphi 0, %s361
    %s363 = sphi 0, %s361
    %s364 = sphi 0, %s363
    %s378 = sphi 0, %s364
    %s382 = sphi 0, %s382
    %s384 = sphi 0, %s382
    %s385 = sphi 0, %s384
    %s399 = sphi 0, %s385
    %s403 = sphi 0, %s403
    %s405 = sphi 0, %s403
    %s406 = sphi 0, %s405
    %s420 = sphi 0, %s406
    %s424 = sphi 0, %s424
    %s426 = sphi 0, %s424
    %s427 = sphi 0, %s426
    %s441 = sphi 0, %s427
    %s445 = sphi 0, %s445
    %s447 = sphi 0, %s445
    %s448 = sphi 0, %s447
    %s462 = sphi 0, %s448
    %s466 = sphi 0, %s466
    %s468 = sphi 0, %s466
    %s469 = sphi 0, %s468
    %s483 = sphi 0, %s469
    %s487 = sphi 0, %s487
    %s489 = sphi 0, %s487
    %s490 = sphi 0, %s489
    %s504 = sphi 0, %s490
    %s508 = sphi 0, %s508
    %s510 = sphi 0, %s508
    %s511 = sphi 0, %s510
    %s525 = sphi 0, %s511
    %s529 = sphi 0, %s529
    %s531 = sphi 0, %s529
    %s532 = sphi 0, %s531
    %s546 = sphi 0, %s532
    %s550 = sphi 0, %s550
    %s552 = sphi 0, %s550
    %s553 = sphi 0, %s552
    %s567 = sphi 0, %s553
    %s571 = sphi 0, %s571
    %s573 = sphi 0, %s571
    %s574 = sphi 0, %s573
    %s588 = sphi 0, %s574
    %s592 = sphi 0, %s592
    %s594 = sphi 0, %s592
    %s595 = sphi 0, %s594
    %s609 = sphi 0, %s595
    %s615 = sphi 0, %s617
    %s618 = sphi 0, %s615
    %s619 = sphi 0, %s618
    %s635 = sphi 0, %s619
  $region4: #{forward.2} parent=0 // loop_header_branch
    %36 = sbr.rel (%p34) target = $region8
  $region5: #{forward.2} parent=0 // loop_body
    %s38 = ssub.s32 %s33, 1
    %s39 = ssub.s32 %s33, 2
    %s40 = sadd.s32 %s33, 1
    %s41 = ssub.s32 %s33, %s40
    %p42 = scmp.eq.s32.totalorder %s41, 0
    %s44 = sadd.s32 %s43, 1
    %s45 = scalar_select %p42, %s43, %s44
    %p48 = pneg %p42
    %p49 = scmp.eq.s32.totalorder %s33, 3
    %p50 = por %p48, %p49
    %p51 = scmp.ne.s32.totalorder %s43, %s46
    %p52 = scmp.eq.s32.totalorder %s33, 0
    %p53 = por %p51, %p52
    %p54 = scmp.ne.s32.totalorder %s43, %s46
    %p55 = scmp.eq.s32.totalorder %s38, 3
    %p56 = por %p54, %p55
    %p57 = scmp.ne.s32.totalorder %s46, %s47
    %p58 = scmp.eq.s32.totalorder %s38, 0
    %p59 = por %p57, %p58
    %p60 = scmp.ne.s32.totalorder %s46, %s47
    %p61 = scmp.eq.s32.totalorder %s39, 3
    %p62 = por %p60, %p61
    %p64 = scmp.ne.s32.totalorder %s47, %s63
    %p65 = scmp.eq.s32.totalorder %s39, 0
    %p66 = por %p64, %p65
    %s68 = sadd.s32 %s67, 1
    %p71 = scmp.eq.s32.totalorder %s33, 3
    %p72 = scmp.ne.s32.totalorder %s67, %s69
    %p73 = scmp.eq.s32.totalorder %s33, 0
    %p74 = por %p72, %p73
    %p75 = scmp.ne.s32.totalorder %s67, %s69
    %p76 = scmp.eq.s32.totalorder %s38, 3
    %p77 = por %p75, %p76
    %p78 = scmp.ne.s32.totalorder %s69, %s70
    %p79 = scmp.eq.s32.totalorder %s38, 0
    %p80 = por %p78, %p79
    %p81 = scmp.ne.s32.totalorder %s69, %s70
    %p82 = scmp.eq.s32.totalorder %s39, 3
    %p83 = por %p81, %p82
    %p85 = scmp.ne.s32.totalorder %s70, %s84
    %p86 = scmp.eq.s32.totalorder %s39, 0
    %p87 = por %p85, %p86
    %s89 = sadd.s32 %s88, 1
    %p92 = scmp.eq.s32.totalorder %s33, 3
    %p93 = scmp.ne.s32.totalorder %s88, %s90
    %p94 = scmp.eq.s32.totalorder %s33, 0
    %p95 = por %p93, %p94
    %p96 = scmp.ne.s32.totalorder %s88, %s90
    %p97 = scmp.eq.s32.totalorder %s38, 3
    %p98 = por %p96, %p97
    %p99 = scmp.ne.s32.totalorder %s90, %s91
    %p100 = scmp.eq.s32.totalorder %s38, 0
    %p101 = por %p99, %p100
    %p102 = scmp.ne.s32.totalorder %s90, %s91
    %p103 = scmp.eq.s32.totalorder %s39, 3
    %p104 = por %p102, %p103
    %p106 = scmp.ne.s32.totalorder %s91, %s105
    %p107 = scmp.eq.s32.totalorder %s39, 0
    %p108 = por %p106, %p107
    %s110 = sadd.s32 %s109, 1
    %p113 = scmp.eq.s32.totalorder %s33, 3
    %p114 = scmp.ne.s32.totalorder %s109, %s111
    %p115 = scmp.eq.s32.totalorder %s33, 0
    %p116 = por %p114, %p115
    %p117 = scmp.ne.s32.totalorder %s109, %s111
    %p118 = scmp.eq.s32.totalorder %s38, 3
    %p119 = por %p117, %p118
    %p120 = scmp.ne.s32.totalorder %s111, %s112
    %p121 = scmp.eq.s32.totalorder %s38, 0
    %p122 = por %p120, %p121
    %p123 = scmp.ne.s32.totalorder %s111, %s112
    %p124 = scmp.eq.s32.totalorder %s39, 3
    %p125 = por %p123, %p124
    %p127 = scmp.ne.s32.totalorder %s112, %s126
    %p128 = scmp.eq.s32.totalorder %s39, 0
    %p129 = por %p127, %p128
    %s131 = sadd.s32 %s130, 1
    %p134 = scmp.eq.s32.totalorder %s33, 3
    %p135 = scmp.ne.s32.totalorder %s130, %s132
    %p136 = scmp.eq.s32.totalorder %s33, 0
    %p137 = por %p135, %p136
    %p138 = scmp.ne.s32.totalorder %s130, %s132
    %p139 = scmp.eq.s32.totalorder %s38, 3
    %p140 = por %p138, %p139
    %p141 = scmp.ne.s32.totalorder %s132, %s133
    %p142 = scmp.eq.s32.totalorder %s38, 0
    %p143 = por %p141, %p142
    %p144 = scmp.ne.s32.totalorder %s132, %s133
    %p145 = scmp.eq.s32.totalorder %s39, 3
    %p146 = por %p144, %p145
    %p148 = scmp.ne.s32.totalorder %s133, %s147
    %p149 = scmp.eq.s32.totalorder %s39, 0
    %p150 = por %p148, %p149
    %s152 = sadd.s32 %s151, 1
    %p155 = scmp.eq.s32.totalorder %s33, 3
    %p156 = scmp.ne.s32.totalorder %s151, %s153
    %p157 = scmp.eq.s32.totalorder %s33, 0
    %p158 = por %p156, %p157
    %p159 = scmp.ne.s32.totalorder %s151, %s153
    %p160 = scmp.eq.s32.totalorder %s38, 3
    %p161 = por %p159, %p160
    %p162 = scmp.ne.s32.totalorder %s153, %s154
    %p163 = scmp.eq.s32.totalorder %s38, 0
    %p164 = por %p162, %p163
    %p165 = scmp.ne.s32.totalorder %s153, %s154
    %p166 = scmp.eq.s32.totalorder %s39, 3
    %p167 = por %p165, %p166
    %p169 = scmp.ne.s32.totalorder %s154, %s168
    %p170 = scmp.eq.s32.totalorder %s39, 0
    %p171 = por %p169, %p170
    %s173 = sadd.s32 %s172, 1
    %p176 = scmp.eq.s32.totalorder %s33, 3
    %p177 = scmp.ne.s32.totalorder %s172, %s174
    %p178 = scmp.eq.s32.totalorder %s33, 0
    %p179 = por %p177, %p178
    %p180 = scmp.ne.s32.totalorder %s172, %s174
    %p181 = scmp.eq.s32.totalorder %s38, 3
    %p182 = por %p180, %p181
    %p183 = scmp.ne.s32.totalorder %s174, %s175
    %p184 = scmp.eq.s32.totalorder %s38, 0
    %p185 = por %p183, %p184
    %p186 = scmp.ne.s32.totalorder %s174, %s175
    %p187 = scmp.eq.s32.totalorder %s39, 3
    %p188 = por %p186, %p187
    %p190 = scmp.ne.s32.totalorder %s175, %s189
    %p191 = scmp.eq.s32.totalorder %s39, 0
    %p192 = por %p190, %p191
    %s194 = sadd.s32 %s193, 1
    %p197 = scmp.eq.s32.totalorder %s33, 3
    %p198 = scmp.ne.s32.totalorder %s193, %s195
    %p199 = scmp.eq.s32.totalorder %s33, 0
    %p200 = por %p198, %p199
    %p201 = scmp.ne.s32.totalorder %s193, %s195
    %p202 = scmp.eq.s32.totalorder %s38, 3
    %p203 = por %p201, %p202
    %p204 = scmp.ne.s32.totalorder %s195, %s196
    %p205 = scmp.eq.s32.totalorder %s38, 0
    %p206 = por %p204, %p205
    %p207 = scmp.ne.s32.totalorder %s195, %s196
    %p208 = scmp.eq.s32.totalorder %s39, 3
    %p209 = por %p207, %p208
    %p211 = scmp.ne.s32.totalorder %s196, %s210
    %p212 = scmp.eq.s32.totalorder %s39, 0
    %p213 = por %p211, %p212
    %s215 = sadd.s32 %s214, 1
    %p218 = scmp.eq.s32.totalorder %s33, 3
    %p219 = scmp.ne.s32.totalorder %s214, %s216
    %p220 = scmp.eq.s32.totalorder %s33, 0
    %p221 = por %p219, %p220
    %p222 = scmp.ne.s32.totalorder %s214, %s216
    %p223 = scmp.eq.s32.totalorder %s38, 3
    %p224 = por %p222, %p223
    %p225 = scmp.ne.s32.totalorder %s216, %s217
    %p226 = scmp.eq.s32.totalorder %s38, 0
    %p227 = por %p225, %p226
    %p228 = scmp.ne.s32.totalorder %s216, %s217
    %p229 = scmp.eq.s32.totalorder %s39, 3
    %p230 = por %p228, %p229
    %p232 = scmp.ne.s32.totalorder %s217, %s231
    %p233 = scmp.eq.s32.totalorder %s39, 0
    %p234 = por %p232, %p233
    %s236 = sadd.s32 %s235, 1
    %p239 = scmp.eq.s32.totalorder %s33, 3
    %p240 = scmp.ne.s32.totalorder %s235, %s237
    %p241 = scmp.eq.s32.totalorder %s33, 0
    %p242 = por %p240, %p241
    %p243 = scmp.ne.s32.totalorder %s235, %s237
    %p244 = scmp.eq.s32.totalorder %s38, 3
    %p245 = por %p243, %p244
    %p246 = scmp.ne.s32.totalorder %s237, %s238
    %p247 = scmp.eq.s32.totalorder %s38, 0
    %p248 = por %p246, %p247
    %p249 = scmp.ne.s32.totalorder %s237, %s238
    %p250 = scmp.eq.s32.totalorder %s39, 3
    %p251 = por %p249, %p250
    %p253 = scmp.ne.s32.totalorder %s238, %s252
    %p254 = scmp.eq.s32.totalorder %s39, 0
    %p255 = por %p253, %p254
    %s257 = sadd.s32 %s256, 1
    %p260 = scmp.eq.s32.totalorder %s33, 3
    %p261 = scmp.ne.s32.totalorder %s256, %s258
    %p262 = scmp.eq.s32.totalorder %s33, 0
    %p263 = por %p261, %p262
    %p264 = scmp.ne.s32.totalorder %s256, %s258
    %p265 = scmp.eq.s32.totalorder %s38, 3
    %p266 = por %p264, %p265
    %p267 = scmp.ne.s32.totalorder %s258, %s259
    %p268 = scmp.eq.s32.totalorder %s38, 0
    %p269 = por %p267, %p268
    %p270 = scmp.ne.s32.totalorder %s258, %s259
    %p271 = scmp.eq.s32.totalorder %s39, 3
    %p272 = por %p270, %p271
    %p274 = scmp.ne.s32.totalorder %s259, %s273
    %p275 = scmp.eq.s32.totalorder %s39, 0
    %p276 = por %p274, %p275
    %s278 = sadd.s32 %s277, 1
    %p281 = scmp.eq.s32.totalorder %s33, 3
    %p282 = scmp.ne.s32.totalorder %s277, %s279
    %p283 = scmp.eq.s32.totalorder %s33, 0
    %p284 = por %p282, %p283
    %p285 = scmp.ne.s32.totalorder %s277, %s279
    %p286 = scmp.eq.s32.totalorder %s38, 3
    %p287 = por %p285, %p286
    %p288 = scmp.ne.s32.totalorder %s279, %s280
    %p289 = scmp.eq.s32.totalorder %s38, 0
    %p290 = por %p288, %p289
    %p291 = scmp.ne.s32.totalorder %s279, %s280
    %p292 = scmp.eq.s32.totalorder %s39, 3
    %p293 = por %p291, %p292
    %p295 = scmp.ne.s32.totalorder %s280, %s294
    %p296 = scmp.eq.s32.totalorder %s39, 0
    %p297 = por %p295, %p296
    %s299 = sadd.s32 %s298, 1
    %p302 = scmp.eq.s32.totalorder %s33, 3
    %p303 = scmp.ne.s32.totalorder %s298, %s300
    %p304 = scmp.eq.s32.totalorder %s33, 0
    %p305 = por %p303, %p304
    %p306 = scmp.ne.s32.totalorder %s298, %s300
    %p307 = scmp.eq.s32.totalorder %s38, 3
    %p308 = por %p306, %p307
    %p309 = scmp.ne.s32.totalorder %s300, %s301
    %p310 = scmp.eq.s32.totalorder %s38, 0
    %p311 = por %p309, %p310
    %p312 = scmp.ne.s32.totalorder %s300, %s301
    %p313 = scmp.eq.s32.totalorder %s39, 3
    %p314 = por %p312, %p313
    %p316 = scmp.ne.s32.totalorder %s301, %s315
    %p317 = scmp.eq.s32.totalorder %s39, 0
    %p318 = por %p316, %p317
    %s320 = sadd.s32 %s319, 1
    %p323 = scmp.eq.s32.totalorder %s33, 3
    %p324 = scmp.ne.s32.totalorder %s319, %s321
    %p325 = scmp.eq.s32.totalorder %s33, 0
    %p326 = por %p324, %p325
    %p327 = scmp.ne.s32.totalorder %s319, %s321
    %p328 = scmp.eq.s32.totalorder %s38, 3
    %p329 = por %p327, %p328
    %p330 = scmp.ne.s32.totalorder %s321, %s322
    %p331 = scmp.eq.s32.totalorder %s38, 0
    %p332 = por %p330, %p331
    %p333 = scmp.ne.s32.totalorder %s321, %s322
    %p334 = scmp.eq.s32.totalorder %s39, 3
    %p335 = por %p333, %p334
    %p337 = scmp.ne.s32.totalorder %s322, %s336
    %p338 = scmp.eq.s32.totalorder %s39, 0
    %p339 = por %p337, %p338
    %s341 = sadd.s32 %s340, 1
    %p344 = scmp.eq.s32.totalorder %s33, 3
    %p345 = scmp.ne.s32.totalorder %s340, %s342
    %p346 = scmp.eq.s32.totalorder %s33, 0
    %p347 = por %p345, %p346
    %p348 = scmp.ne.s32.totalorder %s340, %s342
    %p349 = scmp.eq.s32.totalorder %s38, 3
    %p350 = por %p348, %p349
    %p351 = scmp.ne.s32.totalorder %s342, %s343
    %p352 = scmp.eq.s32.totalorder %s38, 0
    %p353 = por %p351, %p352
    %p354 = scmp.ne.s32.totalorder %s342, %s343
    %p355 = scmp.eq.s32.totalorder %s39, 3
    %p356 = por %p354, %p355
    %p358 = scmp.ne.s32.totalorder %s343, %s357
    %p359 = scmp.eq.s32.totalorder %s39, 0
    %p360 = por %p358, %p359
    %s362 = sadd.s32 %s361, 1
    %p365 = scmp.eq.s32.totalorder %s33, 3
    %p366 = scmp.ne.s32.totalorder %s361, %s363
    %p367 = scmp.eq.s32.totalorder %s33, 0
    %p368 = por %p366, %p367
    %p369 = scmp.ne.s32.totalorder %s361, %s363
    %p370 = scmp.eq.s32.totalorder %s38, 3
    %p371 = por %p369, %p370
    %p372 = scmp.ne.s32.totalorder %s363, %s364
    %p373 = scmp.eq.s32.totalorder %s38, 0
    %p374 = por %p372, %p373
    %p375 = scmp.ne.s32.totalorder %s363, %s364
    %p376 = scmp.eq.s32.totalorder %s39, 3
    %p377 = por %p375, %p376
    %p379 = scmp.ne.s32.totalorder %s364, %s378
    %p380 = scmp.eq.s32.totalorder %s39, 0
    %p381 = por %p379, %p380
    %s383 = sadd.s32 %s382, 1
    %p386 = scmp.eq.s32.totalorder %s33, 3
    %p387 = scmp.ne.s32.totalorder %s382, %s384
    %p388 = scmp.eq.s32.totalorder %s33, 0
    %p389 = por %p387, %p388
    %p390 = scmp.ne.s32.totalorder %s382, %s384
    %p391 = scmp.eq.s32.totalorder %s38, 3
    %p392 = por %p390, %p391
    %p393 = scmp.ne.s32.totalorder %s384, %s385
    %p394 = scmp.eq.s32.totalorder %s38, 0
    %p395 = por %p393, %p394
    %p396 = scmp.ne.s32.totalorder %s384, %s385
    %p397 = scmp.eq.s32.totalorder %s39, 3
    %p398 = por %p396, %p397
    %p400 = scmp.ne.s32.totalorder %s385, %s399
    %p401 = scmp.eq.s32.totalorder %s39, 0
    %p402 = por %p400, %p401
    %s404 = sadd.s32 %s403, 1
    %p407 = scmp.eq.s32.totalorder %s33, 3
    %p408 = scmp.ne.s32.totalorder %s403, %s405
    %p409 = scmp.eq.s32.totalorder %s33, 0
    %p410 = por %p408, %p409
    %p411 = scmp.ne.s32.totalorder %s403, %s405
    %p412 = scmp.eq.s32.totalorder %s38, 3
    %p413 = por %p411, %p412
    %p414 = scmp.ne.s32.totalorder %s405, %s406
    %p415 = scmp.eq.s32.totalorder %s38, 0
    %p416 = por %p414, %p415
    %p417 = scmp.ne.s32.totalorder %s405, %s406
    %p418 = scmp.eq.s32.totalorder %s39, 3
    %p419 = por %p417, %p418
    %p421 = scmp.ne.s32.totalorder %s406, %s420
    %p422 = scmp.eq.s32.totalorder %s39, 0
    %p423 = por %p421, %p422
    %s425 = sadd.s32 %s424, 1
    %p428 = scmp.eq.s32.totalorder %s33, 3
    %p429 = scmp.ne.s32.totalorder %s424, %s426
    %p430 = scmp.eq.s32.totalorder %s33, 0
    %p431 = por %p429, %p430
    %p432 = scmp.ne.s32.totalorder %s424, %s426
    %p433 = scmp.eq.s32.totalorder %s38, 3
    %p434 = por %p432, %p433
    %p435 = scmp.ne.s32.totalorder %s426, %s427
    %p436 = scmp.eq.s32.totalorder %s38, 0
    %p437 = por %p435, %p436
    %p438 = scmp.ne.s32.totalorder %s426, %s427
    %p439 = scmp.eq.s32.totalorder %s39, 3
    %p440 = por %p438, %p439
    %p442 = scmp.ne.s32.totalorder %s427, %s441
    %p443 = scmp.eq.s32.totalorder %s39, 0
    %p444 = por %p442, %p443
    %s446 = sadd.s32 %s445, 1
    %p449 = scmp.eq.s32.totalorder %s33, 3
    %p450 = scmp.ne.s32.totalorder %s445, %s447
    %p451 = scmp.eq.s32.totalorder %s33, 0
    %p452 = por %p450, %p451
    %p453 = scmp.ne.s32.totalorder %s445, %s447
    %p454 = scmp.eq.s32.totalorder %s38, 3
    %p455 = por %p453, %p454
    %p456 = scmp.ne.s32.totalorder %s447, %s448
    %p457 = scmp.eq.s32.totalorder %s38, 0
    %p458 = por %p456, %p457
    %p459 = scmp.ne.s32.totalorder %s447, %s448
    %p460 = scmp.eq.s32.totalorder %s39, 3
    %p461 = por %p459, %p460
    %p463 = scmp.ne.s32.totalorder %s448, %s462
    %p464 = scmp.eq.s32.totalorder %s39, 0
    %p465 = por %p463, %p464
    %s467 = sadd.s32 %s466, 1
    %p470 = scmp.eq.s32.totalorder %s33, 3
    %p471 = scmp.ne.s32.totalorder %s466, %s468
    %p472 = scmp.eq.s32.totalorder %s33, 0
    %p473 = por %p471, %p472
    %p474 = scmp.ne.s32.totalorder %s466, %s468
    %p475 = scmp.eq.s32.totalorder %s38, 3
    %p476 = por %p474, %p475
    %p477 = scmp.ne.s32.totalorder %s468, %s469
    %p478 = scmp.eq.s32.totalorder %s38, 0
    %p479 = por %p477, %p478
    %p480 = scmp.ne.s32.totalorder %s468, %s469
    %p481 = scmp.eq.s32.totalorder %s39, 3
    %p482 = por %p480, %p481
    %p484 = scmp.ne.s32.totalorder %s469, %s483
    %p485 = scmp.eq.s32.totalorder %s39, 0
    %p486 = por %p484, %p485
    %s488 = sadd.s32 %s487, 1
    %p491 = scmp.eq.s32.totalorder %s33, 3
    %p492 = scmp.ne.s32.totalorder %s487, %s489
    %p493 = scmp.eq.s32.totalorder %s33, 0
    %p494 = por %p492, %p493
    %p495 = scmp.ne.s32.totalorder %s487, %s489
    %p496 = scmp.eq.s32.totalorder %s38, 3
    %p497 = por %p495, %p496
    %p498 = scmp.ne.s32.totalorder %s489, %s490
    %p499 = scmp.eq.s32.totalorder %s38, 0
    %p500 = por %p498, %p499
    %p501 = scmp.ne.s32.totalorder %s489, %s490
    %p502 = scmp.eq.s32.totalorder %s39, 3
    %p503 = por %p501, %p502
    %p505 = scmp.ne.s32.totalorder %s490, %s504
    %p506 = scmp.eq.s32.totalorder %s39, 0
    %p507 = por %p505, %p506
    %s509 = sadd.s32 %s508, 1
    %p512 = scmp.eq.s32.totalorder %s33, 3
    %p513 = scmp.ne.s32.totalorder %s508, %s510
    %p514 = scmp.eq.s32.totalorder %s33, 0
    %p515 = por %p513, %p514
    %p516 = scmp.ne.s32.totalorder %s508, %s510
    %p517 = scmp.eq.s32.totalorder %s38, 3
    %p518 = por %p516, %p517
    %p519 = scmp.ne.s32.totalorder %s510, %s511
    %p520 = scmp.eq.s32.totalorder %s38, 0
    %p521 = por %p519, %p520
    %p522 = scmp.ne.s32.totalorder %s510, %s511
    %p523 = scmp.eq.s32.totalorder %s39, 3
    %p524 = por %p522, %p523
    %p526 = scmp.ne.s32.totalorder %s511, %s525
    %p527 = scmp.eq.s32.totalorder %s39, 0
    %p528 = por %p526, %p527
    %s530 = sadd.s32 %s529, 1
    %p533 = scmp.eq.s32.totalorder %s33, 3
    %p534 = scmp.ne.s32.totalorder %s529, %s531
    %p535 = scmp.eq.s32.totalorder %s33, 0
    %p536 = por %p534, %p535
    %p537 = scmp.ne.s32.totalorder %s529, %s531
    %p538 = scmp.eq.s32.totalorder %s38, 3
    %p539 = por %p537, %p538
    %p540 = scmp.ne.s32.totalorder %s531, %s532
    %p541 = scmp.eq.s32.totalorder %s38, 0
    %p542 = por %p540, %p541
    %p543 = scmp.ne.s32.totalorder %s531, %s532
    %p544 = scmp.eq.s32.totalorder %s39, 3
    %p545 = por %p543, %p544
    %p547 = scmp.ne.s32.totalorder %s532, %s546
    %p548 = scmp.eq.s32.totalorder %s39, 0
    %p549 = por %p547, %p548
    %s551 = sadd.s32 %s550, 1
    %p554 = scmp.eq.s32.totalorder %s33, 3
    %p555 = scmp.ne.s32.totalorder %s550, %s552
    %p556 = scmp.eq.s32.totalorder %s33, 0
    %p557 = por %p555, %p556
    %p558 = scmp.ne.s32.totalorder %s550, %s552
    %p559 = scmp.eq.s32.totalorder %s38, 3
    %p560 = por %p558, %p559
    %p561 = scmp.ne.s32.totalorder %s552, %s553
    %p562 = scmp.eq.s32.totalorder %s38, 0
    %p563 = por %p561, %p562
    %p564 = scmp.ne.s32.totalorder %s552, %s553
    %p565 = scmp.eq.s32.totalorder %s39, 3
    %p566 = por %p564, %p565
    %p568 = scmp.ne.s32.totalorder %s553, %s567
    %p569 = scmp.eq.s32.totalorder %s39, 0
    %p570 = por %p568, %p569
    %s572 = sadd.s32 %s571, 1
    %p575 = scmp.eq.s32.totalorder %s33, 3
    %p576 = scmp.ne.s32.totalorder %s571, %s573
    %p577 = scmp.eq.s32.totalorder %s33, 0
    %p578 = por %p576, %p577
    %p579 = scmp.ne.s32.totalorder %s571, %s573
    %p580 = scmp.eq.s32.totalorder %s38, 3
    %p581 = por %p579, %p580
    %p582 = scmp.ne.s32.totalorder %s573, %s574
    %p583 = scmp.eq.s32.totalorder %s38, 0
    %p584 = por %p582, %p583
    %p585 = scmp.ne.s32.totalorder %s573, %s574
    %p586 = scmp.eq.s32.totalorder %s39, 3
    %p587 = por %p585, %p586
    %p589 = scmp.ne.s32.totalorder %s574, %s588
    %p590 = scmp.eq.s32.totalorder %s39, 0
    %p591 = por %p589, %p590
    %s593 = sadd.s32 %s592, 1
    %p596 = scmp.eq.s32.totalorder %s33, 3
    %p597 = scmp.ne.s32.totalorder %s592, %s594
    %p598 = scmp.eq.s32.totalorder %s33, 0
    %p599 = por %p597, %p598
    %p600 = scmp.ne.s32.totalorder %s592, %s594
    %p601 = scmp.eq.s32.totalorder %s38, 3
    %p602 = por %p600, %p601
    %p603 = scmp.ne.s32.totalorder %s594, %s595
    %p604 = scmp.eq.s32.totalorder %s38, 0
    %p605 = por %p603, %p604
    %p606 = scmp.ne.s32.totalorder %s594, %s595
    %p607 = scmp.eq.s32.totalorder %s39, 3
    %p608 = por %p606, %p607
    %p610 = scmp.ne.s32.totalorder %s595, %s609
    %p611 = scmp.eq.s32.totalorder %s39, 0
    %p612 = por %p610, %p611
    %s613 = ssub.s32 %s33, %s40
    %p614 = scmp.eq.s32.totalorder %s613, 0
    %s616 = sadd.s32 %s615, 1
    %s617 = scalar_select %p614, %s615, %s616
    %p620 = pneg %p614
    %p621 = scmp.eq.s32.totalorder %s33, 3
    %p622 = por %p620, %p621
    %p623 = scmp.ne.s32.totalorder %s615, %s618
    %p624 = scmp.eq.s32.totalorder %s33, 0
    %p625 = por %p623, %p624
    %p626 = scmp.ne.s32.totalorder %s615, %s618
    %p627 = scmp.eq.s32.totalorder %s38, 3
    %p628 = por %p626, %p627
    %p629 = scmp.ne.s32.totalorder %s618, %s619
    %p630 = scmp.eq.s32.totalorder %s38, 0
    %p631 = por %p629, %p630
    %p632 = scmp.ne.s32.totalorder %s618, %s619
    %p633 = scmp.eq.s32.totalorder %s39, 3
    %p634 = por %p632, %p633
    %p636 = scmp.ne.s32.totalorder %s619, %s635
    %p637 = scmp.eq.s32.totalorder %s39, 0
    %p638 = por %p636, %p637
    %p639 = scmp.le.s32.totalorder 1, %s33
    %p640 = scmp.lt.s32.totalorder %s33, 5
    %p641 = pnand %p639, %p640
    %p642 = pneg %p641
    // Predicated region
    $region9: #{forward.2} parent=5 // pred_check
      _
    $region10: #{forward.2} parent=5 // pred_check_branch
      %644 = sbr.rel (%p641) target = $region12
    $region11: #{forward.2} parent=5 // pred_region
      %s645 = ssub.s32 %s33, 1
      // Predicated region
      $region13: #{forward.2} parent=11 // pred_check
        %p646 = pneg %p80
      $region14: #{forward.2} parent=11 // pred_check_branch
        %648 = sbr.rel (%p646) target = $region16
      $region15: #{forward.2} parent=11 // pred_region
        _
      $region16: #{forward.2} parent=11 // pred_fallthru
        _
      // Predicated region
      $region17: #{forward.2} parent=11 // pred_check
        %p649 = pneg %p101
      $region18: #{forward.2} parent=11 // pred_check_branch
        %651 = sbr.rel (%p649) target = $region20
      $region19: #{forward.2} parent=11 // pred_region
        _
      $region20: #{forward.2} parent=11 // pred_fallthru
        _
      // Predicated region
      $region21: #{forward.2} parent=11 // pred_check
        %p652 = pneg %p122
      $region22: #{forward.2} parent=11 // pred_check_branch
        %654 = sbr.rel (%p652) target = $region24
      $region23: #{forward.2} parent=11 // pred_region
        _
      $region24: #{forward.2} parent=11 // pred_fallthru
        _
      // Predicated region
      $region25: #{forward.2} parent=11 // pred_check
        %p655 = pneg %p143
      $region26: #{forward.2} parent=11 // pred_check_branch
        %657 = sbr.rel (%p655) target = $region28
      $region27: #{forward.2} parent=11 // pred_region
        _
      $region28: #{forward.2} parent=11 // pred_fallthru
        _
      // Predicated region
      $region29: #{forward.2} parent=11 // pred_check
        %p658 = pneg %p164
      $region30: #{forward.2} parent=11 // pred_check_branch
        %660 = sbr.rel (%p658) target = $region32
      $region31: #{forward.2} parent=11 // pred_region
        _
      $region32: #{forward.2} parent=11 // pred_fallthru
        _
      // Predicated region
      $region33: #{forward.2} parent=11 // pred_check
        %p661 = pneg %p185
      $region34: #{forward.2} parent=11 // pred_check_branch
        %663 = sbr.rel (%p661) target = $region36
      $region35: #{forward.2} parent=11 // pred_region
        _
      $region36: #{forward.2} parent=11 // pred_fallthru
        _
      // Predicated region
      $region37: #{forward.2} parent=11 // pred_check
        %p664 = pneg %p206
      $region38: #{forward.2} parent=11 // pred_check_branch
        %666 = sbr.rel (%p664) target = $region40
      $region39: #{forward.2} parent=11 // pred_region
        _
      $region40: #{forward.2} parent=11 // pred_fallthru
        _
      // Predicated region
      $region41: #{forward.2} parent=11 // pred_check
        %p667 = pneg %p227
      $region42: #{forward.2} parent=11 // pred_check_branch
        %669 = sbr.rel (%p667) target = $region44
      $region43: #{forward.2} parent=11 // pred_region
        _
      $region44: #{forward.2} parent=11 // pred_fallthru
        _
      // Predicated region
      $region45: #{forward.2} parent=11 // pred_check
        %p670 = pneg %p248
      $region46: #{forward.2} parent=11 // pred_check_branch
        %672 = sbr.rel (%p670) target = $region48
      $region47: #{forward.2} parent=11 // pred_region
        _
      $region48: #{forward.2} parent=11 // pred_fallthru
        _
      // Predicated region
      $region49: #{forward.2} parent=11 // pred_check
        %p673 = pneg %p269
      $region50: #{forward.2} parent=11 // pred_check_branch
        %675 = sbr.rel (%p673) target = $region52
      $region51: #{forward.2} parent=11 // pred_region
        _
      $region52: #{forward.2} parent=11 // pred_fallthru
        _
      // Predicated region
      $region53: #{forward.2} parent=11 // pred_check
        %p676 = pneg %p290
      $region54: #{forward.2} parent=11 // pred_check_branch
        %678 = sbr.rel (%p676) target = $region56
      $region55: #{forward.2} parent=11 // pred_region
        _
      $region56: #{forward.2} parent=11 // pred_fallthru
        _
      // Predicated region
      $region57: #{forward.2} parent=11 // pred_check
        %p679 = pneg %p311
      $region58: #{forward.2} parent=11 // pred_check_branch
        %681 = sbr.rel (%p679) target = $region60
      $region59: #{forward.2} parent=11 // pred_region
        _
      $region60: #{forward.2} parent=11 // pred_fallthru
        _
      // Predicated region
      $region61: #{forward.2} parent=11 // pred_check
        %p682 = pneg %p332
      $region62: #{forward.2} parent=11 // pred_check_branch
        %684 = sbr.rel (%p682) target = $region64
      $region63: #{forward.2} parent=11 // pred_region
        _
      $region64: #{forward.2} parent=11 // pred_fallthru
        _
      // Predicated region
      $region65: #{forward.2} parent=11 // pred_check
        %p685 = pneg %p353
      $region66: #{forward.2} parent=11 // pred_check_branch
        %687 = sbr.rel (%p685) target = $region68
      $region67: #{forward.2} parent=11 // pred_region
        _
      $region68: #{forward.2} parent=11 // pred_fallthru
        _
      // Predicated region
      $region69: #{forward.2} parent=11 // pred_check
        %p688 = pneg %p374
      $region70: #{forward.2} parent=11 // pred_check_branch
        %690 = sbr.rel (%p688) target = $region72
      $region71: #{forward.2} parent=11 // pred_region
        _
      $region72: #{forward.2} parent=11 // pred_fallthru
        _
      // Predicated region
      $region73: #{forward.2} parent=11 // pred_check
        %p691 = pneg %p395
      $region74: #{forward.2} parent=11 // pred_check_branch
        %693 = sbr.rel (%p691) target = $region76
      $region75: #{forward.2} parent=11 // pred_region
        _
      $region76: #{forward.2} parent=11 // pred_fallthru
        _
      // Predicated region
      $region77: #{forward.2} parent=11 // pred_check
        %p694 = pneg %p416
      $region78: #{forward.2} parent=11 // pred_check_branch
        %696 = sbr.rel (%p694) target = $region80
      $region79: #{forward.2} parent=11 // pred_region
        _
      $region80: #{forward.2} parent=11 // pred_fallthru
        _
      // Predicated region
      $region81: #{forward.2} parent=11 // pred_check
        %p697 = pneg %p437
      $region82: #{forward.2} parent=11 // pred_check_branch
        %699 = sbr.rel (%p697) target = $region84
      $region83: #{forward.2} parent=11 // pred_region
        _
      $region84: #{forward.2} parent=11 // pred_fallthru
        _
      // Predicated region
      $region85: #{forward.2} parent=11 // pred_check
        %p700 = pneg %p458
      $region86: #{forward.2} parent=11 // pred_check_branch
        %702 = sbr.rel (%p700) target = $region88
      $region87: #{forward.2} parent=11 // pred_region
        _
      $region88: #{forward.2} parent=11 // pred_fallthru
        _
      // Predicated region
      $region89: #{forward.2} parent=11 // pred_check
        %p703 = pneg %p479
      $region90: #{forward.2} parent=11 // pred_check_branch
        %705 = sbr.rel (%p703) target = $region92
      $region91: #{forward.2} parent=11 // pred_region
        _
      $region92: #{forward.2} parent=11 // pred_fallthru
        _
      // Predicated region
      $region93: #{forward.2} parent=11 // pred_check
        %p706 = pneg %p500
      $region94: #{forward.2} parent=11 // pred_check_branch
        %708 = sbr.rel (%p706) target = $region96
      $region95: #{forward.2} parent=11 // pred_region
        _
      $region96: #{forward.2} parent=11 // pred_fallthru
        _
      // Predicated region
      $region97: #{forward.2} parent=11 // pred_check
        %p709 = pneg %p521
      $region98: #{forward.2} parent=11 // pred_check_branch
        %711 = sbr.rel (%p709) target = $region100
      $region99: #{forward.2} parent=11 // pred_region
        _
      $region100: #{forward.2} parent=11 // pred_fallthru
        _
      // Predicated region
      $region101: #{forward.2} parent=11 // pred_check
        %p712 = pneg %p542
      $region102: #{forward.2} parent=11 // pred_check_branch
        %714 = sbr.rel (%p712) target = $region104
      $region103: #{forward.2} parent=11 // pred_region
        _
      $region104: #{forward.2} parent=11 // pred_fallthru
        _
      // Predicated region
      $region105: #{forward.2} parent=11 // pred_check
        %p715 = pneg %p563
      $region106: #{forward.2} parent=11 // pred_check_branch
        %717 = sbr.rel (%p715) target = $region108
      $region107: #{forward.2} parent=11 // pred_region
        _
      $region108: #{forward.2} parent=11 // pred_fallthru
        _
      // Predicated region
      $region109: #{forward.2} parent=11 // pred_check
        %p718 = pneg %p584
      $region110: #{forward.2} parent=11 // pred_check_branch
        %720 = sbr.rel (%p718) target = $region112
      $region111: #{forward.2} parent=11 // pred_region
        _
      $region112: #{forward.2} parent=11 // pred_fallthru
        _
      // Predicated region
      $region113: #{forward.2} parent=11 // pred_check
        %p721 = pneg %p605
      $region114: #{forward.2} parent=11 // pred_check_branch
        %723 = sbr.rel (%p721) target = $region116
      $region115: #{forward.2} parent=11 // pred_region
        _
      $region116: #{forward.2} parent=11 // pred_fallthru
        _
    $region12: #{forward.2} parent=5 // pred_fallthru
      _
    %p724 = scmp.lt.s32.totalorder %s33, 4
    // Predicated region
    $region117: #{forward.2} parent=5 // pred_check
      %p725 = pneg %p724
    $region118: #{forward.2} parent=5 // pred_check_branch
      %727 = sbr.rel (%p725) target = $region120
    $region119: #{forward.2} parent=5 // pred_region
      // Predicated region
      $region121: #{forward.2} parent=119 // pred_check
        %p728 = pneg %p53
      $region122: #{forward.2} parent=119 // pred_check_branch
        %730 = sbr.rel (%p728) target = $region124
      $region123: #{forward.2} parent=119 // pred_region
        %s731 = smul.u32 4, %s33
        %p732 = scmp.lt.s32.totalorder %s731, 15
        %s733 = scalar_select %p732, %s731, 15
        %s734 = smul.addr %s733, 8
        %s735 = scalar_lea.vmem %s0, %s734
        %s736 = smul.u32 4, %s33
      $region124: #{forward.2} parent=119 // pred_fallthru
        _
    $region120: #{forward.2} parent=5 // pred_fallthru
      _
    %p737 = scmp.le.s32.totalorder 1, %s33
    %p738 = scmp.lt.s32.totalorder %s33, 5
    %p739 = pnand %p737, %p738
    %p740 = pneg %p739
    // Predicated region
    $region125: #{forward.2} parent=5 // pred_check
      _
    $region126: #{forward.2} parent=5 // pred_check_branch
      %742 = sbr.rel (%p739) target = $region128
    $region127: #{forward.2} parent=5 // pred_region
      %s743 = ssub.s32 %s33, 1
      %s744 = smul.u32 4, %s38
      %p745 = scmp.lt.s32.totalorder %s744, 15
      %s746 = scalar_select %p745, %s744, 15
      %s747 = smul.addr %s746, 8
      %s748 = scalar_lea.vmem %s0, %s747
      %p749 = pneg %p59
      %p750 = pneg %p56
      %p751 = pneg %p80
      %p752 = pneg %p77
      %p753 = pneg %p101
      %p754 = pneg %p98
      %p755 = pneg %p122
      %p756 = pneg %p119
      %p757 = pneg %p143
      %p758 = pneg %p140
      %p759 = pneg %p164
      %p760 = pneg %p161
      %p761 = pneg %p185
      %p762 = pneg %p182
      %p763 = pneg %p206
      %p764 = pneg %p203
      %p765 = pneg %p227
      %p766 = pneg %p224
      %p767 = pneg %p248
      %p768 = pneg %p245
      %p769 = pneg %p269
      %p770 = pneg %p266
      %p771 = pneg %p290
      %p772 = pneg %p287
      %p773 = pneg %p311
      %p774 = pneg %p308
      %p775 = pneg %p332
      %p776 = pneg %p329
      %p777 = pneg %p353
      %p778 = pneg %p350
      %p779 = pneg %p374
      %p780 = pneg %p371
      %p781 = pneg %p395
      %p782 = pneg %p392
      %p783 = pneg %p416
      %p784 = pneg %p413
      %p785 = pneg %p437
      %p786 = pneg %p434
      %p787 = pneg %p458
      %p788 = pneg %p455
      %p789 = pneg %p479
      %p790 = pneg %p476
      %p791 = pneg %p500
      %p792 = pneg %p497
      %p793 = pneg %p521
      %p794 = pneg %p518
      %p795 = pneg %p542
      %p796 = pneg %p539
      %p797 = pneg %p563
      %p798 = pneg %p560
      %p799 = pneg %p584
      %p800 = pneg %p581
      %p801 = pneg %p605
      %p802 = pneg %p602
      %p803 = pneg %p631
      %p804 = pneg %p628
      %s805 = smul.u32 4, %s38
      %p806 = scmp.lt.s32.totalorder %s805, 15
      %s807 = scalar_select %p806, %s805, 15
      %s808 = smul.addr %s807, 8
      %s809 = scalar_lea.vmem %s27, %s808
      %s810 = smul.u32 4, %s38
      %p811 = scmp.lt.s32.totalorder %s810, 15
      %s812 = scalar_select %p811, %s810, 15
      %s813 = smul.addr %s812, 8
      %s814 = scalar_lea.vmem %s0, %s813
      %s815 = smul.u32 4, %s38
      %s816 = smul.u32 4, %s38
      %p817 = scmp.lt.s32.totalorder %s816, 15
      %s818 = scalar_select %p817, %s816, 15
      %s819 = smul.addr %s818, 8
      %s820 = scalar_lea.vmem %s27, %s819
      %s821 = smul.u32 4, %s38
      %v823 = vld [vmem:[%s814] sm:$0xff]
      %v824 = vld [vmem:[%s814 + $0x8] sm:$0xff]
      %v825 = vld [vmem:[%s814 + $0x10] sm:$0xff]
      %v826 = vld [vmem:[%s814 + $0x18] sm:$0xff]
      %v827 = vld [vmem:[%s6] sm:$0xff]
      %v828 = vld [vmem:[%s6 + $0x8] sm:$0xff]
      %v829 = vld [vmem:[%s7] sm:$0x1]
      %v831 = vlaneseq
      %v832 = vshrl.u32 %v831, 7
      %v833 = vsub.s32 0, %v832
      %v834 = vrot.slane %v829, %v833
      %vm836 = vcmask 130048
      %v838 = vsel %vm836, %v823, 0
      %v841 = vsel %vm836, %v824, 0
      %v844 = vsel %vm836, %v825, 0
      %v847 = vsel %vm836, %v826, 0
      %849 = vmatprep.subr.mxu0 0.0
      %850 = vmatpush1.msra.mxu0 %v827
      %851 = vmatprep.subr.mxu0 0.0
      %852 = vmatpush1.msra.mxu0 %v828
      %853 = vmatprep.subr.mxu0 0.0
      %854 = vmatpush1.msra.mxu0 0.0
      %855 = vmatprep.subr.mxu0 0.0
      %856 = vmatpush1.msra.mxu0 0.0
      %857 = vmatprep.subr.mxu0 0.0
      %858 = vmatpush1.msra.mxu0 0.0
      %859 = vmatprep.subr.mxu0 0.0
      %860 = vmatpush1.msra.mxu0 0.0
      %861 = vmatprep.subr.mxu0 0.0
      %862 = vmatpush1.msra.mxu0 0.0
      %863 = vmatprep.subr.mxu0 0.0
      %864 = vmatpush1.msra.mxu0 0.0
      %865 = vmatprep.subr.mxu0 0.0
      %866 = vmatpush1.msra.mxu0 0.0
      %867 = vmatprep.subr.mxu0 0.0
      %868 = vmatpush1.msra.mxu0 0.0
      %869 = vmatprep.subr.mxu0 0.0
      %870 = vmatpush1.msra.mxu0 0.0
      %871 = vmatprep.subr.mxu0 0.0
      %872 = vmatpush1.msra.mxu0 0.0
      %873 = vmatprep.subr.mxu0 0.0
      %874 = vmatpush1.msra.mxu0 0.0
      %875 = vmatprep.subr.mxu0 0.0
      %876 = vmatpush1.msra.mxu0 0.0
      %877 = vmatprep.subr.mxu0 0.0
      %878 = vmatpush1.msra.mxu0 0.0
      %879 = vmatprep.subr.mxu0 0.0
      %880 = vmatpush1.msra.mxu0 0.0
      %881 = vmatprep.subr.mxu0 0.0
      %882 = vmatpush1.msra.mxu0 0.0
      %883 = vmatprep.subr.mxu0 0.0
      %884 = vmatpush1.msra.mxu0 0.0
      %885 = vmatprep.subr.mxu0 0.0
      %886 = vmatpush1.msra.mxu0 0.0
      %887 = vmatprep.subr.mxu0 0.0
      %888 = vmatpush1.msra.mxu0 0.0
      %889 = vmatprep.subr.mxu0 0.0
      %890 = vmatpush1.msra.mxu0 0.0
      %891 = vmatprep.subr.mxu0 0.0
      %892 = vmatpush1.msra.mxu0 0.0
      %893 = vmatprep.subr.mxu0 0.0
      %894 = vmatpush1.msra.mxu0 0.0
      %895 = vmatprep.subr.mxu0 0.0
      %896 = vmatpush1.msra.mxu0 0.0
      %897 = vmatprep.subr.mxu0 0.0
      %898 = vmatpush1.msra.mxu0 0.0
      %899 = vmatprep.subr.mxu0 0.0
      %900 = vmatpush1.msra.mxu0 0.0
      %901 = vmatprep.subr.mxu0 0.0
      %902 = vmatpush1.msra.mxu0 0.0
      %903 = vmatprep.subr.mxu0 0.0
      %904 = vmatpush1.msra.mxu0 0.0
      %905 = vmatprep.subr.mxu0 0.0
      %906 = vmatpush1.msra.mxu0 0.0
      %907 = vmatprep.subr.mxu0 0.0
      %908 = vmatpush1.msra.mxu0 0.0
      %909 = vmatprep.subr.mxu0 0.0
      %910 = vmatpush1.msra.mxu0 0.0
      %911 = vmatprep.subr.mxu0 0.0
      %912 = vmatpush1.msra.mxu0 0.0
      %913 = vmatprep.mubr.f32.mxu0 0.0
      %914 = vmatmul.mubr.f32.gmra.mrb[0].mxu0 %v838
      %v915 = vpop.f32.mrb[0].mxu0
      %v916 = vadd.f32 %v834, %v915
      %v917 = vpop.f32.mrb[0].mxu0
      %918 = vmatprep.mubr.f32.mxu0 0.0
      %919 = vmatmul.mubr.f32.gmra.mrb[0].mxu0 %v841
      %v920 = vpop.f32.mrb[0].mxu0
      %v921 = vadd.f32 %v834, %v920
      %v922 = vpop.f32.mrb[0].mxu0
      %923 = vmatprep.mubr.f32.mxu0 0.0
      %924 = vmatmul.mubr.f32.gmra.mrb[0].mxu0 %v844
      %v925 = vpop.f32.mrb[0].mxu0
      %v926 = vadd.f32 %v834, %v925
      %v927 = vpop.f32.mrb[0].mxu0
      %928 = vmatprep.mubr.f32.mxu0 0.0
      %929 = vmatmul.mubr.f32.gmra.mrb[0].mxu0 %v847
      %v930 = vpop.f32.mrb[0].mxu0
      %v931 = vadd.f32 %v834, %v930
      %v932 = vpop.f32.mrb[0].mxu0
      %933 = vdwg.mxu0
      %v934 = vmax.f32 %v916, 0.0
      %v935 = vmax.f32 %v921, 0.0
      %v936 = vmax.f32 %v926, 0.0
      %v937 = vmax.f32 %v931, 0.0
      %v938 = vld [vmem:[%s8] sm:$0xff]
      %v939 = vld [vmem:[%s8 + $0x8] sm:$0xff]
      %v940 = vld [vmem:[%s9] sm:$0x1]
      %v942 = vlaneseq
      %v943 = vshrl.u32 %v942, 7
      %v944 = vsub.s32 0, %v943
      %v945 = vrot.slane %v940, %v944
      %v948 = vsel %vm836, %v934, 0
      %v951 = vsel %vm836, %v935, 0
      %v954 = vsel %vm836, %v936, 0
      %v957 = vsel %vm836, %v937, 0
      %959 = vmatprep.subr.mxu0 0.0
      %960 = vmatpush1.msra.mxu0 %v938
      %961 = vmatprep.subr.mxu0 0.0
      %962 = vmatpush1.msra.mxu0 %v939
      %963 = vmatprep.subr.mxu0 0.0
      %964 = vmatpush1.msra.mxu0 0.0
      %965 = vmatprep.subr.mxu0 0.0
      %966 = vmatpush1.msra.mxu0 0.0
      %967 = vmatprep.subr.mxu0 0.0
      %968 = vmatpush1.msra.mxu0 0.0
      %969 = vmatprep.subr.mxu0 0.0
      %970 = vmatpush1.msra.mxu0 0.0
      %971 = vmatprep.subr.mxu0 0.0
      %972 = vmatpush1.msra.mxu0 0.0
      %973 = vmatprep.subr.mxu0 0.0
      %974 = vmatpush1.msra.mxu0 0.0
      %975 = vmatprep.subr.mxu0 0.0
      %976 = vmatpush1.msra.mxu0 0.0
      %977 = vmatprep.subr.mxu0 0.0
      %978 = vmatpush1.msra.mxu0 0.0
      %979 = vmatprep.subr.mxu0 0.0
      %980 = vmatpush1.msra.mxu0 0.0
      %981 = vmatprep.subr.mxu0 0.0
      %982 = vmatpush1.msra.mxu0 0.0
      %983 = vmatprep.subr.mxu0 0.0
      %984 = vmatpush1.msra.mxu0 0.0
      %985 = vmatprep.subr.mxu0 0.0
      %986 = vmatpush1.msra.mxu0 0.0
      %987 = vmatprep.subr.mxu0 0.0
      %988 = vmatpush1.msra.mxu0 0.0
      %989 = vmatprep.subr.mxu0 0.0
      %990 = vmatpush1.msra.mxu0 0.0
      %991 = vmatprep.subr.mxu0 0.0
      %992 = vmatpush1.msra.mxu0 0.0
      %993 = vmatprep.subr.mxu0 0.0
      %994 = vmatpush1.msra.mxu0 0.0
      %995 = vmatprep.subr.mxu0 0.0
      %996 = vmatpush1.msra.mxu0 0.0
      %997 = vmatprep.subr.mxu0 0.0
      %998 = vmatpush1.msra.mxu0 0.0
      %999 = vmatprep.subr.mxu0 0.0
      %1000 = vmatpush1.msra.mxu0 0.0
      %1001 = vmatprep.subr.mxu0 0.0
      %1002 = vmatpush1.msra.mxu0 0.0
      %1003 = vmatprep.subr.mxu0 0.0
      %1004 = vmatpush1.msra.mxu0 0.0
      %1005 = vmatprep.subr.mxu0 0.0
      %1006 = vmatpush1.msra.mxu0 0.0
      %1007 = vmatprep.subr.mxu0 0.0
      %1008 = vmatpush1.msra.mxu0 0.0
      %1009 = vmatprep.subr.mxu0 0.0
      %1010 = vmatpush1.msra.mxu0 0.0
      %1011 = vmatprep.subr.mxu0 0.0
      %1012 = vmatpush1.msra.mxu0 0.0
      %1013 = vmatprep.subr.mxu0 0.0
      %1014 = vmatpush1.msra.mxu0 0.0
      %1015 = vmatprep.subr.mxu0 0.0
      %1016 = vmatpush1.msra.mxu0 0.0
      %1017 = vmatprep.subr.mxu0 0.0
      %1018 = vmatpush1.msra.mxu0 0.0
      %1019 = vmatprep.subr.mxu0 0.0
      %1020 = vmatpush1.msra.mxu0 0.0
      %1021 = vmatprep.subr.mxu0 0.0
      %1022 = vmatpush1.msra.mxu0 0.0
      %1023 = vmatprep.mubr.f32.mxu0 0.0
      %1024 = vmatmul.mubr.f32.gmra.mrb[0].mxu0 %v948
      %v1025 = vpop.f32.mrb[0].mxu0
      %v1026 = vadd.f32 %v945, %v1025
      %v1027 = vpop.f32.mrb[0].mxu0
      %1028 = vmatprep.mubr.f32.mxu0 0.0
      %1029 = vmatmul.mubr.f32.gmra.mrb[0].mxu0 %v951
      %v1030 = vpop.f32.mrb[0].mxu0
      %v1031 = vadd.f32 %v945, %v1030
      %v1032 = vpop.f32.mrb[0].mxu0
      %1033 = vmatprep.mubr.f32.mxu0 0.0
      %1034 = vmatmul.mubr.f32.gmra.mrb[0].mxu0 %v954
      %v1035 = vpop.f32.mrb[0].mxu0
      %v1036 = vadd.f32 %v945, %v1035
      %v1037 = vpop.f32.mrb[0].mxu0
      %1038 = vmatprep.mubr.f32.mxu0 0.0
      %1039 = vmatmul.mubr.f32.gmra.mrb[0].mxu0 %v957
      %v1040 = vpop.f32.mrb[0].mxu0
      %v1041 = vadd.f32 %v945, %v1040
      %v1042 = vpop.f32.mrb[0].mxu0
      %1043 = vdwg.mxu0
      %v1044 = vmax.f32 %v1026, 0.0
      %v1045 = vmax.f32 %v1031, 0.0
      %v1046 = vmax.f32 %v1036, 0.0
      %v1047 = vmax.f32 %v1041, 0.0
      %v1048 = vld [vmem:[%s1] sm:$0xf]
      %v1049 = vld [vmem:[%s1 + $0x4] sm:$0xf]
      %v1050 = vld [vmem:[%s1 + $0x8] sm:$0xf]
      %v1051 = vld [vmem:[%s1 + $0xc] sm:$0xf]
      %v1052 = vld [vmem:[%s1 + $0x10] sm:$0xf]
      %v1053 = vld [vmem:[%s1 + $0x14] sm:$0xf]
      %v1054 = vld [vmem:[%s1 + $0x18] sm:$0xf]
      %v1055 = vld [vmem:[%s1 + $0x1c] sm:$0xf]
      %v1056 = vld [vmem:[%s1 + $0x20] sm:$0xf]
      %v1057 = vld [vmem:[%s1 + $0x24] sm:$0xf]
      %v1058 = vld [vmem:[%s1 + $0x28] sm:$0xf]
      %v1059 = vld [vmem:[%s1 + $0x2c] sm:$0xf]
      %v1060 = vld [vmem:[%s1 + $0x30] sm:$0xf]
      %v1061 = vld [vmem:[%s1 + $0x34] sm:$0xf]
      %v1062 = vld [vmem:[%s1 + $0x38] sm:$0xf]
      %v1063 = vld [vmem:[%s1 + $0x3c] sm:$0xf]
      %v1064 = vld [vmem:[%s2] sm:$0xf]
      %v1065 = vld [vmem:[%s2 + $0x4] sm:$0xf]
      %v1066 = vld [vmem:[%s2 + $0x8] sm:$0xf]
      %v1067 = vld [vmem:[%s2 + $0xc] sm:$0xf]
      %v1068 = vld [vmem:[%s2 + $0x10] sm:$0xf]
      %v1069 = vld [vmem:[%s2 + $0x14] sm:$0xf]
      %v1070 = vld [vmem:[%s2 + $0x18] sm:$0xf]
      %v1071 = vld [vmem:[%s2 + $0x1c] sm:$0xf]
      %v1072 = vld [vmem:[%s2 + $0x20] sm:$0xf]
      %v1073 = vld [vmem:[%s2 + $0x24] sm:$0xf]
      %v1074 = vld [vmem:[%s2 + $0x28] sm:$0xf]
      %v1075 = vld [vmem:[%s2 + $0x2c] sm:$0xf]
      %v1076 = vld [vmem:[%s2 + $0x30] sm:$0xf]
      %v1077 = vld [vmem:[%s2 + $0x34] sm:$0xf]
      %v1078 = vld [vmem:[%s2 + $0x38] sm:$0xf]
      %v1079 = vld [vmem:[%s2 + $0x3c] sm:$0xf]
      %v1080 = vld [vmem:[%s3] sm:$0xf]
      %v1081 = vld [vmem:[%s3 + $0x4] sm:$0xf]
      %v1082 = vld [vmem:[%s3 + $0x8] sm:$0xf]
      %v1083 = vld [vmem:[%s3 + $0xc] sm:$0xf]
      %v1084 = vpack.c.bf16 %v1045, %v1044
      %v1085 = vpack.c.bf16 %v1047, %v1046
      %v1102 = vunpack.c.l.b16 %v1048
      %v1103 = vunpack.c.l.b16 %v1049
      %v1104 = vunpack.c.l.b16 %v1050
      %v1105 = vunpack.c.l.b16 %v1051
      %v1106 = vunpack.c.l.b16 %v1052
      %v1107 = vunpack.c.l.b16 %v1053
      %v1108 = vunpack.c.l.b16 %v1054
      %v1109 = vunpack.c.l.b16 %v1055
      %v1110 = vunpack.c.l.b16 %v1056
      %v1111 = vunpack.c.l.b16 %v1057
      %v1112 = vunpack.c.l.b16 %v1058
      %v1113 = vunpack.c.l.b16 %v1059
      %v1114 = vunpack.c.l.b16 %v1060
      %v1115 = vunpack.c.l.b16 %v1061
      %v1116 = vunpack.c.l.b16 %v1062
      %v1117 = vunpack.c.l.b16 %v1063
      %v1118 = vpack.c.b16 %v1103, %v1102
      %v1119 = vpack.c.b16 %v1105, %v1104
      %v1120 = vpack.c.b16 %v1107, %v1106
      %v1121 = vpack.c.b16 %v1109, %v1108
      %v1122 = vpack.c.b16 %v1111, %v1110
      %v1123 = vpack.c.b16 %v1113, %v1112
      %v1124 = vpack.c.b16 %v1115, %v1114
      %v1125 = vpack.c.b16 %v1117, %v1116
      %vm1126 = vcmask 261120
      %v1128 = vsel %vm1126, %v1118, 0
      %v1131 = vsel %vm1126, %v1119, 0
      %v1134 = vsel %vm1126, %v1120, 0
      %v1137 = vsel %vm1126, %v1121, 0
      %v1140 = vsel %vm1126, %v1122, 0
      %v1143 = vsel %vm1126, %v1123, 0
      %v1146 = vsel %vm1126, %v1124, 0
      %v1149 = vsel %vm1126, %v1125, 0
      %1151 = vmatprep.subr.bf16.mxu0 0
      %1152 = vmatpush1.bf16.msra.mxu0 %v1084
      %1153 = vmatprep.subr.bf16.mxu0 0
      %1154 = vmatpush1.bf16.msra.mxu0 %v1085
      %1155 = vmatprep.subr.bf16.mxu0 0
      %1156 = vmatpush1.bf16.msra.mxu0 0
      %1157 = vmatprep.subr.bf16.mxu0 0
      %1158 = vmatpush1.bf16.msra.mxu0 0
      %1159 = vmatprep.subr.bf16.mxu0 0
      %1160 = vmatpush1.bf16.msra.mxu0 0
      %1161 = vmatprep.subr.bf16.mxu0 0
      %1162 = vmatpush1.bf16.msra.mxu0 0
      %1163 = vmatprep.subr.bf16.mxu0 0
      %1164 = vmatpush1.bf16.msra.mxu0 0
      %1165 = vmatprep.subr.bf16.mxu0 0
      %1166 = vmatpush1.bf16.msra.mxu0 0
      %1167 = vmatprep.subr.bf16.mxu0 0
      %1168 = vmatpush1.bf16.msra.mxu0 0
      %1169 = vmatprep.subr.bf16.mxu0 0
      %1170 = vmatpush1.bf16.msra.mxu0 0
      %1171 = vmatprep.subr.bf16.mxu0 0
      %1172 = vmatpush1.bf16.msra.mxu0 0
      %1173 = vmatprep.subr.bf16.mxu0 0
      %1174 = vmatpush1.bf16.msra.mxu0 0
      %1175 = vmatprep.subr.bf16.mxu0 0
      %1176 = vmatpush1.bf16.msra.mxu0 0
      %1177 = vmatprep.subr.bf16.mxu0 0
      %1178 = vmatpush1.bf16.msra.mxu0 0
      %1179 = vmatprep.subr.bf16.mxu0 0
      %1180 = vmatpush1.bf16.msra.mxu0 0
      %1181 = vmatprep.subr.bf16.mxu0 0
      %1182 = vmatpush1.bf16.msra.mxu0 0
      %1183 = vmatprep.mubr.bf16.mxu0 0
      %1184 = vmatmul.mubr.bf16.gmra.mrb[0].mxu0 %v1128
      %v1185 = vpop.f32.mrb[0].mxu0
      %v1186 = vadd.f32 0.0, %v1185
      %v1187 = vpop.f32.mrb[0].mxu0
      %v1188 = vpop.f32.mrb[0].mxu0
      %v1189 = vadd.f32 0.0, %v1188
      %v1190 = vpop.f32.mrb[0].mxu0
      %1191 = vmatprep.mubr.bf16.mxu0 0
      %1192 = vmatmul.mubr.bf16.gmra.mrb[0].mxu0 %v1131
      %v1193 = vpop.f32.mrb[0].mxu0
      %v1194 = vadd.f32 0.0, %v1193
      %v1195 = vpop.f32.mrb[0].mxu0
      %v1196 = vpop.f32.mrb[0].mxu0
      %v1197 = vadd.f32 0.0, %v1196
      %v1198 = vpop.f32.mrb[0].mxu0
      %1199 = vmatprep.mubr.bf16.mxu0 0
      %1200 = vmatmul.mubr.bf16.gmra.mrb[0].mxu0 %v1134
      %v1201 = vpop.f32.mrb[0].mxu0
      %v1202 = vadd.f32 0.0, %v1201
      %v1203 = vpop.f32.mrb[0].mxu0
      %v1204 = vpop.f32.mrb[0].mxu0
      %v1205 = vadd.f32 0.0, %v1204
      %v1206 = vpop.f32.mrb[0].mxu0
      %1207 = vmatprep.mubr.bf16.mxu0 0
      %1208 = vmatmul.mubr.bf16.gmra.mrb[0].mxu0 %v1137
      %v1209 = vpop.f32.mrb[0].mxu0
      %v1210 = vadd.f32 0.0, %v1209
      %v1211 = vpop.f32.mrb[0].mxu0
      %v1212 = vpop.f32.mrb[0].mxu0
      %v1213 = vadd.f32 0.0, %v1212
      %v1214 = vpop.f32.mrb[0].mxu0
      %1215 = vmatprep.mubr.bf16.mxu0 0
      %1216 = vmatmul.mubr.bf16.gmra.mrb[0].mxu0 %v1140
      %v1217 = vpop.f32.mrb[0].mxu0
      %v1218 = vadd.f32 0.0, %v1217
      %v1219 = vpop.f32.mrb[0].mxu0
      %v1220 = vpop.f32.mrb[0].mxu0
      %v1221 = vadd.f32 0.0, %v1220
      %v1222 = vpop.f32.mrb[0].mxu0
      %1223 = vmatprep.mubr.bf16.mxu0 0
      %1224 = vmatmul.mubr.bf16.gmra.mrb[0].mxu0 %v1143
      %v1225 = vpop.f32.mrb[0].mxu0
      %v1226 = vadd.f32 0.0, %v1225
      %v1227 = vpop.f32.mrb[0].mxu0
      %v1228 = vpop.f32.mrb[0].mxu0
      %v1229 = vadd.f32 0.0, %v1228
      %v1230 = vpop.f32.mrb[0].mxu0
      %1231 = vmatprep.mubr.bf16.mxu0 0
      %1232 = vmatmul.mubr.bf16.gmra.mrb[0].mxu0 %v1146
      %v1233 = vpop.f32.mrb[0].mxu0
      %v1234 = vadd.f32 0.0, %v1233
      %v1235 = vpop.f32.mrb[0].mxu0
      %v1236 = vpop.f32.mrb[0].mxu0
      %v1237 = vadd.f32 0.0, %v1236
      %v1238 = vpop.f32.mrb[0].mxu0
      %1239 = vmatprep.mubr.bf16.mxu0 0
      %1240 = vmatmul.mubr.bf16.gmra.mrb[0].mxu0 %v1149
      %v1241 = vpop.f32.mrb[0].mxu0
      %v1242 = vadd.f32 0.0, %v1241
      %v1243 = vpop.f32.mrb[0].mxu0
      %v1244 = vpop.f32.mrb[0].mxu0
      %v1245 = vadd.f32 0.0, %v1244
      %v1246 = vpop.f32.mrb[0].mxu0
      %1247 = vdwg.mxu0
      %v1264 = vunpack.c.l.b16 %v1064
      %v1265 = vunpack.c.l.b16 %v1065
      %v1266 = vunpack.c.l.b16 %v1066
      %v1267 = vunpack.c.l.b16 %v1067
      %v1268 = vunpack.c.l.b16 %v1068
      %v1269 = vunpack.c.l.b16 %v1069
      %v1270 = vunpack.c.l.b16 %v1070
      %v1271 = vunpack.c.l.b16 %v1071
      %v1272 = vunpack.c.l.b16 %v1072
      %v1273 = vunpack.c.l.b16 %v1073
      %v1274 = vunpack.c.l.b16 %v1074
      %v1275 = vunpack.c.l.b16 %v1075
      %v1276 = vunpack.c.l.b16 %v1076
      %v1277 = vunpack.c.l.b16 %v1077
      %v1278 = vunpack.c.l.b16 %v1078
      %v1279 = vunpack.c.l.b16 %v1079
      %v1280 = vpack.c.b16 %v1265, %v1264
      %v1281 = vpack.c.b16 %v1267, %v1266
      %v1282 = vpack.c.b16 %v1269, %v1268
      %v1283 = vpack.c.b16 %v1271, %v1270
      %v1284 = vpack.c.b16 %v1273, %v1272
      %v1285 = vpack.c.b16 %v1275, %v1274
      %v1286 = vpack.c.b16 %v1277, %v1276
      %v1287 = vpack.c.b16 %v1279, %v1278
      %v1289 = vsel %vm1126, %v1280, 0
      %v1292 = vsel %vm1126, %v1281, 0
      %v1295 = vsel %vm1126, %v1282, 0
      %v1298 = vsel %vm1126, %v1283, 0
      %v1301 = vsel %vm1126, %v1284, 0
      %v1304 = vsel %vm1126, %v1285, 0
      %v1307 = vsel %vm1126, %v1286, 0
      %v1310 = vsel %vm1126, %v1287, 0
      %1312 = vmatprep.subr.bf16.mxu0 0
      %1313 = vmatpush1.bf16.msra.mxu0 %v1084
      %1314 = vmatprep.subr.bf16.mxu0 0
      %1315 = vmatpush1.bf16.msra.mxu0 %v1085
      %1316 = vmatprep.subr.bf16.mxu0 0
      %1317 = vmatpush1.bf16.msra.mxu0 0
      %1318 = vmatprep.subr.bf16.mxu0 0
      %1319 = vmatpush1.bf16.msra.mxu0 0
      %1320 = vmatprep.subr.bf16.mxu0 0
      %1321 = vmatpush1.bf16.msra.mxu0 0
      %1322 = vmatprep.subr.bf16.mxu0 0
      %1323 = vmatpush1.bf16.msra.mxu0 0
      %1324 = vmatprep.subr.bf16.mxu0 0
      %1325 = vmatpush1.bf16.msra.mxu0 0
      %1326 = vmatprep.subr.bf16.mxu0 0
      %1327 = vmatpush1.bf16.msra.mxu0 0
      %1328 = vmatprep.subr.bf16.mxu0 0
      %1329 = vmatpush1.bf16.msra.mxu0 0
      %1330 = vmatprep.subr.bf16.mxu0 0
      %1331 = vmatpush1.bf16.msra.mxu0 0
      %1332 = vmatprep.subr.bf16.mxu0 0
      %1333 = vmatpush1.bf16.msra.mxu0 0
      %1334 = vmatprep.subr.bf16.mxu0 0
      %1335 = vmatpush1.bf16.msra.mxu0 0
      %1336 = vmatprep.subr.bf16.mxu0 0
      %1337 = vmatpush1.bf16.msra.mxu0 0
      %1338 = vmatprep.subr.bf16.mxu0 0
      %1339 = vmatpush1.bf16.msra.mxu0 0
      %1340 = vmatprep.subr.bf16.mxu0 0
      %1341 = vmatpush1.bf16.msra.mxu0 0
      %1342 = vmatprep.subr.bf16.mxu0 0
      %1343 = vmatpush1.bf16.msra.mxu0 0
      %1344 = vmatprep.mubr.bf16.mxu0 0
      %1345 = vmatmul.mubr.bf16.gmra.mrb[0].mxu0 %v1289
      %v1346 = vpop.f32.mrb[0].mxu0
      %v1347 = vadd.f32 0.0, %v1346
      %v1348 = vpop.f32.mrb[0].mxu0
      %v1349 = vpop.f32.mrb[0].mxu0
      %v1350 = vadd.f32 0.0, %v1349
      %v1351 = vpop.f32.mrb[0].mxu0
      %1352 = vmatprep.mubr.bf16.mxu0 0
      %1353 = vmatmul.mubr.bf16.gmra.mrb[0].mxu0 %v1292
      %v1354 = vpop.f32.mrb[0].mxu0
      %v1355 = vadd.f32 0.0, %v1354
      %v1356 = vpop.f32.mrb[0].mxu0
      %v1357 = vpop.f32.mrb[0].mxu0
      %v1358 = vadd.f32 0.0, %v1357
      %v1359 = vpop.f32.mrb[0].mxu0
      %1360 = vmatprep.mubr.bf16.mxu0 0
      %1361 = vmatmul.mubr.bf16.gmra.mrb[0].mxu0 %v1295
      %v1362 = vpop.f32.mrb[0].mxu0
      %v1363 = vadd.f32 0.0, %v1362
      %v1364 = vpop.f32.mrb[0].mxu0
      %v1365 = vpop.f32.mrb[0].mxu0
      %v1366 = vadd.f32 0.0, %v1365
      %v1367 = vpop.f32.mrb[0].mxu0
      %1368 = vmatprep.mubr.bf16.mxu0 0
      %1369 = vmatmul.mubr.bf16.gmra.mrb[0].mxu0 %v1298
      %v1370 = vpop.f32.mrb[0].mxu0
      %v1371 = vadd.f32 0.0, %v1370
      %v1372 = vpop.f32.mrb[0].mxu0
      %v1373 = vpop.f32.mrb[0].mxu0
      %v1374 = vadd.f32 0.0, %v1373
      %v1375 = vpop.f32.mrb[0].mxu0
      %1376 = vmatprep.mubr.bf16.mxu0 0
      %1377 = vmatmul.mubr.bf16.gmra.mrb[0].mxu0 %v1301
      %v1378 = vpop.f32.mrb[0].mxu0
      %v1379 = vadd.f32 0.0, %v1378
      %v1380 = vpop.f32.mrb[0].mxu0
      %v1381 = vpop.f32.mrb[0].mxu0
      %v1382 = vadd.f32 0.0, %v1381
      %v1383 = vpop.f32.mrb[0].mxu0
      %1384 = vmatprep.mubr.bf16.mxu0 0
      %1385 = vmatmul.mubr.bf16.gmra.mrb[0].mxu0 %v1304
      %v1386 = vpop.f32.mrb[0].mxu0
      %v1387 = vadd.f32 0.0, %v1386
      %v1388 = vpop.f32.mrb[0].mxu0
      %v1389 = vpop.f32.mrb[0].mxu0
      %v1390 = vadd.f32 0.0, %v1389
      %v1391 = vpop.f32.mrb[0].mxu0
      %1392 = vmatprep.mubr.bf16.mxu0 0
      %1393 = vmatmul.mubr.bf16.gmra.mrb[0].mxu0 %v1307
      %v1394 = vpop.f32.mrb[0].mxu0
      %v1395 = vadd.f32 0.0, %v1394
      %v1396 = vpop.f32.mrb[0].mxu0
      %v1397 = vpop.f32.mrb[0].mxu0
      %v1398 = vadd.f32 0.0, %v1397
      %v1399 = vpop.f32.mrb[0].mxu0
      %1400 = vmatprep.mubr.bf16.mxu0 0
      %1401 = vmatmul.mubr.bf16.gmra.mrb[0].mxu0 %v1310
      %v1402 = vpop.f32.mrb[0].mxu0
      %v1403 = vadd.f32 0.0, %v1402
      %v1404 = vpop.f32.mrb[0].mxu0
      %v1405 = vpop.f32.mrb[0].mxu0
      %v1406 = vadd.f32 0.0, %v1405
      %v1407 = vpop.f32.mrb[0].mxu0
      %1408 = vdwg.mxu0
      %v1409 = vld [vmem:[%s10] sm:$0xff]
      %v1410 = vld [vmem:[%s10 + $0x8] sm:$0xff]
      %v1411 = vld [vmem:[%s10 + $0x10] sm:$0xff]
      %v1412 = vld [vmem:[%s10 + $0x18] sm:$0xff]
      %v1413 = vld [vmem:[%s11] sm:$0xff]
      %v1414 = vld [vmem:[%s11 + $0x8] sm:$0xff]
      %v1415 = vld [vmem:[%s11 + $0x10] sm:$0xff]
      %v1416 = vld [vmem:[%s11 + $0x18] sm:$0xff]
      %v1418 = vsel %vm1126, %v1347, 0
      %v1421 = vsel %vm1126, %v1350, 0
      %v1424 = vsel %vm1126, %v1355, 0
      %v1427 = vsel %vm1126, %v1358, 0
      %v1430 = vsel %vm1126, %v1363, 0
      %v1433 = vsel %vm1126, %v1366, 0
      %v1436 = vsel %vm1126, %v1371, 0
      %v1439 = vsel %vm1126, %v1374, 0
      %v1442 = vsel %vm1126, %v1379, 0
      %v1445 = vsel %vm1126, %v1382, 0
      %v1448 = vsel %vm1126, %v1387, 0
      %v1451 = vsel %vm1126, %v1390, 0
      %v1454 = vsel %vm1126, %v1395, 0
      %v1457 = vsel %vm1126, %v1398, 0
      %v1460 = vsel %vm1126, %v1403, 0
      %v1463 = vsel %vm1126, %v1406, 0
      %1465 = vmatprep.subr.mxu0 0.0
      %1466 = vmatpush1.msra.mxu0 %v1413
      %1467 = vmatprep.subr.mxu0 0.0
      %1468 = vmatpush1.msra.mxu0 %v1414
      %1469 = vmatprep.subr.mxu0 0.0
      %1470 = vmatpush1.msra.mxu0 %v1415
      %1471 = vmatprep.subr.mxu0 0.0
      %1472 = vmatpush1.msra.mxu0 %v1416
      %1473 = vmatprep.subr.mxu0 0.0
      %1474 = vmatpush1.msra.mxu0 0.0
      %1475 = vmatprep.subr.mxu0 0.0
      %1476 = vmatpush1.msra.mxu0 0.0
      %1477 = vmatprep.subr.mxu0 0.0
      %1478 = vmatpush1.msra.mxu0 0.0
      %1479 = vmatprep.subr.mxu0 0.0
      %1480 = vmatpush1.msra.mxu0 0.0
      %1481 = vmatprep.subr.mxu0 0.0
      %1482 = vmatpush1.msra.mxu0 0.0
      %1483 = vmatprep.subr.mxu0 0.0
      %1484 = vmatpush1.msra.mxu0 0.0
      %1485 = vmatprep.subr.mxu0 0.0
      %1486 = vmatpush1.msra.mxu0 0.0
      %1487 = vmatprep.subr.mxu0 0.0
      %1488 = vmatpush1.msra.mxu0 0.0
      %1489 = vmatprep.subr.mxu0 0.0
      %1490 = vmatpush1.msra.mxu0 0.0
      %1491 = vmatprep.subr.mxu0 0.0
      %1492 = vmatpush1.msra.mxu0 0.0
      %1493 = vmatprep.subr.mxu0 0.0
      %1494 = vmatpush1.msra.mxu0 0.0
      %1495 = vmatprep.subr.mxu0 0.0
      %1496 = vmatpush1.msra.mxu0 0.0
      %1497 = vmatprep.subr.mxu0 0.0
      %1498 = vmatpush1.msra.mxu0 0.0
      %1499 = vmatprep.subr.mxu0 0.0
      %1500 = vmatpush1.msra.mxu0 0.0
      %1501 = vmatprep.subr.mxu0 0.0
      %1502 = vmatpush1.msra.mxu0 0.0
      %1503 = vmatprep.subr.mxu0 0.0
      %1504 = vmatpush1.msra.mxu0 0.0
      %1505 = vmatprep.subr.mxu0 0.0
      %1506 = vmatpush1.msra.mxu0 0.0
      %1507 = vmatprep.subr.mxu0 0.0
      %1508 = vmatpush1.msra.mxu0 0.0
      %1509 = vmatprep.subr.mxu0 0.0
      %1510 = vmatpush1.msra.mxu0 0.0
      %1511 = vmatprep.subr.mxu0 0.0
      %1512 = vmatpush1.msra.mxu0 0.0
      %1513 = vmatprep.subr.mxu0 0.0
      %1514 = vmatpush1.msra.mxu0 0.0
      %1515 = vmatprep.subr.mxu0 0.0
      %1516 = vmatpush1.msra.mxu0 0.0
      %1517 = vmatprep.subr.mxu0 0.0
      %1518 = vmatpush1.msra.mxu0 0.0
      %1519 = vmatprep.subr.mxu0 0.0
      %1520 = vmatpush1.msra.mxu0 0.0
      %1521 = vmatprep.subr.mxu0 0.0
      %1522 = vmatpush1.msra.mxu0 0.0
      %1523 = vmatprep.subr.mxu0 0.0
      %1524 = vmatpush1.msra.mxu0 0.0
      %1525 = vmatprep.subr.mxu0 0.0
      %1526 = vmatpush1.msra.mxu0 0.0
      %1527 = vmatprep.subr.mxu0 0.0
      %1528 = vmatpush1.msra.mxu0 0.0
      %1529 = vmatprep.mubr.f32.mxu0 0.0
      %1530 = vmatmul.mubr.f32.gmra.mrb[0].mxu0 %v1418
      %v1531 = vpop.f32.mrb[0].mxu0
      %v1532 = vadd.f32 0.0, %v1531
      %v1533 = vpop.f32.mrb[0].mxu0
      %1534 = vmatprep.mubr.f32.mxu0 0.0
      %1535 = vmatmul.mubr.f32.gmra.mrb[0].mxu0 %v1421
      %v1536 = vpop.f32.mrb[0].mxu0
      %v1537 = vadd.f32 0.0, %v1536
      %v1538 = vpop.f32.mrb[0].mxu0
      %1539 = vmatprep.mubr.f32.mxu0 0.0
      %1540 = vmatmul.mubr.f32.gmra.mrb[0].mxu0 %v1424
      %v1541 = vpop.f32.mrb[0].mxu0
      %v1542 = vadd.f32 0.0, %v1541
      %v1543 = vpop.f32.mrb[0].mxu0
      %1544 = vmatprep.mubr.f32.mxu0 0.0
      %1545 = vmatmul.mubr.f32.gmra.mrb[0].mxu0 %v1427
      %v1546 = vpop.f32.mrb[0].mxu0
      %v1547 = vadd.f32 0.0, %v1546
      %v1548 = vpop.f32.mrb[0].mxu0
      %1549 = vmatprep.mubr.f32.mxu0 0.0
      %1550 = vmatmul.mubr.f32.gmra.mrb[0].mxu0 %v1430
      %v1551 = vpop.f32.mrb[0].mxu0
      %v1552 = vadd.f32 0.0, %v1551
      %v1553 = vpop.f32.mrb[0].mxu0
      %1554 = vmatprep.mubr.f32.mxu0 0.0
      %1555 = vmatmul.mubr.f32.gmra.mrb[0].mxu0 %v1433
      %v1556 = vpop.f32.mrb[0].mxu0
      %v1557 = vadd.f32 0.0, %v1556
      %v1558 = vpop.f32.mrb[0].mxu0
      %1559 = vmatprep.mubr.f32.mxu0 0.0
      %1560 = vmatmul.mubr.f32.gmra.mrb[0].mxu0 %v1436
      %v1561 = vpop.f32.mrb[0].mxu0
      %v1562 = vadd.f32 0.0, %v1561
      %v1563 = vpop.f32.mrb[0].mxu0
      %1564 = vmatprep.mubr.f32.mxu0 0.0
      %1565 = vmatmul.mubr.f32.gmra.mrb[0].mxu0 %v1439
      %v1566 = vpop.f32.mrb[0].mxu0
      %v1567 = vadd.f32 0.0, %v1566
      %v1568 = vpop.f32.mrb[0].mxu0
      %1569 = vmatprep.mubr.f32.mxu0 0.0
      %1570 = vmatmul.mubr.f32.gmra.mrb[0].mxu0 %v1442
      %v1571 = vpop.f32.mrb[0].mxu0
      %v1572 = vadd.f32 0.0, %v1571
      %v1573 = vpop.f32.mrb[0].mxu0
      %1574 = vmatprep.mubr.f32.mxu0 0.0
      %1575 = vmatmul.mubr.f32.gmra.mrb[0].mxu0 %v1445
      %v1576 = vpop.f32.mrb[0].mxu0
      %v1577 = vadd.f32 0.0, %v1576
      %v1578 = vpop.f32.mrb[0].mxu0
      %1579 = vmatprep.mubr.f32.mxu0 0.0
      %1580 = vmatmul.mubr.f32.gmra.mrb[0].mxu0 %v1448
      %v1581 = vpop.f32.mrb[0].mxu0
      %v1582 = vadd.f32 0.0, %v1581
      %v1583 = vpop.f32.mrb[0].mxu0
      %1584 = vmatprep.mubr.f32.mxu0 0.0
      %1585 = vmatmul.mubr.f32.gmra.mrb[0].mxu0 %v1451
      %v1586 = vpop.f32.mrb[0].mxu0
      %v1587 = vadd.f32 0.0, %v1586
      %v1588 = vpop.f32.mrb[0].mxu0
      %1589 = vmatprep.mubr.f32.mxu0 0.0
      %1590 = vmatmul.mubr.f32.gmra.mrb[0].mxu0 %v1454
      %v1591 = vpop.f32.mrb[0].mxu0
      %v1592 = vadd.f32 0.0, %v1591
      %v1593 = vpop.f32.mrb[0].mxu0
      %1594 = vmatprep.mubr.f32.mxu0 0.0
      %1595 = vmatmul.mubr.f32.gmra.mrb[0].mxu0 %v1457
      %v1596 = vpop.f32.mrb[0].mxu0
      %v1597 = vadd.f32 0.0, %v1596
      %v1598 = vpop.f32.mrb[0].mxu0
      %1599 = vmatprep.mubr.f32.mxu0 0.0
      %1600 = vmatmul.mubr.f32.gmra.mrb[0].mxu0 %v1460
      %v1601 = vpop.f32.mrb[0].mxu0
      %v1602 = vadd.f32 0.0, %v1601
      %v1603 = vpop.f32.mrb[0].mxu0
      %1604 = vmatprep.mubr.f32.mxu0 0.0
      %1605 = vmatmul.mubr.f32.gmra.mrb[0].mxu0 %v1463
      %v1606 = vpop.f32.mrb[0].mxu0
      %v1607 = vadd.f32 0.0, %v1606
      %v1608 = vpop.f32.mrb[0].mxu0
      %1609 = vdwg.mxu0
      %v1611 = vsel %vm1126, %v1186, 0
      %v1614 = vsel %vm1126, %v1189, 0
      %v1617 = vsel %vm1126, %v1194, 0
      %v1620 = vsel %vm1126, %v1197, 0
      %v1623 = vsel %vm1126, %v1202, 0
      %v1626 = vsel %vm1126, %v1205, 0
      %v1629 = vsel %vm1126, %v1210, 0
      %v1632 = vsel %vm1126, %v1213, 0
      %v1635 = vsel %vm1126, %v1218, 0
      %v1638 = vsel %vm1126, %v1221, 0
      %v1641 = vsel %vm1126, %v1226, 0
      %v1644 = vsel %vm1126, %v1229, 0
      %v1647 = vsel %vm1126, %v1234, 0
      %v1650 = vsel %vm1126, %v1237, 0
      %v1653 = vsel %vm1126, %v1242, 0
      %v1656 = vsel %vm1126, %v1245, 0
      %1658 = vmatprep.subr.mxu0 0.0
      %1659 = vmatpush1.msra.mxu0 %v1409
      %1660 = vmatprep.subr.mxu0 0.0
      %1661 = vmatpush1.msra.mxu0 %v1410
      %1662 = vmatprep.subr.mxu0 0.0
      %1663 = vmatpush1.msra.mxu0 %v1411
      %1664 = vmatprep.subr.mxu0 0.0
      %1665 = vmatpush1.msra.mxu0 %v1412
      %1666 = vmatprep.subr.mxu0 0.0
      %1667 = vmatpush1.msra.mxu0 0.0
      %1668 = vmatprep.subr.mxu0 0.0
      %1669 = vmatpush1.msra.mxu0 0.0
      %1670 = vmatprep.subr.mxu0 0.0
      %1671 = vmatpush1.msra.mxu0 0.0
      %1672 = vmatprep.subr.mxu0 0.0
      %1673 = vmatpush1.msra.mxu0 0.0
      %1674 = vmatprep.subr.mxu0 0.0
      %1675 = vmatpush1.msra.mxu0 0.0
      %1676 = vmatprep.subr.mxu0 0.0
      %1677 = vmatpush1.msra.mxu0 0.0
      %1678 = vmatprep.subr.mxu0 0.0
      %1679 = vmatpush1.msra.mxu0 0.0
      %1680 = vmatprep.subr.mxu0 0.0
      %1681 = vmatpush1.msra.mxu0 0.0
      %1682 = vmatprep.subr.mxu0 0.0
      %1683 = vmatpush1.msra.mxu0 0.0
      %1684 = vmatprep.subr.mxu0 0.0
      %1685 = vmatpush1.msra.mxu0 0.0
      %1686 = vmatprep.subr.mxu0 0.0
      %1687 = vmatpush1.msra.mxu0 0.0
      %1688 = vmatprep.subr.mxu0 0.0
      %1689 = vmatpush1.msra.mxu0 0.0
      %1690 = vmatprep.subr.mxu0 0.0
      %1691 = vmatpush1.msra.mxu0 0.0
      %1692 = vmatprep.subr.mxu0 0.0
      %1693 = vmatpush1.msra.mxu0 0.0
      %1694 = vmatprep.subr.mxu0 0.0
      %1695 = vmatpush1.msra.mxu0 0.0
      %1696 = vmatprep.subr.mxu0 0.0
      %1697 = vmatpush1.msra.mxu0 0.0
      %1698 = vmatprep.subr.mxu0 0.0
      %1699 = vmatpush1.msra.mxu0 0.0
      %1700 = vmatprep.subr.mxu0 0.0
      %1701 = vmatpush1.msra.mxu0 0.0
      %1702 = vmatprep.subr.mxu0 0.0
      %1703 = vmatpush1.msra.mxu0 0.0
      %1704 = vmatprep.subr.mxu0 0.0
      %1705 = vmatpush1.msra.mxu0 0.0
      %1706 = vmatprep.subr.mxu0 0.0
      %1707 = vmatpush1.msra.mxu0 0.0
      %1708 = vmatprep.subr.mxu0 0.0
      %1709 = vmatpush1.msra.mxu0 0.0
      %1710 = vmatprep.subr.mxu0 0.0
      %1711 = vmatpush1.msra.mxu0 0.0
      %1712 = vmatprep.subr.mxu0 0.0
      %1713 = vmatpush1.msra.mxu0 0.0
      %1714 = vmatprep.subr.mxu0 0.0
      %1715 = vmatpush1.msra.mxu0 0.0
      %1716 = vmatprep.subr.mxu0 0.0
      %1717 = vmatpush1.msra.mxu0 0.0
      %1718 = vmatprep.subr.mxu0 0.0
      %1719 = vmatpush1.msra.mxu0 0.0
      %1720 = vmatprep.subr.mxu0 0.0
      %1721 = vmatpush1.msra.mxu0 0.0
      %1722 = vmatprep.mubr.f32.mxu0 0.0
      %1723 = vmatmul.mubr.f32.gmra.mrb[0].mxu0 %v1611
      %v1724 = vpop.f32.mrb[0].mxu0
      %v1725 = vadd.f32 %v1532, %v1724
      %v1726 = vpop.f32.mrb[0].mxu0
      %1727 = vmatprep.mubr.f32.mxu0 0.0
      %1728 = vmatmul.mubr.f32.gmra.mrb[0].mxu0 %v1614
      %v1729 = vpop.f32.mrb[0].mxu0
      %v1730 = vadd.f32 %v1537, %v1729
      %v1731 = vpop.f32.mrb[0].mxu0
      %1732 = vmatprep.mubr.f32.mxu0 0.0
      %1733 = vmatmul.mubr.f32.gmra.mrb[0].mxu0 %v1617
      %v1734 = vpop.f32.mrb[0].mxu0
      %v1735 = vadd.f32 %v1542, %v1734
      %v1736 = vpop.f32.mrb[0].mxu0
      %1737 = vmatprep.mubr.f32.mxu0 0.0
      %1738 = vmatmul.mubr.f32.gmra.mrb[0].mxu0 %v1620
      %v1739 = vpop.f32.mrb[0].mxu0
      %v1740 = vadd.f32 %v1547, %v1739
      %v1741 = vpop.f32.mrb[0].mxu0
      %1742 = vmatprep.mubr.f32.mxu0 0.0
      %1743 = vmatmul.mubr.f32.gmra.mrb[0].mxu0 %v1623
      %v1744 = vpop.f32.mrb[0].mxu0
      %v1745 = vadd.f32 %v1552, %v1744
      %v1746 = vpop.f32.mrb[0].mxu0
      %1747 = vmatprep.mubr.f32.mxu0 0.0
      %1748 = vmatmul.mubr.f32.gmra.mrb[0].mxu0 %v1626
      %v1749 = vpop.f32.mrb[0].mxu0
      %v1750 = vadd.f32 %v1557, %v1749
      %v1751 = vpop.f32.mrb[0].mxu0
      %1752 = vmatprep.mubr.f32.mxu0 0.0
      %1753 = vmatmul.mubr.f32.gmra.mrb[0].mxu0 %v1629
      %v1754 = vpop.f32.mrb[0].mxu0
      %v1755 = vadd.f32 %v1562, %v1754
      %v1756 = vpop.f32.mrb[0].mxu0
      %1757 = vmatprep.mubr.f32.mxu0 0.0
      %1758 = vmatmul.mubr.f32.gmra.mrb[0].mxu0 %v1632
      %v1759 = vpop.f32.mrb[0].mxu0
      %v1760 = vadd.f32 %v1567, %v1759
      %v1761 = vpop.f32.mrb[0].mxu0
      %1762 = vmatprep.mubr.f32.mxu0 0.0
      %1763 = vmatmul.mubr.f32.gmra.mrb[0].mxu0 %v1635
      %v1764 = vpop.f32.mrb[0].mxu0
      %v1765 = vadd.f32 %v1572, %v1764
      %v1766 = vpop.f32.mrb[0].mxu0
      %1767 = vmatprep.mubr.f32.mxu0 0.0
      %1768 = vmatmul.mubr.f32.gmra.mrb[0].mxu0 %v1638
      %v1769 = vpop.f32.mrb[0].mxu0
      %v1770 = vadd.f32 %v1577, %v1769
      %v1771 = vpop.f32.mrb[0].mxu0
      %1772 = vmatprep.mubr.f32.mxu0 0.0
      %1773 = vmatmul.mubr.f32.gmra.mrb[0].mxu0 %v1641
      %v1774 = vpop.f32.mrb[0].mxu0
      %v1775 = vadd.f32 %v1582, %v1774
      %v1776 = vpop.f32.mrb[0].mxu0
      %1777 = vmatprep.mubr.f32.mxu0 0.0
      %1778 = vmatmul.mubr.f32.gmra.mrb[0].mxu0 %v1644
      %v1779 = vpop.f32.mrb[0].mxu0
      %v1780 = vadd.f32 %v1587, %v1779
      %v1781 = vpop.f32.mrb[0].mxu0
      %1782 = vmatprep.mubr.f32.mxu0 0.0
      %1783 = vmatmul.mubr.f32.gmra.mrb[0].mxu0 %v1647
      %v1784 = vpop.f32.mrb[0].mxu0
      %v1785 = vadd.f32 %v1592, %v1784
      %v1786 = vpop.f32.mrb[0].mxu0
      %1787 = vmatprep.mubr.f32.mxu0 0.0
      %1788 = vmatmul.mubr.f32.gmra.mrb[0].mxu0 %v1650
      %v1789 = vpop.f32.mrb[0].mxu0
      %v1790 = vadd.f32 %v1597, %v1789
      %v1791 = vpop.f32.mrb[0].mxu0
      %1792 = vmatprep.mubr.f32.mxu0 0.0
      %1793 = vmatmul.mubr.f32.gmra.mrb[0].mxu0 %v1653
      %v1794 = vpop.f32.mrb[0].mxu0
      %v1795 = vadd.f32 %v1602, %v1794
      %v1796 = vpop.f32.mrb[0].mxu0
      %1797 = vmatprep.mubr.f32.mxu0 0.0
      %1798 = vmatmul.mubr.f32.gmra.mrb[0].mxu0 %v1656
      %v1799 = vpop.f32.mrb[0].mxu0
      %v1800 = vadd.f32 %v1607, %v1799
      %v1801 = vpop.f32.mrb[0].mxu0
      %1802 = vdwg.mxu0
      %v1803 = vld [vmem:[%s4] sm:$0xff]
      %v1804 = vld [vmem:[%s4 + $0x8] sm:$0xff]
      %v1805 = vld [vmem:[%s4 + $0x10] sm:$0xff]
      %v1806 = vld [vmem:[%s4 + $0x18] sm:$0xff]
      %v1807 = vld [vmem:[%s4 + $0x20] sm:$0xff]
      %v1808 = vld [vmem:[%s4 + $0x28] sm:$0xff]
      %v1809 = vld [vmem:[%s4 + $0x30] sm:$0xff]
      %v1810 = vld [vmem:[%s4 + $0x38] sm:$0xff]
      %v1811 = vld [vmem:[%s4 + $0x40] sm:$0xff]
      %v1812 = vld [vmem:[%s4 + $0x48] sm:$0xff]
      %v1813 = vld [vmem:[%s4 + $0x50] sm:$0xff]
      %v1814 = vld [vmem:[%s4 + $0x58] sm:$0xff]
      %v1815 = vld [vmem:[%s4 + $0x60] sm:$0xff]
      %v1816 = vld [vmem:[%s4 + $0x68] sm:$0xff]
      %v1817 = vld [vmem:[%s4 + $0x70] sm:$0xff]
      %v1818 = vld [vmem:[%s4 + $0x78] sm:$0xff]
      %v1819 = vadd.f32 %v1725, %v1803
      %v1820 = vadd.f32 %v1730, %v1804
      %v1821 = vadd.f32 %v1735, %v1805
      %v1822 = vadd.f32 %v1740, %v1806
      %v1823 = vadd.f32 %v1745, %v1807
      %v1824 = vadd.f32 %v1750, %v1808
      %v1825 = vadd.f32 %v1755, %v1809
      %v1826 = vadd.f32 %v1760, %v1810
      %v1827 = vadd.f32 %v1765, %v1811
      %v1828 = vadd.f32 %v1770, %v1812
      %v1829 = vadd.f32 %v1775, %v1813
      %v1830 = vadd.f32 %v1780, %v1814
      %v1831 = vadd.f32 %v1785, %v1815
      %v1832 = vadd.f32 %v1790, %v1816
      %v1833 = vadd.f32 %v1795, %v1817
      %v1834 = vadd.f32 %v1800, %v1818
      %v1835 = vmax.f32 %v1819, 0.0
      %v1836 = vmax.f32 %v1820, 0.0
      %v1837 = vmax.f32 %v1821, 0.0
      %v1838 = vmax.f32 %v1822, 0.0
      %v1839 = vmax.f32 %v1823, 0.0
      %v1840 = vmax.f32 %v1824, 0.0
      %v1841 = vmax.f32 %v1825, 0.0
      %v1842 = vmax.f32 %v1826, 0.0
      %v1843 = vmax.f32 %v1827, 0.0
      %v1844 = vmax.f32 %v1828, 0.0
      %v1845 = vmax.f32 %v1829, 0.0
      %v1846 = vmax.f32 %v1830, 0.0
      %v1847 = vmax.f32 %v1831, 0.0
      %v1848 = vmax.f32 %v1832, 0.0
      %v1849 = vmax.f32 %v1833, 0.0
      %v1850 = vmax.f32 %v1834, 0.0
      %v1851 = vld [vmem:[%s12] sm:$0xff]
      %v1852 = vld [vmem:[%s12 + $0x8] sm:$0xff]
      %v1853 = vld [vmem:[%s12 + $0x10] sm:$0xff]
      %v1854 = vld [vmem:[%s12 + $0x18] sm:$0xff]
      %v1855 = vld [vmem:[%s13] sm:$0x1]
      %v1857 = vlaneseq
      %v1858 = vshrl.u32 %v1857, 7
      %v1859 = vsub.s32 0, %v1858
      %v1860 = vrot.slane %v1855, %v1859
      %v1863 = vsel %vm1126, %v1835, 0
      %v1866 = vsel %vm1126, %v1836, 0
      %v1869 = vsel %vm1126, %v1837, 0
      %v1872 = vsel %vm1126, %v1838, 0
      %v1875 = vsel %vm1126, %v1839, 0
      %v1878 = vsel %vm1126, %v1840, 0
      %v1881 = vsel %vm1126, %v1841, 0
      %v1884 = vsel %vm1126, %v1842, 0
      %v1887 = vsel %vm1126, %v1843, 0
      %v1890 = vsel %vm1126, %v1844, 0
      %v1893 = vsel %vm1126, %v1845, 0
      %v1896 = vsel %vm1126, %v1846, 0
      %v1899 = vsel %vm1126, %v1847, 0
      %v1902 = vsel %vm1126, %v1848, 0
      %v1905 = vsel %vm1126, %v1849, 0
      %v1908 = vsel %vm1126, %v1850, 0
      %1910 = vmatprep.subr.mxu0 0.0
      %1911 = vmatpush1.msra.mxu0 %v1851
      %1912 = vmatprep.subr.mxu0 0.0
      %1913 = vmatpush1.msra.mxu0 %v1852
      %1914 = vmatprep.subr.mxu0 0.0
      %1915 = vmatpush1.msra.mxu0 %v1853
      %1916 = vmatprep.subr.mxu0 0.0
      %1917 = vmatpush1.msra.mxu0 %v1854
      %1918 = vmatprep.subr.mxu0 0.0
      %1919 = vmatpush1.msra.mxu0 0.0
      %1920 = vmatprep.subr.mxu0 0.0
      %1921 = vmatpush1.msra.mxu0 0.0
      %1922 = vmatprep.subr.mxu0 0.0
      %1923 = vmatpush1.msra.mxu0 0.0
      %1924 = vmatprep.subr.mxu0 0.0
      %1925 = vmatpush1.msra.mxu0 0.0
      %1926 = vmatprep.subr.mxu0 0.0
      %1927 = vmatpush1.msra.mxu0 0.0
      %1928 = vmatprep.subr.mxu0 0.0
      %1929 = vmatpush1.msra.mxu0 0.0
      %1930 = vmatprep.subr.mxu0 0.0
      %1931 = vmatpush1.msra.mxu0 0.0
      %1932 = vmatprep.subr.mxu0 0.0
      %1933 = vmatpush1.msra.mxu0 0.0
      %1934 = vmatprep.subr.mxu0 0.0
      %1935 = vmatpush1.msra.mxu0 0.0
      %1936 = vmatprep.subr.mxu0 0.0
      %1937 = vmatpush1.msra.mxu0 0.0
      %1938 = vmatprep.subr.mxu0 0.0
      %1939 = vmatpush1.msra.mxu0 0.0
      %1940 = vmatprep.subr.mxu0 0.0
      %1941 = vmatpush1.msra.mxu0 0.0
      %1942 = vmatprep.subr.mxu0 0.0
      %1943 = vmatpush1.msra.mxu0 0.0
      %1944 = vmatprep.subr.mxu0 0.0
      %1945 = vmatpush1.msra.mxu0 0.0
      %1946 = vmatprep.subr.mxu0 0.0
      %1947 = vmatpush1.msra.mxu0 0.0
      %1948 = vmatprep.subr.mxu0 0.0
      %1949 = vmatpush1.msra.mxu0 0.0
      %1950 = vmatprep.subr.mxu0 0.0
      %1951 = vmatpush1.msra.mxu0 0.0
      %1952 = vmatprep.subr.mxu0 0.0
      %1953 = vmatpush1.msra.mxu0 0.0
      %1954 = vmatprep.subr.mxu0 0.0
      %1955 = vmatpush1.msra.mxu0 0.0
      %1956 = vmatprep.subr.mxu0 0.0
      %1957 = vmatpush1.msra.mxu0 0.0
      %1958 = vmatprep.subr.mxu0 0.0
      %1959 = vmatpush1.msra.mxu0 0.0
      %1960 = vmatprep.subr.mxu0 0.0
      %1961 = vmatpush1.msra.mxu0 0.0
      %1962 = vmatprep.subr.mxu0 0.0
      %1963 = vmatpush1.msra.mxu0 0.0
      %1964 = vmatprep.subr.mxu0 0.0
      %1965 = vmatpush1.msra.mxu0 0.0
      %1966 = vmatprep.subr.mxu0 0.0
      %1967 = vmatpush1.msra.mxu0 0.0
      %1968 = vmatprep.subr.mxu0 0.0
      %1969 = vmatpush1.msra.mxu0 0.0
      %1970 = vmatprep.subr.mxu0 0.0
      %1971 = vmatpush1.msra.mxu0 0.0
      %1972 = vmatprep.subr.mxu0 0.0
      %1973 = vmatpush1.msra.mxu0 0.0
      %1974 = vmatprep.mubr.f32.mxu0 0.0
      %1975 = vmatmul.mubr.f32.gmra.mrb[0].mxu0 %v1863
      %v1976 = vpop.f32.mrb[0].mxu0
      %v1977 = vadd.f32 %v1860, %v1976
      %v1978 = vpop.f32.mrb[0].mxu0
      %1979 = vmatprep.mubr.f32.mxu0 0.0
      %1980 = vmatmul.mubr.f32.gmra.mrb[0].mxu0 %v1866
      %v1981 = vpop.f32.mrb[0].mxu0
      %v1982 = vadd.f32 %v1860, %v1981
      %v1983 = vpop.f32.mrb[0].mxu0
      %1984 = vmatprep.mubr.f32.mxu0 0.0
      %1985 = vmatmul.mubr.f32.gmra.mrb[0].mxu0 %v1869
      %v1986 = vpop.f32.mrb[0].mxu0
      %v1987 = vadd.f32 %v1860, %v1986
      %v1988 = vpop.f32.mrb[0].mxu0
      %1989 = vmatprep.mubr.f32.mxu0 0.0
      %1990 = vmatmul.mubr.f32.gmra.mrb[0].mxu0 %v1872
      %v1991 = vpop.f32.mrb[0].mxu0
      %v1992 = vadd.f32 %v1860, %v1991
      %v1993 = vpop.f32.mrb[0].mxu0
      %1994 = vmatprep.mubr.f32.mxu0 0.0
      %1995 = vmatmul.mubr.f32.gmra.mrb[0].mxu0 %v1875
      %v1996 = vpop.f32.mrb[0].mxu0
      %v1997 = vadd.f32 %v1860, %v1996
      %v1998 = vpop.f32.mrb[0].mxu0
      %1999 = vmatprep.mubr.f32.mxu0 0.0
      %2000 = vmatmul.mubr.f32.gmra.mrb[0].mxu0 %v1878
      %v2001 = vpop.f32.mrb[0].mxu0
      %v2002 = vadd.f32 %v1860, %v2001
      %v2003 = vpop.f32.mrb[0].mxu0
      %2004 = vmatprep.mubr.f32.mxu0 0.0
      %2005 = vmatmul.mubr.f32.gmra.mrb[0].mxu0 %v1881
      %v2006 = vpop.f32.mrb[0].mxu0
      %v2007 = vadd.f32 %v1860, %v2006
      %v2008 = vpop.f32.mrb[0].mxu0
      %2009 = vmatprep.mubr.f32.mxu0 0.0
      %2010 = vmatmul.mubr.f32.gmra.mrb[0].mxu0 %v1884
      %v2011 = vpop.f32.mrb[0].mxu0
      %v2012 = vadd.f32 %v1860, %v2011
      %v2013 = vpop.f32.mrb[0].mxu0
      %2014 = vmatprep.mubr.f32.mxu0 0.0
      %2015 = vmatmul.mubr.f32.gmra.mrb[0].mxu0 %v1887
      %v2016 = vpop.f32.mrb[0].mxu0
      %v2017 = vadd.f32 %v1860, %v2016
      %v2018 = vpop.f32.mrb[0].mxu0
      %2019 = vmatprep.mubr.f32.mxu0 0.0
      %2020 = vmatmul.mubr.f32.gmra.mrb[0].mxu0 %v1890
      %v2021 = vpop.f32.mrb[0].mxu0
      %v2022 = vadd.f32 %v1860, %v2021
      %v2023 = vpop.f32.mrb[0].mxu0
      %2024 = vmatprep.mubr.f32.mxu0 0.0
      %2025 = vmatmul.mubr.f32.gmra.mrb[0].mxu0 %v1893
      %v2026 = vpop.f32.mrb[0].mxu0
      %v2027 = vadd.f32 %v1860, %v2026
      %v2028 = vpop.f32.mrb[0].mxu0
      %2029 = vmatprep.mubr.f32.mxu0 0.0
      %2030 = vmatmul.mubr.f32.gmra.mrb[0].mxu0 %v1896
      %v2031 = vpop.f32.mrb[0].mxu0
      %v2032 = vadd.f32 %v1860, %v2031
      %v2033 = vpop.f32.mrb[0].mxu0
      %2034 = vmatprep.mubr.f32.mxu0 0.0
      %2035 = vmatmul.mubr.f32.gmra.mrb[0].mxu0 %v1899
      %v2036 = vpop.f32.mrb[0].mxu0
      %v2037 = vadd.f32 %v1860, %v2036
      %v2038 = vpop.f32.mrb[0].mxu0
      %2039 = vmatprep.mubr.f32.mxu0 0.0
      %2040 = vmatmul.mubr.f32.gmra.mrb[0].mxu0 %v1902
      %v2041 = vpop.f32.mrb[0].mxu0
      %v2042 = vadd.f32 %v1860, %v2041
      %v2043 = vpop.f32.mrb[0].mxu0
      %2044 = vmatprep.mubr.f32.mxu0 0.0
      %2045 = vmatmul.mubr.f32.gmra.mrb[0].mxu0 %v1905
      %v2046 = vpop.f32.mrb[0].mxu0
      %v2047 = vadd.f32 %v1860, %v2046
      %v2048 = vpop.f32.mrb[0].mxu0
      %2049 = vmatprep.mubr.f32.mxu0 0.0
      %2050 = vmatmul.mubr.f32.gmra.mrb[0].mxu0 %v1908
      %v2051 = vpop.f32.mrb[0].mxu0
      %v2052 = vadd.f32 %v1860, %v2051
      %v2053 = vpop.f32.mrb[0].mxu0
      %2054 = vdwg.mxu0
      %v2055 = vpack.c.bf16 %v1982, %v1977
      %v2056 = vpack.c.bf16 %v1992, %v1987
      %v2057 = vpack.c.bf16 %v2002, %v1997
      %v2058 = vpack.c.bf16 %v2012, %v2007
      %v2059 = vpack.c.bf16 %v2022, %v2017
      %v2060 = vpack.c.bf16 %v2032, %v2027
      %v2061 = vpack.c.bf16 %v2042, %v2037
      %v2062 = vpack.c.bf16 %v2052, %v2047
      %v2067 = vunpack.c.l.b16 %v1080
      %v2068 = vunpack.c.l.b16 %v1081
      %v2069 = vunpack.c.l.b16 %v1082
      %v2070 = vunpack.c.l.b16 %v1083
      %v2071 = vpack.c.b16 %v2068, %v2067
      %v2072 = vpack.c.b16 %v2070, %v2069
      %2075 = vmatprep.subr.bf16.mxu0 0
      %2076 = vmatpush1.bf16.msra.mxu0 %v2055
      %2077 = vmatprep.subr.bf16.mxu0 0
      %2078 = vmatpush1.bf16.msra.mxu0 %v2056
      %2079 = vmatprep.subr.bf16.mxu0 0
      %2080 = vmatpush1.bf16.msra.mxu0 %v2057
      %2081 = vmatprep.subr.bf16.mxu0 0
      %2082 = vmatpush1.bf16.msra.mxu0 %v2058
      %2083 = vmatprep.subr.bf16.mxu0 0
      %2084 = vmatpush1.bf16.msra.mxu0 %v2059
      %2085 = vmatprep.subr.bf16.mxu0 0
      %2086 = vmatpush1.bf16.msra.mxu0 %v2060
      %2087 = vmatprep.subr.bf16.mxu0 0
      %2088 = vmatpush1.bf16.msra.mxu0 %v2061
      %2089 = vmatprep.subr.bf16.mxu0 0
      %2090 = vmatpush1.bf16.msra.mxu0 %v2062
      %2091 = vmatprep.subr.bf16.mxu0 0
      %2092 = vmatpush1.bf16.msra.mxu0 0
      %2093 = vmatprep.subr.bf16.mxu0 0
      %2094 = vmatpush1.bf16.msra.mxu0 0
      %2095 = vmatprep.subr.bf16.mxu0 0
      %2096 = vmatpush1.bf16.msra.mxu0 0
      %2097 = vmatprep.subr.bf16.mxu0 0
      %2098 = vmatpush1.bf16.msra.mxu0 0
      %2099 = vmatprep.subr.bf16.mxu0 0
      %2100 = vmatpush1.bf16.msra.mxu0 0
      %2101 = vmatprep.subr.bf16.mxu0 0
      %2102 = vmatpush1.bf16.msra.mxu0 0
      %2103 = vmatprep.subr.bf16.mxu0 0
      %2104 = vmatpush1.bf16.msra.mxu0 0
      %2105 = vmatprep.subr.bf16.mxu0 0
      %2106 = vmatpush1.bf16.msra.mxu0 0
      %2107 = vmatprep.mubr.bf16.mxu0 0
      %2108 = vmatmul.mubr.bf16.gmra.mrb[0].mxu0 %v2071
      %v2109 = vpop.f32.mrb[0].mxu0
      %v2110 = vadd.f32 0.0, %v2109
      %v2111 = vpop.f32.mrb[0].mxu0
      %v2112 = vpop.f32.mrb[0].mxu0
      %v2113 = vadd.f32 0.0, %v2112
      %v2114 = vpop.f32.mrb[0].mxu0
      %2115 = vmatprep.mubr.bf16.mxu0 0
      %2116 = vmatmul.mubr.bf16.gmra.mrb[0].mxu0 %v2072
      %v2117 = vpop.f32.mrb[0].mxu0
      %v2118 = vadd.f32 0.0, %v2117
      %v2119 = vpop.f32.mrb[0].mxu0
      %v2120 = vpop.f32.mrb[0].mxu0
      %v2121 = vadd.f32 0.0, %v2120
      %v2122 = vpop.f32.mrb[0].mxu0
      %2123 = vdwg.mxu0
      %v2124 = vld [vmem:[%s14] sm:$0xff]
      %v2125 = vld [vmem:[%s14 + $0x8] sm:$0xff]
      %v2126 = vld [vmem:[%s14 + $0x10] sm:$0xff]
      %v2127 = vld [vmem:[%s14 + $0x18] sm:$0xff]
      %v2128 = vld [vmem:[%s15] sm:$0xff]
      %v2129 = vld [vmem:[%s15 + $0x8] sm:$0xff]
      %v2130 = vld [vmem:[%s15 + $0x10] sm:$0xff]
      %v2131 = vld [vmem:[%s15 + $0x18] sm:$0xff]
      %v2133 = vsel %vm1126, %v2110, 0
      %v2136 = vsel %vm1126, %v2113, 0
      %v2139 = vsel %vm1126, %v2118, 0
      %v2142 = vsel %vm1126, %v2121, 0
      %2144 = vmatprep.subr.mxu0 0.0
      %2145 = vmatpush1.msra.mxu0 %v2128
      %2146 = vmatprep.subr.mxu0 0.0
      %2147 = vmatpush1.msra.mxu0 %v2129
      %2148 = vmatprep.subr.mxu0 0.0
      %2149 = vmatpush1.msra.mxu0 %v2130
      %2150 = vmatprep.subr.mxu0 0.0
      %2151 = vmatpush1.msra.mxu0 %v2131
      %2152 = vmatprep.subr.mxu0 0.0
      %2153 = vmatpush1.msra.mxu0 0.0
      %2154 = vmatprep.subr.mxu0 0.0
      %2155 = vmatpush1.msra.mxu0 0.0
      %2156 = vmatprep.subr.mxu0 0.0
      %2157 = vmatpush1.msra.mxu0 0.0
      %2158 = vmatprep.subr.mxu0 0.0
      %2159 = vmatpush1.msra.mxu0 0.0
      %2160 = vmatprep.subr.mxu0 0.0
      %2161 = vmatpush1.msra.mxu0 0.0
      %2162 = vmatprep.subr.mxu0 0.0
      %2163 = vmatpush1.msra.mxu0 0.0
      %2164 = vmatprep.subr.mxu0 0.0
      %2165 = vmatpush1.msra.mxu0 0.0
      %2166 = vmatprep.subr.mxu0 0.0
      %2167 = vmatpush1.msra.mxu0 0.0
      %2168 = vmatprep.subr.mxu0 0.0
      %2169 = vmatpush1.msra.mxu0 0.0
      %2170 = vmatprep.subr.mxu0 0.0
      %2171 = vmatpush1.msra.mxu0 0.0
      %2172 = vmatprep.subr.mxu0 0.0
      %2173 = vmatpush1.msra.mxu0 0.0
      %2174 = vmatprep.subr.mxu0 0.0
      %2175 = vmatpush1.msra.mxu0 0.0
      %2176 = vmatprep.subr.mxu0 0.0
      %2177 = vmatpush1.msra.mxu0 0.0
      %2178 = vmatprep.subr.mxu0 0.0
      %2179 = vmatpush1.msra.mxu0 0.0
      %2180 = vmatprep.subr.mxu0 0.0
      %2181 = vmatpush1.msra.mxu0 0.0
      %2182 = vmatprep.subr.mxu0 0.0
      %2183 = vmatpush1.msra.mxu0 0.0
      %2184 = vmatprep.subr.mxu0 0.0
      %2185 = vmatpush1.msra.mxu0 0.0
      %2186 = vmatprep.subr.mxu0 0.0
      %2187 = vmatpush1.msra.mxu0 0.0
      %2188 = vmatprep.subr.mxu0 0.0
      %2189 = vmatpush1.msra.mxu0 0.0
      %2190 = vmatprep.subr.mxu0 0.0
      %2191 = vmatpush1.msra.mxu0 0.0
      %2192 = vmatprep.subr.mxu0 0.0
      %2193 = vmatpush1.msra.mxu0 0.0
      %2194 = vmatprep.subr.mxu0 0.0
      %2195 = vmatpush1.msra.mxu0 0.0
      %2196 = vmatprep.subr.mxu0 0.0
      %2197 = vmatpush1.msra.mxu0 0.0
      %2198 = vmatprep.subr.mxu0 0.0
      %2199 = vmatpush1.msra.mxu0 0.0
      %2200 = vmatprep.subr.mxu0 0.0
      %2201 = vmatpush1.msra.mxu0 0.0
      %2202 = vmatprep.subr.mxu0 0.0
      %2203 = vmatpush1.msra.mxu0 0.0
      %2204 = vmatprep.subr.mxu0 0.0
      %2205 = vmatpush1.msra.mxu0 0.0
      %2206 = vmatprep.subr.mxu0 0.0
      %2207 = vmatpush1.msra.mxu0 0.0
      %2208 = vmatprep.mubr.f32.mxu0 0.0
      %2209 = vmatmul.mubr.f32.gmra.mrb[0].mxu0 %v2133
      %v2210 = vpop.f32.mrb[0].mxu0
      %v2211 = vadd.f32 0.0, %v2210
      %v2212 = vpop.f32.mrb[0].mxu0
      %2213 = vmatprep.mubr.f32.mxu0 0.0
      %2214 = vmatmul.mubr.f32.gmra.mrb[0].mxu0 %v2136
      %v2215 = vpop.f32.mrb[0].mxu0
      %v2216 = vadd.f32 0.0, %v2215
      %v2217 = vpop.f32.mrb[0].mxu0
      %2218 = vmatprep.mubr.f32.mxu0 0.0
      %2219 = vmatmul.mubr.f32.gmra.mrb[0].mxu0 %v2139
      %v2220 = vpop.f32.mrb[0].mxu0
      %v2221 = vadd.f32 0.0, %v2220
      %v2222 = vpop.f32.mrb[0].mxu0
      %2223 = vmatprep.mubr.f32.mxu0 0.0
      %2224 = vmatmul.mubr.f32.gmra.mrb[0].mxu0 %v2142
      %v2225 = vpop.f32.mrb[0].mxu0
      %v2226 = vadd.f32 0.0, %v2225
      %v2227 = vpop.f32.mrb[0].mxu0
      %2228 = vdwg.mxu0
      %v2230 = vsel %vm1126, %v1044, 0
      %v2233 = vsel %vm1126, %v1045, 0
      %v2236 = vsel %vm1126, %v1046, 0
      %v2239 = vsel %vm1126, %v1047, 0
      %2241 = vmatprep.subr.mxu0 0.0
      %2242 = vmatpush1.msra.mxu0 %v2124
      %2243 = vmatprep.subr.mxu0 0.0
      %2244 = vmatpush1.msra.mxu0 %v2125
      %2245 = vmatprep.subr.mxu0 0.0
      %2246 = vmatpush1.msra.mxu0 %v2126
      %2247 = vmatprep.subr.mxu0 0.0
      %2248 = vmatpush1.msra.mxu0 %v2127
      %2249 = vmatprep.subr.mxu0 0.0
      %2250 = vmatpush1.msra.mxu0 0.0
      %2251 = vmatprep.subr.mxu0 0.0
      %2252 = vmatpush1.msra.mxu0 0.0
      %2253 = vmatprep.subr.mxu0 0.0
      %2254 = vmatpush1.msra.mxu0 0.0
      %2255 = vmatprep.subr.mxu0 0.0
      %2256 = vmatpush1.msra.mxu0 0.0
      %2257 = vmatprep.subr.mxu0 0.0
      %2258 = vmatpush1.msra.mxu0 0.0
      %2259 = vmatprep.subr.mxu0 0.0
      %2260 = vmatpush1.msra.mxu0 0.0
      %2261 = vmatprep.subr.mxu0 0.0
      %2262 = vmatpush1.msra.mxu0 0.0
      %2263 = vmatprep.subr.mxu0 0.0
      %2264 = vmatpush1.msra.mxu0 0.0
      %2265 = vmatprep.subr.mxu0 0.0
      %2266 = vmatpush1.msra.mxu0 0.0
      %2267 = vmatprep.subr.mxu0 0.0
      %2268 = vmatpush1.msra.mxu0 0.0
      %2269 = vmatprep.subr.mxu0 0.0
      %2270 = vmatpush1.msra.mxu0 0.0
      %2271 = vmatprep.subr.mxu0 0.0
      %2272 = vmatpush1.msra.mxu0 0.0
      %2273 = vmatprep.subr.mxu0 0.0
      %2274 = vmatpush1.msra.mxu0 0.0
      %2275 = vmatprep.subr.mxu0 0.0
      %2276 = vmatpush1.msra.mxu0 0.0
      %2277 = vmatprep.subr.mxu0 0.0
      %2278 = vmatpush1.msra.mxu0 0.0
      %2279 = vmatprep.subr.mxu0 0.0
      %2280 = vmatpush1.msra.mxu0 0.0
      %2281 = vmatprep.subr.mxu0 0.0
      %2282 = vmatpush1.msra.mxu0 0.0
      %2283 = vmatprep.subr.mxu0 0.0
      %2284 = vmatpush1.msra.mxu0 0.0
      %2285 = vmatprep.subr.mxu0 0.0
      %2286 = vmatpush1.msra.mxu0 0.0
      %2287 = vmatprep.subr.mxu0 0.0
      %2288 = vmatpush1.msra.mxu0 0.0
      %2289 = vmatprep.subr.mxu0 0.0
      %2290 = vmatpush1.msra.mxu0 0.0
      %2291 = vmatprep.subr.mxu0 0.0
      %2292 = vmatpush1.msra.mxu0 0.0
      %2293 = vmatprep.subr.mxu0 0.0
      %2294 = vmatpush1.msra.mxu0 0.0
      %2295 = vmatprep.subr.mxu0 0.0
      %2296 = vmatpush1.msra.mxu0 0.0
      %2297 = vmatprep.subr.mxu0 0.0
      %2298 = vmatpush1.msra.mxu0 0.0
      %2299 = vmatprep.subr.mxu0 0.0
      %2300 = vmatpush1.msra.mxu0 0.0
      %2301 = vmatprep.subr.mxu0 0.0
      %2302 = vmatpush1.msra.mxu0 0.0
      %2303 = vmatprep.subr.mxu0 0.0
      %2304 = vmatpush1.msra.mxu0 0.0
      %2305 = vmatprep.mubr.f32.mxu0 0.0
      %2306 = vmatmul.mubr.f32.gmra.mrb[0].mxu0 %v2230
      %v2307 = vpop.f32.mrb[0].mxu0
      %v2308 = vadd.f32 %v2211, %v2307
      %v2309 = vpop.f32.mrb[0].mxu0
      %2310 = vmatprep.mubr.f32.mxu0 0.0
      %2311 = vmatmul.mubr.f32.gmra.mrb[0].mxu0 %v2233
      %v2312 = vpop.f32.mrb[0].mxu0
      %v2313 = vadd.f32 %v2216, %v2312
      %v2314 = vpop.f32.mrb[0].mxu0
      %2315 = vmatprep.mubr.f32.mxu0 0.0
      %2316 = vmatmul.mubr.f32.gmra.mrb[0].mxu0 %v2236
      %v2317 = vpop.f32.mrb[0].mxu0
      %v2318 = vadd.f32 %v2221, %v2317
      %v2319 = vpop.f32.mrb[0].mxu0
      %2320 = vmatprep.mubr.f32.mxu0 0.0
      %2321 = vmatmul.mubr.f32.gmra.mrb[0].mxu0 %v2239
      %v2322 = vpop.f32.mrb[0].mxu0
      %v2323 = vadd.f32 %v2226, %v2322
      %v2324 = vpop.f32.mrb[0].mxu0
      %2325 = vdwg.mxu0
      %v2326 = vld [vmem:[%s16] sm:$0x1]
      %v2328 = vlaneseq
      %v2329 = vshrl.u32 %v2328, 7
      %v2330 = vsub.s32 0, %v2329
      %v2331 = vrot.slane %v2326, %v2330
      %v2333 = vadd.f32 %v2308, %v2331
      %v2334 = vadd.f32 %v2313, %v2331
      %v2335 = vadd.f32 %v2318, %v2331
      %v2336 = vadd.f32 %v2323, %v2331
      %v2337 = vxor.u32 %v2333, 2147483648
      %v2338 = vxor.u32 %v2334, 2147483648
      %v2339 = vxor.u32 %v2335, 2147483648
      %v2340 = vxor.u32 %v2336, 2147483648
      %v2341 = vmul.f32 %v2337, 1.442695
      %v2342 = vpow.pop %v2341
      %v2343 = vmul.f32 %v2338, 1.442695
      %v2344 = vpow.pop %v2343
      %v2345 = vmul.f32 %v2339, 1.442695
      %v2346 = vpow.pop %v2345
      %v2347 = vmul.f32 %v2340, 1.442695
      %v2348 = vpow.pop %v2347
      %v2349 = vadd.f32 %v2342, 1.0
      %v2350 = vadd.f32 %v2344, 1.0
      %v2351 = vadd.f32 %v2346, 1.0
      %v2352 = vadd.f32 %v2348, 1.0
      %v2353 = vrcp.pop %v2349
      %v2354 = vmul.f32 1.0, %v2353
      %v2355 = vrcp.pop %v2350
      %v2356 = vmul.f32 1.0, %v2355
      %v2357 = vrcp.pop %v2351
      %v2358 = vmul.f32 1.0, %v2357
      %v2359 = vrcp.pop %v2352
      %v2360 = vmul.f32 1.0, %v2359
      %v2361 = vmax.f32 %v2333, 0.0
      %v2362 = vmax.f32 %v2334, 0.0
      %v2363 = vmax.f32 %v2335, 0.0
      %v2364 = vmax.f32 %v2336, 0.0
      %v2365 = vld [vmem:[%s17] sm:$0xff]
      %v2366 = vld [vmem:[%s17 + $0x8] sm:$0xff]
      %v2367 = vld [vmem:[%s17 + $0x10] sm:$0xff]
      %v2368 = vld [vmem:[%s17 + $0x18] sm:$0xff]
      %v2369 = vld [vmem:[%s18] sm:$0x1]
      %v2371 = vlaneseq
      %v2372 = vshrl.u32 %v2371, 7
      %v2373 = vsub.s32 0, %v2372
      %v2374 = vrot.slane %v2369, %v2373
      %2380 = vrot.lane.b32.xlu0 %v2361, 96
      %v2381 = vpop.permute.xlu0 %2380
      %2382 = vrot.lane.b32.xlu0 %v2362, 96
      %v2383 = vpop.permute.xlu0 %2382
      %2384 = vrot.lane.b32.xlu0 %v2363, 96
      %v2385 = vpop.permute.xlu0 %2384
      %2386 = vrot.lane.b32.xlu0 %v2364, 96
      %v2387 = vpop.permute.xlu0 %2386
      %v2388 = vsel %vm1126, %v2381, 0
      %v2390 = vsel %vm1126, %v2383, 0
      %v2392 = vsel %vm1126, %v2385, 0
      %v2394 = vsel %vm1126, %v2387, 0
      %2396 = vmatprep.subr.mxu0 0.0
      %2397 = vmatpush1.msra.mxu0 %v2365
      %2398 = vmatprep.subr.mxu0 0.0
      %2399 = vmatpush1.msra.mxu0 %v2366
      %2400 = vmatprep.subr.mxu0 0.0
      %2401 = vmatpush1.msra.mxu0 %v2367
      %2402 = vmatprep.subr.mxu0 0.0
      %2403 = vmatpush1.msra.mxu0 %v2368
      %2404 = vmatprep.subr.mxu0 0.0
      %2405 = vmatpush1.msra.mxu0 0.0
      %2406 = vmatprep.subr.mxu0 0.0
      %2407 = vmatpush1.msra.mxu0 0.0
      %2408 = vmatprep.subr.mxu0 0.0
      %2409 = vmatpush1.msra.mxu0 0.0
      %2410 = vmatprep.subr.mxu0 0.0
      %2411 = vmatpush1.msra.mxu0 0.0
      %2412 = vmatprep.subr.mxu0 0.0
      %2413 = vmatpush1.msra.mxu0 0.0
      %2414 = vmatprep.subr.mxu0 0.0
      %2415 = vmatpush1.msra.mxu0 0.0
      %2416 = vmatprep.subr.mxu0 0.0
      %2417 = vmatpush1.msra.mxu0 0.0
      %2418 = vmatprep.subr.mxu0 0.0
      %2419 = vmatpush1.msra.mxu0 0.0
      %2420 = vmatprep.subr.mxu0 0.0
      %2421 = vmatpush1.msra.mxu0 0.0
      %2422 = vmatprep.subr.mxu0 0.0
      %2423 = vmatpush1.msra.mxu0 0.0
      %2424 = vmatprep.subr.mxu0 0.0
      %2425 = vmatpush1.msra.mxu0 0.0
      %2426 = vmatprep.subr.mxu0 0.0
      %2427 = vmatpush1.msra.mxu0 0.0
      %2428 = vmatprep.subr.mxu0 0.0
      %2429 = vmatpush1.msra.mxu0 0.0
      %2430 = vmatprep.subr.mxu0 0.0
      %2431 = vmatpush1.msra.mxu0 0.0
      %2432 = vmatprep.subr.mxu0 0.0
      %2433 = vmatpush1.msra.mxu0 0.0
      %2434 = vmatprep.subr.mxu0 0.0
      %2435 = vmatpush1.msra.mxu0 0.0
      %2436 = vmatprep.subr.mxu0 0.0
      %2437 = vmatpush1.msra.mxu0 0.0
      %2438 = vmatprep.subr.mxu0 0.0
      %2439 = vmatpush1.msra.mxu0 0.0
      %2440 = vmatprep.subr.mxu0 0.0
      %2441 = vmatpush1.msra.mxu0 0.0
      %2442 = vmatprep.subr.mxu0 0.0
      %2443 = vmatpush1.msra.mxu0 0.0
      %2444 = vmatprep.subr.mxu0 0.0
      %2445 = vmatpush1.msra.mxu0 0.0
      %2446 = vmatprep.subr.mxu0 0.0
      %2447 = vmatpush1.msra.mxu0 0.0
      %2448 = vmatprep.subr.mxu0 0.0
      %2449 = vmatpush1.msra.mxu0 0.0
      %2450 = vmatprep.subr.mxu0 0.0
      %2451 = vmatpush1.msra.mxu0 0.0
      %2452 = vmatprep.subr.mxu0 0.0
      %2453 = vmatpush1.msra.mxu0 0.0
      %2454 = vmatprep.subr.mxu0 0.0
      %2455 = vmatpush1.msra.mxu0 0.0
      %2456 = vmatprep.subr.mxu0 0.0
      %2457 = vmatpush1.msra.mxu0 0.0
      %2458 = vmatprep.subr.mxu0 0.0
      %2459 = vmatpush1.msra.mxu0 0.0
      %2460 = vmatprep.mubr.f32.mxu0 0.0
      %2461 = vmatmul.mubr.f32.gmra.mrb[0].mxu0 %v2388
      %v2462 = vpop.f32.mrb[0].mxu0
      %v2463 = vadd.f32 %v2374, %v2462
      %v2464 = vpop.f32.mrb[0].mxu0
      %2465 = vmatprep.mubr.f32.mxu0 0.0
      %2466 = vmatmul.mubr.f32.gmra.mrb[0].mxu0 %v2390
      %v2467 = vpop.f32.mrb[0].mxu0
      %v2468 = vadd.f32 %v2374, %v2467
      %v2469 = vpop.f32.mrb[0].mxu0
      %2470 = vmatprep.mubr.f32.mxu0 0.0
      %2471 = vmatmul.mubr.f32.gmra.mrb[0].mxu0 %v2392
      %v2472 = vpop.f32.mrb[0].mxu0
      %v2473 = vadd.f32 %v2374, %v2472
      %v2474 = vpop.f32.mrb[0].mxu0
      %2475 = vmatprep.mubr.f32.mxu0 0.0
      %2476 = vmatmul.mubr.f32.gmra.mrb[0].mxu0 %v2394
      %v2477 = vpop.f32.mrb[0].mxu0
      %v2478 = vadd.f32 %v2374, %v2477
      %v2479 = vpop.f32.mrb[0].mxu0
      %2480 = vdwg.mxu0
      %v2481 = vmul.f32 %v2354, %v2463
      %v2482 = vmul.f32 %v2356, %v2468
      %v2483 = vmul.f32 %v2358, %v2473
      %v2484 = vmul.f32 %v2360, %v2478
      %v2485 = vsub.f32 1.0, %v2354
      %v2486 = vsub.f32 1.0, %v2356
      %v2487 = vsub.f32 1.0, %v2358
      %v2488 = vsub.f32 1.0, %v2360
      %v2489 = vmul.f32 %v2485, %v1044
      %v2490 = vmul.f32 %v2486, %v1045
      %v2491 = vmul.f32 %v2487, %v1046
      %v2492 = vmul.f32 %v2488, %v1047
      %v2493 = vadd.f32 %v2481, %v2489
      %v2494 = vadd.f32 %v2482, %v2490
      %v2495 = vadd.f32 %v2483, %v2491
      %v2496 = vadd.f32 %v2484, %v2492
      %v2497 = vld [vmem:[%s19] sm:$0x1]
      %v2498 = vld [vmem:[%s20] sm:$0x1]
      %v2499 = vsel %vm1126, %v2493, 0.0
      %2500 = vadd.xlane.f32.xlu0 %v2499
      %v2501 = vpop.xlane.xlu0 %2500
      %v2502 = vsel %vm1126, %v2494, 0.0
      %2503 = vadd.xlane.f32.xlu0 %v2502
      %v2504 = vpop.xlane.xlu0 %2503
      %v2505 = vsel %vm1126, %v2495, 0.0
      %2506 = vadd.xlane.f32.xlu0 %v2505
      %v2507 = vpop.xlane.xlu0 %2506
      %v2508 = vsel %vm1126, %v2496, 0.0
      %2509 = vadd.xlane.f32.xlu0 %v2508
      %v2510 = vpop.xlane.xlu0 %2509
      %v2511 = vrcp.pop 32.0
      %v2512 = vmul.f32 %v2501, %v2511
      %v2513 = vmul.f32 %v2504, %v2511
      %v2514 = vmul.f32 %v2507, %v2511
      %v2515 = vmul.f32 %v2510, %v2511
      %v2516 = vsub.f32 %v2493, %v2512
      %v2517 = vsub.f32 %v2494, %v2513
      %v2518 = vsub.f32 %v2495, %v2514
      %v2519 = vsub.f32 %v2496, %v2515
      %v2520 = vmul.f32 %v2516, %v2516
      %v2521 = vmul.f32 %v2517, %v2517
      %v2522 = vmul.f32 %v2518, %v2518
      %v2523 = vmul.f32 %v2519, %v2519
      %v2524 = vsel %vm1126, %v2520, 0.0
      %2525 = vadd.xlane.f32.xlu0 %v2524
      %v2526 = vpop.xlane.xlu0 %2525
      %v2527 = vsel %vm1126, %v2521, 0.0
      %2528 = vadd.xlane.f32.xlu0 %v2527
      %v2529 = vpop.xlane.xlu0 %2528
      %v2530 = vsel %vm1126, %v2522, 0.0
      %2531 = vadd.xlane.f32.xlu0 %v2530
      %v2532 = vpop.xlane.xlu0 %2531
      %v2533 = vsel %vm1126, %v2523, 0.0
      %2534 = vadd.xlane.f32.xlu0 %v2533
      %v2535 = vpop.xlane.xlu0 %2534
      %v2536 = vmul.f32 %v2526, %v2511
      %v2537 = vmul.f32 %v2529, %v2511
      %v2538 = vmul.f32 %v2532, %v2511
      %v2539 = vmul.f32 %v2535, %v2511
      %v2540 = vadd.f32 %v2536, 1e-05
      %v2541 = vadd.f32 %v2537, 1e-05
      %v2542 = vadd.f32 %v2538, 1e-05
      %v2543 = vadd.f32 %v2539, 1e-05
      %v2544 = vrsqrt.pop %v2540
      %v2545 = vrsqrt.pop %v2541
      %v2546 = vrsqrt.pop %v2542
      %v2547 = vrsqrt.pop %v2543
      %v2548 = vmul.f32 %v2516, %v2544
      %v2549 = vmul.f32 %v2517, %v2545
      %v2550 = vmul.f32 %v2518, %v2546
      %v2551 = vmul.f32 %v2519, %v2547
      %v2553 = vlaneseq
      %v2554 = vshrl.u32 %v2553, 7
      %v2555 = vsub.s32 0, %v2554
      %v2556 = vrot.slane %v2497, %v2555
      %v2558 = vmul.f32 %v2548, %v2556
      %v2559 = vmul.f32 %v2549, %v2556
      %v2560 = vmul.f32 %v2550, %v2556
      %v2561 = vmul.f32 %v2551, %v2556
      %v2563 = vlaneseq
      %v2564 = vshrl.u32 %v2563, 7
      %v2565 = vsub.s32 0, %v2564
      %v2566 = vrot.slane %v2498, %v2565
      %v2568 = vadd.f32 %v2558, %v2566
      %v2569 = vadd.f32 %v2559, %v2566
      %v2570 = vadd.f32 %v2560, %v2566
      %v2571 = vadd.f32 %v2561, %v2566
      %v2572 = vpack.c.bf16 %v2569, %v2568
      %v2573 = vpack.c.bf16 %v2571, %v2570
      %2574 = vmatprep.subr.bf16.mxu0 0
      %2575 = vmatpush1.bf16.msra.mxu0 %v2572
      %2576 = vmatprep.subr.bf16.mxu0 0
      %2577 = vmatpush1.bf16.msra.mxu0 %v2573
      %2578 = vmatprep.subr.bf16.mxu0 0
      %2579 = vmatpush1.bf16.msra.mxu0 0
      %2580 = vmatprep.subr.bf16.mxu0 0
      %2581 = vmatpush1.bf16.msra.mxu0 0
      %2582 = vmatprep.subr.bf16.mxu0 0
      %2583 = vmatpush1.bf16.msra.mxu0 0
      %2584 = vmatprep.subr.bf16.mxu0 0
      %2585 = vmatpush1.bf16.msra.mxu0 0
      %2586 = vmatprep.subr.bf16.mxu0 0
      %2587 = vmatpush1.bf16.msra.mxu0 0
      %2588 = vmatprep.subr.bf16.mxu0 0
      %2589 = vmatpush1.bf16.msra.mxu0 0
      %2590 = vmatprep.subr.bf16.mxu0 0
      %2591 = vmatpush1.bf16.msra.mxu0 0
      %2592 = vmatprep.subr.bf16.mxu0 0
      %2593 = vmatpush1.bf16.msra.mxu0 0
      %2594 = vmatprep.subr.bf16.mxu0 0
      %2595 = vmatpush1.bf16.msra.mxu0 0
      %2596 = vmatprep.subr.bf16.mxu0 0
      %2597 = vmatpush1.bf16.msra.mxu0 0
      %2598 = vmatprep.subr.bf16.mxu0 0
      %2599 = vmatpush1.bf16.msra.mxu0 0
      %2600 = vmatprep.subr.bf16.mxu0 0
      %2601 = vmatpush1.bf16.msra.mxu0 0
      %2602 = vmatprep.subr.bf16.mxu0 0
      %2603 = vmatpush1.bf16.msra.mxu0 0
      %2604 = vmatprep.subr.bf16.mxu0 0
      %2605 = vmatpush1.bf16.msra.mxu0 0
      %2606 = vmatprep.mubr.bf16.mxu0 0
      %2607 = vmatmul.mubr.bf16.gmra.mrb[0].mxu0 %v1128
      %v2608 = vpop.f32.mrb[0].mxu0
      %v2609 = vadd.f32 0.0, %v2608
      %v2610 = vpop.f32.mrb[0].mxu0
      %v2611 = vpop.f32.mrb[0].mxu0
      %v2612 = vadd.f32 0.0, %v2611
      %v2613 = vpop.f32.mrb[0].mxu0
      %2614 = vmatprep.mubr.bf16.mxu0 0
      %2615 = vmatmul.mubr.bf16.gmra.mrb[0].mxu0 %v1131
      %v2616 = vpop.f32.mrb[0].mxu0
      %v2617 = vadd.f32 0.0, %v2616
      %v2618 = vpop.f32.mrb[0].mxu0
      %v2619 = vpop.f32.mrb[0].mxu0
      %v2620 = vadd.f32 0.0, %v2619
      %v2621 = vpop.f32.mrb[0].mxu0
      %2622 = vmatprep.mubr.bf16.mxu0 0
      %2623 = vmatmul.mubr.bf16.gmra.mrb[0].mxu0 %v1134
      %v2624 = vpop.f32.mrb[0].mxu0
      %v2625 = vadd.f32 0.0, %v2624
      %v2626 = vpop.f32.mrb[0].mxu0
      %v2627 = vpop.f32.mrb[0].mxu0
      %v2628 = vadd.f32 0.0, %v2627
      %v2629 = vpop.f32.mrb[0].mxu0
      %2630 = vmatprep.mubr.bf16.mxu0 0
      %2631 = vmatmul.mubr.bf16.gmra.mrb[0].mxu0 %v1137
      %v2632 = vpop.f32.mrb[0].mxu0
      %v2633 = vadd.f32 0.0, %v2632
      %v2634 = vpop.f32.mrb[0].mxu0
      %v2635 = vpop.f32.mrb[0].mxu0
      %v2636 = vadd.f32 0.0, %v2635
      %v2637 = vpop.f32.mrb[0].mxu0
      %2638 = vmatprep.mubr.bf16.mxu0 0
      %2639 = vmatmul.mubr.bf16.gmra.mrb[0].mxu0 %v1140
      %v2640 = vpop.f32.mrb[0].mxu0
      %v2641 = vadd.f32 0.0, %v2640
      %v2642 = vpop.f32.mrb[0].mxu0
      %v2643 = vpop.f32.mrb[0].mxu0
      %v2644 = vadd.f32 0.0, %v2643
      %v2645 = vpop.f32.mrb[0].mxu0
      %2646 = vmatprep.mubr.bf16.mxu0 0
      %2647 = vmatmul.mubr.bf16.gmra.mrb[0].mxu0 %v1143
      %v2648 = vpop.f32.mrb[0].mxu0
      %v2649 = vadd.f32 0.0, %v2648
      %v2650 = vpop.f32.mrb[0].mxu0
      %v2651 = vpop.f32.mrb[0].mxu0
      %v2652 = vadd.f32 0.0, %v2651
      %v2653 = vpop.f32.mrb[0].mxu0
      %2654 = vmatprep.mubr.bf16.mxu0 0
      %2655 = vmatmul.mubr.bf16.gmra.mrb[0].mxu0 %v1146
      %v2656 = vpop.f32.mrb[0].mxu0
      %v2657 = vadd.f32 0.0, %v2656
      %v2658 = vpop.f32.mrb[0].mxu0
      %v2659 = vpop.f32.mrb[0].mxu0
      %v2660 = vadd.f32 0.0, %v2659
      %v2661 = vpop.f32.mrb[0].mxu0
      %2662 = vmatprep.mubr.bf16.mxu0 0
      %2663 = vmatmul.mubr.bf16.gmra.mrb[0].mxu0 %v1149
      %v2664 = vpop.f32.mrb[0].mxu0
      %v2665 = vadd.f32 0.0, %v2664
      %v2666 = vpop.f32.mrb[0].mxu0
      %v2667 = vpop.f32.mrb[0].mxu0
      %v2668 = vadd.f32 0.0, %v2667
      %v2669 = vpop.f32.mrb[0].mxu0
      %2670 = vdwg.mxu0
      %2671 = vmatprep.subr.bf16.mxu0 0
      %2672 = vmatpush1.bf16.msra.mxu0 %v2572
      %2673 = vmatprep.subr.bf16.mxu0 0
      %2674 = vmatpush1.bf16.msra.mxu0 %v2573
      %2675 = vmatprep.subr.bf16.mxu0 0
      %2676 = vmatpush1.bf16.msra.mxu0 0
      %2677 = vmatprep.subr.bf16.mxu0 0
      %2678 = vmatpush1.bf16.msra.mxu0 0
      %2679 = vmatprep.subr.bf16.mxu0 0
      %2680 = vmatpush1.bf16.msra.mxu0 0
      %2681 = vmatprep.subr.bf16.mxu0 0
      %2682 = vmatpush1.bf16.msra.mxu0 0
      %2683 = vmatprep.subr.bf16.mxu0 0
      %2684 = vmatpush1.bf16.msra.mxu0 0
      %2685 = vmatprep.subr.bf16.mxu0 0
      %2686 = vmatpush1.bf16.msra.mxu0 0
      %2687 = vmatprep.subr.bf16.mxu0 0
      %2688 = vmatpush1.bf16.msra.mxu0 0
      %2689 = vmatprep.subr.bf16.mxu0 0
      %2690 = vmatpush1.bf16.msra.mxu0 0
      %2691 = vmatprep.subr.bf16.mxu0 0
      %2692 = vmatpush1.bf16.msra.mxu0 0
      %2693 = vmatprep.subr.bf16.mxu0 0
      %2694 = vmatpush1.bf16.msra.mxu0 0
      %2695 = vmatprep.subr.bf16.mxu0 0
      %2696 = vmatpush1.bf16.msra.mxu0 0
      %2697 = vmatprep.subr.bf16.mxu0 0
      %2698 = vmatpush1.bf16.msra.mxu0 0
      %2699 = vmatprep.subr.bf16.mxu0 0
      %2700 = vmatpush1.bf16.msra.mxu0 0
      %2701 = vmatprep.subr.bf16.mxu0 0
      %2702 = vmatpush1.bf16.msra.mxu0 0
      %2703 = vmatprep.mubr.bf16.mxu0 0
      %2704 = vmatmul.mubr.bf16.gmra.mrb[0].mxu0 %v1289
      %v2705 = vpop.f32.mrb[0].mxu0
      %v2706 = vadd.f32 0.0, %v2705
      %v2707 = vpop.f32.mrb[0].mxu0
      %v2708 = vpop.f32.mrb[0].mxu0
      %v2709 = vadd.f32 0.0, %v2708
      %v2710 = vpop.f32.mrb[0].mxu0
      %2711 = vmatprep.mubr.bf16.mxu0 0
      %2712 = vmatmul.mubr.bf16.gmra.mrb[0].mxu0 %v1292
      %v2713 = vpop.f32.mrb[0].mxu0
      %v2714 = vadd.f32 0.0, %v2713
      %v2715 = vpop.f32.mrb[0].mxu0
      %v2716 = vpop.f32.mrb[0].mxu0
      %v2717 = vadd.f32 0.0, %v2716
      %v2718 = vpop.f32.mrb[0].mxu0
      %2719 = vmatprep.mubr.bf16.mxu0 0
      %2720 = vmatmul.mubr.bf16.gmra.mrb[0].mxu0 %v1295
      %v2721 = vpop.f32.mrb[0].mxu0
      %v2722 = vadd.f32 0.0, %v2721
      %v2723 = vpop.f32.mrb[0].mxu0
      %v2724 = vpop.f32.mrb[0].mxu0
      %v2725 = vadd.f32 0.0, %v2724
      %v2726 = vpop.f32.mrb[0].mxu0
      %2727 = vmatprep.mubr.bf16.mxu0 0
      %2728 = vmatmul.mubr.bf16.gmra.mrb[0].mxu0 %v1298
      %v2729 = vpop.f32.mrb[0].mxu0
      %v2730 = vadd.f32 0.0, %v2729
      %v2731 = vpop.f32.mrb[0].mxu0
      %v2732 = vpop.f32.mrb[0].mxu0
      %v2733 = vadd.f32 0.0, %v2732
      %v2734 = vpop.f32.mrb[0].mxu0
      %2735 = vmatprep.mubr.bf16.mxu0 0
      %2736 = vmatmul.mubr.bf16.gmra.mrb[0].mxu0 %v1301
      %v2737 = vpop.f32.mrb[0].mxu0
      %v2738 = vadd.f32 0.0, %v2737
      %v2739 = vpop.f32.mrb[0].mxu0
      %v2740 = vpop.f32.mrb[0].mxu0
      %v2741 = vadd.f32 0.0, %v2740
      %v2742 = vpop.f32.mrb[0].mxu0
      %2743 = vmatprep.mubr.bf16.mxu0 0
      %2744 = vmatmul.mubr.bf16.gmra.mrb[0].mxu0 %v1304
      %v2745 = vpop.f32.mrb[0].mxu0
      %v2746 = vadd.f32 0.0, %v2745
      %v2747 = vpop.f32.mrb[0].mxu0
      %v2748 = vpop.f32.mrb[0].mxu0
      %v2749 = vadd.f32 0.0, %v2748
      %v2750 = vpop.f32.mrb[0].mxu0
      %2751 = vmatprep.mubr.bf16.mxu0 0
      %2752 = vmatmul.mubr.bf16.gmra.mrb[0].mxu0 %v1307
      %v2753 = vpop.f32.mrb[0].mxu0
      %v2754 = vadd.f32 0.0, %v2753
      %v2755 = vpop.f32.mrb[0].mxu0
      %v2756 = vpop.f32.mrb[0].mxu0
      %v2757 = vadd.f32 0.0, %v2756
      %v2758 = vpop.f32.mrb[0].mxu0
      %2759 = vmatprep.mubr.bf16.mxu0 0
      %2760 = vmatmul.mubr.bf16.gmra.mrb[0].mxu0 %v1310
      %v2761 = vpop.f32.mrb[0].mxu0
      %v2762 = vadd.f32 0.0, %v2761
      %v2763 = vpop.f32.mrb[0].mxu0
      %v2764 = vpop.f32.mrb[0].mxu0
      %v2765 = vadd.f32 0.0, %v2764
      %v2766 = vpop.f32.mrb[0].mxu0
      %2767 = vdwg.mxu0
      %s2768 = scalar_lea.vmem %s10, 32
      %v2769 = vld [vmem:[%s2768] sm:$0xff]
      %v2770 = vld [vmem:[%s2768 + $0x8] sm:$0xff]
      %v2771 = vld [vmem:[%s2768 + $0x10] sm:$0xff]
      %v2772 = vld [vmem:[%s2768 + $0x18] sm:$0xff]
      %s2773 = scalar_lea.vmem %s11, 32
      %v2774 = vld [vmem:[%s2773] sm:$0xff]
      %v2775 = vld [vmem:[%s2773 + $0x8] sm:$0xff]
      %v2776 = vld [vmem:[%s2773 + $0x10] sm:$0xff]
      %v2777 = vld [vmem:[%s2773 + $0x18] sm:$0xff]
      %v2779 = vsel %vm1126, %v2706, 0
      %v2782 = vsel %vm1126, %v2709, 0
      %v2785 = vsel %vm1126, %v2714, 0
      %v2788 = vsel %vm1126, %v2717, 0
      %v2791 = vsel %vm1126, %v2722, 0
      %v2794 = vsel %vm1126, %v2725, 0
      %v2797 = vsel %vm1126, %v2730, 0
      %v2800 = vsel %vm1126, %v2733, 0
      %v2803 = vsel %vm1126, %v2738, 0
      %v2806 = vsel %vm1126, %v2741, 0
      %v2809 = vsel %vm1126, %v2746, 0
      %v2812 = vsel %vm1126, %v2749, 0
      %v2815 = vsel %vm1126, %v2754, 0
      %v2818 = vsel %vm1126, %v2757, 0
      %v2821 = vsel %vm1126, %v2762, 0
      %v2824 = vsel %vm1126, %v2765, 0
      %2826 = vmatprep.subr.mxu0 0.0
      %2827 = vmatpush1.msra.mxu0 %v2774
      %2828 = vmatprep.subr.mxu0 0.0
      %2829 = vmatpush1.msra.mxu0 %v2775
      %2830 = vmatprep.subr.mxu0 0.0
      %2831 = vmatpush1.msra.mxu0 %v2776
      %2832 = vmatprep.subr.mxu0 0.0
      %2833 = vmatpush1.msra.mxu0 %v2777
      %2834 = vmatprep.subr.mxu0 0.0
      %2835 = vmatpush1.msra.mxu0 0.0
      %2836 = vmatprep.subr.mxu0 0.0
      %2837 = vmatpush1.msra.mxu0 0.0
      %2838 = vmatprep.subr.mxu0 0.0
      %2839 = vmatpush1.msra.mxu0 0.0
      %2840 = vmatprep.subr.mxu0 0.0
      %2841 = vmatpush1.msra.mxu0 0.0
      %2842 = vmatprep.subr.mxu0 0.0
      %2843 = vmatpush1.msra.mxu0 0.0
      %2844 = vmatprep.subr.mxu0 0.0
      %2845 = vmatpush1.msra.mxu0 0.0
      %2846 = vmatprep.subr.mxu0 0.0
      %2847 = vmatpush1.msra.mxu0 0.0
      %2848 = vmatprep.subr.mxu0 0.0
      %2849 = vmatpush1.msra.mxu0 0.0
      %2850 = vmatprep.subr.mxu0 0.0
      %2851 = vmatpush1.msra.mxu0 0.0
      %2852 = vmatprep.subr.mxu0 0.0
      %2853 = vmatpush1.msra.mxu0 0.0
      %2854 = vmatprep.subr.mxu0 0.0
      %2855 = vmatpush1.msra.mxu0 0.0
      %2856 = vmatprep.subr.mxu0 0.0
      %2857 = vmatpush1.msra.mxu0 0.0
      %2858 = vmatprep.subr.mxu0 0.0
      %2859 = vmatpush1.msra.mxu0 0.0
      %2860 = vmatprep.subr.mxu0 0.0
      %2861 = vmatpush1.msra.mxu0 0.0
      %2862 = vmatprep.subr.mxu0 0.0
      %2863 = vmatpush1.msra.mxu0 0.0
      %2864 = vmatprep.subr.mxu0 0.0
      %2865 = vmatpush1.msra.mxu0 0.0
      %2866 = vmatprep.subr.mxu0 0.0
      %2867 = vmatpush1.msra.mxu0 0.0
      %2868 = vmatprep.subr.mxu0 0.0
      %2869 = vmatpush1.msra.mxu0 0.0
      %2870 = vmatprep.subr.mxu0 0.0
      %2871 = vmatpush1.msra.mxu0 0.0
      %2872 = vmatprep.subr.mxu0 0.0
      %2873 = vmatpush1.msra.mxu0 0.0
      %2874 = vmatprep.subr.mxu0 0.0
      %2875 = vmatpush1.msra.mxu0 0.0
      %2876 = vmatprep.subr.mxu0 0.0
      %2877 = vmatpush1.msra.mxu0 0.0
      %2878 = vmatprep.subr.mxu0 0.0
      %2879 = vmatpush1.msra.mxu0 0.0
      %2880 = vmatprep.subr.mxu0 0.0
      %2881 = vmatpush1.msra.mxu0 0.0
      %2882 = vmatprep.subr.mxu0 0.0
      %2883 = vmatpush1.msra.mxu0 0.0
      %2884 = vmatprep.subr.mxu0 0.0
      %2885 = vmatpush1.msra.mxu0 0.0
      %2886 = vmatprep.subr.mxu0 0.0
      %2887 = vmatpush1.msra.mxu0 0.0
      %2888 = vmatprep.subr.mxu0 0.0
      %2889 = vmatpush1.msra.mxu0 0.0
      %2890 = vmatprep.mubr.f32.mxu0 0.0
      %2891 = vmatmul.mubr.f32.gmra.mrb[0].mxu0 %v2779
      %v2892 = vpop.f32.mrb[0].mxu0
      %v2893 = vadd.f32 0.0, %v2892
      %v2894 = vpop.f32.mrb[0].mxu0
      %2895 = vmatprep.mubr.f32.mxu0 0.0
      %2896 = vmatmul.mubr.f32.gmra.mrb[0].mxu0 %v2782
      %v2897 = vpop.f32.mrb[0].mxu0
      %v2898 = vadd.f32 0.0, %v2897
      %v2899 = vpop.f32.mrb[0].mxu0
      %2900 = vmatprep.mubr.f32.mxu0 0.0
      %2901 = vmatmul.mubr.f32.gmra.mrb[0].mxu0 %v2785
      %v2902 = vpop.f32.mrb[0].mxu0
      %v2903 = vadd.f32 0.0, %v2902
      %v2904 = vpop.f32.mrb[0].mxu0
      %2905 = vmatprep.mubr.f32.mxu0 0.0
      %2906 = vmatmul.mubr.f32.gmra.mrb[0].mxu0 %v2788
      %v2907 = vpop.f32.mrb[0].mxu0
      %v2908 = vadd.f32 0.0, %v2907
      %v2909 = vpop.f32.mrb[0].mxu0
      %2910 = vmatprep.mubr.f32.mxu0 0.0
      %2911 = vmatmul.mubr.f32.gmra.mrb[0].mxu0 %v2791
      %v2912 = vpop.f32.mrb[0].mxu0
      %v2913 = vadd.f32 0.0, %v2912
      %v2914 = vpop.f32.mrb[0].mxu0
      %2915 = vmatprep.mubr.f32.mxu0 0.0
      %2916 = vmatmul.mubr.f32.gmra.mrb[0].mxu0 %v2794
      %v2917 = vpop.f32.mrb[0].mxu0
      %v2918 = vadd.f32 0.0, %v2917
      %v2919 = vpop.f32.mrb[0].mxu0
      %2920 = vmatprep.mubr.f32.mxu0 0.0
      %2921 = vmatmul.mubr.f32.gmra.mrb[0].mxu0 %v2797
      %v2922 = vpop.f32.mrb[0].mxu0
      %v2923 = vadd.f32 0.0, %v2922
      %v2924 = vpop.f32.mrb[0].mxu0
      %2925 = vmatprep.mubr.f32.mxu0 0.0
      %2926 = vmatmul.mubr.f32.gmra.mrb[0].mxu0 %v2800
      %v2927 = vpop.f32.mrb[0].mxu0
      %v2928 = vadd.f32 0.0, %v2927
      %v2929 = vpop.f32.mrb[0].mxu0
      %2930 = vmatprep.mubr.f32.mxu0 0.0
      %2931 = vmatmul.mubr.f32.gmra.mrb[0].mxu0 %v2803
      %v2932 = vpop.f32.mrb[0].mxu0
      %v2933 = vadd.f32 0.0, %v2932
      %v2934 = vpop.f32.mrb[0].mxu0
      %2935 = vmatprep.mubr.f32.mxu0 0.0
      %2936 = vmatmul.mubr.f32.gmra.mrb[0].mxu0 %v2806
      %v2937 = vpop.f32.mrb[0].mxu0
      %v2938 = vadd.f32 0.0, %v2937
      %v2939 = vpop.f32.mrb[0].mxu0
      %2940 = vmatprep.mubr.f32.mxu0 0.0
      %2941 = vmatmul.mubr.f32.gmra.mrb[0].mxu0 %v2809
      %v2942 = vpop.f32.mrb[0].mxu0
      %v2943 = vadd.f32 0.0, %v2942
      %v2944 = vpop.f32.mrb[0].mxu0
      %2945 = vmatprep.mubr.f32.mxu0 0.0
      %2946 = vmatmul.mubr.f32.gmra.mrb[0].mxu0 %v2812
      %v2947 = vpop.f32.mrb[0].mxu0
      %v2948 = vadd.f32 0.0, %v2947
      %v2949 = vpop.f32.mrb[0].mxu0
      %2950 = vmatprep.mubr.f32.mxu0 0.0
      %2951 = vmatmul.mubr.f32.gmra.mrb[0].mxu0 %v2815
      %v2952 = vpop.f32.mrb[0].mxu0
      %v2953 = vadd.f32 0.0, %v2952
      %v2954 = vpop.f32.mrb[0].mxu0
      %2955 = vmatprep.mubr.f32.mxu0 0.0
      %2956 = vmatmul.mubr.f32.gmra.mrb[0].mxu0 %v2818
      %v2957 = vpop.f32.mrb[0].mxu0
      %v2958 = vadd.f32 0.0, %v2957
      %v2959 = vpop.f32.mrb[0].mxu0
      %2960 = vmatprep.mubr.f32.mxu0 0.0
      %2961 = vmatmul.mubr.f32.gmra.mrb[0].mxu0 %v2821
      %v2962 = vpop.f32.mrb[0].mxu0
      %v2963 = vadd.f32 0.0, %v2962
      %v2964 = vpop.f32.mrb[0].mxu0
      %2965 = vmatprep.mubr.f32.mxu0 0.0
      %2966 = vmatmul.mubr.f32.gmra.mrb[0].mxu0 %v2824
      %v2967 = vpop.f32.mrb[0].mxu0
      %v2968 = vadd.f32 0.0, %v2967
      %v2969 = vpop.f32.mrb[0].mxu0
      %2970 = vdwg.mxu0
      %v2972 = vsel %vm1126, %v2609, 0
      %v2975 = vsel %vm1126, %v2612, 0
      %v2978 = vsel %vm1126, %v2617, 0
      %v2981 = vsel %vm1126, %v2620, 0
      %v2984 = vsel %vm1126, %v2625, 0
      %v2987 = vsel %vm1126, %v2628, 0
      %v2990 = vsel %vm1126, %v2633, 0
      %v2993 = vsel %vm1126, %v2636, 0
      %v2996 = vsel %vm1126, %v2641, 0
      %v2999 = vsel %vm1126, %v2644, 0
      %v3002 = vsel %vm1126, %v2649, 0
      %v3005 = vsel %vm1126, %v2652, 0
      %v3008 = vsel %vm1126, %v2657, 0
      %v3011 = vsel %vm1126, %v2660, 0
      %v3014 = vsel %vm1126, %v2665, 0
      %v3017 = vsel %vm1126, %v2668, 0
      %3019 = vmatprep.subr.mxu0 0.0
      %3020 = vmatpush1.msra.mxu0 %v2769
      %3021 = vmatprep.subr.mxu0 0.0
      %3022 = vmatpush1.msra.mxu0 %v2770
      %3023 = vmatprep.subr.mxu0 0.0
      %3024 = vmatpush1.msra.mxu0 %v2771
      %3025 = vmatprep.subr.mxu0 0.0
      %3026 = vmatpush1.msra.mxu0 %v2772
      %3027 = vmatprep.subr.mxu0 0.0
      %3028 = vmatpush1.msra.mxu0 0.0
      %3029 = vmatprep.subr.mxu0 0.0
      %3030 = vmatpush1.msra.mxu0 0.0
      %3031 = vmatprep.subr.mxu0 0.0
      %3032 = vmatpush1.msra.mxu0 0.0
      %3033 = vmatprep.subr.mxu0 0.0
      %3034 = vmatpush1.msra.mxu0 0.0
      %3035 = vmatprep.subr.mxu0 0.0
      %3036 = vmatpush1.msra.mxu0 0.0
      %3037 = vmatprep.subr.mxu0 0.0
      %3038 = vmatpush1.msra.mxu0 0.0
      %3039 = vmatprep.subr.mxu0 0.0
      %3040 = vmatpush1.msra.mxu0 0.0
      %3041 = vmatprep.subr.mxu0 0.0
      %3042 = vmatpush1.msra.mxu0 0.0
      %3043 = vmatprep.subr.mxu0 0.0
      %3044 = vmatpush1.msra.mxu0 0.0
      %3045 = vmatprep.subr.mxu0 0.0
      %3046 = vmatpush1.msra.mxu0 0.0
      %3047 = vmatprep.subr.mxu0 0.0
      %3048 = vmatpush1.msra.mxu0 0.0
      %3049 = vmatprep.subr.mxu0 0.0
      %3050 = vmatpush1.msra.mxu0 0.0
      %3051 = vmatprep.subr.mxu0 0.0
      %3052 = vmatpush1.msra.mxu0 0.0
      %3053 = vmatprep.subr.mxu0 0.0
      %3054 = vmatpush1.msra.mxu0 0.0
      %3055 = vmatprep.subr.mxu0 0.0
      %3056 = vmatpush1.msra.mxu0 0.0
      %3057 = vmatprep.subr.mxu0 0.0
      %3058 = vmatpush1.msra.mxu0 0.0
      %3059 = vmatprep.subr.mxu0 0.0
      %3060 = vmatpush1.msra.mxu0 0.0
      %3061 = vmatprep.subr.mxu0 0.0
      %3062 = vmatpush1.msra.mxu0 0.0
      %3063 = vmatprep.subr.mxu0 0.0
      %3064 = vmatpush1.msra.mxu0 0.0
      %3065 = vmatprep.subr.mxu0 0.0
      %3066 = vmatpush1.msra.mxu0 0.0
      %3067 = vmatprep.subr.mxu0 0.0
      %3068 = vmatpush1.msra.mxu0 0.0
      %3069 = vmatprep.subr.mxu0 0.0
      %3070 = vmatpush1.msra.mxu0 0.0
      %3071 = vmatprep.subr.mxu0 0.0
      %3072 = vmatpush1.msra.mxu0 0.0
      %3073 = vmatprep.subr.mxu0 0.0
      %3074 = vmatpush1.msra.mxu0 0.0
      %3075 = vmatprep.subr.mxu0 0.0
      %3076 = vmatpush1.msra.mxu0 0.0
      %3077 = vmatprep.subr.mxu0 0.0
      %3078 = vmatpush1.msra.mxu0 0.0
      %3079 = vmatprep.subr.mxu0 0.0
      %3080 = vmatpush1.msra.mxu0 0.0
      %3081 = vmatprep.subr.mxu0 0.0
      %3082 = vmatpush1.msra.mxu0 0.0
      %3083 = vmatprep.mubr.f32.mxu0 0.0
      %3084 = vmatmul.mubr.f32.gmra.mrb[0].mxu0 %v2972
      %v3085 = vpop.f32.mrb[0].mxu0
      %v3086 = vadd.f32 %v2893, %v3085
      %v3087 = vpop.f32.mrb[0].mxu0
      %3088 = vmatprep.mubr.f32.mxu0 0.0
      %3089 = vmatmul.mubr.f32.gmra.mrb[0].mxu0 %v2975
      %v3090 = vpop.f32.mrb[0].mxu0
      %v3091 = vadd.f32 %v2898, %v3090
      %v3092 = vpop.f32.mrb[0].mxu0
      %3093 = vmatprep.mubr.f32.mxu0 0.0
      %3094 = vmatmul.mubr.f32.gmra.mrb[0].mxu0 %v2978
      %v3095 = vpop.f32.mrb[0].mxu0
      %v3096 = vadd.f32 %v2903, %v3095
      %v3097 = vpop.f32.mrb[0].mxu0
      %3098 = vmatprep.mubr.f32.mxu0 0.0
      %3099 = vmatmul.mubr.f32.gmra.mrb[0].mxu0 %v2981
      %v3100 = vpop.f32.mrb[0].mxu0
      %v3101 = vadd.f32 %v2908, %v3100
      %v3102 = vpop.f32.mrb[0].mxu0
      %3103 = vmatprep.mubr.f32.mxu0 0.0
      %3104 = vmatmul.mubr.f32.gmra.mrb[0].mxu0 %v2984
      %v3105 = vpop.f32.mrb[0].mxu0
      %v3106 = vadd.f32 %v2913, %v3105
      %v3107 = vpop.f32.mrb[0].mxu0
      %3108 = vmatprep.mubr.f32.mxu0 0.0
      %3109 = vmatmul.mubr.f32.gmra.mrb[0].mxu0 %v2987
      %v3110 = vpop.f32.mrb[0].mxu0
      %v3111 = vadd.f32 %v2918, %v3110
      %v3112 = vpop.f32.mrb[0].mxu0
      %3113 = vmatprep.mubr.f32.mxu0 0.0
      %3114 = vmatmul.mubr.f32.gmra.mrb[0].mxu0 %v2990
      %v3115 = vpop.f32.mrb[0].mxu0
      %v3116 = vadd.f32 %v2923, %v3115
      %v3117 = vpop.f32.mrb[0].mxu0
      %3118 = vmatprep.mubr.f32.mxu0 0.0
      %3119 = vmatmul.mubr.f32.gmra.mrb[0].mxu0 %v2993
      %v3120 = vpop.f32.mrb[0].mxu0
      %v3121 = vadd.f32 %v2928, %v3120
      %v3122 = vpop.f32.mrb[0].mxu0
      %3123 = vmatprep.mubr.f32.mxu0 0.0
      %3124 = vmatmul.mubr.f32.gmra.mrb[0].mxu0 %v2996
      %v3125 = vpop.f32.mrb[0].mxu0
      %v3126 = vadd.f32 %v2933, %v3125
      %v3127 = vpop.f32.mrb[0].mxu0
      %3128 = vmatprep.mubr.f32.mxu0 0.0
      %3129 = vmatmul.mubr.f32.gmra.mrb[0].mxu0 %v2999
      %v3130 = vpop.f32.mrb[0].mxu0
      %v3131 = vadd.f32 %v2938, %v3130
      %v3132 = vpop.f32.mrb[0].mxu0
      %3133 = vmatprep.mubr.f32.mxu0 0.0
      %3134 = vmatmul.mubr.f32.gmra.mrb[0].mxu0 %v3002
      %v3135 = vpop.f32.mrb[0].mxu0
      %v3136 = vadd.f32 %v2943, %v3135
      %v3137 = vpop.f32.mrb[0].mxu0
      %3138 = vmatprep.mubr.f32.mxu0 0.0
      %3139 = vmatmul.mubr.f32.gmra.mrb[0].mxu0 %v3005
      %v3140 = vpop.f32.mrb[0].mxu0
      %v3141 = vadd.f32 %v2948, %v3140
      %v3142 = vpop.f32.mrb[0].mxu0
      %3143 = vmatprep.mubr.f32.mxu0 0.0
      %3144 = vmatmul.mubr.f32.gmra.mrb[0].mxu0 %v3008
      %v3145 = vpop.f32.mrb[0].mxu0
      %v3146 = vadd.f32 %v2953, %v3145
      %v3147 = vpop.f32.mrb[0].mxu0
      %3148 = vmatprep.mubr.f32.mxu0 0.0
      %3149 = vmatmul.mubr.f32.gmra.mrb[0].mxu0 %v3011
      %v3150 = vpop.f32.mrb[0].mxu0
      %v3151 = vadd.f32 %v2958, %v3150
      %v3152 = vpop.f32.mrb[0].mxu0
      %3153 = vmatprep.mubr.f32.mxu0 0.0
      %3154 = vmatmul.mubr.f32.gmra.mrb[0].mxu0 %v3014
      %v3155 = vpop.f32.mrb[0].mxu0
      %v3156 = vadd.f32 %v2963, %v3155
      %v3157 = vpop.f32.mrb[0].mxu0
      %3158 = vmatprep.mubr.f32.mxu0 0.0
      %3159 = vmatmul.mubr.f32.gmra.mrb[0].mxu0 %v3017
      %v3160 = vpop.f32.mrb[0].mxu0
      %v3161 = vadd.f32 %v2968, %v3160
      %v3162 = vpop.f32.mrb[0].mxu0
      %3163 = vdwg.mxu0
      %s3164 = scalar_lea.vmem %s4, 128
      %v3165 = vld [vmem:[%s3164] sm:$0xff]
      %v3166 = vld [vmem:[%s3164 + $0x8] sm:$0xff]
      %v3167 = vld [vmem:[%s3164 + $0x10] sm:$0xff]
      %v3168 = vld [vmem:[%s3164 + $0x18] sm:$0xff]
      %v3169 = vld [vmem:[%s3164 + $0x20] sm:$0xff]
      %v3170 = vld [vmem:[%s3164 + $0x28] sm:$0xff]
      %v3171 = vld [vmem:[%s3164 + $0x30] sm:$0xff]
      %v3172 = vld [vmem:[%s3164 + $0x38] sm:$0xff]
      %v3173 = vld [vmem:[%s3164 + $0x40] sm:$0xff]
      %v3174 = vld [vmem:[%s3164 + $0x48] sm:$0xff]
      %v3175 = vld [vmem:[%s3164 + $0x50] sm:$0xff]
      %v3176 = vld [vmem:[%s3164 + $0x58] sm:$0xff]
      %v3177 = vld [vmem:[%s3164 + $0x60] sm:$0xff]
      %v3178 = vld [vmem:[%s3164 + $0x68] sm:$0xff]
      %v3179 = vld [vmem:[%s3164 + $0x70] sm:$0xff]
      %v3180 = vld [vmem:[%s3164 + $0x78] sm:$0xff]
      %v3181 = vadd.f32 %v3086, %v3165
      %v3182 = vadd.f32 %v3091, %v3166
      %v3183 = vadd.f32 %v3096, %v3167
      %v3184 = vadd.f32 %v3101, %v3168
      %v3185 = vadd.f32 %v3106, %v3169
      %v3186 = vadd.f32 %v3111, %v3170
      %v3187 = vadd.f32 %v3116, %v3171
      %v3188 = vadd.f32 %v3121, %v3172
      %v3189 = vadd.f32 %v3126, %v3173
      %v3190 = vadd.f32 %v3131, %v3174
      %v3191 = vadd.f32 %v3136, %v3175
      %v3192 = vadd.f32 %v3141, %v3176
      %v3193 = vadd.f32 %v3146, %v3177
      %v3194 = vadd.f32 %v3151, %v3178
      %v3195 = vadd.f32 %v3156, %v3179
      %v3196 = vadd.f32 %v3161, %v3180
      %v3197 = vmax.f32 %v3181, 0.0
      %v3198 = vmax.f32 %v3182, 0.0
      %v3199 = vmax.f32 %v3183, 0.0
      %v3200 = vmax.f32 %v3184, 0.0
      %v3201 = vmax.f32 %v3185, 0.0
      %v3202 = vmax.f32 %v3186, 0.0
      %v3203 = vmax.f32 %v3187, 0.0
      %v3204 = vmax.f32 %v3188, 0.0
      %v3205 = vmax.f32 %v3189, 0.0
      %v3206 = vmax.f32 %v3190, 0.0
      %v3207 = vmax.f32 %v3191, 0.0
      %v3208 = vmax.f32 %v3192, 0.0
      %v3209 = vmax.f32 %v3193, 0.0
      %v3210 = vmax.f32 %v3194, 0.0
      %v3211 = vmax.f32 %v3195, 0.0
      %v3212 = vmax.f32 %v3196, 0.0
      %s3213 = scalar_lea.vmem %s12, 32
      %v3214 = vld [vmem:[%s3213] sm:$0xff]
      %v3215 = vld [vmem:[%s3213 + $0x8] sm:$0xff]
      %v3216 = vld [vmem:[%s3213 + $0x10] sm:$0xff]
      %v3217 = vld [vmem:[%s3213 + $0x18] sm:$0xff]
      %s3218 = scalar_lea.vmem %s13, 1
      %v3219 = vld [vmem:[%s3218] sm:$0x1]
      %v3221 = vlaneseq
      %v3222 = vshrl.u32 %v3221, 7
      %v3223 = vsub.s32 0, %v3222
      %v3224 = vrot.slane %v3219, %v3223
      %v3227 = vsel %vm1126, %v3197, 0
      %v3230 = vsel %vm1126, %v3198, 0
      %v3233 = vsel %vm1126, %v3199, 0
      %v3236 = vsel %vm1126, %v3200, 0
      %v3239 = vsel %vm1126, %v3201, 0
      %v3242 = vsel %vm1126, %v3202, 0
      %v3245 = vsel %vm1126, %v3203, 0
      %v3248 = vsel %vm1126, %v3204, 0
      %v3251 = vsel %vm1126, %v3205, 0
      %v3254 = vsel %vm1126, %v3206, 0
      %v3257 = vsel %vm1126, %v3207, 0
      %v3260 = vsel %vm1126, %v3208, 0
      %v3263 = vsel %vm1126, %v3209, 0
      %v3266 = vsel %vm1126, %v3210, 0
      %v3269 = vsel %vm1126, %v3211, 0
      %v3272 = vsel %vm1126, %v3212, 0
      %3274 = vmatprep.subr.mxu0 0.0
      %3275 = vmatpush1.msra.mxu0 %v3214
      %3276 = vmatprep.subr.mxu0 0.0
      %3277 = vmatpush1.msra.mxu0 %v3215
      %3278 = vmatprep.subr.mxu0 0.0
      %3279 = vmatpush1.msra.mxu0 %v3216
      %3280 = vmatprep.subr.mxu0 0.0
      %3281 = vmatpush1.msra.mxu0 %v3217
      %3282 = vmatprep.subr.mxu0 0.0
      %3283 = vmatpush1.msra.mxu0 0.0
      %3284 = vmatprep.subr.mxu0 0.0
      %3285 = vmatpush1.msra.mxu0 0.0
      %3286 = vmatprep.subr.mxu0 0.0
      %3287 = vmatpush1.msra.mxu0 0.0
      %3288 = vmatprep.subr.mxu0 0.0
      %3289 = vmatpush1.msra.mxu0 0.0
      %3290 = vmatprep.subr.mxu0 0.0
      %3291 = vmatpush1.msra.mxu0 0.0
      %3292 = vmatprep.subr.mxu0 0.0
      %3293 = vmatpush1.msra.mxu0 0.0
      %3294 = vmatprep.subr.mxu0 0.0
      %3295 = vmatpush1.msra.mxu0 0.0
      %3296 = vmatprep.subr.mxu0 0.0
      %3297 = vmatpush1.msra.mxu0 0.0
      %3298 = vmatprep.subr.mxu0 0.0
      %3299 = vmatpush1.msra.mxu0 0.0
      %3300 = vmatprep.subr.mxu0 0.0
      %3301 = vmatpush1.msra.mxu0 0.0
      %3302 = vmatprep.subr.mxu0 0.0
      %3303 = vmatpush1.msra.mxu0 0.0
      %3304 = vmatprep.subr.mxu0 0.0
      %3305 = vmatpush1.msra.mxu0 0.0
      %3306 = vmatprep.subr.mxu0 0.0
      %3307 = vmatpush1.msra.mxu0 0.0
      %3308 = vmatprep.subr.mxu0 0.0
      %3309 = vmatpush1.msra.mxu0 0.0
      %3310 = vmatprep.subr.mxu0 0.0
      %3311 = vmatpush1.msra.mxu0 0.0
      %3312 = vmatprep.subr.mxu0 0.0
      %3313 = vmatpush1.msra.mxu0 0.0
      %3314 = vmatprep.subr.mxu0 0.0
      %3315 = vmatpush1.msra.mxu0 0.0
      %3316 = vmatprep.subr.mxu0 0.0
      %3317 = vmatpush1.msra.mxu0 0.0
      %3318 = vmatprep.subr.mxu0 0.0
      %3319 = vmatpush1.msra.mxu0 0.0
      %3320 = vmatprep.subr.mxu0 0.0
      %3321 = vmatpush1.msra.mxu0 0.0
      %3322 = vmatprep.subr.mxu0 0.0
      %3323 = vmatpush1.msra.mxu0 0.0
      %3324 = vmatprep.subr.mxu0 0.0
      %3325 = vmatpush1.msra.mxu0 0.0
      %3326 = vmatprep.subr.mxu0 0.0
      %3327 = vmatpush1.msra.mxu0 0.0
      %3328 = vmatprep.subr.mxu0 0.0
      %3329 = vmatpush1.msra.mxu0 0.0
      %3330 = vmatprep.subr.mxu0 0.0
      %3331 = vmatpush1.msra.mxu0 0.0
      %3332 = vmatprep.subr.mxu0 0.0
      %3333 = vmatpush1.msra.mxu0 0.0
      %3334 = vmatprep.subr.mxu0 0.0
      %3335 = vmatpush1.msra.mxu0 0.0
      %3336 = vmatprep.subr.mxu0 0.0
      %3337 = vmatpush1.msra.mxu0 0.0
      %3338 = vmatprep.mubr.f32.mxu0 0.0
      %3339 = vmatmul.mubr.f32.gmra.mrb[0].mxu0 %v3227
      %v3340 = vpop.f32.mrb[0].mxu0
      %v3341 = vadd.f32 %v3224, %v3340
      %v3342 = vpop.f32.mrb[0].mxu0
      %3343 = vmatprep.mubr.f32.mxu0 0.0
      %3344 = vmatmul.mubr.f32.gmra.mrb[0].mxu0 %v3230
      %v3345 = vpop.f32.mrb[0].mxu0
      %v3346 = vadd.f32 %v3224, %v3345
      %v3347 = vpop.f32.mrb[0].mxu0
      %3348 = vmatprep.mubr.f32.mxu0 0.0
      %3349 = vmatmul.mubr.f32.gmra.mrb[0].mxu0 %v3233
      %v3350 = vpop.f32.mrb[0].mxu0
      %v3351 = vadd.f32 %v3224, %v3350
      %v3352 = vpop.f32.mrb[0].mxu0
      %3353 = vmatprep.mubr.f32.mxu0 0.0
      %3354 = vmatmul.mubr.f32.gmra.mrb[0].mxu0 %v3236
      %v3355 = vpop.f32.mrb[0].mxu0
      %v3356 = vadd.f32 %v3224, %v3355
      %v3357 = vpop.f32.mrb[0].mxu0
      %3358 = vmatprep.mubr.f32.mxu0 0.0
      %3359 = vmatmul.mubr.f32.gmra.mrb[0].mxu0 %v3239
      %v3360 = vpop.f32.mrb[0].mxu0
      %v3361 = vadd.f32 %v3224, %v3360
      %v3362 = vpop.f32.mrb[0].mxu0
      %3363 = vmatprep.mubr.f32.mxu0 0.0
      %3364 = vmatmul.mubr.f32.gmra.mrb[0].mxu0 %v3242
      %v3365 = vpop.f32.mrb[0].mxu0
      %v3366 = vadd.f32 %v3224, %v3365
      %v3367 = vpop.f32.mrb[0].mxu0
      %3368 = vmatprep.mubr.f32.mxu0 0.0
      %3369 = vmatmul.mubr.f32.gmra.mrb[0].mxu0 %v3245
      %v3370 = vpop.f32.mrb[0].mxu0
      %v3371 = vadd.f32 %v3224, %v3370
      %v3372 = vpop.f32.mrb[0].mxu0
      %3373 = vmatprep.mubr.f32.mxu0 0.0
      %3374 = vmatmul.mubr.f32.gmra.mrb[0].mxu0 %v3248
      %v3375 = vpop.f32.mrb[0].mxu0
      %v3376 = vadd.f32 %v3224, %v3375
      %v3377 = vpop.f32.mrb[0].mxu0
      %3378 = vmatprep.mubr.f32.mxu0 0.0
      %3379 = vmatmul.mubr.f32.gmra.mrb[0].mxu0 %v3251
      %v3380 = vpop.f32.mrb[0].mxu0
      %v3381 = vadd.f32 %v3224, %v3380
      %v3382 = vpop.f32.mrb[0].mxu0
      %3383 = vmatprep.mubr.f32.mxu0 0.0
      %3384 = vmatmul.mubr.f32.gmra.mrb[0].mxu0 %v3254
      %v3385 = vpop.f32.mrb[0].mxu0
      %v3386 = vadd.f32 %v3224, %v3385
      %v3387 = vpop.f32.mrb[0].mxu0
      %3388 = vmatprep.mubr.f32.mxu0 0.0
      %3389 = vmatmul.mubr.f32.gmra.mrb[0].mxu0 %v3257
      %v3390 = vpop.f32.mrb[0].mxu0
      %v3391 = vadd.f32 %v3224, %v3390
      %v3392 = vpop.f32.mrb[0].mxu0
      %3393 = vmatprep.mubr.f32.mxu0 0.0
      %3394 = vmatmul.mubr.f32.gmra.mrb[0].mxu0 %v3260
      %v3395 = vpop.f32.mrb[0].mxu0
      %v3396 = vadd.f32 %v3224, %v3395
      %v3397 = vpop.f32.mrb[0].mxu0
      %3398 = vmatprep.mubr.f32.mxu0 0.0
      %3399 = vmatmul.mubr.f32.gmra.mrb[0].mxu0 %v3263
      %v3400 = vpop.f32.mrb[0].mxu0
      %v3401 = vadd.f32 %v3224, %v3400
      %v3402 = vpop.f32.mrb[0].mxu0
      %3403 = vmatprep.mubr.f32.mxu0 0.0
      %3404 = vmatmul.mubr.f32.gmra.mrb[0].mxu0 %v3266
      %v3405 = vpop.f32.mrb[0].mxu0
      %v3406 = vadd.f32 %v3224, %v3405
      %v3407 = vpop.f32.mrb[0].mxu0
      %3408 = vmatprep.mubr.f32.mxu0 0.0
      %3409 = vmatmul.mubr.f32.gmra.mrb[0].mxu0 %v3269
      %v3410 = vpop.f32.mrb[0].mxu0
      %v3411 = vadd.f32 %v3224, %v3410
      %v3412 = vpop.f32.mrb[0].mxu0
      %3413 = vmatprep.mubr.f32.mxu0 0.0
      %3414 = vmatmul.mubr.f32.gmra.mrb[0].mxu0 %v3272
      %v3415 = vpop.f32.mrb[0].mxu0
      %v3416 = vadd.f32 %v3224, %v3415
      %v3417 = vpop.f32.mrb[0].mxu0
      %3418 = vdwg.mxu0
      %v3419 = vpack.c.bf16 %v3346, %v3341
      %v3420 = vpack.c.bf16 %v3356, %v3351
      %v3421 = vpack.c.bf16 %v3366, %v3361
      %v3422 = vpack.c.bf16 %v3376, %v3371
      %v3423 = vpack.c.bf16 %v3386, %v3381
      %v3424 = vpack.c.bf16 %v3396, %v3391
      %v3425 = vpack.c.bf16 %v3406, %v3401
      %v3426 = vpack.c.bf16 %v3416, %v3411
      %3427 = vmatprep.subr.bf16.mxu0 0
      %3428 = vmatpush1.bf16.msra.mxu0 %v3419
      %3429 = vmatprep.subr.bf16.mxu0 0
      %3430 = vmatpush1.bf16.msra.mxu0 %v3420
      %3431 = vmatprep.subr.bf16.mxu0 0
      %3432 = vmatpush1.bf16.msra.mxu0 %v3421
      %3433 = vmatprep.subr.bf16.mxu0 0
      %3434 = vmatpush1.bf16.msra.mxu0 %v3422
      %3435 = vmatprep.subr.bf16.mxu0 0
      %3436 = vmatpush1.bf16.msra.mxu0 %v3423
      %3437 = vmatprep.subr.bf16.mxu0 0
      %3438 = vmatpush1.bf16.msra.mxu0 %v3424
      %3439 = vmatprep.subr.bf16.mxu0 0
      %3440 = vmatpush1.bf16.msra.mxu0 %v3425
      %3441 = vmatprep.subr.bf16.mxu0 0
      %3442 = vmatpush1.bf16.msra.mxu0 %v3426
      %3443 = vmatprep.subr.bf16.mxu0 0
      %3444 = vmatpush1.bf16.msra.mxu0 0
      %3445 = vmatprep.subr.bf16.mxu0 0
      %3446 = vmatpush1.bf16.msra.mxu0 0
      %3447 = vmatprep.subr.bf16.mxu0 0
      %3448 = vmatpush1.bf16.msra.mxu0 0
      %3449 = vmatprep.subr.bf16.mxu0 0
      %3450 = vmatpush1.bf16.msra.mxu0 0
      %3451 = vmatprep.subr.bf16.mxu0 0
      %3452 = vmatpush1.bf16.msra.mxu0 0
      %3453 = vmatprep.subr.bf16.mxu0 0
      %3454 = vmatpush1.bf16.msra.mxu0 0
      %3455 = vmatprep.subr.bf16.mxu0 0
      %3456 = vmatpush1.bf16.msra.mxu0 0
      %3457 = vmatprep.subr.bf16.mxu0 0
      %3458 = vmatpush1.bf16.msra.mxu0 0
      %3459 = vmatprep.mubr.bf16.mxu0 0
      %3460 = vmatmul.mubr.bf16.gmra.mrb[0].mxu0 %v2071
      %v3461 = vpop.f32.mrb[0].mxu0
      %v3462 = vadd.f32 0.0, %v3461
      %v3463 = vpop.f32.mrb[0].mxu0
      %v3464 = vpop.f32.mrb[0].mxu0
      %v3465 = vadd.f32 0.0, %v3464
      %v3466 = vpop.f32.mrb[0].mxu0
      %3467 = vmatprep.mubr.bf16.mxu0 0
      %3468 = vmatmul.mubr.bf16.gmra.mrb[0].mxu0 %v2072
      %v3469 = vpop.f32.mrb[0].mxu0
      %v3470 = vadd.f32 0.0, %v3469
      %v3471 = vpop.f32.mrb[0].mxu0
      %v3472 = vpop.f32.mrb[0].mxu0
      %v3473 = vadd.f32 0.0, %v3472
      %v3474 = vpop.f32.mrb[0].mxu0
      %3475 = vdwg.mxu0
      %s3476 = scalar_lea.vmem %s14, 32
      %v3477 = vld [vmem:[%s3476] sm:$0xff]
      %v3478 = vld [vmem:[%s3476 + $0x8] sm:$0xff]
      %v3479 = vld [vmem:[%s3476 + $0x10] sm:$0xff]
      %v3480 = vld [vmem:[%s3476 + $0x18] sm:$0xff]
      %s3481 = scalar_lea.vmem %s15, 32
      %v3482 = vld [vmem:[%s3481] sm:$0xff]
      %v3483 = vld [vmem:[%s3481 + $0x8] sm:$0xff]
      %v3484 = vld [vmem:[%s3481 + $0x10] sm:$0xff]
      %v3485 = vld [vmem:[%s3481 + $0x18] sm:$0xff]
      %v3487 = vsel %vm1126, %v3462, 0
      %v3490 = vsel %vm1126, %v3465, 0
      %v3493 = vsel %vm1126, %v3470, 0
      %v3496 = vsel %vm1126, %v3473, 0
      %3498 = vmatprep.subr.mxu0 0.0
      %3499 = vmatpush1.msra.mxu0 %v3482
      %3500 = vmatprep.subr.mxu0 0.0
      %3501 = vmatpush1.msra.mxu0 %v3483
      %3502 = vmatprep.subr.mxu0 0.0
      %3503 = vmatpush1.msra.mxu0 %v3484
      %3504 = vmatprep.subr.mxu0 0.0
      %3505 = vmatpush1.msra.mxu0 %v3485
      %3506 = vmatprep.subr.mxu0 0.0
      %3507 = vmatpush1.msra.mxu0 0.0
      %3508 = vmatprep.subr.mxu0 0.0
      %3509 = vmatpush1.msra.mxu0 0.0
      %3510 = vmatprep.subr.mxu0 0.0
      %3511 = vmatpush1.msra.mxu0 0.0
      %3512 = vmatprep.subr.mxu0 0.0
      %3513 = vmatpush1.msra.mxu0 0.0
      %3514 = vmatprep.subr.mxu0 0.0
      %3515 = vmatpush1.msra.mxu0 0.0
      %3516 = vmatprep.subr.mxu0 0.0
      %3517 = vmatpush1.msra.mxu0 0.0
      %3518 = vmatprep.subr.mxu0 0.0
      %3519 = vmatpush1.msra.mxu0 0.0
      %3520 = vmatprep.subr.mxu0 0.0
      %3521 = vmatpush1.msra.mxu0 0.0
      %3522 = vmatprep.subr.mxu0 0.0
      %3523 = vmatpush1.msra.mxu0 0.0
      %3524 = vmatprep.subr.mxu0 0.0
      %3525 = vmatpush1.msra.mxu0 0.0
      %3526 = vmatprep.subr.mxu0 0.0
      %3527 = vmatpush1.msra.mxu0 0.0
      %3528 = vmatprep.subr.mxu0 0.0
      %3529 = vmatpush1.msra.mxu0 0.0
      %3530 = vmatprep.subr.mxu0 0.0
      %3531 = vmatpush1.msra.mxu0 0.0
      %3532 = vmatprep.subr.mxu0 0.0
      %3533 = vmatpush1.msra.mxu0 0.0
      %3534 = vmatprep.subr.mxu0 0.0
      %3535 = vmatpush1.msra.mxu0 0.0
      %3536 = vmatprep.subr.mxu0 0.0
      %3537 = vmatpush1.msra.mxu0 0.0
      %3538 = vmatprep.subr.mxu0 0.0
      %3539 = vmatpush1.msra.mxu0 0.0
      %3540 = vmatprep.subr.mxu0 0.0
      %3541 = vmatpush1.msra.mxu0 0.0
      %3542 = vmatprep.subr.mxu0 0.0
      %3543 = vmatpush1.msra.mxu0 0.0
      %3544 = vmatprep.subr.mxu0 0.0
      %3545 = vmatpush1.msra.mxu0 0.0
      %3546 = vmatprep.subr.mxu0 0.0
      %3547 = vmatpush1.msra.mxu0 0.0
      %3548 = vmatprep.subr.mxu0 0.0
      %3549 = vmatpush1.msra.mxu0 0.0
      %3550 = vmatprep.subr.mxu0 0.0
      %3551 = vmatpush1.msra.mxu0 0.0
      %3552 = vmatprep.subr.mxu0 0.0
      %3553 = vmatpush1.msra.mxu0 0.0
      %3554 = vmatprep.subr.mxu0 0.0
      %3555 = vmatpush1.msra.mxu0 0.0
      %3556 = vmatprep.subr.mxu0 0.0
      %3557 = vmatpush1.msra.mxu0 0.0
      %3558 = vmatprep.subr.mxu0 0.0
      %3559 = vmatpush1.msra.mxu0 0.0
      %3560 = vmatprep.subr.mxu0 0.0
      %3561 = vmatpush1.msra.mxu0 0.0
      %3562 = vmatprep.mubr.f32.mxu0 0.0
      %3563 = vmatmul.mubr.f32.gmra.mrb[0].mxu0 %v3487
      %v3564 = vpop.f32.mrb[0].mxu0
      %v3565 = vadd.f32 0.0, %v3564
      %v3566 = vpop.f32.mrb[0].mxu0
      %3567 = vmatprep.mubr.f32.mxu0 0.0
      %3568 = vmatmul.mubr.f32.gmra.mrb[0].mxu0 %v3490
      %v3569 = vpop.f32.mrb[0].mxu0
      %v3570 = vadd.f32 0.0, %v3569
      %v3571 = vpop.f32.mrb[0].mxu0
      %3572 = vmatprep.mubr.f32.mxu0 0.0
      %3573 = vmatmul.mubr.f32.gmra.mrb[0].mxu0 %v3493
      %v3574 = vpop.f32.mrb[0].mxu0
      %v3575 = vadd.f32 0.0, %v3574
      %v3576 = vpop.f32.mrb[0].mxu0
      %3577 = vmatprep.mubr.f32.mxu0 0.0
      %3578 = vmatmul.mubr.f32.gmra.mrb[0].mxu0 %v3496
      %v3579 = vpop.f32.mrb[0].mxu0
      %v3580 = vadd.f32 0.0, %v3579
      %v3581 = vpop.f32.mrb[0].mxu0
      %3582 = vdwg.mxu0
      %v3584 = vsel %vm1126, %v2568, 0
      %v3587 = vsel %vm1126, %v2569, 0
      %v3590 = vsel %vm1126, %v2570, 0
      %v3593 = vsel %vm1126, %v2571, 0
      %3595 = vmatprep.subr.mxu0 0.0
      %3596 = vmatpush1.msra.mxu0 %v3477
      %3597 = vmatprep.subr.mxu0 0.0
      %3598 = vmatpush1.msra.mxu0 %v3478
      %3599 = vmatprep.subr.mxu0 0.0
      %3600 = vmatpush1.msra.mxu0 %v3479
      %3601 = vmatprep.subr.mxu0 0.0
      %3602 = vmatpush1.msra.mxu0 %v3480
      %3603 = vmatprep.subr.mxu0 0.0
      %3604 = vmatpush1.msra.mxu0 0.0
      %3605 = vmatprep.subr.mxu0 0.0
      %3606 = vmatpush1.msra.mxu0 0.0
      %3607 = vmatprep.subr.mxu0 0.0
      %3608 = vmatpush1.msra.mxu0 0.0
      %3609 = vmatprep.subr.mxu0 0.0
      %3610 = vmatpush1.msra.mxu0 0.0
      %3611 = vmatprep.subr.mxu0 0.0
      %3612 = vmatpush1.msra.mxu0 0.0
      %3613 = vmatprep.subr.mxu0 0.0
      %3614 = vmatpush1.msra.mxu0 0.0
      %3615 = vmatprep.subr.mxu0 0.0
      %3616 = vmatpush1.msra.mxu0 0.0
      %3617 = vmatprep.subr.mxu0 0.0
      %3618 = vmatpush1.msra.mxu0 0.0
      %3619 = vmatprep.subr.mxu0 0.0
      %3620 = vmatpush1.msra.mxu0 0.0
      %3621 = vmatprep.subr.mxu0 0.0
      %3622 = vmatpush1.msra.mxu0 0.0
      %3623 = vmatprep.subr.mxu0 0.0
      %3624 = vmatpush1.msra.mxu0 0.0
      %3625 = vmatprep.subr.mxu0 0.0
      %3626 = vmatpush1.msra.mxu0 0.0
      %3627 = vmatprep.subr.mxu0 0.0
      %3628 = vmatpush1.msra.mxu0 0.0
      %3629 = vmatprep.subr.mxu0 0.0
      %3630 = vmatpush1.msra.mxu0 0.0
      %3631 = vmatprep.subr.mxu0 0.0
      %3632 = vmatpush1.msra.mxu0 0.0
      %3633 = vmatprep.subr.mxu0 0.0
      %3634 = vmatpush1.msra.mxu0 0.0
      %3635 = vmatprep.subr.mxu0 0.0
      %3636 = vmatpush1.msra.mxu0 0.0
      %3637 = vmatprep.subr.mxu0 0.0
      %3638 = vmatpush1.msra.mxu0 0.0
      %3639 = vmatprep.subr.mxu0 0.0
      %3640 = vmatpush1.msra.mxu0 0.0
      %3641 = vmatprep.subr.mxu0 0.0
      %3642 = vmatpush1.msra.mxu0 0.0
      %3643 = vmatprep.subr.mxu0 0.0
      %3644 = vmatpush1.msra.mxu0 0.0
      %3645 = vmatprep.subr.mxu0 0.0
      %3646 = vmatpush1.msra.mxu0 0.0
      %3647 = vmatprep.subr.mxu0 0.0
      %3648 = vmatpush1.msra.mxu0 0.0
      %3649 = vmatprep.subr.mxu0 0.0
      %3650 = vmatpush1.msra.mxu0 0.0
      %3651 = vmatprep.subr.mxu0 0.0
      %3652 = vmatpush1.msra.mxu0 0.0
      %3653 = vmatprep.subr.mxu0 0.0
      %3654 = vmatpush1.msra.mxu0 0.0
      %3655 = vmatprep.subr.mxu0 0.0
      %3656 = vmatpush1.msra.mxu0 0.0
      %3657 = vmatprep.subr.mxu0 0.0
      %3658 = vmatpush1.msra.mxu0 0.0
      %3659 = vmatprep.mubr.f32.mxu0 0.0
      %3660 = vmatmul.mubr.f32.gmra.mrb[0].mxu0 %v3584
      %v3661 = vpop.f32.mrb[0].mxu0
      %v3662 = vadd.f32 %v3565, %v3661
      %v3663 = vpop.f32.mrb[0].mxu0
      %3664 = vmatprep.mubr.f32.mxu0 0.0
      %3665 = vmatmul.mubr.f32.gmra.mrb[0].mxu0 %v3587
      %v3666 = vpop.f32.mrb[0].mxu0
      %v3667 = vadd.f32 %v3570, %v3666
      %v3668 = vpop.f32.mrb[0].mxu0
      %3669 = vmatprep.mubr.f32.mxu0 0.0
      %3670 = vmatmul.mubr.f32.gmra.mrb[0].mxu0 %v3590
      %v3671 = vpop.f32.mrb[0].mxu0
      %v3672 = vadd.f32 %v3575, %v3671
      %v3673 = vpop.f32.mrb[0].mxu0
      %3674 = vmatprep.mubr.f32.mxu0 0.0
      %3675 = vmatmul.mubr.f32.gmra.mrb[0].mxu0 %v3593
      %v3676 = vpop.f32.mrb[0].mxu0
      %v3677 = vadd.f32 %v3580, %v3676
      %v3678 = vpop.f32.mrb[0].mxu0
      %3679 = vdwg.mxu0
      %s3680 = scalar_lea.vmem %s16, 1
      %v3681 = vld [vmem:[%s3680] sm:$0x1]
      %v3683 = vlaneseq
      %v3684 = vshrl.u32 %v3683, 7
      %v3685 = vsub.s32 0, %v3684
      %v3686 = vrot.slane %v3681, %v3685
      %v3688 = vadd.f32 %v3662, %v3686
      %v3689 = vadd.f32 %v3667, %v3686
      %v3690 = vadd.f32 %v3672, %v3686
      %v3691 = vadd.f32 %v3677, %v3686
      %v3692 = vxor.u32 %v3688, 2147483648
      %v3693 = vxor.u32 %v3689, 2147483648
      %v3694 = vxor.u32 %v3690, 2147483648
      %v3695 = vxor.u32 %v3691, 2147483648
      %v3696 = vmul.f32 %v3692, 1.442695
      %v3697 = vpow.pop %v3696
      %v3698 = vmul.f32 %v3693, 1.442695
      %v3699 = vpow.pop %v3698
      %v3700 = vmul.f32 %v3694, 1.442695
      %v3701 = vpow.pop %v3700
      %v3702 = vmul.f32 %v3695, 1.442695
      %v3703 = vpow.pop %v3702
      %v3704 = vadd.f32 %v3697, 1.0
      %v3705 = vadd.f32 %v3699, 1.0
      %v3706 = vadd.f32 %v3701, 1.0
      %v3707 = vadd.f32 %v3703, 1.0
      %v3708 = vrcp.pop %v3704
      %v3709 = vmul.f32 1.0, %v3708
      %v3710 = vrcp.pop %v3705
      %v3711 = vmul.f32 1.0, %v3710
      %v3712 = vrcp.pop %v3706
      %v3713 = vmul.f32 1.0, %v3712
      %v3714 = vrcp.pop %v3707
      %v3715 = vmul.f32 1.0, %v3714
      %v3716 = vmax.f32 %v3688, 0.0
      %v3717 = vmax.f32 %v3689, 0.0
      %v3718 = vmax.f32 %v3690, 0.0
      %v3719 = vmax.f32 %v3691, 0.0
      %s3720 = scalar_lea.vmem %s17, 32
      %v3721 = vld [vmem:[%s3720] sm:$0xff]
      %v3722 = vld [vmem:[%s3720 + $0x8] sm:$0xff]
      %v3723 = vld [vmem:[%s3720 + $0x10] sm:$0xff]
      %v3724 = vld [vmem:[%s3720 + $0x18] sm:$0xff]
      %s3725 = scalar_lea.vmem %s18, 1
      %v3726 = vld [vmem:[%s3725] sm:$0x1]
      %v3728 = vlaneseq
      %v3729 = vshrl.u32 %v3728, 7
      %v3730 = vsub.s32 0, %v3729
      %v3731 = vrot.slane %v3726, %v3730
      %3737 = vrot.lane.b32.xlu0 %v3716, 96
      %v3738 = vpop.permute.xlu0 %3737
      %3739 = vrot.lane.b32.xlu0 %v3717, 96
      %v3740 = vpop.permute.xlu0 %3739
      %3741 = vrot.lane.b32.xlu0 %v3718, 96
      %v3742 = vpop.permute.xlu0 %3741
      %3743 = vrot.lane.b32.xlu0 %v3719, 96
      %v3744 = vpop.permute.xlu0 %3743
      %v3745 = vsel %vm1126, %v3738, 0
      %v3747 = vsel %vm1126, %v3740, 0
      %v3749 = vsel %vm1126, %v3742, 0
      %v3751 = vsel %vm1126, %v3744, 0
      %3753 = vmatprep.subr.mxu0 0.0
      %3754 = vmatpush1.msra.mxu0 %v3721
      %3755 = vmatprep.subr.mxu0 0.0
      %3756 = vmatpush1.msra.mxu0 %v3722
      %3757 = vmatprep.subr.mxu0 0.0
      %3758 = vmatpush1.msra.mxu0 %v3723
      %3759 = vmatprep.subr.mxu0 0.0
      %3760 = vmatpush1.msra.mxu0 %v3724
      %3761 = vmatprep.subr.mxu0 0.0
      %3762 = vmatpush1.msra.mxu0 0.0
      %3763 = vmatprep.subr.mxu0 0.0
      %3764 = vmatpush1.msra.mxu0 0.0
      %3765 = vmatprep.subr.mxu0 0.0
      %3766 = vmatpush1.msra.mxu0 0.0
      %3767 = vmatprep.subr.mxu0 0.0
      %3768 = vmatpush1.msra.mxu0 0.0
      %3769 = vmatprep.subr.mxu0 0.0
      %3770 = vmatpush1.msra.mxu0 0.0
      %3771 = vmatprep.subr.mxu0 0.0
      %3772 = vmatpush1.msra.mxu0 0.0
      %3773 = vmatprep.subr.mxu0 0.0
      %3774 = vmatpush1.msra.mxu0 0.0
      %3775 = vmatprep.subr.mxu0 0.0
      %3776 = vmatpush1.msra.mxu0 0.0
      %3777 = vmatprep.subr.mxu0 0.0
      %3778 = vmatpush1.msra.mxu0 0.0
      %3779 = vmatprep.subr.mxu0 0.0
      %3780 = vmatpush1.msra.mxu0 0.0
      %3781 = vmatprep.subr.mxu0 0.0
      %3782 = vmatpush1.msra.mxu0 0.0
      %3783 = vmatprep.subr.mxu0 0.0
      %3784 = vmatpush1.msra.mxu0 0.0
      %3785 = vmatprep.subr.mxu0 0.0
      %3786 = vmatpush1.msra.mxu0 0.0
      %3787 = vmatprep.subr.mxu0 0.0
      %3788 = vmatpush1.msra.mxu0 0.0
      %3789 = vmatprep.subr.mxu0 0.0
      %3790 = vmatpush1.msra.mxu0 0.0
      %3791 = vmatprep.subr.mxu0 0.0
      %3792 = vmatpush1.msra.mxu0 0.0
      %3793 = vmatprep.subr.mxu0 0.0
      %3794 = vmatpush1.msra.mxu0 0.0
      %3795 = vmatprep.subr.mxu0 0.0
      %3796 = vmatpush1.msra.mxu0 0.0
      %3797 = vmatprep.subr.mxu0 0.0
      %3798 = vmatpush1.msra.mxu0 0.0
      %3799 = vmatprep.subr.mxu0 0.0
      %3800 = vmatpush1.msra.mxu0 0.0
      %3801 = vmatprep.subr.mxu0 0.0
      %3802 = vmatpush1.msra.mxu0 0.0
      %3803 = vmatprep.subr.mxu0 0.0
      %3804 = vmatpush1.msra.mxu0 0.0
      %3805 = vmatprep.subr.mxu0 0.0
      %3806 = vmatpush1.msra.mxu0 0.0
      %3807 = vmatprep.subr.mxu0 0.0
      %3808 = vmatpush1.msra.mxu0 0.0
      %3809 = vmatprep.subr.mxu0 0.0
      %3810 = vmatpush1.msra.mxu0 0.0
      %3811 = vmatprep.subr.mxu0 0.0
      %3812 = vmatpush1.msra.mxu0 0.0
      %3813 = vmatprep.subr.mxu0 0.0
      %3814 = vmatpush1.msra.mxu0 0.0
      %3815 = vmatprep.subr.mxu0 0.0
      %3816 = vmatpush1.msra.mxu0 0.0
      %3817 = vmatprep.mubr.f32.mxu0 0.0
      %3818 = vmatmul.mubr.f32.gmra.mrb[0].mxu0 %v3745
      %v3819 = vpop.f32.mrb[0].mxu0
      %v3820 = vadd.f32 %v3731, %v3819
      %v3821 = vpop.f32.mrb[0].mxu0
      %3822 = vmatprep.mubr.f32.mxu0 0.0
      %3823 = vmatmul.mubr.f32.gmra.mrb[0].mxu0 %v3747
      %v3824 = vpop.f32.mrb[0].mxu0
      %v3825 = vadd.f32 %v3731, %v3824
      %v3826 = vpop.f32.mrb[0].mxu0
      %3827 = vmatprep.mubr.f32.mxu0 0.0
      %3828 = vmatmul.mubr.f32.gmra.mrb[0].mxu0 %v3749
      %v3829 = vpop.f32.mrb[0].mxu0
      %v3830 = vadd.f32 %v3731, %v3829
      %v3831 = vpop.f32.mrb[0].mxu0
      %3832 = vmatprep.mubr.f32.mxu0 0.0
      %3833 = vmatmul.mubr.f32.gmra.mrb[0].mxu0 %v3751
      %v3834 = vpop.f32.mrb[0].mxu0
      %v3835 = vadd.f32 %v3731, %v3834
      %v3836 = vpop.f32.mrb[0].mxu0
      %3837 = vdwg.mxu0
      %v3838 = vmul.f32 %v3709, %v3820
      %v3839 = vmul.f32 %v3711, %v3825
      %v3840 = vmul.f32 %v3713, %v3830
      %v3841 = vmul.f32 %v3715, %v3835
      %v3842 = vsub.f32 1.0, %v3709
      %v3843 = vsub.f32 1.0, %v3711
      %v3844 = vsub.f32 1.0, %v3713
      %v3845 = vsub.f32 1.0, %v3715
      %v3846 = vmul.f32 %v3842, %v2568
      %v3847 = vmul.f32 %v3843, %v2569
      %v3848 = vmul.f32 %v3844, %v2570
      %v3849 = vmul.f32 %v3845, %v2571
      %v3850 = vadd.f32 %v3838, %v3846
      %v3851 = vadd.f32 %v3839, %v3847
      %v3852 = vadd.f32 %v3840, %v3848
      %v3853 = vadd.f32 %v3841, %v3849
      %s3854 = scalar_lea.vmem %s19, 1
      %v3855 = vld [vmem:[%s3854] sm:$0x1]
      %s3856 = scalar_lea.vmem %s20, 1
      %v3857 = vld [vmem:[%s3856] sm:$0x1]
      %v3858 = vsel %vm1126, %v3850, 0.0
      %3859 = vadd.xlane.f32.xlu0 %v3858
      %v3860 = vpop.xlane.xlu0 %3859
      %v3861 = vsel %vm1126, %v3851, 0.0
      %3862 = vadd.xlane.f32.xlu0 %v3861
      %v3863 = vpop.xlane.xlu0 %3862
      %v3864 = vsel %vm1126, %v3852, 0.0
      %3865 = vadd.xlane.f32.xlu0 %v3864
      %v3866 = vpop.xlane.xlu0 %3865
      %v3867 = vsel %vm1126, %v3853, 0.0
      %3868 = vadd.xlane.f32.xlu0 %v3867
      %v3869 = vpop.xlane.xlu0 %3868
      %v3870 = vmul.f32 %v3860, %v2511
      %v3871 = vmul.f32 %v3863, %v2511
      %v3872 = vmul.f32 %v3866, %v2511
      %v3873 = vmul.f32 %v3869, %v2511
      %v3874 = vsub.f32 %v3850, %v3870
      %v3875 = vsub.f32 %v3851, %v3871
      %v3876 = vsub.f32 %v3852, %v3872
      %v3877 = vsub.f32 %v3853, %v3873
      %v3878 = vmul.f32 %v3874, %v3874
      %v3879 = vmul.f32 %v3875, %v3875
      %v3880 = vmul.f32 %v3876, %v3876
      %v3881 = vmul.f32 %v3877, %v3877
      %v3882 = vsel %vm1126, %v3878, 0.0
      %3883 = vadd.xlane.f32.xlu0 %v3882
      %v3884 = vpop.xlane.xlu0 %3883
      %v3885 = vsel %vm1126, %v3879, 0.0
      %3886 = vadd.xlane.f32.xlu0 %v3885
      %v3887 = vpop.xlane.xlu0 %3886
      %v3888 = vsel %vm1126, %v3880, 0.0
      %3889 = vadd.xlane.f32.xlu0 %v3888
      %v3890 = vpop.xlane.xlu0 %3889
      %v3891 = vsel %vm1126, %v3881, 0.0
      %3892 = vadd.xlane.f32.xlu0 %v3891
      %v3893 = vpop.xlane.xlu0 %3892
      %v3894 = vmul.f32 %v3884, %v2511
      %v3895 = vmul.f32 %v3887, %v2511
      %v3896 = vmul.f32 %v3890, %v2511
      %v3897 = vmul.f32 %v3893, %v2511
      %v3898 = vadd.f32 %v3894, 1e-05
      %v3899 = vadd.f32 %v3895, 1e-05
      %v3900 = vadd.f32 %v3896, 1e-05
      %v3901 = vadd.f32 %v3897, 1e-05
      %v3902 = vrsqrt.pop %v3898
      %v3903 = vrsqrt.pop %v3899
      %v3904 = vrsqrt.pop %v3900
      %v3905 = vrsqrt.pop %v3901
      %v3906 = vmul.f32 %v3874, %v3902
      %v3907 = vmul.f32 %v3875, %v3903
      %v3908 = vmul.f32 %v3876, %v3904
      %v3909 = vmul.f32 %v3877, %v3905
      %v3911 = vlaneseq
      %v3912 = vshrl.u32 %v3911, 7
      %v3913 = vsub.s32 0, %v3912
      %v3914 = vrot.slane %v3855, %v3913
      %v3916 = vmul.f32 %v3906, %v3914
      %v3917 = vmul.f32 %v3907, %v3914
      %v3918 = vmul.f32 %v3908, %v3914
      %v3919 = vmul.f32 %v3909, %v3914
      %v3921 = vlaneseq
      %v3922 = vshrl.u32 %v3921, 7
      %v3923 = vsub.s32 0, %v3922
      %v3924 = vrot.slane %v3857, %v3923
      %v3926 = vadd.f32 %v3916, %v3924
      %v3927 = vadd.f32 %v3917, %v3924
      %v3928 = vadd.f32 %v3918, %v3924
      %v3929 = vadd.f32 %v3919, %v3924
      %v3930 = vld [vmem:[%s5] sm:$0xf]
      %v3931 = vld [vmem:[%s5 + $0x4] sm:$0xf]
      %v3932 = vld [vmem:[%s5 + $0x8] sm:$0xf]
      %v3933 = vld [vmem:[%s5 + $0xc] sm:$0xf]
      %v3934 = vunpack.c.l.bf16 %v3930
      %v3935 = vunpack.c.l.bf16 %v3931
      %v3936 = vunpack.c.l.bf16 %v3932
      %v3937 = vunpack.c.l.bf16 %v3933
      %v3938 = vld [vmem:[%s21] sm:$0xff]
      %v3939 = vld [vmem:[%s21 + $0x8] sm:$0xff]
      %v3940 = vld [vmem:[%s21 + $0x10] sm:$0xff]
      %v3941 = vld [vmem:[%s21 + $0x18] sm:$0xff]
      %v3942 = vld [vmem:[%s22] sm:$0x1]
      %v3944 = vlaneseq
      %v3945 = vshrl.u32 %v3944, 7
      %v3946 = vsub.s32 0, %v3945
      %v3947 = vrot.slane %v3942, %v3946
      %v3950 = vsel %vm1126, %v3926, 0
      %v3953 = vsel %vm1126, %v3927, 0
      %v3956 = vsel %vm1126, %v3928, 0
      %v3959 = vsel %vm1126, %v3929, 0
      %3961 = vmatprep.subr.mxu0 0.0
      %3962 = vmatpush1.msra.mxu0 %v3938
      %3963 = vmatprep.subr.mxu0 0.0
      %3964 = vmatpush1.msra.mxu0 %v3939
      %3965 = vmatprep.subr.mxu0 0.0
      %3966 = vmatpush1.msra.mxu0 %v3940
      %3967 = vmatprep.subr.mxu0 0.0
      %3968 = vmatpush1.msra.mxu0 %v3941
      %3969 = vmatprep.subr.mxu0 0.0
      %3970 = vmatpush1.msra.mxu0 0.0
      %3971 = vmatprep.subr.mxu0 0.0
      %3972 = vmatpush1.msra.mxu0 0.0
      %3973 = vmatprep.subr.mxu0 0.0
      %3974 = vmatpush1.msra.mxu0 0.0
      %3975 = vmatprep.subr.mxu0 0.0
      %3976 = vmatpush1.msra.mxu0 0.0
      %3977 = vmatprep.subr.mxu0 0.0
      %3978 = vmatpush1.msra.mxu0 0.0
      %3979 = vmatprep.subr.mxu0 0.0
      %3980 = vmatpush1.msra.mxu0 0.0
      %3981 = vmatprep.subr.mxu0 0.0
      %3982 = vmatpush1.msra.mxu0 0.0
      %3983 = vmatprep.subr.mxu0 0.0
      %3984 = vmatpush1.msra.mxu0 0.0
      %3985 = vmatprep.subr.mxu0 0.0
      %3986 = vmatpush1.msra.mxu0 0.0
      %3987 = vmatprep.subr.mxu0 0.0
      %3988 = vmatpush1.msra.mxu0 0.0
      %3989 = vmatprep.subr.mxu0 0.0
      %3990 = vmatpush1.msra.mxu0 0.0
      %3991 = vmatprep.subr.mxu0 0.0
      %3992 = vmatpush1.msra.mxu0 0.0
      %3993 = vmatprep.subr.mxu0 0.0
      %3994 = vmatpush1.msra.mxu0 0.0
      %3995 = vmatprep.subr.mxu0 0.0
      %3996 = vmatpush1.msra.mxu0 0.0
      %3997 = vmatprep.subr.mxu0 0.0
      %3998 = vmatpush1.msra.mxu0 0.0
      %3999 = vmatprep.subr.mxu0 0.0
      %4000 = vmatpush1.msra.mxu0 0.0
      %4001 = vmatprep.subr.mxu0 0.0
      %4002 = vmatpush1.msra.mxu0 0.0
      %4003 = vmatprep.subr.mxu0 0.0
      %4004 = vmatpush1.msra.mxu0 0.0
      %4005 = vmatprep.subr.mxu0 0.0
      %4006 = vmatpush1.msra.mxu0 0.0
      %4007 = vmatprep.subr.mxu0 0.0
      %4008 = vmatpush1.msra.mxu0 0.0
      %4009 = vmatprep.subr.mxu0 0.0
      %4010 = vmatpush1.msra.mxu0 0.0
      %4011 = vmatprep.subr.mxu0 0.0
      %4012 = vmatpush1.msra.mxu0 0.0
      %4013 = vmatprep.subr.mxu0 0.0
      %4014 = vmatpush1.msra.mxu0 0.0
      %4015 = vmatprep.subr.mxu0 0.0
      %4016 = vmatpush1.msra.mxu0 0.0
      %4017 = vmatprep.subr.mxu0 0.0
      %4018 = vmatpush1.msra.mxu0 0.0
      %4019 = vmatprep.subr.mxu0 0.0
      %4020 = vmatpush1.msra.mxu0 0.0
      %4021 = vmatprep.subr.mxu0 0.0
      %4022 = vmatpush1.msra.mxu0 0.0
      %4023 = vmatprep.subr.mxu0 0.0
      %4024 = vmatpush1.msra.mxu0 0.0
      %4025 = vmatprep.mubr.f32.mxu0 0.0
      %4026 = vmatmul.mubr.f32.gmra.mrb[0].mxu0 %v3950
      %v4027 = vpop.f32.mrb[0].mxu0
      %v4028 = vadd.f32 %v3947, %v4027
      %v4029 = vpop.f32.mrb[0].mxu0
      %4030 = vmatprep.mubr.f32.mxu0 0.0
      %4031 = vmatmul.mubr.f32.gmra.mrb[0].mxu0 %v3953
      %v4032 = vpop.f32.mrb[0].mxu0
      %v4033 = vadd.f32 %v3947, %v4032
      %v4034 = vpop.f32.mrb[0].mxu0
      %4035 = vmatprep.mubr.f32.mxu0 0.0
      %4036 = vmatmul.mubr.f32.gmra.mrb[0].mxu0 %v3956
      %v4037 = vpop.f32.mrb[0].mxu0
      %v4038 = vadd.f32 %v3947, %v4037
      %v4039 = vpop.f32.mrb[0].mxu0
      %4040 = vmatprep.mubr.f32.mxu0 0.0
      %4041 = vmatmul.mubr.f32.gmra.mrb[0].mxu0 %v3959
      %v4042 = vpop.f32.mrb[0].mxu0
      %v4043 = vadd.f32 %v3947, %v4042
      %v4044 = vpop.f32.mrb[0].mxu0
      %4045 = vdwg.mxu0
      %v4046 = vld [vmem:[%s23] sm:$0xff]
      %v4047 = vld [vmem:[%s23 + $0x8] sm:$0xff]
      %v4048 = vld [vmem:[%s23 + $0x10] sm:$0xff]
      %v4049 = vld [vmem:[%s23 + $0x18] sm:$0xff]
      %4054 = vrot.lane.b32.xlu0 %v4028, 96
      %v4055 = vpop.permute.xlu0 %4054
      %4056 = vrot.lane.b32.xlu0 %v4033, 96
      %v4057 = vpop.permute.xlu0 %4056
      %4058 = vrot.lane.b32.xlu0 %v4038, 96
      %v4059 = vpop.permute.xlu0 %4058
      %4060 = vrot.lane.b32.xlu0 %v4043, 96
      %v4061 = vpop.permute.xlu0 %4060
      %vm4062 = vcmask 64512
      %v4063 = vsel %vm4062, %v4028, 0
      %v4065 = vsel %vm4062, %v4033, 0
      %v4067 = vsel %vm4062, %v4038, 0
      %v4069 = vsel %vm4062, %v4043, 0
      %v4071 = vsel %vm4062, %v4055, 0
      %v4073 = vsel %vm4062, %v4057, 0
      %v4075 = vsel %vm4062, %v4059, 0
      %v4077 = vsel %vm4062, %v4061, 0
      %4079 = vmatprep.subr.mxu0 0.0
      %4080 = vmatpush1.xpose.msra.mxu0 %v4071
      %4081 = vmatprep.subr.mxu0 0.0
      %4082 = vmatpush1.xpose.msra.mxu0 %v4073
      %4083 = vmatprep.subr.mxu0 0.0
      %4084 = vmatpush1.xpose.msra.mxu0 %v4075
      %4085 = vmatprep.subr.mxu0 0.0
      %4086 = vmatpush1.xpose.msra.mxu0 %v4077
      %4087 = vmatprep.subr.mxu0 0.0
      %4088 = vmatpush1.xpose.msra.mxu0 0.0
      %4089 = vmatprep.subr.mxu0 0.0
      %4090 = vmatpush1.xpose.msra.mxu0 0.0
      %4091 = vmatprep.subr.mxu0 0.0
      %4092 = vmatpush1.xpose.msra.mxu0 0.0
      %4093 = vmatprep.subr.mxu0 0.0
      %4094 = vmatpush1.xpose.msra.mxu0 0.0
      %4095 = vmatprep.subr.mxu0 0.0
      %4096 = vmatpush1.xpose.msra.mxu0 0.0
      %4097 = vmatprep.subr.mxu0 0.0
      %4098 = vmatpush1.xpose.msra.mxu0 0.0
      %4099 = vmatprep.subr.mxu0 0.0
      %4100 = vmatpush1.xpose.msra.mxu0 0.0
      %4101 = vmatprep.subr.mxu0 0.0
      %4102 = vmatpush1.xpose.msra.mxu0 0.0
      %4103 = vmatprep.subr.mxu0 0.0
      %4104 = vmatpush1.xpose.msra.mxu0 0.0
      %4105 = vmatprep.subr.mxu0 0.0
      %4106 = vmatpush1.xpose.msra.mxu0 0.0
      %4107 = vmatprep.subr.mxu0 0.0
      %4108 = vmatpush1.xpose.msra.mxu0 0.0
      %4109 = vmatprep.subr.mxu0 0.0
      %4110 = vmatpush1.xpose.msra.mxu0 0.0
      %4111 = vmatprep.subr.mxu0 0.0
      %4112 = vmatpush1.xpose.msra.mxu0 0.0
      %4113 = vmatprep.subr.mxu0 0.0
      %4114 = vmatpush1.xpose.msra.mxu0 0.0
      %4115 = vmatprep.subr.mxu0 0.0
      %4116 = vmatpush1.xpose.msra.mxu0 0.0
      %4117 = vmatprep.subr.mxu0 0.0
      %4118 = vmatpush1.xpose.msra.mxu0 0.0
      %4119 = vmatprep.subr.mxu0 0.0
      %4120 = vmatpush1.xpose.msra.mxu0 0.0
      %4121 = vmatprep.subr.mxu0 0.0
      %4122 = vmatpush1.xpose.msra.mxu0 0.0
      %4123 = vmatprep.subr.mxu0 0.0
      %4124 = vmatpush1.xpose.msra.mxu0 0.0
      %4125 = vmatprep.subr.mxu0 0.0
      %4126 = vmatpush1.xpose.msra.mxu0 0.0
      %4127 = vmatprep.subr.mxu0 0.0
      %4128 = vmatpush1.xpose.msra.mxu0 0.0
      %4129 = vmatprep.subr.mxu0 0.0
      %4130 = vmatpush1.xpose.msra.mxu0 0.0
      %4131 = vmatprep.subr.mxu0 0.0
      %4132 = vmatpush1.xpose.msra.mxu0 0.0
      %4133 = vmatprep.subr.mxu0 0.0
      %4134 = vmatpush1.xpose.msra.mxu0 0.0
      %4135 = vmatprep.subr.mxu0 0.0
      %4136 = vmatpush1.xpose.msra.mxu0 0.0
      %4137 = vmatprep.subr.mxu0 0.0
      %4138 = vmatpush1.xpose.msra.mxu0 0.0
      %4139 = vmatprep.subr.mxu0 0.0
      %4140 = vmatpush1.xpose.msra.mxu0 0.0
      %4141 = vmatprep.subr.mxu0 0.0
      %4142 = vmatpush1.xpose.msra.mxu0 0.0
      %4143 = vmatprep.mubr.f32.mxu0 0.0
      %4144 = vmatmul.mubr.f32.gmra.mrb[0].mxu0 %v4063
      %v4145 = vpop.f32.mrb[0].mxu0
      %v4146 = vadd.f32 0.0, %v4145
      %v4147 = vpop.f32.mrb[0].mxu0
      %4148 = vmatprep.mubr.f32.mxu0 0.0
      %4149 = vmatmul.mubr.f32.gmra.mrb[0].mxu0 %v4065
      %v4150 = vpop.f32.mrb[0].mxu0
      %v4151 = vadd.f32 0.0, %v4150
      %v4152 = vpop.f32.mrb[0].mxu0
      %4153 = vmatprep.mubr.f32.mxu0 0.0
      %4154 = vmatmul.mubr.f32.gmra.mrb[0].mxu0 %v4067
      %v4155 = vpop.f32.mrb[0].mxu0
      %v4156 = vadd.f32 0.0, %v4155
      %v4157 = vpop.f32.mrb[0].mxu0
      %4158 = vmatprep.mubr.f32.mxu0 0.0
      %4159 = vmatmul.mubr.f32.gmra.mrb[0].mxu0 %v4069
      %v4160 = vpop.f32.mrb[0].mxu0
      %v4161 = vadd.f32 0.0, %v4160
      %v4162 = vpop.f32.mrb[0].mxu0
      %4163 = vdwg.mxu0
      %v4164 = vmul.f32 %v4146, 0.35355338
      %v4165 = vmul.f32 %v4151, 0.35355338
      %v4166 = vmul.f32 %v4156, 0.35355338
      %v4167 = vmul.f32 %v4161, 0.35355338
      %v4168 = vadd.f32 %v4164, %v3934
      %v4169 = vadd.f32 %v4165, %v3935
      %v4170 = vadd.f32 %v4166, %v3936
      %v4171 = vadd.f32 %v4167, %v3937
      %v4172 = vsel %vm1126, %v4168, -inf
      %4173 = vmax.xlane.f32.xlu0 %v4172
      %v4174 = vpop.xlane.xlu0 %4173
      %v4175 = vsel %vm1126, %v4169, -inf
      %4176 = vmax.xlane.f32.xlu0 %v4175
      %v4177 = vpop.xlane.xlu0 %4176
      %v4178 = vsel %vm1126, %v4170, -inf
      %4179 = vmax.xlane.f32.xlu0 %v4178
      %v4180 = vpop.xlane.xlu0 %4179
      %v4181 = vsel %vm1126, %v4171, -inf
      %4182 = vmax.xlane.f32.xlu0 %v4181
      %v4183 = vpop.xlane.xlu0 %4182
      %v4184 = vsub.f32 %v4168, %v4174
      %v4185 = vsub.f32 %v4169, %v4177
      %v4186 = vsub.f32 %v4170, %v4180
      %v4187 = vsub.f32 %v4171, %v4183
      %v4188 = vmul.f32 %v4184, 1.442695
      %v4189 = vpow.pop %v4188
      %v4190 = vmul.f32 %v4185, 1.442695
      %v4191 = vpow.pop %v4190
      %v4192 = vmul.f32 %v4186, 1.442695
      %v4193 = vpow.pop %v4192
      %v4194 = vmul.f32 %v4187, 1.442695
      %v4195 = vpow.pop %v4194
      %v4196 = vsel %vm1126, %v4189, 0.0
      %4197 = vadd.xlane.f32.xlu0 %v4196
      %v4198 = vpop.xlane.xlu0 %4197
      %v4199 = vsel %vm1126, %v4191, 0.0
      %4200 = vadd.xlane.f32.xlu0 %v4199
      %v4201 = vpop.xlane.xlu0 %4200
      %v4202 = vsel %vm1126, %v4193, 0.0
      %4203 = vadd.xlane.f32.xlu0 %v4202
      %v4204 = vpop.xlane.xlu0 %4203
      %v4205 = vsel %vm1126, %v4195, 0.0
      %4206 = vadd.xlane.f32.xlu0 %v4205
      %v4207 = vpop.xlane.xlu0 %4206
      %v4208 = vrcp.pop %v4198
      %v4209 = vrcp.pop %v4201
      %v4210 = vrcp.pop %v4204
      %v4211 = vrcp.pop %v4207
      %v4212 = vmul.f32 %v4189, %v4208
      %v4213 = vmul.f32 %v4191, %v4209
      %v4214 = vmul.f32 %v4193, %v4210
      %v4215 = vmul.f32 %v4195, %v4211
      %4216 = vrot.lane.b32.xlu0 %v4028, 64
      %v4217 = vpop.permute.xlu0 %4216
      %4218 = vrot.lane.b32.xlu0 %v4033, 64
      %v4219 = vpop.permute.xlu0 %4218
      %4220 = vrot.lane.b32.xlu0 %v4038, 64
      %v4221 = vpop.permute.xlu0 %4220
      %4222 = vrot.lane.b32.xlu0 %v4043, 64
      %v4223 = vpop.permute.xlu0 %4222
      %v4229 = vsel %vm1126, %v4212, 0
      %v4232 = vsel %vm1126, %v4213, 0
      %v4235 = vsel %vm1126, %v4214, 0
      %v4238 = vsel %vm1126, %v4215, 0
      %4240 = vmatprep.subr.mxu0 0.0
      %4241 = vmatpush1.msra.mxu0 %v4217
      %4242 = vmatprep.subr.mxu0 0.0
      %4243 = vmatpush1.msra.mxu0 %v4219
      %4244 = vmatprep.subr.mxu0 0.0
      %4245 = vmatpush1.msra.mxu0 %v4221
      %4246 = vmatprep.subr.mxu0 0.0
      %4247 = vmatpush1.msra.mxu0 %v4223
      %4248 = vmatprep.subr.mxu0 0.0
      %4249 = vmatpush1.msra.mxu0 0.0
      %4250 = vmatprep.subr.mxu0 0.0
      %4251 = vmatpush1.msra.mxu0 0.0
      %4252 = vmatprep.subr.mxu0 0.0
      %4253 = vmatpush1.msra.mxu0 0.0
      %4254 = vmatprep.subr.mxu0 0.0
      %4255 = vmatpush1.msra.mxu0 0.0
      %4256 = vmatprep.subr.mxu0 0.0
      %4257 = vmatpush1.msra.mxu0 0.0
      %4258 = vmatprep.subr.mxu0 0.0
      %4259 = vmatpush1.msra.mxu0 0.0
      %4260 = vmatprep.subr.mxu0 0.0
      %4261 = vmatpush1.msra.mxu0 0.0
      %4262 = vmatprep.subr.mxu0 0.0
      %4263 = vmatpush1.msra.mxu0 0.0
      %4264 = vmatprep.subr.mxu0 0.0
      %4265 = vmatpush1.msra.mxu0 0.0
      %4266 = vmatprep.subr.mxu0 0.0
      %4267 = vmatpush1.msra.mxu0 0.0
      %4268 = vmatprep.subr.mxu0 0.0
      %4269 = vmatpush1.msra.mxu0 0.0
      %4270 = vmatprep.subr.mxu0 0.0
      %4271 = vmatpush1.msra.mxu0 0.0
      %4272 = vmatprep.subr.mxu0 0.0
      %4273 = vmatpush1.msra.mxu0 0.0
      %4274 = vmatprep.subr.mxu0 0.0
      %4275 = vmatpush1.msra.mxu0 0.0
      %4276 = vmatprep.subr.mxu0 0.0
      %4277 = vmatpush1.msra.mxu0 0.0
      %4278 = vmatprep.subr.mxu0 0.0
      %4279 = vmatpush1.msra.mxu0 0.0
      %4280 = vmatprep.subr.mxu0 0.0
      %4281 = vmatpush1.msra.mxu0 0.0
      %4282 = vmatprep.subr.mxu0 0.0
      %4283 = vmatpush1.msra.mxu0 0.0
      %4284 = vmatprep.subr.mxu0 0.0
      %4285 = vmatpush1.msra.mxu0 0.0
      %4286 = vmatprep.subr.mxu0 0.0
      %4287 = vmatpush1.msra.mxu0 0.0
      %4288 = vmatprep.subr.mxu0 0.0
      %4289 = vmatpush1.msra.mxu0 0.0
      %4290 = vmatprep.subr.mxu0 0.0
      %4291 = vmatpush1.msra.mxu0 0.0
      %4292 = vmatprep.subr.mxu0 0.0
      %4293 = vmatpush1.msra.mxu0 0.0
      %4294 = vmatprep.subr.mxu0 0.0
      %4295 = vmatpush1.msra.mxu0 0.0
      %4296 = vmatprep.subr.mxu0 0.0
      %4297 = vmatpush1.msra.mxu0 0.0
      %4298 = vmatprep.subr.mxu0 0.0
      %4299 = vmatpush1.msra.mxu0 0.0
      %4300 = vmatprep.subr.mxu0 0.0
      %4301 = vmatpush1.msra.mxu0 0.0
      %4302 = vmatprep.subr.mxu0 0.0
      %4303 = vmatpush1.msra.mxu0 0.0
      %4304 = vmatprep.mubr.f32.mxu0 0.0
      %4305 = vmatmul.mubr.f32.gmra.mrb[0].mxu0 %v4229
      %v4306 = vpop.f32.mrb[0].mxu0
      %v4307 = vadd.f32 0.0, %v4306
      %v4308 = vpop.f32.mrb[0].mxu0
      %4309 = vmatprep.mubr.f32.mxu0 0.0
      %4310 = vmatmul.mubr.f32.gmra.mrb[0].mxu0 %v4232
      %v4311 = vpop.f32.mrb[0].mxu0
      %v4312 = vadd.f32 0.0, %v4311
      %v4313 = vpop.f32.mrb[0].mxu0
      %4314 = vmatprep.mubr.f32.mxu0 0.0
      %4315 = vmatmul.mubr.f32.gmra.mrb[0].mxu0 %v4235
      %v4316 = vpop.f32.mrb[0].mxu0
      %v4317 = vadd.f32 0.0, %v4316
      %v4318 = vpop.f32.mrb[0].mxu0
      %4319 = vmatprep.mubr.f32.mxu0 0.0
      %4320 = vmatmul.mubr.f32.gmra.mrb[0].mxu0 %v4238
      %v4321 = vpop.f32.mrb[0].mxu0
      %v4322 = vadd.f32 0.0, %v4321
      %v4323 = vpop.f32.mrb[0].mxu0
      %4324 = vdwg.mxu0
      %4325 = vrot.lane.b32.xlu0 %v4028, 120
      %v4326 = vpop.permute.xlu0 %4325
      %4327 = vrot.lane.b32.xlu0 %v4033, 120
      %v4328 = vpop.permute.xlu0 %4327
      %4329 = vrot.lane.b32.xlu0 %v4038, 120
      %v4330 = vpop.permute.xlu0 %4329
      %4331 = vrot.lane.b32.xlu0 %v4043, 120
      %v4332 = vpop.permute.xlu0 %4331
      %4333 = vrot.lane.b32.xlu0 %v4028, 88
      %v4334 = vpop.permute.xlu0 %4333
      %4335 = vrot.lane.b32.xlu0 %v4033, 88
      %v4336 = vpop.permute.xlu0 %4335
      %4337 = vrot.lane.b32.xlu0 %v4038, 88
      %v4338 = vpop.permute.xlu0 %4337
      %4339 = vrot.lane.b32.xlu0 %v4043, 88
      %v4340 = vpop.permute.xlu0 %4339
      %v4341 = vsel %vm4062, %v4326, 0
      %v4343 = vsel %vm4062, %v4328, 0
      %v4345 = vsel %vm4062, %v4330, 0
      %v4347 = vsel %vm4062, %v4332, 0
      %v4349 = vsel %vm4062, %v4334, 0
      %v4351 = vsel %vm4062, %v4336, 0
      %v4353 = vsel %vm4062, %v4338, 0
      %v4355 = vsel %vm4062, %v4340, 0
      %4357 = vmatprep.subr.mxu0 0.0
      %4358 = vmatpush1.xpose.msra.mxu0 %v4349
      %4359 = vmatprep.subr.mxu0 0.0
      %4360 = vmatpush1.xpose.msra.mxu0 %v4351
      %4361 = vmatprep.subr.mxu0 0.0
      %4362 = vmatpush1.xpose.msra.mxu0 %v4353
      %4363 = vmatprep.subr.mxu0 0.0
      %4364 = vmatpush1.xpose.msra.mxu0 %v4355
      %4365 = vmatprep.subr.mxu0 0.0
      %4366 = vmatpush1.xpose.msra.mxu0 0.0
      %4367 = vmatprep.subr.mxu0 0.0
      %4368 = vmatpush1.xpose.msra.mxu0 0.0
      %4369 = vmatprep.subr.mxu0 0.0
      %4370 = vmatpush1.xpose.msra.mxu0 0.0
      %4371 = vmatprep.subr.mxu0 0.0
      %4372 = vmatpush1.xpose.msra.mxu0 0.0
      %4373 = vmatprep.subr.mxu0 0.0
      %4374 = vmatpush1.xpose.msra.mxu0 0.0
      %4375 = vmatprep.subr.mxu0 0.0
      %4376 = vmatpush1.xpose.msra.mxu0 0.0
      %4377 = vmatprep.subr.mxu0 0.0
      %4378 = vmatpush1.xpose.msra.mxu0 0.0
      %4379 = vmatprep.subr.mxu0 0.0
      %4380 = vmatpush1.xpose.msra.mxu0 0.0
      %4381 = vmatprep.subr.mxu0 0.0
      %4382 = vmatpush1.xpose.msra.mxu0 0.0
      %4383 = vmatprep.subr.mxu0 0.0
      %4384 = vmatpush1.xpose.msra.mxu0 0.0
      %4385 = vmatprep.subr.mxu0 0.0
      %4386 = vmatpush1.xpose.msra.mxu0 0.0
      %4387 = vmatprep.subr.mxu0 0.0
      %4388 = vmatpush1.xpose.msra.mxu0 0.0
      %4389 = vmatprep.subr.mxu0 0.0
      %4390 = vmatpush1.xpose.msra.mxu0 0.0
      %4391 = vmatprep.subr.mxu0 0.0
      %4392 = vmatpush1.xpose.msra.mxu0 0.0
      %4393 = vmatprep.subr.mxu0 0.0
      %4394 = vmatpush1.xpose.msra.mxu0 0.0
      %4395 = vmatprep.subr.mxu0 0.0
      %4396 = vmatpush1.xpose.msra.mxu0 0.0
      %4397 = vmatprep.subr.mxu0 0.0
      %4398 = vmatpush1.xpose.msra.mxu0 0.0
      %4399 = vmatprep.subr.mxu0 0.0
      %4400 = vmatpush1.xpose.msra.mxu0 0.0
      %4401 = vmatprep.subr.mxu0 0.0
      %4402 = vmatpush1.xpose.msra.mxu0 0.0
      %4403 = vmatprep.subr.mxu0 0.0
      %4404 = vmatpush1.xpose.msra.mxu0 0.0
      %4405 = vmatprep.subr.mxu0 0.0
      %4406 = vmatpush1.xpose.msra.mxu0 0.0
      %4407 = vmatprep.subr.mxu0 0.0
      %4408 = vmatpush1.xpose.msra.mxu0 0.0
      %4409 = vmatprep.subr.mxu0 0.0
      %4410 = vmatpush1.xpose.msra.mxu0 0.0
      %4411 = vmatprep.subr.mxu0 0.0
      %4412 = vmatpush1.xpose.msra.mxu0 0.0
      %4413 = vmatprep.subr.mxu0 0.0
      %4414 = vmatpush1.xpose.msra.mxu0 0.0
      %4415 = vmatprep.subr.mxu0 0.0
      %4416 = vmatpush1.xpose.msra.mxu0 0.0
      %4417 = vmatprep.subr.mxu0 0.0
      %4418 = vmatpush1.xpose.msra.mxu0 0.0
      %4419 = vmatprep.subr.mxu0 0.0
      %4420 = vmatpush1.xpose.msra.mxu0 0.0
      %4421 = vmatprep.mubr.f32.mxu0 0.0
      %4422 = vmatmul.mubr.f32.gmra.mrb[0].mxu0 %v4341
      %v4423 = vpop.f32.mrb[0].mxu0
      %v4424 = vadd.f32 0.0, %v4423
      %v4425 = vpop.f32.mrb[0].mxu0
      %4426 = vmatprep.mubr.f32.mxu0 0.0
      %4427 = vmatmul.mubr.f32.gmra.mrb[0].mxu0 %v4343
      %v4428 = vpop.f32.mrb[0].mxu0
      %v4429 = vadd.f32 0.0, %v4428
      %v4430 = vpop.f32.mrb[0].mxu0
      %4431 = vmatprep.mubr.f32.mxu0 0.0
      %4432 = vmatmul.mubr.f32.gmra.mrb[0].mxu0 %v4345
      %v4433 = vpop.f32.mrb[0].mxu0
      %v4434 = vadd.f32 0.0, %v4433
      %v4435 = vpop.f32.mrb[0].mxu0
      %4436 = vmatprep.mubr.f32.mxu0 0.0
      %4437 = vmatmul.mubr.f32.gmra.mrb[0].mxu0 %v4347
      %v4438 = vpop.f32.mrb[0].mxu0
      %v4439 = vadd.f32 0.0, %v4438
      %v4440 = vpop.f32.mrb[0].mxu0
      %4441 = vdwg.mxu0
      %v4442 = vmul.f32 %v4424, 0.35355338
      %v4443 = vmul.f32 %v4429, 0.35355338
      %v4444 = vmul.f32 %v4434, 0.35355338
      %v4445 = vmul.f32 %v4439, 0.35355338
      %v4446 = vadd.f32 %v4442, %v3934
      %v4447 = vadd.f32 %v4443, %v3935
      %v4448 = vadd.f32 %v4444, %v3936
      %v4449 = vadd.f32 %v4445, %v3937
      %v4450 = vsel %vm1126, %v4446, -inf
      %4451 = vmax.xlane.f32.xlu0 %v4450
      %v4452 = vpop.xlane.xlu0 %4451
      %v4453 = vsel %vm1126, %v4447, -inf
      %4454 = vmax.xlane.f32.xlu0 %v4453
      %v4455 = vpop.xlane.xlu0 %4454
      %v4456 = vsel %vm1126, %v4448, -inf
      %4457 = vmax.xlane.f32.xlu0 %v4456
      %v4458 = vpop.xlane.xlu0 %4457
      %v4459 = vsel %vm1126, %v4449, -inf
      %4460 = vmax.xlane.f32.xlu0 %v4459
      %v4461 = vpop.xlane.xlu0 %4460
      %v4462 = vsub.f32 %v4446, %v4452
      %v4463 = vsub.f32 %v4447, %v4455
      %v4464 = vsub.f32 %v4448, %v4458
      %v4465 = vsub.f32 %v4449, %v4461
      %v4466 = vmul.f32 %v4462, 1.442695
      %v4467 = vpow.pop %v4466
      %v4468 = vmul.f32 %v4463, 1.442695
      %v4469 = vpow.pop %v4468
      %v4470 = vmul.f32 %v4464, 1.442695
      %v4471 = vpow.pop %v4470
      %v4472 = vmul.f32 %v4465, 1.442695
      %v4473 = vpow.pop %v4472
      %v4474 = vsel %vm1126, %v4467, 0.0
      %4475 = vadd.xlane.f32.xlu0 %v4474
      %v4476 = vpop.xlane.xlu0 %4475
      %v4477 = vsel %vm1126, %v4469, 0.0
      %4478 = vadd.xlane.f32.xlu0 %v4477
      %v4479 = vpop.xlane.xlu0 %4478
      %v4480 = vsel %vm1126, %v4471, 0.0
      %4481 = vadd.xlane.f32.xlu0 %v4480
      %v4482 = vpop.xlane.xlu0 %4481
      %v4483 = vsel %vm1126, %v4473, 0.0
      %4484 = vadd.xlane.f32.xlu0 %v4483
      %v4485 = vpop.xlane.xlu0 %4484
      %v4486 = vrcp.pop %v4476
      %v4487 = vrcp.pop %v4479
      %v4488 = vrcp.pop %v4482
      %v4489 = vrcp.pop %v4485
      %v4490 = vmul.f32 %v4467, %v4486
      %v4491 = vmul.f32 %v4469, %v4487
      %v4492 = vmul.f32 %v4471, %v4488
      %v4493 = vmul.f32 %v4473, %v4489
      %4494 = vrot.lane.b32.xlu0 %v4028, 56
      %v4495 = vpop.permute.xlu0 %4494
      %4496 = vrot.lane.b32.xlu0 %v4033, 56
      %v4497 = vpop.permute.xlu0 %4496
      %4498 = vrot.lane.b32.xlu0 %v4038, 56
      %v4499 = vpop.permute.xlu0 %4498
      %4500 = vrot.lane.b32.xlu0 %v4043, 56
      %v4501 = vpop.permute.xlu0 %4500
      %v4507 = vsel %vm1126, %v4490, 0
      %v4510 = vsel %vm1126, %v4491, 0
      %v4513 = vsel %vm1126, %v4492, 0
      %v4516 = vsel %vm1126, %v4493, 0
      %4518 = vmatprep.subr.mxu0 0.0
      %4519 = vmatpush1.msra.mxu0 %v4495
      %4520 = vmatprep.subr.mxu0 0.0
      %4521 = vmatpush1.msra.mxu0 %v4497
      %4522 = vmatprep.subr.mxu0 0.0
      %4523 = vmatpush1.msra.mxu0 %v4499
      %4524 = vmatprep.subr.mxu0 0.0
      %4525 = vmatpush1.msra.mxu0 %v4501
      %4526 = vmatprep.subr.mxu0 0.0
      %4527 = vmatpush1.msra.mxu0 0.0
      %4528 = vmatprep.subr.mxu0 0.0
      %4529 = vmatpush1.msra.mxu0 0.0
      %4530 = vmatprep.subr.mxu0 0.0
      %4531 = vmatpush1.msra.mxu0 0.0
      %4532 = vmatprep.subr.mxu0 0.0
      %4533 = vmatpush1.msra.mxu0 0.0
      %4534 = vmatprep.subr.mxu0 0.0
      %4535 = vmatpush1.msra.mxu0 0.0
      %4536 = vmatprep.subr.mxu0 0.0
      %4537 = vmatpush1.msra.mxu0 0.0
      %4538 = vmatprep.subr.mxu0 0.0
      %4539 = vmatpush1.msra.mxu0 0.0
      %4540 = vmatprep.subr.mxu0 0.0
      %4541 = vmatpush1.msra.mxu0 0.0
      %4542 = vmatprep.subr.mxu0 0.0
      %4543 = vmatpush1.msra.mxu0 0.0
      %4544 = vmatprep.subr.mxu0 0.0
      %4545 = vmatpush1.msra.mxu0 0.0
      %4546 = vmatprep.subr.mxu0 0.0
      %4547 = vmatpush1.msra.mxu0 0.0
      %4548 = vmatprep.subr.mxu0 0.0
      %4549 = vmatpush1.msra.mxu0 0.0
      %4550 = vmatprep.subr.mxu0 0.0
      %4551 = vmatpush1.msra.mxu0 0.0
      %4552 = vmatprep.subr.mxu0 0.0
      %4553 = vmatpush1.msra.mxu0 0.0
      %4554 = vmatprep.subr.mxu0 0.0
      %4555 = vmatpush1.msra.mxu0 0.0
      %4556 = vmatprep.subr.mxu0 0.0
      %4557 = vmatpush1.msra.mxu0 0.0
      %4558 = vmatprep.subr.mxu0 0.0
      %4559 = vmatpush1.msra.mxu0 0.0
      %4560 = vmatprep.subr.mxu0 0.0
      %4561 = vmatpush1.msra.mxu0 0.0
      %4562 = vmatprep.subr.mxu0 0.0
      %4563 = vmatpush1.msra.mxu0 0.0
      %4564 = vmatprep.subr.mxu0 0.0
      %4565 = vmatpush1.msra.mxu0 0.0
      %4566 = vmatprep.subr.mxu0 0.0
      %4567 = vmatpush1.msra.mxu0 0.0
      %4568 = vmatprep.subr.mxu0 0.0
      %4569 = vmatpush1.msra.mxu0 0.0
      %4570 = vmatprep.subr.mxu0 0.0
      %4571 = vmatpush1.msra.mxu0 0.0
      %4572 = vmatprep.subr.mxu0 0.0
      %4573 = vmatpush1.msra.mxu0 0.0
      %4574 = vmatprep.subr.mxu0 0.0
      %4575 = vmatpush1.msra.mxu0 0.0
      %4576 = vmatprep.subr.mxu0 0.0
      %4577 = vmatpush1.msra.mxu0 0.0
      %4578 = vmatprep.subr.mxu0 0.0
      %4579 = vmatpush1.msra.mxu0 0.0
      %4580 = vmatprep.subr.mxu0 0.0
      %4581 = vmatpush1.msra.mxu0 0.0
      %4582 = vmatprep.mubr.f32.mxu0 0.0
      %4583 = vmatmul.mubr.f32.gmra.mrb[0].mxu0 %v4507
      %v4584 = vpop.f32.mrb[0].mxu0
      %v4585 = vadd.f32 0.0, %v4584
      %v4586 = vpop.f32.mrb[0].mxu0
      %4587 = vmatprep.mubr.f32.mxu0 0.0
      %4588 = vmatmul.mubr.f32.gmra.mrb[0].mxu0 %v4510
      %v4589 = vpop.f32.mrb[0].mxu0
      %v4590 = vadd.f32 0.0, %v4589
      %v4591 = vpop.f32.mrb[0].mxu0
      %4592 = vmatprep.mubr.f32.mxu0 0.0
      %4593 = vmatmul.mubr.f32.gmra.mrb[0].mxu0 %v4513
      %v4594 = vpop.f32.mrb[0].mxu0
      %v4595 = vadd.f32 0.0, %v4594
      %v4596 = vpop.f32.mrb[0].mxu0
      %4597 = vmatprep.mubr.f32.mxu0 0.0
      %4598 = vmatmul.mubr.f32.gmra.mrb[0].mxu0 %v4516
      %v4599 = vpop.f32.mrb[0].mxu0
      %v4600 = vadd.f32 0.0, %v4599
      %v4601 = vpop.f32.mrb[0].mxu0
      %4602 = vdwg.mxu0
      %v4604 = vsel %vm4062, %v4585, 0
      %v4607 = vsel %vm4062, %v4590, 0
      %v4610 = vsel %vm4062, %v4595, 0
      %v4613 = vsel %vm4062, %v4600, 0
      %4615 = vmatprep.subr.mxu0 0.0
      %4616 = vmatpush1.msra.mxu0 %v4047
      %4617 = vmatprep.subr.mxu0 0.0
      %4618 = vmatpush1.msra.mxu0 0.0
      %4619 = vmatprep.subr.mxu0 0.0
      %4620 = vmatpush1.msra.mxu0 0.0
      %4621 = vmatprep.subr.mxu0 0.0
      %4622 = vmatpush1.msra.mxu0 0.0
      %4623 = vmatprep.subr.mxu0 0.0
      %4624 = vmatpush1.msra.mxu0 0.0
      %4625 = vmatprep.subr.mxu0 0.0
      %4626 = vmatpush1.msra.mxu0 0.0
      %4627 = vmatprep.subr.mxu0 0.0
      %4628 = vmatpush1.msra.mxu0 0.0
      %4629 = vmatprep.subr.mxu0 0.0
      %4630 = vmatpush1.msra.mxu0 0.0
      %4631 = vmatprep.subr.mxu0 0.0
      %4632 = vmatpush1.msra.mxu0 0.0
      %4633 = vmatprep.subr.mxu0 0.0
      %4634 = vmatpush1.msra.mxu0 0.0
      %4635 = vmatprep.subr.mxu0 0.0
      %4636 = vmatpush1.msra.mxu0 0.0
      %4637 = vmatprep.subr.mxu0 0.0
      %4638 = vmatpush1.msra.mxu0 0.0
      %4639 = vmatprep.subr.mxu0 0.0
      %4640 = vmatpush1.msra.mxu0 0.0
      %4641 = vmatprep.subr.mxu0 0.0
      %4642 = vmatpush1.msra.mxu0 0.0
      %4643 = vmatprep.subr.mxu0 0.0
      %4644 = vmatpush1.msra.mxu0 0.0
      %4645 = vmatprep.subr.mxu0 0.0
      %4646 = vmatpush1.msra.mxu0 0.0
      %4647 = vmatprep.subr.mxu0 0.0
      %4648 = vmatpush1.msra.mxu0 0.0
      %4649 = vmatprep.subr.mxu0 0.0
      %4650 = vmatpush1.msra.mxu0 0.0
      %4651 = vmatprep.subr.mxu0 0.0
      %4652 = vmatpush1.msra.mxu0 0.0
      %4653 = vmatprep.subr.mxu0 0.0
      %4654 = vmatpush1.msra.mxu0 0.0
      %4655 = vmatprep.subr.mxu0 0.0
      %4656 = vmatpush1.msra.mxu0 0.0
      %4657 = vmatprep.subr.mxu0 0.0
      %4658 = vmatpush1.msra.mxu0 0.0
      %4659 = vmatprep.subr.mxu0 0.0
      %4660 = vmatpush1.msra.mxu0 0.0
      %4661 = vmatprep.subr.mxu0 0.0
      %4662 = vmatpush1.msra.mxu0 0.0
      %4663 = vmatprep.subr.mxu0 0.0
      %4664 = vmatpush1.msra.mxu0 0.0
      %4665 = vmatprep.subr.mxu0 0.0
      %4666 = vmatpush1.msra.mxu0 0.0
      %4667 = vmatprep.subr.mxu0 0.0
      %4668 = vmatpush1.msra.mxu0 0.0
      %4669 = vmatprep.subr.mxu0 0.0
      %4670 = vmatpush1.msra.mxu0 0.0
      %4671 = vmatprep.subr.mxu0 0.0
      %4672 = vmatpush1.msra.mxu0 0.0
      %4673 = vmatprep.subr.mxu0 0.0
      %4674 = vmatpush1.msra.mxu0 0.0
      %4675 = vmatprep.subr.mxu0 0.0
      %4676 = vmatpush1.msra.mxu0 0.0
      %4677 = vmatprep.subr.mxu0 0.0
      %4678 = vmatpush1.msra.mxu0 0.0
      %4679 = vmatprep.mubr.f32.mxu0 0.0
      %4680 = vmatmul.mubr.f32.gmra.mrb[0].mxu0 %v4604
      %v4681 = vpop.f32.mrb[0].mxu0
      %v4682 = vadd.f32 0.0, %v4681
      %v4683 = vpop.f32.mrb[0].mxu0
      %4684 = vmatprep.mubr.f32.mxu0 0.0
      %4685 = vmatmul.mubr.f32.gmra.mrb[0].mxu0 %v4607
      %v4686 = vpop.f32.mrb[0].mxu0
      %v4687 = vadd.f32 0.0, %v4686
      %v4688 = vpop.f32.mrb[0].mxu0
      %4689 = vmatprep.mubr.f32.mxu0 0.0
      %4690 = vmatmul.mubr.f32.gmra.mrb[0].mxu0 %v4610
      %v4691 = vpop.f32.mrb[0].mxu0
      %v4692 = vadd.f32 0.0, %v4691
      %v4693 = vpop.f32.mrb[0].mxu0
      %4694 = vmatprep.mubr.f32.mxu0 0.0
      %4695 = vmatmul.mubr.f32.gmra.mrb[0].mxu0 %v4613
      %v4696 = vpop.f32.mrb[0].mxu0
      %v4697 = vadd.f32 0.0, %v4696
      %v4698 = vpop.f32.mrb[0].mxu0
      %4699 = vdwg.mxu0
      %v4701 = vsel %vm4062, %v4307, 0
      %v4704 = vsel %vm4062, %v4312, 0
      %v4707 = vsel %vm4062, %v4317, 0
      %v4710 = vsel %vm4062, %v4322, 0
      %4712 = vmatprep.subr.mxu0 0.0
      %4713 = vmatpush1.msra.mxu0 %v4046
      %4714 = vmatprep.subr.mxu0 0.0
      %4715 = vmatpush1.msra.mxu0 0.0
      %4716 = vmatprep.subr.mxu0 0.0
      %4717 = vmatpush1.msra.mxu0 0.0
      %4718 = vmatprep.subr.mxu0 0.0
      %4719 = vmatpush1.msra.mxu0 0.0
      %4720 = vmatprep.subr.mxu0 0.0
      %4721 = vmatpush1.msra.mxu0 0.0
      %4722 = vmatprep.subr.mxu0 0.0
      %4723 = vmatpush1.msra.mxu0 0.0
      %4724 = vmatprep.subr.mxu0 0.0
      %4725 = vmatpush1.msra.mxu0 0.0
      %4726 = vmatprep.subr.mxu0 0.0
      %4727 = vmatpush1.msra.mxu0 0.0
      %4728 = vmatprep.subr.mxu0 0.0
      %4729 = vmatpush1.msra.mxu0 0.0
      %4730 = vmatprep.subr.mxu0 0.0
      %4731 = vmatpush1.msra.mxu0 0.0
      %4732 = vmatprep.subr.mxu0 0.0
      %4733 = vmatpush1.msra.mxu0 0.0
      %4734 = vmatprep.subr.mxu0 0.0
      %4735 = vmatpush1.msra.mxu0 0.0
      %4736 = vmatprep.subr.mxu0 0.0
      %4737 = vmatpush1.msra.mxu0 0.0
      %4738 = vmatprep.subr.mxu0 0.0
      %4739 = vmatpush1.msra.mxu0 0.0
      %4740 = vmatprep.subr.mxu0 0.0
      %4741 = vmatpush1.msra.mxu0 0.0
      %4742 = vmatprep.subr.mxu0 0.0
      %4743 = vmatpush1.msra.mxu0 0.0
      %4744 = vmatprep.subr.mxu0 0.0
      %4745 = vmatpush1.msra.mxu0 0.0
      %4746 = vmatprep.subr.mxu0 0.0
      %4747 = vmatpush1.msra.mxu0 0.0
      %4748 = vmatprep.subr.mxu0 0.0
      %4749 = vmatpush1.msra.mxu0 0.0
      %4750 = vmatprep.subr.mxu0 0.0
      %4751 = vmatpush1.msra.mxu0 0.0
      %4752 = vmatprep.subr.mxu0 0.0
      %4753 = vmatpush1.msra.mxu0 0.0
      %4754 = vmatprep.subr.mxu0 0.0
      %4755 = vmatpush1.msra.mxu0 0.0
      %4756 = vmatprep.subr.mxu0 0.0
      %4757 = vmatpush1.msra.mxu0 0.0
      %4758 = vmatprep.subr.mxu0 0.0
      %4759 = vmatpush1.msra.mxu0 0.0
      %4760 = vmatprep.subr.mxu0 0.0
      %4761 = vmatpush1.msra.mxu0 0.0
      %4762 = vmatprep.subr.mxu0 0.0
      %4763 = vmatpush1.msra.mxu0 0.0
      %4764 = vmatprep.subr.mxu0 0.0
      %4765 = vmatpush1.msra.mxu0 0.0
      %4766 = vmatprep.subr.mxu0 0.0
      %4767 = vmatpush1.msra.mxu0 0.0
      %4768 = vmatprep.subr.mxu0 0.0
      %4769 = vmatpush1.msra.mxu0 0.0
      %4770 = vmatprep.subr.mxu0 0.0
      %4771 = vmatpush1.msra.mxu0 0.0
      %4772 = vmatprep.subr.mxu0 0.0
      %4773 = vmatpush1.msra.mxu0 0.0
      %4774 = vmatprep.subr.mxu0 0.0
      %4775 = vmatpush1.msra.mxu0 0.0
      %4776 = vmatprep.mubr.f32.mxu0 0.0
      %4777 = vmatmul.mubr.f32.gmra.mrb[0].mxu0 %v4701
      %v4778 = vpop.f32.mrb[0].mxu0
      %v4779 = vadd.f32 %v4682, %v4778
      %v4780 = vpop.f32.mrb[0].mxu0
      %4781 = vmatprep.mubr.f32.mxu0 0.0
      %4782 = vmatmul.mubr.f32.gmra.mrb[0].mxu0 %v4704
      %v4783 = vpop.f32.mrb[0].mxu0
      %v4784 = vadd.f32 %v4687, %v4783
      %v4785 = vpop.f32.mrb[0].mxu0
      %4786 = vmatprep.mubr.f32.mxu0 0.0
      %4787 = vmatmul.mubr.f32.gmra.mrb[0].mxu0 %v4707
      %v4788 = vpop.f32.mrb[0].mxu0
      %v4789 = vadd.f32 %v4692, %v4788
      %v4790 = vpop.f32.mrb[0].mxu0
      %4791 = vmatprep.mubr.f32.mxu0 0.0
      %4792 = vmatmul.mubr.f32.gmra.mrb[0].mxu0 %v4710
      %v4793 = vpop.f32.mrb[0].mxu0
      %v4794 = vadd.f32 %v4697, %v4793
      %v4795 = vpop.f32.mrb[0].mxu0
      %4796 = vdwg.mxu0
      %4797 = vrot.lane.b32.xlu0 %v4028, 112
      %v4798 = vpop.permute.xlu0 %4797
      %4799 = vrot.lane.b32.xlu0 %v4033, 112
      %v4800 = vpop.permute.xlu0 %4799
      %4801 = vrot.lane.b32.xlu0 %v4038, 112
      %v4802 = vpop.permute.xlu0 %4801
      %4803 = vrot.lane.b32.xlu0 %v4043, 112
      %v4804 = vpop.permute.xlu0 %4803
      %4805 = vrot.lane.b32.xlu0 %v4028, 80
      %v4806 = vpop.permute.xlu0 %4805
      %4807 = vrot.lane.b32.xlu0 %v4033, 80
      %v4808 = vpop.permute.xlu0 %4807
      %4809 = vrot.lane.b32.xlu0 %v4038, 80
      %v4810 = vpop.permute.xlu0 %4809
      %4811 = vrot.lane.b32.xlu0 %v4043, 80
      %v4812 = vpop.permute.xlu0 %4811
      %v4813 = vsel %vm4062, %v4798, 0
      %v4815 = vsel %vm4062, %v4800, 0
      %v4817 = vsel %vm4062, %v4802, 0
      %v4819 = vsel %vm4062, %v4804, 0
      %v4821 = vsel %vm4062, %v4806, 0
      %v4823 = vsel %vm4062, %v4808, 0
      %v4825 = vsel %vm4062, %v4810, 0
      %v4827 = vsel %vm4062, %v4812, 0
      %4829 = vmatprep.subr.mxu0 0.0
      %4830 = vmatpush1.xpose.msra.mxu0 %v4821
      %4831 = vmatprep.subr.mxu0 0.0
      %4832 = vmatpush1.xpose.msra.mxu0 %v4823
      %4833 = vmatprep.subr.mxu0 0.0
      %4834 = vmatpush1.xpose.msra.mxu0 %v4825
      %4835 = vmatprep.subr.mxu0 0.0
      %4836 = vmatpush1.xpose.msra.mxu0 %v4827
      %4837 = vmatprep.subr.mxu0 0.0
      %4838 = vmatpush1.xpose.msra.mxu0 0.0
      %4839 = vmatprep.subr.mxu0 0.0
      %4840 = vmatpush1.xpose.msra.mxu0 0.0
      %4841 = vmatprep.subr.mxu0 0.0
      %4842 = vmatpush1.xpose.msra.mxu0 0.0
      %4843 = vmatprep.subr.mxu0 0.0
      %4844 = vmatpush1.xpose.msra.mxu0 0.0
      %4845 = vmatprep.subr.mxu0 0.0
      %4846 = vmatpush1.xpose.msra.mxu0 0.0
      %4847 = vmatprep.subr.mxu0 0.0
      %4848 = vmatpush1.xpose.msra.mxu0 0.0
      %4849 = vmatprep.subr.mxu0 0.0
      %4850 = vmatpush1.xpose.msra.mxu0 0.0
      %4851 = vmatprep.subr.mxu0 0.0
      %4852 = vmatpush1.xpose.msra.mxu0 0.0
      %4853 = vmatprep.subr.mxu0 0.0
      %4854 = vmatpush1.xpose.msra.mxu0 0.0
      %4855 = vmatprep.subr.mxu0 0.0
      %4856 = vmatpush1.xpose.msra.mxu0 0.0
      %4857 = vmatprep.subr.mxu0 0.0
      %4858 = vmatpush1.xpose.msra.mxu0 0.0
      %4859 = vmatprep.subr.mxu0 0.0
      %4860 = vmatpush1.xpose.msra.mxu0 0.0
      %4861 = vmatprep.subr.mxu0 0.0
      %4862 = vmatpush1.xpose.msra.mxu0 0.0
      %4863 = vmatprep.subr.mxu0 0.0
      %4864 = vmatpush1.xpose.msra.mxu0 0.0
      %4865 = vmatprep.subr.mxu0 0.0
      %4866 = vmatpush1.xpose.msra.mxu0 0.0
      %4867 = vmatprep.subr.mxu0 0.0
      %4868 = vmatpush1.xpose.msra.mxu0 0.0
      %4869 = vmatprep.subr.mxu0 0.0
      %4870 = vmatpush1.xpose.msra.mxu0 0.0
      %4871 = vmatprep.subr.mxu0 0.0
      %4872 = vmatpush1.xpose.msra.mxu0 0.0
      %4873 = vmatprep.subr.mxu0 0.0
      %4874 = vmatpush1.xpose.msra.mxu0 0.0
      %4875 = vmatprep.subr.mxu0 0.0
      %4876 = vmatpush1.xpose.msra.mxu0 0.0
      %4877 = vmatprep.subr.mxu0 0.0
      %4878 = vmatpush1.xpose.msra.mxu0 0.0
      %4879 = vmatprep.subr.mxu0 0.0
      %4880 = vmatpush1.xpose.msra.mxu0 0.0
      %4881 = vmatprep.subr.mxu0 0.0
      %4882 = vmatpush1.xpose.msra.mxu0 0.0
      %4883 = vmatprep.subr.mxu0 0.0
      %4884 = vmatpush1.xpose.msra.mxu0 0.0
      %4885 = vmatprep.subr.mxu0 0.0
      %4886 = vmatpush1.xpose.msra.mxu0 0.0
      %4887 = vmatprep.subr.mxu0 0.0
      %4888 = vmatpush1.xpose.msra.mxu0 0.0
      %4889 = vmatprep.subr.mxu0 0.0
      %4890 = vmatpush1.xpose.msra.mxu0 0.0
      %4891 = vmatprep.subr.mxu0 0.0
      %4892 = vmatpush1.xpose.msra.mxu0 0.0
      %4893 = vmatprep.mubr.f32.mxu0 0.0
      %4894 = vmatmul.mubr.f32.gmra.mrb[0].mxu0 %v4813
      %v4895 = vpop.f32.mrb[0].mxu0
      %v4896 = vadd.f32 0.0, %v4895
      %v4897 = vpop.f32.mrb[0].mxu0
      %4898 = vmatprep.mubr.f32.mxu0 0.0
      %4899 = vmatmul.mubr.f32.gmra.mrb[0].mxu0 %v4815
      %v4900 = vpop.f32.mrb[0].mxu0
      %v4901 = vadd.f32 0.0, %v4900
      %v4902 = vpop.f32.mrb[0].mxu0
      %4903 = vmatprep.mubr.f32.mxu0 0.0
      %4904 = vmatmul.mubr.f32.gmra.mrb[0].mxu0 %v4817
      %v4905 = vpop.f32.mrb[0].mxu0
      %v4906 = vadd.f32 0.0, %v4905
      %v4907 = vpop.f32.mrb[0].mxu0
      %4908 = vmatprep.mubr.f32.mxu0 0.0
      %4909 = vmatmul.mubr.f32.gmra.mrb[0].mxu0 %v4819
      %v4910 = vpop.f32.mrb[0].mxu0
      %v4911 = vadd.f32 0.0, %v4910
      %v4912 = vpop.f32.mrb[0].mxu0
      %4913 = vdwg.mxu0
      %v4914 = vmul.f32 %v4896, 0.35355338
      %v4915 = vmul.f32 %v4901, 0.35355338
      %v4916 = vmul.f32 %v4906, 0.35355338
      %v4917 = vmul.f32 %v4911, 0.35355338
      %v4918 = vadd.f32 %v4914, %v3934
      %v4919 = vadd.f32 %v4915, %v3935
      %v4920 = vadd.f32 %v4916, %v3936
      %v4921 = vadd.f32 %v4917, %v3937
      %v4922 = vsel %vm1126, %v4918, -inf
      %4923 = vmax.xlane.f32.xlu0 %v4922
      %v4924 = vpop.xlane.xlu0 %4923
      %v4925 = vsel %vm1126, %v4919, -inf
      %4926 = vmax.xlane.f32.xlu0 %v4925
      %v4927 = vpop.xlane.xlu0 %4926
      %v4928 = vsel %vm1126, %v4920, -inf
      %4929 = vmax.xlane.f32.xlu0 %v4928
      %v4930 = vpop.xlane.xlu0 %4929
      %v4931 = vsel %vm1126, %v4921, -inf
      %4932 = vmax.xlane.f32.xlu0 %v4931
      %v4933 = vpop.xlane.xlu0 %4932
      %v4934 = vsub.f32 %v4918, %v4924
      %v4935 = vsub.f32 %v4919, %v4927
      %v4936 = vsub.f32 %v4920, %v4930
      %v4937 = vsub.f32 %v4921, %v4933
      %v4938 = vmul.f32 %v4934, 1.442695
      %v4939 = vpow.pop %v4938
      %v4940 = vmul.f32 %v4935, 1.442695
      %v4941 = vpow.pop %v4940
      %v4942 = vmul.f32 %v4936, 1.442695
      %v4943 = vpow.pop %v4942
      %v4944 = vmul.f32 %v4937, 1.442695
      %v4945 = vpow.pop %v4944
      %v4946 = vsel %vm1126, %v4939, 0.0
      %4947 = vadd.xlane.f32.xlu0 %v4946
      %v4948 = vpop.xlane.xlu0 %4947
      %v4949 = vsel %vm1126, %v4941, 0.0
      %4950 = vadd.xlane.f32.xlu0 %v4949
      %v4951 = vpop.xlane.xlu0 %4950
      %v4952 = vsel %vm1126, %v4943, 0.0
      %4953 = vadd.xlane.f32.xlu0 %v4952
      %v4954 = vpop.xlane.xlu0 %4953
      %v4955 = vsel %vm1126, %v4945, 0.0
      %4956 = vadd.xlane.f32.xlu0 %v4955
      %v4957 = vpop.xlane.xlu0 %4956
      %v4958 = vrcp.pop %v4948
      %v4959 = vrcp.pop %v4951
      %v4960 = vrcp.pop %v4954
      %v4961 = vrcp.pop %v4957
      %v4962 = vmul.f32 %v4939, %v4958
      %v4963 = vmul.f32 %v4941, %v4959
      %v4964 = vmul.f32 %v4943, %v4960
      %v4965 = vmul.f32 %v4945, %v4961
      %4966 = vrot.lane.b32.xlu0 %v4028, 48
      %v4967 = vpop.permute.xlu0 %4966
      %4968 = vrot.lane.b32.xlu0 %v4033, 48
      %v4969 = vpop.permute.xlu0 %4968
      %4970 = vrot.lane.b32.xlu0 %v4038, 48
      %v4971 = vpop.permute.xlu0 %4970
      %4972 = vrot.lane.b32.xlu0 %v4043, 48
      %v4973 = vpop.permute.xlu0 %4972
      %v4979 = vsel %vm1126, %v4962, 0
      %v4982 = vsel %vm1126, %v4963, 0
      %v4985 = vsel %vm1126, %v4964, 0
      %v4988 = vsel %vm1126, %v4965, 0
      %4990 = vmatprep.subr.mxu0 0.0
      %4991 = vmatpush1.msra.mxu0 %v4967
      %4992 = vmatprep.subr.mxu0 0.0
      %4993 = vmatpush1.msra.mxu0 %v4969
      %4994 = vmatprep.subr.mxu0 0.0
      %4995 = vmatpush1.msra.mxu0 %v4971
      %4996 = vmatprep.subr.mxu0 0.0
      %4997 = vmatpush1.msra.mxu0 %v4973
      %4998 = vmatprep.subr.mxu0 0.0
      %4999 = vmatpush1.msra.mxu0 0.0
      %5000 = vmatprep.subr.mxu0 0.0
      %5001 = vmatpush1.msra.mxu0 0.0
      %5002 = vmatprep.subr.mxu0 0.0
      %5003 = vmatpush1.msra.mxu0 0.0
      %5004 = vmatprep.subr.mxu0 0.0
      %5005 = vmatpush1.msra.mxu0 0.0
      %5006 = vmatprep.subr.mxu0 0.0
      %5007 = vmatpush1.msra.mxu0 0.0
      %5008 = vmatprep.subr.mxu0 0.0
      %5009 = vmatpush1.msra.mxu0 0.0
      %5010 = vmatprep.subr.mxu0 0.0
      %5011 = vmatpush1.msra.mxu0 0.0
      %5012 = vmatprep.subr.mxu0 0.0
      %5013 = vmatpush1.msra.mxu0 0.0
      %5014 = vmatprep.subr.mxu0 0.0
      %5015 = vmatpush1.msra.mxu0 0.0
      %5016 = vmatprep.subr.mxu0 0.0
      %5017 = vmatpush1.msra.mxu0 0.0
      %5018 = vmatprep.subr.mxu0 0.0
      %5019 = vmatpush1.msra.mxu0 0.0
      %5020 = vmatprep.subr.mxu0 0.0
      %5021 = vmatpush1.msra.mxu0 0.0
      %5022 = vmatprep.subr.mxu0 0.0
      %5023 = vmatpush1.msra.mxu0 0.0
      %5024 = vmatprep.subr.mxu0 0.0
      %5025 = vmatpush1.msra.mxu0 0.0
      %5026 = vmatprep.subr.mxu0 0.0
      %5027 = vmatpush1.msra.mxu0 0.0
      %5028 = vmatprep.subr.mxu0 0.0
      %5029 = vmatpush1.msra.mxu0 0.0
      %5030 = vmatprep.subr.mxu0 0.0
      %5031 = vmatpush1.msra.mxu0 0.0
      %5032 = vmatprep.subr.mxu0 0.0
      %5033 = vmatpush1.msra.mxu0 0.0
      %5034 = vmatprep.subr.mxu0 0.0
      %5035 = vmatpush1.msra.mxu0 0.0
      %5036 = vmatprep.subr.mxu0 0.0
      %5037 = vmatpush1.msra.mxu0 0.0
      %5038 = vmatprep.subr.mxu0 0.0
      %5039 = vmatpush1.msra.mxu0 0.0
      %5040 = vmatprep.subr.mxu0 0.0
      %5041 = vmatpush1.msra.mxu0 0.0
      %5042 = vmatprep.subr.mxu0 0.0
      %5043 = vmatpush1.msra.mxu0 0.0
      %5044 = vmatprep.subr.mxu0 0.0
      %5045 = vmatpush1.msra.mxu0 0.0
      %5046 = vmatprep.subr.mxu0 0.0
      %5047 = vmatpush1.msra.mxu0 0.0
      %5048 = vmatprep.subr.mxu0 0.0
      %5049 = vmatpush1.msra.mxu0 0.0
      %5050 = vmatprep.subr.mxu0 0.0
      %5051 = vmatpush1.msra.mxu0 0.0
      %5052 = vmatprep.subr.mxu0 0.0
      %5053 = vmatpush1.msra.mxu0 0.0
      %5054 = vmatprep.mubr.f32.mxu0 0.0
      %5055 = vmatmul.mubr.f32.gmra.mrb[0].mxu0 %v4979
      %v5056 = vpop.f32.mrb[0].mxu0
      %v5057 = vadd.f32 0.0, %v5056
      %v5058 = vpop.f32.mrb[0].mxu0
      %5059 = vmatprep.mubr.f32.mxu0 0.0
      %5060 = vmatmul.mubr.f32.gmra.mrb[0].mxu0 %v4982
      %v5061 = vpop.f32.mrb[0].mxu0
      %v5062 = vadd.f32 0.0, %v5061
      %v5063 = vpop.f32.mrb[0].mxu0
      %5064 = vmatprep.mubr.f32.mxu0 0.0
      %5065 = vmatmul.mubr.f32.gmra.mrb[0].mxu0 %v4985
      %v5066 = vpop.f32.mrb[0].mxu0
      %v5067 = vadd.f32 0.0, %v5066
      %v5068 = vpop.f32.mrb[0].mxu0
      %5069 = vmatprep.mubr.f32.mxu0 0.0
      %5070 = vmatmul.mubr.f32.gmra.mrb[0].mxu0 %v4988
      %v5071 = vpop.f32.mrb[0].mxu0
      %v5072 = vadd.f32 0.0, %v5071
      %v5073 = vpop.f32.mrb[0].mxu0
      %5074 = vdwg.mxu0
      %v5076 = vsel %vm4062, %v5057, 0
      %v5079 = vsel %vm4062, %v5062, 0
      %v5082 = vsel %vm4062, %v5067, 0
      %v5085 = vsel %vm4062, %v5072, 0
      %5087 = vmatprep.subr.mxu0 0.0
      %5088 = vmatpush1.msra.mxu0 %v4048
      %5089 = vmatprep.subr.mxu0 0.0
      %5090 = vmatpush1.msra.mxu0 0.0
      %5091 = vmatprep.subr.mxu0 0.0
      %5092 = vmatpush1.msra.mxu0 0.0
      %5093 = vmatprep.subr.mxu0 0.0
      %5094 = vmatpush1.msra.mxu0 0.0
      %5095 = vmatprep.subr.mxu0 0.0
      %5096 = vmatpush1.msra.mxu0 0.0
      %5097 = vmatprep.subr.mxu0 0.0
      %5098 = vmatpush1.msra.mxu0 0.0
      %5099 = vmatprep.subr.mxu0 0.0
      %5100 = vmatpush1.msra.mxu0 0.0
      %5101 = vmatprep.subr.mxu0 0.0
      %5102 = vmatpush1.msra.mxu0 0.0
      %5103 = vmatprep.subr.mxu0 0.0
      %5104 = vmatpush1.msra.mxu0 0.0
      %5105 = vmatprep.subr.mxu0 0.0
      %5106 = vmatpush1.msra.mxu0 0.0
      %5107 = vmatprep.subr.mxu0 0.0
      %5108 = vmatpush1.msra.mxu0 0.0
      %5109 = vmatprep.subr.mxu0 0.0
      %5110 = vmatpush1.msra.mxu0 0.0
      %5111 = vmatprep.subr.mxu0 0.0
      %5112 = vmatpush1.msra.mxu0 0.0
      %5113 = vmatprep.subr.mxu0 0.0
      %5114 = vmatpush1.msra.mxu0 0.0
      %5115 = vmatprep.subr.mxu0 0.0
      %5116 = vmatpush1.msra.mxu0 0.0
      %5117 = vmatprep.subr.mxu0 0.0
      %5118 = vmatpush1.msra.mxu0 0.0
      %5119 = vmatprep.subr.mxu0 0.0
      %5120 = vmatpush1.msra.mxu0 0.0
      %5121 = vmatprep.subr.mxu0 0.0
      %5122 = vmatpush1.msra.mxu0 0.0
      %5123 = vmatprep.subr.mxu0 0.0
      %5124 = vmatpush1.msra.mxu0 0.0
      %5125 = vmatprep.subr.mxu0 0.0
      %5126 = vmatpush1.msra.mxu0 0.0
      %5127 = vmatprep.subr.mxu0 0.0
      %5128 = vmatpush1.msra.mxu0 0.0
      %5129 = vmatprep.subr.mxu0 0.0
      %5130 = vmatpush1.msra.mxu0 0.0
      %5131 = vmatprep.subr.mxu0 0.0
      %5132 = vmatpush1.msra.mxu0 0.0
      %5133 = vmatprep.subr.mxu0 0.0
      %5134 = vmatpush1.msra.mxu0 0.0
      %5135 = vmatprep.subr.mxu0 0.0
      %5136 = vmatpush1.msra.mxu0 0.0
      %5137 = vmatprep.subr.mxu0 0.0
      %5138 = vmatpush1.msra.mxu0 0.0
      %5139 = vmatprep.subr.mxu0 0.0
      %5140 = vmatpush1.msra.mxu0 0.0
      %5141 = vmatprep.subr.mxu0 0.0
      %5142 = vmatpush1.msra.mxu0 0.0
      %5143 = vmatprep.subr.mxu0 0.0
      %5144 = vmatpush1.msra.mxu0 0.0
      %5145 = vmatprep.subr.mxu0 0.0
      %5146 = vmatpush1.msra.mxu0 0.0
      %5147 = vmatprep.subr.mxu0 0.0
      %5148 = vmatpush1.msra.mxu0 0.0
      %5149 = vmatprep.subr.mxu0 0.0
      %5150 = vmatpush1.msra.mxu0 0.0
      %5151 = vmatprep.mubr.f32.mxu0 0.0
      %5152 = vmatmul.mubr.f32.gmra.mrb[0].mxu0 %v5076
      %v5153 = vpop.f32.mrb[0].mxu0
      %v5154 = vadd.f32 0.0, %v5153
      %v5155 = vpop.f32.mrb[0].mxu0
      %5156 = vmatprep.mubr.f32.mxu0 0.0
      %5157 = vmatmul.mubr.f32.gmra.mrb[0].mxu0 %v5079
      %v5158 = vpop.f32.mrb[0].mxu0
      %v5159 = vadd.f32 0.0, %v5158
      %v5160 = vpop.f32.mrb[0].mxu0
      %5161 = vmatprep.mubr.f32.mxu0 0.0
      %5162 = vmatmul.mubr.f32.gmra.mrb[0].mxu0 %v5082
      %v5163 = vpop.f32.mrb[0].mxu0
      %v5164 = vadd.f32 0.0, %v5163
      %v5165 = vpop.f32.mrb[0].mxu0
      %5166 = vmatprep.mubr.f32.mxu0 0.0
      %5167 = vmatmul.mubr.f32.gmra.mrb[0].mxu0 %v5085
      %v5168 = vpop.f32.mrb[0].mxu0
      %v5169 = vadd.f32 0.0, %v5168
      %v5170 = vpop.f32.mrb[0].mxu0
      %5171 = vdwg.mxu0
      %v5172 = vadd.f32 %v4779, %v5154
      %v5173 = vadd.f32 %v4784, %v5159
      %v5174 = vadd.f32 %v4789, %v5164
      %v5175 = vadd.f32 %v4794, %v5169
      %5176 = vrot.lane.b32.xlu0 %v4028, 104
      %v5177 = vpop.permute.xlu0 %5176
      %5178 = vrot.lane.b32.xlu0 %v4033, 104
      %v5179 = vpop.permute.xlu0 %5178
      %5180 = vrot.lane.b32.xlu0 %v4038, 104
      %v5181 = vpop.permute.xlu0 %5180
      %5182 = vrot.lane.b32.xlu0 %v4043, 104
      %v5183 = vpop.permute.xlu0 %5182
      %5184 = vrot.lane.b32.xlu0 %v4028, 72
      %v5185 = vpop.permute.xlu0 %5184
      %5186 = vrot.lane.b32.xlu0 %v4033, 72
      %v5187 = vpop.permute.xlu0 %5186
      %5188 = vrot.lane.b32.xlu0 %v4038, 72
      %v5189 = vpop.permute.xlu0 %5188
      %5190 = vrot.lane.b32.xlu0 %v4043, 72
      %v5191 = vpop.permute.xlu0 %5190
      %v5192 = vsel %vm4062, %v5177, 0
      %v5194 = vsel %vm4062, %v5179, 0
      %v5196 = vsel %vm4062, %v5181, 0
      %v5198 = vsel %vm4062, %v5183, 0
      %v5200 = vsel %vm4062, %v5185, 0
      %v5202 = vsel %vm4062, %v5187, 0
      %v5204 = vsel %vm4062, %v5189, 0
      %v5206 = vsel %vm4062, %v5191, 0
      %5208 = vmatprep.subr.mxu0 0.0
      %5209 = vmatpush1.xpose.msra.mxu0 %v5200
      %5210 = vmatprep.subr.mxu0 0.0
      %5211 = vmatpush1.xpose.msra.mxu0 %v5202
      %5212 = vmatprep.subr.mxu0 0.0
      %5213 = vmatpush1.xpose.msra.mxu0 %v5204
      %5214 = vmatprep.subr.mxu0 0.0
      %5215 = vmatpush1.xpose.msra.mxu0 %v5206
      %5216 = vmatprep.subr.mxu0 0.0
      %5217 = vmatpush1.xpose.msra.mxu0 0.0
      %5218 = vmatprep.subr.mxu0 0.0
      %5219 = vmatpush1.xpose.msra.mxu0 0.0
      %5220 = vmatprep.subr.mxu0 0.0
      %5221 = vmatpush1.xpose.msra.mxu0 0.0
      %5222 = vmatprep.subr.mxu0 0.0
      %5223 = vmatpush1.xpose.msra.mxu0 0.0
      %5224 = vmatprep.subr.mxu0 0.0
      %5225 = vmatpush1.xpose.msra.mxu0 0.0
      %5226 = vmatprep.subr.mxu0 0.0
      %5227 = vmatpush1.xpose.msra.mxu0 0.0
      %5228 = vmatprep.subr.mxu0 0.0
      %5229 = vmatpush1.xpose.msra.mxu0 0.0
      %5230 = vmatprep.subr.mxu0 0.0
      %5231 = vmatpush1.xpose.msra.mxu0 0.0
      %5232 = vmatprep.subr.mxu0 0.0
      %5233 = vmatpush1.xpose.msra.mxu0 0.0
      %5234 = vmatprep.subr.mxu0 0.0
      %5235 = vmatpush1.xpose.msra.mxu0 0.0
      %5236 = vmatprep.subr.mxu0 0.0
      %5237 = vmatpush1.xpose.msra.mxu0 0.0
      %5238 = vmatprep.subr.mxu0 0.0
      %5239 = vmatpush1.xpose.msra.mxu0 0.0
      %5240 = vmatprep.subr.mxu0 0.0
      %5241 = vmatpush1.xpose.msra.mxu0 0.0
      %5242 = vmatprep.subr.mxu0 0.0
      %5243 = vmatpush1.xpose.msra.mxu0 0.0
      %5244 = vmatprep.subr.mxu0 0.0
      %5245 = vmatpush1.xpose.msra.mxu0 0.0
      %5246 = vmatprep.subr.mxu0 0.0
      %5247 = vmatpush1.xpose.msra.mxu0 0.0
      %5248 = vmatprep.subr.mxu0 0.0
      %5249 = vmatpush1.xpose.msra.mxu0 0.0
      %5250 = vmatprep.subr.mxu0 0.0
      %5251 = vmatpush1.xpose.msra.mxu0 0.0
      %5252 = vmatprep.subr.mxu0 0.0
      %5253 = vmatpush1.xpose.msra.mxu0 0.0
      %5254 = vmatprep.subr.mxu0 0.0
      %5255 = vmatpush1.xpose.msra.mxu0 0.0
      %5256 = vmatprep.subr.mxu0 0.0
      %5257 = vmatpush1.xpose.msra.mxu0 0.0
      %5258 = vmatprep.subr.mxu0 0.0
      %5259 = vmatpush1.xpose.msra.mxu0 0.0
      %5260 = vmatprep.subr.mxu0 0.0
      %5261 = vmatpush1.xpose.msra.mxu0 0.0
      %5262 = vmatprep.subr.mxu0 0.0
      %5263 = vmatpush1.xpose.msra.mxu0 0.0
      %5264 = vmatprep.subr.mxu0 0.0
      %5265 = vmatpush1.xpose.msra.mxu0 0.0
      %5266 = vmatprep.subr.mxu0 0.0
      %5267 = vmatpush1.xpose.msra.mxu0 0.0
      %5268 = vmatprep.subr.mxu0 0.0
      %5269 = vmatpush1.xpose.msra.mxu0 0.0
      %5270 = vmatprep.subr.mxu0 0.0
      %5271 = vmatpush1.xpose.msra.mxu0 0.0
      %5272 = vmatprep.mubr.f32.mxu0 0.0
      %5273 = vmatmul.mubr.f32.gmra.mrb[0].mxu0 %v5192
      %v5274 = vpop.f32.mrb[0].mxu0
      %v5275 = vadd.f32 0.0, %v5274
      %v5276 = vpop.f32.mrb[0].mxu0
      %5277 = vmatprep.mubr.f32.mxu0 0.0
      %5278 = vmatmul.mubr.f32.gmra.mrb[0].mxu0 %v5194
      %v5279 = vpop.f32.mrb[0].mxu0
      %v5280 = vadd.f32 0.0, %v5279
      %v5281 = vpop.f32.mrb[0].mxu0
      %5282 = vmatprep.mubr.f32.mxu0 0.0
      %5283 = vmatmul.mubr.f32.gmra.mrb[0].mxu0 %v5196
      %v5284 = vpop.f32.mrb[0].mxu0
      %v5285 = vadd.f32 0.0, %v5284
      %v5286 = vpop.f32.mrb[0].mxu0
      %5287 = vmatprep.mubr.f32.mxu0 0.0
      %5288 = vmatmul.mubr.f32.gmra.mrb[0].mxu0 %v5198
      %v5289 = vpop.f32.mrb[0].mxu0
      %v5290 = vadd.f32 0.0, %v5289
      %v5291 = vpop.f32.mrb[0].mxu0
      %5292 = vdwg.mxu0
      %v5293 = vmul.f32 %v5275, 0.35355338
      %v5294 = vmul.f32 %v5280, 0.35355338
      %v5295 = vmul.f32 %v5285, 0.35355338
      %v5296 = vmul.f32 %v5290, 0.35355338
      %v5297 = vadd.f32 %v5293, %v3934
      %v5298 = vadd.f32 %v5294, %v3935
      %v5299 = vadd.f32 %v5295, %v3936
      %v5300 = vadd.f32 %v5296, %v3937
      %v5301 = vsel %vm1126, %v5297, -inf
      %5302 = vmax.xlane.f32.xlu0 %v5301
      %v5303 = vpop.xlane.xlu0 %5302
      %v5304 = vsel %vm1126, %v5298, -inf
      %5305 = vmax.xlane.f32.xlu0 %v5304
      %v5306 = vpop.xlane.xlu0 %5305
      %v5307 = vsel %vm1126, %v5299, -inf
      %5308 = vmax.xlane.f32.xlu0 %v5307
      %v5309 = vpop.xlane.xlu0 %5308
      %v5310 = vsel %vm1126, %v5300, -inf
      %5311 = vmax.xlane.f32.xlu0 %v5310
      %v5312 = vpop.xlane.xlu0 %5311
      %v5313 = vsub.f32 %v5297, %v5303
      %v5314 = vsub.f32 %v5298, %v5306
      %v5315 = vsub.f32 %v5299, %v5309
      %v5316 = vsub.f32 %v5300, %v5312
      %v5317 = vmul.f32 %v5313, 1.442695
      %v5318 = vpow.pop %v5317
      %v5319 = vmul.f32 %v5314, 1.442695
      %v5320 = vpow.pop %v5319
      %v5321 = vmul.f32 %v5315, 1.442695
      %v5322 = vpow.pop %v5321
      %v5323 = vmul.f32 %v5316, 1.442695
      %v5324 = vpow.pop %v5323
      %v5325 = vsel %vm1126, %v5318, 0.0
      %5326 = vadd.xlane.f32.xlu0 %v5325
      %v5327 = vpop.xlane.xlu0 %5326
      %v5328 = vsel %vm1126, %v5320, 0.0
      %5329 = vadd.xlane.f32.xlu0 %v5328
      %v5330 = vpop.xlane.xlu0 %5329
      %v5331 = vsel %vm1126, %v5322, 0.0
      %5332 = vadd.xlane.f32.xlu0 %v5331
      %v5333 = vpop.xlane.xlu0 %5332
      %v5334 = vsel %vm1126, %v5324, 0.0
      %5335 = vadd.xlane.f32.xlu0 %v5334
      %v5336 = vpop.xlane.xlu0 %5335
      %v5337 = vrcp.pop %v5327
      %v5338 = vrcp.pop %v5330
      %v5339 = vrcp.pop %v5333
      %v5340 = vrcp.pop %v5336
      %v5341 = vmul.f32 %v5318, %v5337
      %v5342 = vmul.f32 %v5320, %v5338
      %v5343 = vmul.f32 %v5322, %v5339
      %v5344 = vmul.f32 %v5324, %v5340
      %5345 = vrot.lane.b32.xlu0 %v4028, 40
      %v5346 = vpop.permute.xlu0 %5345
      %5347 = vrot.lane.b32.xlu0 %v4033, 40
      %v5348 = vpop.permute.xlu0 %5347
      %5349 = vrot.lane.b32.xlu0 %v4038, 40
      %v5350 = vpop.permute.xlu0 %5349
      %5351 = vrot.lane.b32.xlu0 %v4043, 40
      %v5352 = vpop.permute.xlu0 %5351
      %v5358 = vsel %vm1126, %v5341, 0
      %v5361 = vsel %vm1126, %v5342, 0
      %v5364 = vsel %vm1126, %v5343, 0
      %v5367 = vsel %vm1126, %v5344, 0
      %5369 = vmatprep.subr.mxu0 0.0
      %5370 = vmatpush1.msra.mxu0 %v5346
      %5371 = vmatprep.subr.mxu0 0.0
      %5372 = vmatpush1.msra.mxu0 %v5348
      %5373 = vmatprep.subr.mxu0 0.0
      %5374 = vmatpush1.msra.mxu0 %v5350
      %5375 = vmatprep.subr.mxu0 0.0
      %5376 = vmatpush1.msra.mxu0 %v5352
      %5377 = vmatprep.subr.mxu0 0.0
      %5378 = vmatpush1.msra.mxu0 0.0
      %5379 = vmatprep.subr.mxu0 0.0
      %5380 = vmatpush1.msra.mxu0 0.0
      %5381 = vmatprep.subr.mxu0 0.0
      %5382 = vmatpush1.msra.mxu0 0.0
      %5383 = vmatprep.subr.mxu0 0.0
      %5384 = vmatpush1.msra.mxu0 0.0
      %5385 = vmatprep.subr.mxu0 0.0
      %5386 = vmatpush1.msra.mxu0 0.0
      %5387 = vmatprep.subr.mxu0 0.0
      %5388 = vmatpush1.msra.mxu0 0.0
      %5389 = vmatprep.subr.mxu0 0.0
      %5390 = vmatpush1.msra.mxu0 0.0
      %5391 = vmatprep.subr.mxu0 0.0
      %5392 = vmatpush1.msra.mxu0 0.0
      %5393 = vmatprep.subr.mxu0 0.0
      %5394 = vmatpush1.msra.mxu0 0.0
      %5395 = vmatprep.subr.mxu0 0.0
      %5396 = vmatpush1.msra.mxu0 0.0
      %5397 = vmatprep.subr.mxu0 0.0
      %5398 = vmatpush1.msra.mxu0 0.0
      %5399 = vmatprep.subr.mxu0 0.0
      %5400 = vmatpush1.msra.mxu0 0.0
      %5401 = vmatprep.subr.mxu0 0.0
      %5402 = vmatpush1.msra.mxu0 0.0
      %5403 = vmatprep.subr.mxu0 0.0
      %5404 = vmatpush1.msra.mxu0 0.0
      %5405 = vmatprep.subr.mxu0 0.0
      %5406 = vmatpush1.msra.mxu0 0.0
      %5407 = vmatprep.subr.mxu0 0.0
      %5408 = vmatpush1.msra.mxu0 0.0
      %5409 = vmatprep.subr.mxu0 0.0
      %5410 = vmatpush1.msra.mxu0 0.0
      %5411 = vmatprep.subr.mxu0 0.0
      %5412 = vmatpush1.msra.mxu0 0.0
      %5413 = vmatprep.subr.mxu0 0.0
      %5414 = vmatpush1.msra.mxu0 0.0
      %5415 = vmatprep.subr.mxu0 0.0
      %5416 = vmatpush1.msra.mxu0 0.0
      %5417 = vmatprep.subr.mxu0 0.0
      %5418 = vmatpush1.msra.mxu0 0.0
      %5419 = vmatprep.subr.mxu0 0.0
      %5420 = vmatpush1.msra.mxu0 0.0
      %5421 = vmatprep.subr.mxu0 0.0
      %5422 = vmatpush1.msra.mxu0 0.0
      %5423 = vmatprep.subr.mxu0 0.0
      %5424 = vmatpush1.msra.mxu0 0.0
      %5425 = vmatprep.subr.mxu0 0.0
      %5426 = vmatpush1.msra.mxu0 0.0
      %5427 = vmatprep.subr.mxu0 0.0
      %5428 = vmatpush1.msra.mxu0 0.0
      %5429 = vmatprep.subr.mxu0 0.0
      %5430 = vmatpush1.msra.mxu0 0.0
      %5431 = vmatprep.subr.mxu0 0.0
      %5432 = vmatpush1.msra.mxu0 0.0
      %5433 = vmatprep.mubr.f32.mxu0 0.0
      %5434 = vmatmul.mubr.f32.gmra.mrb[0].mxu0 %v5358
      %v5435 = vpop.f32.mrb[0].mxu0
      %v5436 = vadd.f32 0.0, %v5435
      %v5437 = vpop.f32.mrb[0].mxu0
      %5438 = vmatprep.mubr.f32.mxu0 0.0
      %5439 = vmatmul.mubr.f32.gmra.mrb[0].mxu0 %v5361
      %v5440 = vpop.f32.mrb[0].mxu0
      %v5441 = vadd.f32 0.0, %v5440
      %v5442 = vpop.f32.mrb[0].mxu0
      %5443 = vmatprep.mubr.f32.mxu0 0.0
      %5444 = vmatmul.mubr.f32.gmra.mrb[0].mxu0 %v5364
      %v5445 = vpop.f32.mrb[0].mxu0
      %v5446 = vadd.f32 0.0, %v5445
      %v5447 = vpop.f32.mrb[0].mxu0
      %5448 = vmatprep.mubr.f32.mxu0 0.0
      %5449 = vmatmul.mubr.f32.gmra.mrb[0].mxu0 %v5367
      %v5450 = vpop.f32.mrb[0].mxu0
      %v5451 = vadd.f32 0.0, %v5450
      %v5452 = vpop.f32.mrb[0].mxu0
      %5453 = vdwg.mxu0
      %v5455 = vsel %vm4062, %v5436, 0
      %v5458 = vsel %vm4062, %v5441, 0
      %v5461 = vsel %vm4062, %v5446, 0
      %v5464 = vsel %vm4062, %v5451, 0
      %5466 = vmatprep.subr.mxu0 0.0
      %5467 = vmatpush1.msra.mxu0 %v4049
      %5468 = vmatprep.subr.mxu0 0.0
      %5469 = vmatpush1.msra.mxu0 0.0
      %5470 = vmatprep.subr.mxu0 0.0
      %5471 = vmatpush1.msra.mxu0 0.0
      %5472 = vmatprep.subr.mxu0 0.0
      %5473 = vmatpush1.msra.mxu0 0.0
      %5474 = vmatprep.subr.mxu0 0.0
      %5475 = vmatpush1.msra.mxu0 0.0
      %5476 = vmatprep.subr.mxu0 0.0
      %5477 = vmatpush1.msra.mxu0 0.0
      %5478 = vmatprep.subr.mxu0 0.0
      %5479 = vmatpush1.msra.mxu0 0.0
      %5480 = vmatprep.subr.mxu0 0.0
      %5481 = vmatpush1.msra.mxu0 0.0
      %5482 = vmatprep.subr.mxu0 0.0
      %5483 = vmatpush1.msra.mxu0 0.0
      %5484 = vmatprep.subr.mxu0 0.0
      %5485 = vmatpush1.msra.mxu0 0.0
      %5486 = vmatprep.subr.mxu0 0.0
      %5487 = vmatpush1.msra.mxu0 0.0
      %5488 = vmatprep.subr.mxu0 0.0
      %5489 = vmatpush1.msra.mxu0 0.0
      %5490 = vmatprep.subr.mxu0 0.0
      %5491 = vmatpush1.msra.mxu0 0.0
      %5492 = vmatprep.subr.mxu0 0.0
      %5493 = vmatpush1.msra.mxu0 0.0
      %5494 = vmatprep.subr.mxu0 0.0
      %5495 = vmatpush1.msra.mxu0 0.0
      %5496 = vmatprep.subr.mxu0 0.0
      %5497 = vmatpush1.msra.mxu0 0.0
      %5498 = vmatprep.subr.mxu0 0.0
      %5499 = vmatpush1.msra.mxu0 0.0
      %5500 = vmatprep.subr.mxu0 0.0
      %5501 = vmatpush1.msra.mxu0 0.0
      %5502 = vmatprep.subr.mxu0 0.0
      %5503 = vmatpush1.msra.mxu0 0.0
      %5504 = vmatprep.subr.mxu0 0.0
      %5505 = vmatpush1.msra.mxu0 0.0
      %5506 = vmatprep.subr.mxu0 0.0
      %5507 = vmatpush1.msra.mxu0 0.0
      %5508 = vmatprep.subr.mxu0 0.0
      %5509 = vmatpush1.msra.mxu0 0.0
      %5510 = vmatprep.subr.mxu0 0.0
      %5511 = vmatpush1.msra.mxu0 0.0
      %5512 = vmatprep.subr.mxu0 0.0
      %5513 = vmatpush1.msra.mxu0 0.0
      %5514 = vmatprep.subr.mxu0 0.0
      %5515 = vmatpush1.msra.mxu0 0.0
      %5516 = vmatprep.subr.mxu0 0.0
      %5517 = vmatpush1.msra.mxu0 0.0
      %5518 = vmatprep.subr.mxu0 0.0
      %5519 = vmatpush1.msra.mxu0 0.0
      %5520 = vmatprep.subr.mxu0 0.0
      %5521 = vmatpush1.msra.mxu0 0.0
      %5522 = vmatprep.subr.mxu0 0.0
      %5523 = vmatpush1.msra.mxu0 0.0
      %5524 = vmatprep.subr.mxu0 0.0
      %5525 = vmatpush1.msra.mxu0 0.0
      %5526 = vmatprep.subr.mxu0 0.0
      %5527 = vmatpush1.msra.mxu0 0.0
      %5528 = vmatprep.subr.mxu0 0.0
      %5529 = vmatpush1.msra.mxu0 0.0
      %5530 = vmatprep.mubr.f32.mxu0 0.0
      %5531 = vmatmul.mubr.f32.gmra.mrb[0].mxu0 %v5455
      %v5532 = vpop.f32.mrb[0].mxu0
      %v5533 = vadd.f32 0.0, %v5532
      %v5534 = vpop.f32.mrb[0].mxu0
      %5535 = vmatprep.mubr.f32.mxu0 0.0
      %5536 = vmatmul.mubr.f32.gmra.mrb[0].mxu0 %v5458
      %v5537 = vpop.f32.mrb[0].mxu0
      %v5538 = vadd.f32 0.0, %v5537
      %v5539 = vpop.f32.mrb[0].mxu0
      %5540 = vmatprep.mubr.f32.mxu0 0.0
      %5541 = vmatmul.mubr.f32.gmra.mrb[0].mxu0 %v5461
      %v5542 = vpop.f32.mrb[0].mxu0
      %v5543 = vadd.f32 0.0, %v5542
      %v5544 = vpop.f32.mrb[0].mxu0
      %5545 = vmatprep.mubr.f32.mxu0 0.0
      %5546 = vmatmul.mubr.f32.gmra.mrb[0].mxu0 %v5464
      %v5547 = vpop.f32.mrb[0].mxu0
      %v5548 = vadd.f32 0.0, %v5547
      %v5549 = vpop.f32.mrb[0].mxu0
      %5550 = vdwg.mxu0
      %v5551 = vadd.f32 %v5172, %v5533
      %v5552 = vadd.f32 %v5173, %v5538
      %v5553 = vadd.f32 %v5174, %v5543
      %v5554 = vadd.f32 %v5175, %v5548
      %v5555 = vadd.f32 %v3926, %v5551
      %v5556 = vadd.f32 %v3927, %v5552
      %v5557 = vadd.f32 %v3928, %v5553
      %v5558 = vadd.f32 %v3929, %v5554
      %v5559 = vld [vmem:[%s24] sm:$0x1]
      %v5561 = vlaneseq
      %v5562 = vshrl.u32 %v5561, 7
      %v5563 = vsub.s32 0, %v5562
      %v5564 = vrot.slane %v5559, %v5563
      %v5566 = vadd.f32 %v5555, %v5564
      %v5567 = vadd.f32 %v5556, %v5564
      %v5568 = vadd.f32 %v5557, %v5564
      %v5569 = vadd.f32 %v5558, %v5564
      %v5570 = vld [vmem:[%s25] sm:$0x1]
      %v5571 = vld [vmem:[%s26] sm:$0x1]
      %v5572 = vsel %vm1126, %v5566, 0.0
      %5573 = vadd.xlane.f32.xlu0 %v5572
      %v5574 = vpop.xlane.xlu0 %5573
      %v5575 = vsel %vm1126, %v5567, 0.0
      %5576 = vadd.xlane.f32.xlu0 %v5575
      %v5577 = vpop.xlane.xlu0 %5576
      %v5578 = vsel %vm1126, %v5568, 0.0
      %5579 = vadd.xlane.f32.xlu0 %v5578
      %v5580 = vpop.xlane.xlu0 %5579
      %v5581 = vsel %vm1126, %v5569, 0.0
      %5582 = vadd.xlane.f32.xlu0 %v5581
      %v5583 = vpop.xlane.xlu0 %5582
      %v5584 = vmul.f32 %v5574, %v2511
      %v5585 = vmul.f32 %v5577, %v2511
      %v5586 = vmul.f32 %v5580, %v2511
      %v5587 = vmul.f32 %v5583, %v2511
      %v5588 = vsub.f32 %v5566, %v5584
      %v5589 = vsub.f32 %v5567, %v5585
      %v5590 = vsub.f32 %v5568, %v5586
      %v5591 = vsub.f32 %v5569, %v5587
      %v5592 = vmul.f32 %v5588, %v5588
      %v5593 = vmul.f32 %v5589, %v5589
      %v5594 = vmul.f32 %v5590, %v5590
      %v5595 = vmul.f32 %v5591, %v5591
      %v5596 = vsel %vm1126, %v5592, 0.0
      %5597 = vadd.xlane.f32.xlu0 %v5596
      %v5598 = vpop.xlane.xlu0 %5597
      %v5599 = vsel %vm1126, %v5593, 0.0
      %5600 = vadd.xlane.f32.xlu0 %v5599
      %v5601 = vpop.xlane.xlu0 %5600
      %v5602 = vsel %vm1126, %v5594, 0.0
      %5603 = vadd.xlane.f32.xlu0 %v5602
      %v5604 = vpop.xlane.xlu0 %5603
      %v5605 = vsel %vm1126, %v5595, 0.0
      %5606 = vadd.xlane.f32.xlu0 %v5605
      %v5607 = vpop.xlane.xlu0 %5606
      %v5608 = vmul.f32 %v5598, %v2511
      %v5609 = vmul.f32 %v5601, %v2511
      %v5610 = vmul.f32 %v5604, %v2511
      %v5611 = vmul.f32 %v5607, %v2511
      %v5612 = vadd.f32 %v5608, 1e-05
      %v5613 = vadd.f32 %v5609, 1e-05
      %v5614 = vadd.f32 %v5610, 1e-05
      %v5615 = vadd.f32 %v5611, 1e-05
      %v5616 = vrsqrt.pop %v5612
      %v5617 = vrsqrt.pop %v5613
      %v5618 = vrsqrt.pop %v5614
      %v5619 = vrsqrt.pop %v5615
      %v5620 = vmul.f32 %v5588, %v5616
      %v5621 = vmul.f32 %v5589, %v5617
      %v5622 = vmul.f32 %v5590, %v5618
      %v5623 = vmul.f32 %v5591, %v5619
      %v5625 = vlaneseq
      %v5626 = vshrl.u32 %v5625, 7
      %v5627 = vsub.s32 0, %v5626
      %v5628 = vrot.slane %v5570, %v5627
      %v5630 = vmul.f32 %v5620, %v5628
      %v5631 = vmul.f32 %v5621, %v5628
      %v5632 = vmul.f32 %v5622, %v5628
      %v5633 = vmul.f32 %v5623, %v5628
      %v5635 = vlaneseq
      %v5636 = vshrl.u32 %v5635, 7
      %v5637 = vsub.s32 0, %v5636
      %v5638 = vrot.slane %v5571, %v5637
      %v5640 = vadd.f32 %v5630, %v5638
      %v5641 = vadd.f32 %v5631, %v5638
      %v5642 = vadd.f32 %v5632, %v5638
      %v5643 = vadd.f32 %v5633, %v5638
      %5644 = vst.msk [vmem:[%s820] sm:$0xff] %vm1126, %v5640
      %5645 = vst.msk [vmem:[%s820 + $0x8] sm:$0xff] %vm1126, %v5641
      %5646 = vst.msk [vmem:[%s820 + $0x10] sm:$0xff] %vm1126, %v5642
      %5647 = vst.msk [vmem:[%s820 + $0x18] sm:$0xff] %vm1126, %v5643
      %s5648 = smul.u32 4, %s38
      %p5649 = scmp.lt.s32.totalorder %s5648, 15
      %s5650 = scalar_select %p5649, %s5648, 15
      %s5651 = smul.addr %s5650, 8
      %s5652 = scalar_lea.vmem %s27, %s5651
      // Predicated region
      $region129: #{forward.2} parent=127 // pred_check
        %p5653 = pneg %p628
      $region130: #{forward.2} parent=127 // pred_check_branch
        %5655 = sbr.rel (%p5653) target = $region132
      $region131: #{forward.2} parent=127 // pred_region
        %s5656 = smul.u32 4, %s38
      $region132: #{forward.2} parent=127 // pred_fallthru
        _
    $region128: #{forward.2} parent=5 // pred_fallthru
      _
    %p5657 = scmp.le.s32.totalorder 2, %s33
    // Predicated region
    $region133: #{forward.2} parent=5 // pred_check
      %p5658 = pneg %p5657
    $region134: #{forward.2} parent=5 // pred_check_branch
      %5660 = sbr.rel (%p5658) target = $region136
    $region135: #{forward.2} parent=5 // pred_region
      %s5661 = ssub.s32 %s33, 2
      // Predicated region
      $region137: #{forward.2} parent=135 // pred_check
        %p5662 = pneg %p634
      $region138: #{forward.2} parent=135 // pred_check_branch
        %5664 = sbr.rel (%p5662) target = $region140
      $region139: #{forward.2} parent=135 // pred_region
        %s5665 = smul.u32 4, %s39
        %p5666 = scmp.lt.s32.totalorder %s5665, 15
        %s5667 = scalar_select %p5666, %s5665, 15
        %s5668 = smul.addr %s5667, 8
        %s5669 = scalar_lea.vmem %s27, %s5668
      $region140: #{forward.2} parent=135 // pred_fallthru
        _
    $region136: #{forward.2} parent=5 // pred_fallthru
      _
  $region6: #{forward.2} parent=0 // loop_footer
    %s37 = sadd.s32 1, %s33
  $region7: #{forward.2} parent=0 // loop_footer_branch
    %32 = sbr.rel target = $region3
  $region8: #{forward.2} parent=0 // loop_exit
    _

</llo_original>
